<compile_context>
chip_gen: v7x
topology: tpu7x:2x2x1
jax: 0.10.0
libtpu: 0.0.40
codegen_flags: <defaults>
</compile_context>

<pallas_src>
import jax
import jax.numpy as jnp
from jax.experimental import pallas as pl
from jax.experimental.pallas import tpu as pltpu

EPS = 1e-5          # nn.BatchNorm2d default eps
C_OUT = 64
K1_PAD = 32         # layer-1 im2col contraction: 3*3*3 = 27, padded to 32


# ------------------------------------------------------------------ geometry
def _geometry(N, H, W):
    H1, W1 = H - 2, W - 2                  # layer1 conv (valid)
    Hp1, Wp1 = H1 // 2, W1 // 2            # pool1
    H2, W2 = Hp1 - 2, Wp1 - 2              # layer2 conv (valid)
    Hp2, Wp2 = H2 // 2, W2 // 2            # pool2
    Hg3, Wg3 = Hp2 + 2, Wp2 + 2            # zero-padded grid for layers 3/4 (padding=1)
    return dict(
        H1=H1, W1=W1, Hp1=Hp1, Wp1=Wp1, H2=H2, W2=W2, Hp2=Hp2, Wp2=Wp2,
        Hg3=Hg3, Wg3=Wg3,
        R1=N * H * W - (2 * W + 2),              # layer-1 conv output slab rows
        R2=N * Hp1 * Wp1 - (2 * Wp1 + 2),        # layer-2 conv output slab rows
        R34=N * Hg3 * Wg3 - (2 * Wg3 + 2),       # layer-3/4 conv output slab rows
        M1=N * H1 * W1, M2=N * H2 * W2, M34=N * Hp2 * Wp2,
    )


# ------------------------------------------------------------------ fused kernel
def _make_encoder_kernel(N, H, W):
    g = _geometry(N, H, W)
    H1, W1, Hp1, Wp1 = g["H1"], g["W1"], g["Hp1"], g["Wp1"]
    H2, W2, Hp2, Wp2 = g["H2"], g["W2"], g["Hp2"], g["Wp2"]
    Hg3, Wg3 = g["Hg3"], g["Wg3"]
    R1, R2, R34 = g["R1"], g["R2"], g["R34"]
    M1, M2, M34 = float(g["M1"]), float(g["M2"]), float(g["M34"])

    def kernel(x_ref, w1_ref, w2_ref, w3_ref, w4_ref, g_ref, b_ref,
               out_ref, acc1, p1, acc2, pad3, acc3, pad4, acc4):
        f32 = jnp.float32

        def bn_affine(layer, s, ss, count):
            # training-mode BatchNorm (biased batch variance) folded into one scale/shift
            mean = s * (1.0 / count)
            var = jnp.maximum(ss * (1.0 / count) - mean * mean, 0.0)
            scale = g_ref[layer:layer + 1, :] * jax.lax.rsqrt(var + EPS)
            shift = b_ref[layer:layer + 1, :] - mean * scale
            return scale, shift

        def conv9(inp_ref, w_ref, wgrid, n_rows):
            # 3x3 conv == 9 shifted [rows, 64] @ [64, 64] MXU matmuls; taps accumulated
            # in vector registers (f32), written to VMEM once by the caller.
            acc = None
            for dh in range(3):
                for dw in range(3):
                    off = dh * wgrid + dw
                    lhs = inp_ref[off:off + n_rows, :].astype(jnp.bfloat16)
                    part = jnp.dot(lhs, w_ref[dh * 3 + dw],
                                   preferred_element_type=f32)
                    acc = part if acc is None else acc + part
            return acc

        def range_stats(src_ref, bases, vw):
            # mask-free BN statistics: sum / sum-of-squares over the valid contiguous
            # row ranges of the conv-output slab (garbage rows never touched).
            s = jnp.zeros((1, C_OUT), f32)
            ss = jnp.zeros((1, C_OUT), f32)
            for b in bases:
                blk = src_ref[b:b + vw, :]
                s = s + jnp.sum(blk, axis=0, keepdims=True)
                ss = ss + jnp.sum(blk * blk, axis=0, keepdims=True)
            return s, ss

        def pool_row(src_ref, src, wgrid, wp):
            # one whole pooled output row: max over 2x2 windows of two consecutive
            # image rows via stride-2 sublane loads (no per-pixel loop).
            tl = src_ref[pl.ds(src, wp, stride=2), :]
            tr = src_ref[pl.ds(src + 1, wp, stride=2), :]
            bl = src_ref[pl.ds(src + wgrid, wp, stride=2), :]
            br = src_ref[pl.ds(src + wgrid + 1, wp, stride=2), :]
            return jnp.maximum(jnp.maximum(tl, tr), jnp.maximum(bl, br))

        # ---------------- layer 1: single im2col matmul + BN + ReLU -------------------
        # Host-side im2col zeroed the boundary-straddling rows, so whole-slab sums equal
        # sums over exactly the M1 valid conv outputs.
        acc1[...] = jnp.dot(x_ref[...], w1_ref[...], preferred_element_type=f32)
        y1 = acc1[...]
        scale, shift = bn_affine(0,
                                 jnp.sum(y1, axis=0, keepdims=True),
                                 jnp.sum(y1 * y1, axis=0, keepdims=True), M1)
        acc1[...] = jnp.maximum(acc1[...] * scale + shift, 0.0)

        # ---------------- maxpool 2x2 -> p1 (one image row per iteration) -------------
        for n in range(N):
            for i in range(Hp1):
                p1[pl.ds(n * Hp1 * Wp1 + i * Wp1, Wp1), :] = pool_row(
                    acc1, n * H * W + 2 * i * W, W, Wp1)

        # ---------------- layer 2: conv(pad=0) + BN + ReLU ----------------------------
        acc2[...] = conv9(p1, w2_ref, Wp1, R2)
        bases2 = [n * Hp1 * Wp1 + h * Wp1 for n in range(N) for h in range(H2)]
        s, ss = range_stats(acc2, bases2, W2)
        scale, shift = bn_affine(1, s, ss, M2)
        acc2[...] = jnp.maximum(acc2[...] * scale + shift, 0.0)

        # ---------------- maxpool 2x2, scattered into the zero-padded grid ------------
        pad3[...] = jnp.zeros_like(pad3)
        for n in range(N):
            for i in range(Hp2):
                pad3[pl.ds(n * Hg3 * Wg3 + (i + 1) * Wg3 + 1, Wp2), :] = pool_row(
                    acc2, n * Hp1 * Wp1 + 2 * i * Wp1, Wp1, Wp2)

        # ---------------- layer 3: conv(pad=1 via padded grid) + BN + ReLU ------------
        acc3[...] = conv9(pad3, w3_ref, Wg3, R34)
        bases34 = [n * Hg3 * Wg3 + h * Wg3 for n in range(N) for h in range(Hp2)]
        s, ss = range_stats(acc3, bases34, Wp2)
        scale, shift = bn_affine(2, s, ss, M34)
        acc3[...] = jnp.maximum(acc3[...] * scale + shift, 0.0)

        # scatter the valid rows into the next zero-padded grid (whole image rows)
        pad4[...] = jnp.zeros_like(pad4)
        for n in range(N):
            for h in range(Hp2):
                src = n * Hg3 * Wg3 + h * Wg3
                dst = n * Hg3 * Wg3 + (h + 1) * Wg3 + 1
                pad4[pl.ds(dst, Wp2), :] = acc3[src:src + Wp2, :]

        # ---------------- layer 4: conv(pad=1) + BN + ReLU ----------------------------
        acc4[...] = conv9(pad4, w4_ref, Wg3, R34)
        s, ss = range_stats(acc4, bases34, Wp2)
        scale, shift = bn_affine(3, s, ss, M34)
        acc4[...] = jnp.maximum(acc4[...] * scale + shift, 0.0)

        # ---------------- emit the valid (N, Hp2, Wp2, 64) rows (whole image rows) ----
        for n in range(N):
            for h in range(Hp2):
                src = n * Hg3 * Wg3 + h * Wg3
                out_ref[pl.ds(n * Hp2 * Wp2 + h * Wp2, Wp2), :] = acc4[src:src + Wp2, :]

    return kernel, g


# ------------------------------------------------------------------ wrapper
def cnn_encoder(x_nchw, params):
    N, Cin, H, W = x_nchw.shape
    kernel, g = _make_encoder_kernel(N, H, W)
    R1 = g["R1"]

    # Host-side layer-1 im2col: NCHW -> [N*H*W, Cin] slab -> 9 shifted taps concatenated
    # on the lane axis -> [R1, 27] -> zero invalid rows -> pad to [R1, 32] bf16 (tiny).
    x2 = jnp.transpose(x_nchw, (0, 2, 3, 1)).reshape(N * H * W, Cin)
    taps = [x2[dh * W + dw: dh * W + dw + R1, :] for dh in range(3) for dw in range(3)]
    xcol = jnp.concatenate(taps, axis=1)                                 # [R1, 9*Cin]
    r = jnp.arange(R1, dtype=jnp.int32)
    p = r % (H * W)
    valid = ((p // W < g["H1"]) & (p % W < g["W1"])).astype(xcol.dtype)[:, None]
    xcol = jnp.pad(xcol * valid, ((0, 0), (0, K1_PAD - 9 * Cin))).astype(jnp.bfloat16)

    in_arrays = (xcol, params["w1"], params["w2"], params["w3"], params["w4"],
                 params["gamma"], params["beta"])
    out_rows = N * g["Hp2"] * g["Wp2"]

    def full(shape):
        return pl.BlockSpec(shape, lambda i: (0,) * len(shape))

    scratch_rows = (R1 + N * g["Hp1"] * g["Wp1"] + g["R2"]
                    + 2 * N * g["Hg3"] * g["Wg3"] + 2 * g["R34"])
    scratch_bytes = scratch_rows * C_OUT * 4
    bytes_accessed = (sum(int(a.size) * a.dtype.itemsize for a in in_arrays)
                      + out_rows * C_OUT * 4)
    flops = (2 * R1 * K1_PAD * C_OUT
             + 2 * 9 * C_OUT * C_OUT * (g["R2"] + 2 * g["R34"]))
    vmem_limit = int(min(64 * 1024 * 1024,
                         max(8 * 1024 * 1024, 8 * (scratch_bytes + bytes_accessed))))

    out2d = pl.pallas_call(
        kernel,
        out_shape=jax.ShapeDtypeStruct((out_rows, C_OUT), jnp.float32),
        grid=(1,),
        in_specs=[full(a.shape) for a in in_arrays],
        out_specs=full((out_rows, C_OUT)),
        scratch_shapes=[
            pltpu.VMEM((R1, C_OUT), jnp.float32),                           # acc1
            pltpu.VMEM((N * g["Hp1"] * g["Wp1"], C_OUT), jnp.float32),      # p1 (pool1)
            pltpu.VMEM((g["R2"], C_OUT), jnp.float32),                      # acc2
            pltpu.VMEM((N * g["Hg3"] * g["Wg3"], C_OUT), jnp.float32),      # pad3
            pltpu.VMEM((g["R34"], C_OUT), jnp.float32),                     # acc3
            pltpu.VMEM((N * g["Hg3"] * g["Wg3"], C_OUT), jnp.float32),      # pad4
            pltpu.VMEM((g["R34"], C_OUT), jnp.float32),                     # acc4
        ],
        compiler_params=pltpu.CompilerParams(
            dimension_semantics=("arbitrary",),
            vmem_limit_bytes=vmem_limit),
        cost_estimate=pl.CostEstimate(flops=flops, transcendentals=256,
                                      bytes_accessed=bytes_accessed),
    )(*in_arrays)

    # [N*Hp2*Wp2, 64] -> NCHW (tiny final reshape/transpose; bulk data never left VMEM)
    return out2d.reshape(N, g["Hp2"], g["Wp2"], C_OUT).transpose(0, 3, 1, 2)


# ------------------------------------------------------------------ params
def init_params(key):
    """Synthetic parameters matching CNNEncoder's parameter shapes.

    Layer-1 weight is stored in im2col layout [32, 64] bf16 (row = tap*3 + channel,
    rows 27..31 zero).  Layers 2-4 are stored as bf16 [9, 64, 64] (tap k = 3*dh + dw),
    equivalent to torch weight [Cout, Cin, 3, 3] transposed.  Conv biases exist in the
    PyTorch module but cancel exactly under training-mode BatchNorm, so they are kept
    only for parameter parity and never used in the forward pass.
    """
    params = {}
    cins = {"w1": 3, "w2": 64, "w3": 64, "w4": 64}
    biases = []
    for name, cin in cins.items():
        key, kw_, kb_ = jax.random.split(key, 3)
        fan_in = 9 * cin
        bound = 1.0 / (fan_in ** 0.5)
        w = jax.random.uniform(kw_, (9, cin, C_OUT), jnp.float32, -bound, bound)
        if name == "w1":
            w = w.reshape(9 * cin, C_OUT)
            w = jnp.pad(w, ((0, K1_PAD - 9 * cin), (0, 0)))
        params[name] = w.astype(jnp.bfloat16)
        biases.append(jax.random.uniform(kb_, (C_OUT,), jnp.float32, -bound, bound))
    params["conv_bias"] = jnp.stack(biases)                 # unused: cancels under BN
    params["gamma"] = jnp.ones((4, C_OUT), jnp.float32)     # BatchNorm2d affine defaults
    params["beta"] = jnp.zeros((4, C_OUT), jnp.float32)
    return params


# ------------------------------------------------------------------ main
if __name__ == "__main__":
    key = jax.random.PRNGKey(0)
    key, kx = jax.random.split(key)
    x = jax.random.normal(kx, (2, 3, 16, 16), jnp.float32)   # NCHW, like PyTorch
    params = init_params(key)

    encoder = jax.jit(cnn_encoder)
    out = jax.block_until_ready(encoder(x, params))
    # 16 -> conv(p0) 14 -> pool 7 -> conv(p0) 5 -> pool 2 -> conv(p1) 2 -> conv(p1) 2
    assert out.shape == (2, 64, 2, 2), out.shape
    assert bool(jnp.all(jnp.isfinite(out)))
    print("KERNEL_OK")
</pallas_src>

<mosaic_0001>
module attributes {stable_mosaic.version = 11 : i64} {
  func.func @kernel(%arg0: i32, %arg1: memref<478x32xbf16, #tpu.memory_space<vmem>>, %arg2: memref<32x64xbf16, #tpu.memory_space<vmem>>, %arg3: memref<9x64x64xbf16, #tpu.memory_space<vmem>>, %arg4: memref<9x64x64xbf16, #tpu.memory_space<vmem>>, %arg5: memref<9x64x64xbf16, #tpu.memory_space<vmem>>, %arg6: memref<4x64xf32, #tpu.memory_space<vmem>>, %arg7: memref<4x64xf32, #tpu.memory_space<vmem>>, %arg8: memref<8x64xf32, #tpu.memory_space<vmem>>, %arg9: memref<478x64xf32, #tpu.memory_space<vmem>>, %arg10: memref<98x64xf32, #tpu.memory_space<vmem>>, %arg11: memref<82x64xf32, #tpu.memory_space<vmem>>, %arg12: memref<32x64xf32, #tpu.memory_space<vmem>>, %arg13: memref<22x64xf32, #tpu.memory_space<vmem>>, %arg14: memref<32x64xf32, #tpu.memory_space<vmem>>, %arg15: memref<22x64xf32, #tpu.memory_space<vmem>>) attributes {dimension_semantics = [#tpu.dimension_semantics<arbitrary>], iteration_bounds = array<i64: 1>, scalar_prefetch = 0 : i64, scratch_operands = 7 : i64, tpu.core_type = #tpu.core_type<tc>, window_params = [{pipeline_mode = #tpu.pipeline_mode<synchronous>, transform_indices = @transform_0, window_bounds = array<i64: 478, 32>}, {pipeline_mode = #tpu.pipeline_mode<synchronous>, transform_indices = @transform_1, window_bounds = array<i64: 32, 64>}, {pipeline_mode = #tpu.pipeline_mode<synchronous>, transform_indices = @transform_2, window_bounds = array<i64: 9, 64, 64>}, {pipeline_mode = #tpu.pipeline_mode<synchronous>, transform_indices = @transform_3, window_bounds = array<i64: 9, 64, 64>}, {pipeline_mode = #tpu.pipeline_mode<synchronous>, transform_indices = @transform_4, window_bounds = array<i64: 9, 64, 64>}, {pipeline_mode = #tpu.pipeline_mode<synchronous>, transform_indices = @transform_5, window_bounds = array<i64: 4, 64>}, {pipeline_mode = #tpu.pipeline_mode<synchronous>, transform_indices = @transform_6, window_bounds = array<i64: 4, 64>}, {pipeline_mode = #tpu.pipeline_mode<synchronous>, transform_indices = @transform_7, window_bounds = array<i64: 8, 64>}]} {
    %c0 = arith.constant 0 : index
    %c0_0 = arith.constant 0 : index
    %0 = vector.load %arg1[%c0, %c0_0] : memref<478x32xbf16, #tpu.memory_space<vmem>>, vector<478x32xbf16>
    %c0_1 = arith.constant 0 : index
    %c0_2 = arith.constant 0 : index
    %1 = vector.load %arg2[%c0_1, %c0_2] : memref<32x64xbf16, #tpu.memory_space<vmem>>, vector<32x64xbf16>
    %cst = arith.constant dense<0.000000e+00> : vector<478x64xf32>
    %2 = tpu.matmul %0, %1, %cst {dimension_numbers = #tpu.dot_dimension_numbers<[1], [0], [0], [1], [0, 0, 1, 1], [], []>} : vector<478x32xbf16>, vector<32x64xbf16>, vector<478x64xf32> -> vector<478x64xf32>
    %c0_3 = arith.constant 0 : index
    %c0_4 = arith.constant 0 : index
    %3 = vector.load %arg9[%c0_3, %c0_4] : memref<478x64xf32, #tpu.memory_space<vmem>>, vector<478x64xf32>
    tpu.vector_store %arg9[%c0_3, %c0_4], %2 {strides = array<i32>} : memref<478x64xf32, #tpu.memory_space<vmem>>, vector<478x64xf32>,
    %c0_5 = arith.constant 0 : index
    %c0_6 = arith.constant 0 : index
    %4 = vector.load %arg9[%c0_5, %c0_6] : memref<478x64xf32, #tpu.memory_space<vmem>>, vector<478x64xf32>
    %cst_7 = arith.constant dense<0.000000e+00> : vector<64xf32>
    %5 = vector.multi_reduction <add>, %4, %cst_7 [0] : vector<478x64xf32> to vector<64xf32>
    %6 = vector.shape_cast %5 : vector<64xf32> to vector<1x64xf32>
    %7 = arith.mulf %4, %4 : vector<478x64xf32>
    %cst_8 = arith.constant dense<0.000000e+00> : vector<64xf32>
    %8 = vector.multi_reduction <add>, %7, %cst_8 [0] : vector<478x64xf32> to vector<64xf32>
    %9 = vector.shape_cast %8 : vector<64xf32> to vector<1x64xf32>
    %cst_9 = arith.constant 0.00255102036 : f32
    %10 = vector.broadcast %cst_9 : f32 to vector<1x64xf32>
    %11 = arith.mulf %6, %10 : vector<1x64xf32>
    %cst_10 = arith.constant 0.00255102036 : f32
    %12 = vector.broadcast %cst_10 : f32 to vector<1x64xf32>
    %13 = arith.mulf %9, %12 : vector<1x64xf32>
    %14 = arith.mulf %11, %11 : vector<1x64xf32>
    %15 = arith.subf %13, %14 : vector<1x64xf32>
    %cst_11 = arith.constant 0.000000e+00 : f32
    %16 = vector.broadcast %cst_11 : f32 to vector<1x64xf32>
    %17 = arith.maximumf %15, %16 : vector<1x64xf32>
    %c0_12 = arith.constant 0 : index
    %c0_13 = arith.constant 0 : index
    %18 = vector.load %arg6[%c0_12, %c0_13] : memref<4x64xf32, #tpu.memory_space<vmem>>, vector<1x64xf32>
    %cst_14 = arith.constant 9.99999974E-6 : f32
    %19 = vector.broadcast %cst_14 : f32 to vector<1x64xf32>
    %20 = arith.addf %17, %19 : vector<1x64xf32>
    %21 = math.rsqrt %20 : vector<1x64xf32>
    %22 = arith.mulf %18, %21 : vector<1x64xf32>
    %c0_15 = arith.constant 0 : index
    %c0_16 = arith.constant 0 : index
    %23 = vector.load %arg7[%c0_15, %c0_16] : memref<4x64xf32, #tpu.memory_space<vmem>>, vector<1x64xf32>
    %24 = arith.mulf %11, %22 : vector<1x64xf32>
    %25 = arith.subf %23, %24 : vector<1x64xf32>
    %c0_17 = arith.constant 0 : index
    %c0_18 = arith.constant 0 : index
    %26 = vector.load %arg9[%c0_17, %c0_18] : memref<478x64xf32, #tpu.memory_space<vmem>>, vector<478x64xf32>
    %27 = vector.broadcast %22 : vector<1x64xf32> to vector<478x64xf32>
    %28 = arith.mulf %26, %27 : vector<478x64xf32>
    %29 = vector.broadcast %25 : vector<1x64xf32> to vector<478x64xf32>
    %30 = arith.addf %28, %29 : vector<478x64xf32>
    %cst_19 = arith.constant 0.000000e+00 : f32
    %31 = vector.broadcast %cst_19 : f32 to vector<478x64xf32>
    %32 = arith.maximumf %30, %31 : vector<478x64xf32>
    %c0_20 = arith.constant 0 : index
    %c0_21 = arith.constant 0 : index
    %33 = vector.load %arg9[%c0_20, %c0_21] : memref<478x64xf32, #tpu.memory_space<vmem>>, vector<478x64xf32>
    tpu.vector_store %arg9[%c0_20, %c0_21], %32 {strides = array<i32>} : memref<478x64xf32, #tpu.memory_space<vmem>>, vector<478x64xf32>,
    %c0_22 = arith.constant 0 : index
    %c0_23 = arith.constant 0 : index
    %34 = tpu.strided_load %arg9[%c0_22, %c0_23] {strides = array<i32: 2, 1>} : memref<478x64xf32, #tpu.memory_space<vmem>>, vector<7x64xf32>
    %c1 = arith.constant 1 : index
    %c0_24 = arith.constant 0 : index
    %35 = tpu.strided_load %arg9[%c1, %c0_24] {strides = array<i32: 2, 1>} : memref<478x64xf32, #tpu.memory_space<vmem>>, vector<7x64xf32>
    %c16 = arith.constant 16 : index
    %c0_25 = arith.constant 0 : index
    %36 = tpu.strided_load %arg9[%c16, %c0_25] {strides = array<i32: 2, 1>} : memref<478x64xf32, #tpu.memory_space<vmem>>, vector<7x64xf32>
    %c17 = arith.constant 17 : index
    %c0_26 = arith.constant 0 : index
    %37 = tpu.strided_load %arg9[%c17, %c0_26] {strides = array<i32: 2, 1>} : memref<478x64xf32, #tpu.memory_space<vmem>>, vector<7x64xf32>
    %38 = arith.maximumf %34, %35 : vector<7x64xf32>
    %39 = arith.maximumf %36, %37 : vector<7x64xf32>
    %40 = arith.maximumf %38, %39 : vector<7x64xf32>
    %c0_27 = arith.constant 0 : index
    %c0_28 = arith.constant 0 : index
    %41 = vector.load %arg10[%c0_27, %c0_28] : memref<98x64xf32, #tpu.memory_space<vmem>>, vector<7x64xf32>
    tpu.vector_store %arg10[%c0_27, %c0_28], %40 {strides = array<i32>} : memref<98x64xf32, #tpu.memory_space<vmem>>, vector<7x64xf32>,
    %c32 = arith.constant 32 : index
    %c0_29 = arith.constant 0 : index
    %42 = tpu.strided_load %arg9[%c32, %c0_29] {strides = array<i32: 2, 1>} : memref<478x64xf32, #tpu.memory_space<vmem>>, vector<7x64xf32>
    %c33 = arith.constant 33 : index
    %c0_30 = arith.constant 0 : index
    %43 = tpu.strided_load %arg9[%c33, %c0_30] {strides = array<i32: 2, 1>} : memref<478x64xf32, #tpu.memory_space<vmem>>, vector<7x64xf32>
    %c48 = arith.constant 48 : index
    %c0_31 = arith.constant 0 : index
    %44 = tpu.strided_load %arg9[%c48, %c0_31] {strides = array<i32: 2, 1>} : memref<478x64xf32, #tpu.memory_space<vmem>>, vector<7x64xf32>
    %c49 = arith.constant 49 : index
    %c0_32 = arith.constant 0 : index
    %45 = tpu.strided_load %arg9[%c49, %c0_32] {strides = array<i32: 2, 1>} : memref<478x64xf32, #tpu.memory_space<vmem>>, vector<7x64xf32>
    %46 = arith.maximumf %42, %43 : vector<7x64xf32>
    %47 = arith.maximumf %44, %45 : vector<7x64xf32>
    %48 = arith.maximumf %46, %47 : vector<7x64xf32>
    %c7 = arith.constant 7 : index
    %c0_33 = arith.constant 0 : index
    %49 = vector.load %arg10[%c7, %c0_33] : memref<98x64xf32, #tpu.memory_space<vmem>>, vector<7x64xf32>
    tpu.vector_store %arg10[%c7, %c0_33], %48 {strides = array<i32>} : memref<98x64xf32, #tpu.memory_space<vmem>>, vector<7x64xf32>,
    %c64 = arith.constant 64 : index
    %c0_34 = arith.constant 0 : index
    %50 = tpu.strided_load %arg9[%c64, %c0_34] {strides = array<i32: 2, 1>} : memref<478x64xf32, #tpu.memory_space<vmem>>, vector<7x64xf32>
    %c65 = arith.constant 65 : index
    %c0_35 = arith.constant 0 : index
    %51 = tpu.strided_load %arg9[%c65, %c0_35] {strides = array<i32: 2, 1>} : memref<478x64xf32, #tpu.memory_space<vmem>>, vector<7x64xf32>
    %c80 = arith.constant 80 : index
    %c0_36 = arith.constant 0 : index
    %52 = tpu.strided_load %arg9[%c80, %c0_36] {strides = array<i32: 2, 1>} : memref<478x64xf32, #tpu.memory_space<vmem>>, vector<7x64xf32>
    %c81 = arith.constant 81 : index
    %c0_37 = arith.constant 0 : index
    %53 = tpu.strided_load %arg9[%c81, %c0_37] {strides = array<i32: 2, 1>} : memref<478x64xf32, #tpu.memory_space<vmem>>, vector<7x64xf32>
    %54 = arith.maximumf %50, %51 : vector<7x64xf32>
    %55 = arith.maximumf %52, %53 : vector<7x64xf32>
    %56 = arith.maximumf %54, %55 : vector<7x64xf32>
    %c14 = arith.constant 14 : index
    %c0_38 = arith.constant 0 : index
    %57 = vector.load %arg10[%c14, %c0_38] : memref<98x64xf32, #tpu.memory_space<vmem>>, vector<7x64xf32>
    tpu.vector_store %arg10[%c14, %c0_38], %56 {strides = array<i32>} : memref<98x64xf32, #tpu.memory_space<vmem>>, vector<7x64xf32>,
    %c96 = arith.constant 96 : index
    %c0_39 = arith.constant 0 : index
    %58 = tpu.strided_load %arg9[%c96, %c0_39] {strides = array<i32: 2, 1>} : memref<478x64xf32, #tpu.memory_space<vmem>>, vector<7x64xf32>
    %c97 = arith.constant 97 : index
    %c0_40 = arith.constant 0 : index
    %59 = tpu.strided_load %arg9[%c97, %c0_40] {strides = array<i32: 2, 1>} : memref<478x64xf32, #tpu.memory_space<vmem>>, vector<7x64xf32>
    %c112 = arith.constant 112 : index
    %c0_41 = arith.constant 0 : index
    %60 = tpu.strided_load %arg9[%c112, %c0_41] {strides = array<i32: 2, 1>} : memref<478x64xf32, #tpu.memory_space<vmem>>, vector<7x64xf32>
    %c113 = arith.constant 113 : index
    %c0_42 = arith.constant 0 : index
    %61 = tpu.strided_load %arg9[%c113, %c0_42] {strides = array<i32: 2, 1>} : memref<478x64xf32, #tpu.memory_space<vmem>>, vector<7x64xf32>
    %62 = arith.maximumf %58, %59 : vector<7x64xf32>
    %63 = arith.maximumf %60, %61 : vector<7x64xf32>
    %64 = arith.maximumf %62, %63 : vector<7x64xf32>
    %c21 = arith.constant 21 : index
    %c0_43 = arith.constant 0 : index
    %65 = vector.load %arg10[%c21, %c0_43] : memref<98x64xf32, #tpu.memory_space<vmem>>, vector<7x64xf32>
    tpu.vector_store %arg10[%c21, %c0_43], %64 {strides = array<i32>} : memref<98x64xf32, #tpu.memory_space<vmem>>, vector<7x64xf32>,
    %c128 = arith.constant 128 : index
    %c0_44 = arith.constant 0 : index
    %66 = tpu.strided_load %arg9[%c128, %c0_44] {strides = array<i32: 2, 1>} : memref<478x64xf32, #tpu.memory_space<vmem>>, vector<7x64xf32>
    %c129 = arith.constant 129 : index
    %c0_45 = arith.constant 0 : index
    %67 = tpu.strided_load %arg9[%c129, %c0_45] {strides = array<i32: 2, 1>} : memref<478x64xf32, #tpu.memory_space<vmem>>, vector<7x64xf32>
    %c144 = arith.constant 144 : index
    %c0_46 = arith.constant 0 : index
    %68 = tpu.strided_load %arg9[%c144, %c0_46] {strides = array<i32: 2, 1>} : memref<478x64xf32, #tpu.memory_space<vmem>>, vector<7x64xf32>
    %c145 = arith.constant 145 : index
    %c0_47 = arith.constant 0 : index
    %69 = tpu.strided_load %arg9[%c145, %c0_47] {strides = array<i32: 2, 1>} : memref<478x64xf32, #tpu.memory_space<vmem>>, vector<7x64xf32>
    %70 = arith.maximumf %66, %67 : vector<7x64xf32>
    %71 = arith.maximumf %68, %69 : vector<7x64xf32>
    %72 = arith.maximumf %70, %71 : vector<7x64xf32>
    %c28 = arith.constant 28 : index
    %c0_48 = arith.constant 0 : index
    %73 = vector.load %arg10[%c28, %c0_48] : memref<98x64xf32, #tpu.memory_space<vmem>>, vector<7x64xf32>
    tpu.vector_store %arg10[%c28, %c0_48], %72 {strides = array<i32>} : memref<98x64xf32, #tpu.memory_space<vmem>>, vector<7x64xf32>,
    %c160 = arith.constant 160 : index
    %c0_49 = arith.constant 0 : index
    %74 = tpu.strided_load %arg9[%c160, %c0_49] {strides = array<i32: 2, 1>} : memref<478x64xf32, #tpu.memory_space<vmem>>, vector<7x64xf32>
    %c161 = arith.constant 161 : index
    %c0_50 = arith.constant 0 : index
    %75 = tpu.strided_load %arg9[%c161, %c0_50] {strides = array<i32: 2, 1>} : memref<478x64xf32, #tpu.memory_space<vmem>>, vector<7x64xf32>
    %c176 = arith.constant 176 : index
    %c0_51 = arith.constant 0 : index
    %76 = tpu.strided_load %arg9[%c176, %c0_51] {strides = array<i32: 2, 1>} : memref<478x64xf32, #tpu.memory_space<vmem>>, vector<7x64xf32>
    %c177 = arith.constant 177 : index
    %c0_52 = arith.constant 0 : index
    %77 = tpu.strided_load %arg9[%c177, %c0_52] {strides = array<i32: 2, 1>} : memref<478x64xf32, #tpu.memory_space<vmem>>, vector<7x64xf32>
    %78 = arith.maximumf %74, %75 : vector<7x64xf32>
    %79 = arith.maximumf %76, %77 : vector<7x64xf32>
    %80 = arith.maximumf %78, %79 : vector<7x64xf32>
    %c35 = arith.constant 35 : index
    %c0_53 = arith.constant 0 : index
    %81 = vector.load %arg10[%c35, %c0_53] : memref<98x64xf32, #tpu.memory_space<vmem>>, vector<7x64xf32>
    tpu.vector_store %arg10[%c35, %c0_53], %80 {strides = array<i32>} : memref<98x64xf32, #tpu.memory_space<vmem>>, vector<7x64xf32>,
    %c192 = arith.constant 192 : index
    %c0_54 = arith.constant 0 : index
    %82 = tpu.strided_load %arg9[%c192, %c0_54] {strides = array<i32: 2, 1>} : memref<478x64xf32, #tpu.memory_space<vmem>>, vector<7x64xf32>
    %c193 = arith.constant 193 : index
    %c0_55 = arith.constant 0 : index
    %83 = tpu.strided_load %arg9[%c193, %c0_55] {strides = array<i32: 2, 1>} : memref<478x64xf32, #tpu.memory_space<vmem>>, vector<7x64xf32>
    %c208 = arith.constant 208 : index
    %c0_56 = arith.constant 0 : index
    %84 = tpu.strided_load %arg9[%c208, %c0_56] {strides = array<i32: 2, 1>} : memref<478x64xf32, #tpu.memory_space<vmem>>, vector<7x64xf32>
    %c209 = arith.constant 209 : index
    %c0_57 = arith.constant 0 : index
    %85 = tpu.strided_load %arg9[%c209, %c0_57] {strides = array<i32: 2, 1>} : memref<478x64xf32, #tpu.memory_space<vmem>>, vector<7x64xf32>
    %86 = arith.maximumf %82, %83 : vector<7x64xf32>
    %87 = arith.maximumf %84, %85 : vector<7x64xf32>
    %88 = arith.maximumf %86, %87 : vector<7x64xf32>
    %c42 = arith.constant 42 : index
    %c0_58 = arith.constant 0 : index
    %89 = vector.load %arg10[%c42, %c0_58] : memref<98x64xf32, #tpu.memory_space<vmem>>, vector<7x64xf32>
    tpu.vector_store %arg10[%c42, %c0_58], %88 {strides = array<i32>} : memref<98x64xf32, #tpu.memory_space<vmem>>, vector<7x64xf32>,
    %c256 = arith.constant 256 : index
    %c0_59 = arith.constant 0 : index
    %90 = tpu.strided_load %arg9[%c256, %c0_59] {strides = array<i32: 2, 1>} : memref<478x64xf32, #tpu.memory_space<vmem>>, vector<7x64xf32>
    %c257 = arith.constant 257 : index
    %c0_60 = arith.constant 0 : index
    %91 = tpu.strided_load %arg9[%c257, %c0_60] {strides = array<i32: 2, 1>} : memref<478x64xf32, #tpu.memory_space<vmem>>, vector<7x64xf32>
    %c272 = arith.constant 272 : index
    %c0_61 = arith.constant 0 : index
    %92 = tpu.strided_load %arg9[%c272, %c0_61] {strides = array<i32: 2, 1>} : memref<478x64xf32, #tpu.memory_space<vmem>>, vector<7x64xf32>
    %c273 = arith.constant 273 : index
    %c0_62 = arith.constant 0 : index
    %93 = tpu.strided_load %arg9[%c273, %c0_62] {strides = array<i32: 2, 1>} : memref<478x64xf32, #tpu.memory_space<vmem>>, vector<7x64xf32>
    %94 = arith.maximumf %90, %91 : vector<7x64xf32>
    %95 = arith.maximumf %92, %93 : vector<7x64xf32>
    %96 = arith.maximumf %94, %95 : vector<7x64xf32>
    %c49_63 = arith.constant 49 : index
    %c0_64 = arith.constant 0 : index
    %97 = vector.load %arg10[%c49_63, %c0_64] : memref<98x64xf32, #tpu.memory_space<vmem>>, vector<7x64xf32>
    tpu.vector_store %arg10[%c49_63, %c0_64], %96 {strides = array<i32>} : memref<98x64xf32, #tpu.memory_space<vmem>>, vector<7x64xf32>,
    %c288 = arith.constant 288 : index
    %c0_65 = arith.constant 0 : index
    %98 = tpu.strided_load %arg9[%c288, %c0_65] {strides = array<i32: 2, 1>} : memref<478x64xf32, #tpu.memory_space<vmem>>, vector<7x64xf32>
    %c289 = arith.constant 289 : index
    %c0_66 = arith.constant 0 : index
    %99 = tpu.strided_load %arg9[%c289, %c0_66] {strides = array<i32: 2, 1>} : memref<478x64xf32, #tpu.memory_space<vmem>>, vector<7x64xf32>
    %c304 = arith.constant 304 : index
    %c0_67 = arith.constant 0 : index
    %100 = tpu.strided_load %arg9[%c304, %c0_67] {strides = array<i32: 2, 1>} : memref<478x64xf32, #tpu.memory_space<vmem>>, vector<7x64xf32>
    %c305 = arith.constant 305 : index
    %c0_68 = arith.constant 0 : index
    %101 = tpu.strided_load %arg9[%c305, %c0_68] {strides = array<i32: 2, 1>} : memref<478x64xf32, #tpu.memory_space<vmem>>, vector<7x64xf32>
    %102 = arith.maximumf %98, %99 : vector<7x64xf32>
    %103 = arith.maximumf %100, %101 : vector<7x64xf32>
    %104 = arith.maximumf %102, %103 : vector<7x64xf32>
    %c56 = arith.constant 56 : index
    %c0_69 = arith.constant 0 : index
    %105 = vector.load %arg10[%c56, %c0_69] : memref<98x64xf32, #tpu.memory_space<vmem>>, vector<7x64xf32>
    tpu.vector_store %arg10[%c56, %c0_69], %104 {strides = array<i32>} : memref<98x64xf32, #tpu.memory_space<vmem>>, vector<7x64xf32>,
    %c320 = arith.constant 320 : index
    %c0_70 = arith.constant 0 : index
    %106 = tpu.strided_load %arg9[%c320, %c0_70] {strides = array<i32: 2, 1>} : memref<478x64xf32, #tpu.memory_space<vmem>>, vector<7x64xf32>
    %c321 = arith.constant 321 : index
    %c0_71 = arith.constant 0 : index
    %107 = tpu.strided_load %arg9[%c321, %c0_71] {strides = array<i32: 2, 1>} : memref<478x64xf32, #tpu.memory_space<vmem>>, vector<7x64xf32>
    %c336 = arith.constant 336 : index
    %c0_72 = arith.constant 0 : index
    %108 = tpu.strided_load %arg9[%c336, %c0_72] {strides = array<i32: 2, 1>} : memref<478x64xf32, #tpu.memory_space<vmem>>, vector<7x64xf32>
    %c337 = arith.constant 337 : index
    %c0_73 = arith.constant 0 : index
    %109 = tpu.strided_load %arg9[%c337, %c0_73] {strides = array<i32: 2, 1>} : memref<478x64xf32, #tpu.memory_space<vmem>>, vector<7x64xf32>
    %110 = arith.maximumf %106, %107 : vector<7x64xf32>
    %111 = arith.maximumf %108, %109 : vector<7x64xf32>
    %112 = arith.maximumf %110, %111 : vector<7x64xf32>
    %c63 = arith.constant 63 : index
    %c0_74 = arith.constant 0 : index
    %113 = vector.load %arg10[%c63, %c0_74] : memref<98x64xf32, #tpu.memory_space<vmem>>, vector<7x64xf32>
    tpu.vector_store %arg10[%c63, %c0_74], %112 {strides = array<i32>} : memref<98x64xf32, #tpu.memory_space<vmem>>, vector<7x64xf32>,
    %c352 = arith.constant 352 : index
    %c0_75 = arith.constant 0 : index
    %114 = tpu.strided_load %arg9[%c352, %c0_75] {strides = array<i32: 2, 1>} : memref<478x64xf32, #tpu.memory_space<vmem>>, vector<7x64xf32>
    %c353 = arith.constant 353 : index
    %c0_76 = arith.constant 0 : index
    %115 = tpu.strided_load %arg9[%c353, %c0_76] {strides = array<i32: 2, 1>} : memref<478x64xf32, #tpu.memory_space<vmem>>, vector<7x64xf32>
    %c368 = arith.constant 368 : index
    %c0_77 = arith.constant 0 : index
    %116 = tpu.strided_load %arg9[%c368, %c0_77] {strides = array<i32: 2, 1>} : memref<478x64xf32, #tpu.memory_space<vmem>>, vector<7x64xf32>
    %c369 = arith.constant 369 : index
    %c0_78 = arith.constant 0 : index
    %117 = tpu.strided_load %arg9[%c369, %c0_78] {strides = array<i32: 2, 1>} : memref<478x64xf32, #tpu.memory_space<vmem>>, vector<7x64xf32>
    %118 = arith.maximumf %114, %115 : vector<7x64xf32>
    %119 = arith.maximumf %116, %117 : vector<7x64xf32>
    %120 = arith.maximumf %118, %119 : vector<7x64xf32>
    %c70 = arith.constant 70 : index
    %c0_79 = arith.constant 0 : index
    %121 = vector.load %arg10[%c70, %c0_79] : memref<98x64xf32, #tpu.memory_space<vmem>>, vector<7x64xf32>
    tpu.vector_store %arg10[%c70, %c0_79], %120 {strides = array<i32>} : memref<98x64xf32, #tpu.memory_space<vmem>>, vector<7x64xf32>,
    %c384 = arith.constant 384 : index
    %c0_80 = arith.constant 0 : index
    %122 = tpu.strided_load %arg9[%c384, %c0_80] {strides = array<i32: 2, 1>} : memref<478x64xf32, #tpu.memory_space<vmem>>, vector<7x64xf32>
    %c385 = arith.constant 385 : index
    %c0_81 = arith.constant 0 : index
    %123 = tpu.strided_load %arg9[%c385, %c0_81] {strides = array<i32: 2, 1>} : memref<478x64xf32, #tpu.memory_space<vmem>>, vector<7x64xf32>
    %c400 = arith.constant 400 : index
    %c0_82 = arith.constant 0 : index
    %124 = tpu.strided_load %arg9[%c400, %c0_82] {strides = array<i32: 2, 1>} : memref<478x64xf32, #tpu.memory_space<vmem>>, vector<7x64xf32>
    %c401 = arith.constant 401 : index
    %c0_83 = arith.constant 0 : index
    %125 = tpu.strided_load %arg9[%c401, %c0_83] {strides = array<i32: 2, 1>} : memref<478x64xf32, #tpu.memory_space<vmem>>, vector<7x64xf32>
    %126 = arith.maximumf %122, %123 : vector<7x64xf32>
    %127 = arith.maximumf %124, %125 : vector<7x64xf32>
    %128 = arith.maximumf %126, %127 : vector<7x64xf32>
    %c77 = arith.constant 77 : index
    %c0_84 = arith.constant 0 : index
    %129 = vector.load %arg10[%c77, %c0_84] : memref<98x64xf32, #tpu.memory_space<vmem>>, vector<7x64xf32>
    tpu.vector_store %arg10[%c77, %c0_84], %128 {strides = array<i32>} : memref<98x64xf32, #tpu.memory_space<vmem>>, vector<7x64xf32>,
    %c416 = arith.constant 416 : index
    %c0_85 = arith.constant 0 : index
    %130 = tpu.strided_load %arg9[%c416, %c0_85] {strides = array<i32: 2, 1>} : memref<478x64xf32, #tpu.memory_space<vmem>>, vector<7x64xf32>
    %c417 = arith.constant 417 : index
    %c0_86 = arith.constant 0 : index
    %131 = tpu.strided_load %arg9[%c417, %c0_86] {strides = array<i32: 2, 1>} : memref<478x64xf32, #tpu.memory_space<vmem>>, vector<7x64xf32>
    %c432 = arith.constant 432 : index
    %c0_87 = arith.constant 0 : index
    %132 = tpu.strided_load %arg9[%c432, %c0_87] {strides = array<i32: 2, 1>} : memref<478x64xf32, #tpu.memory_space<vmem>>, vector<7x64xf32>
    %c433 = arith.constant 433 : index
    %c0_88 = arith.constant 0 : index
    %133 = tpu.strided_load %arg9[%c433, %c0_88] {strides = array<i32: 2, 1>} : memref<478x64xf32, #tpu.memory_space<vmem>>, vector<7x64xf32>
    %134 = arith.maximumf %130, %131 : vector<7x64xf32>
    %135 = arith.maximumf %132, %133 : vector<7x64xf32>
    %136 = arith.maximumf %134, %135 : vector<7x64xf32>
    %c84 = arith.constant 84 : index
    %c0_89 = arith.constant 0 : index
    %137 = vector.load %arg10[%c84, %c0_89] : memref<98x64xf32, #tpu.memory_space<vmem>>, vector<7x64xf32>
    tpu.vector_store %arg10[%c84, %c0_89], %136 {strides = array<i32>} : memref<98x64xf32, #tpu.memory_space<vmem>>, vector<7x64xf32>,
    %c448 = arith.constant 448 : index
    %c0_90 = arith.constant 0 : index
    %138 = tpu.strided_load %arg9[%c448, %c0_90] {strides = array<i32: 2, 1>} : memref<478x64xf32, #tpu.memory_space<vmem>>, vector<7x64xf32>
    %c449 = arith.constant 449 : index
    %c0_91 = arith.constant 0 : index
    %139 = tpu.strided_load %arg9[%c449, %c0_91] {strides = array<i32: 2, 1>} : memref<478x64xf32, #tpu.memory_space<vmem>>, vector<7x64xf32>
    %c464 = arith.constant 464 : index
    %c0_92 = arith.constant 0 : index
    %140 = tpu.strided_load %arg9[%c464, %c0_92] {strides = array<i32: 2, 1>} : memref<478x64xf32, #tpu.memory_space<vmem>>, vector<7x64xf32>
    %c465 = arith.constant 465 : index
    %c0_93 = arith.constant 0 : index
    %141 = tpu.strided_load %arg9[%c465, %c0_93] {strides = array<i32: 2, 1>} : memref<478x64xf32, #tpu.memory_space<vmem>>, vector<7x64xf32>
    %142 = arith.maximumf %138, %139 : vector<7x64xf32>
    %143 = arith.maximumf %140, %141 : vector<7x64xf32>
    %144 = arith.maximumf %142, %143 : vector<7x64xf32>
    %c91 = arith.constant 91 : index
    %c0_94 = arith.constant 0 : index
    %145 = vector.load %arg10[%c91, %c0_94] : memref<98x64xf32, #tpu.memory_space<vmem>>, vector<7x64xf32>
    tpu.vector_store %arg10[%c91, %c0_94], %144 {strides = array<i32>} : memref<98x64xf32, #tpu.memory_space<vmem>>, vector<7x64xf32>,
    %c0_95 = arith.constant 0 : index
    %c0_96 = arith.constant 0 : index
    %146 = vector.load %arg10[%c0_95, %c0_96] : memref<98x64xf32, #tpu.memory_space<vmem>>, vector<82x64xf32>
    %147 = arith.truncf %146 : vector<82x64xf32> to vector<82x64xbf16>
    %c0_97 = arith.constant 0 : index
    %c0_98 = arith.constant 0 : index
    %c0_99 = arith.constant 0 : index
    %148 = vector.load %arg3[%c0_97, %c0_98, %c0_99] : memref<9x64x64xbf16, #tpu.memory_space<vmem>>, vector<1x64x64xbf16>
    %149 = vector.shape_cast %148 : vector<1x64x64xbf16> to vector<64x64xbf16>
    %cst_100 = arith.constant dense<0.000000e+00> : vector<82x64xf32>
    %150 = tpu.matmul %147, %149, %cst_100 {dimension_numbers = #tpu.dot_dimension_numbers<[1], [0], [0], [1], [0, 0, 1, 1], [], []>} : vector<82x64xbf16>, vector<64x64xbf16>, vector<82x64xf32> -> vector<82x64xf32>
    %c1_101 = arith.constant 1 : index
    %c0_102 = arith.constant 0 : index
    %151 = vector.load %arg10[%c1_101, %c0_102] : memref<98x64xf32, #tpu.memory_space<vmem>>, vector<82x64xf32>
    %152 = arith.truncf %151 : vector<82x64xf32> to vector<82x64xbf16>
    %c1_103 = arith.constant 1 : index
    %c0_104 = arith.constant 0 : index
    %c0_105 = arith.constant 0 : index
    %153 = vector.load %arg3[%c1_103, %c0_104, %c0_105] : memref<9x64x64xbf16, #tpu.memory_space<vmem>>, vector<1x64x64xbf16>
    %154 = vector.shape_cast %153 : vector<1x64x64xbf16> to vector<64x64xbf16>
    %cst_106 = arith.constant dense<0.000000e+00> : vector<82x64xf32>
    %155 = tpu.matmul %152, %154, %cst_106 {dimension_numbers = #tpu.dot_dimension_numbers<[1], [0], [0], [1], [0, 0, 1, 1], [], []>} : vector<82x64xbf16>, vector<64x64xbf16>, vector<82x64xf32> -> vector<82x64xf32>
    %156 = arith.addf %150, %155 : vector<82x64xf32>
    %c2 = arith.constant 2 : index
    %c0_107 = arith.constant 0 : index
    %157 = vector.load %arg10[%c2, %c0_107] : memref<98x64xf32, #tpu.memory_space<vmem>>, vector<82x64xf32>
    %158 = arith.truncf %157 : vector<82x64xf32> to vector<82x64xbf16>
    %c2_108 = arith.constant 2 : index
    %c0_109 = arith.constant 0 : index
    %c0_110 = arith.constant 0 : index
    %159 = vector.load %arg3[%c2_108, %c0_109, %c0_110] : memref<9x64x64xbf16, #tpu.memory_space<vmem>>, vector<1x64x64xbf16>
    %160 = vector.shape_cast %159 : vector<1x64x64xbf16> to vector<64x64xbf16>
    %cst_111 = arith.constant dense<0.000000e+00> : vector<82x64xf32>
    %161 = tpu.matmul %158, %160, %cst_111 {dimension_numbers = #tpu.dot_dimension_numbers<[1], [0], [0], [1], [0, 0, 1, 1], [], []>} : vector<82x64xbf16>, vector<64x64xbf16>, vector<82x64xf32> -> vector<82x64xf32>
    %162 = arith.addf %156, %161 : vector<82x64xf32>
    %c7_112 = arith.constant 7 : index
    %c0_113 = arith.constant 0 : index
    %163 = vector.load %arg10[%c7_112, %c0_113] : memref<98x64xf32, #tpu.memory_space<vmem>>, vector<82x64xf32>
    %164 = arith.truncf %163 : vector<82x64xf32> to vector<82x64xbf16>
    %c3 = arith.constant 3 : index
    %c0_114 = arith.constant 0 : index
    %c0_115 = arith.constant 0 : index
    %165 = vector.load %arg3[%c3, %c0_114, %c0_115] : memref<9x64x64xbf16, #tpu.memory_space<vmem>>, vector<1x64x64xbf16>
    %166 = vector.shape_cast %165 : vector<1x64x64xbf16> to vector<64x64xbf16>
    %cst_116 = arith.constant dense<0.000000e+00> : vector<82x64xf32>
    %167 = tpu.matmul %164, %166, %cst_116 {dimension_numbers = #tpu.dot_dimension_numbers<[1], [0], [0], [1], [0, 0, 1, 1], [], []>} : vector<82x64xbf16>, vector<64x64xbf16>, vector<82x64xf32> -> vector<82x64xf32>
    %168 = arith.addf %162, %167 : vector<82x64xf32>
    %c8 = arith.constant 8 : index
    %c0_117 = arith.constant 0 : index
    %169 = vector.load %arg10[%c8, %c0_117] : memref<98x64xf32, #tpu.memory_space<vmem>>, vector<82x64xf32>
    %170 = arith.truncf %169 : vector<82x64xf32> to vector<82x64xbf16>
    %c4 = arith.constant 4 : index
    %c0_118 = arith.constant 0 : index
    %c0_119 = arith.constant 0 : index
    %171 = vector.load %arg3[%c4, %c0_118, %c0_119] : memref<9x64x64xbf16, #tpu.memory_space<vmem>>, vector<1x64x64xbf16>
    %172 = vector.shape_cast %171 : vector<1x64x64xbf16> to vector<64x64xbf16>
    %cst_120 = arith.constant dense<0.000000e+00> : vector<82x64xf32>
    %173 = tpu.matmul %170, %172, %cst_120 {dimension_numbers = #tpu.dot_dimension_numbers<[1], [0], [0], [1], [0, 0, 1, 1], [], []>} : vector<82x64xbf16>, vector<64x64xbf16>, vector<82x64xf32> -> vector<82x64xf32>
    %174 = arith.addf %168, %173 : vector<82x64xf32>
    %c9 = arith.constant 9 : index
    %c0_121 = arith.constant 0 : index
    %175 = vector.load %arg10[%c9, %c0_121] : memref<98x64xf32, #tpu.memory_space<vmem>>, vector<82x64xf32>
    %176 = arith.truncf %175 : vector<82x64xf32> to vector<82x64xbf16>
    %c5 = arith.constant 5 : index
    %c0_122 = arith.constant 0 : index
    %c0_123 = arith.constant 0 : index
    %177 = vector.load %arg3[%c5, %c0_122, %c0_123] : memref<9x64x64xbf16, #tpu.memory_space<vmem>>, vector<1x64x64xbf16>
    %178 = vector.shape_cast %177 : vector<1x64x64xbf16> to vector<64x64xbf16>
    %cst_124 = arith.constant dense<0.000000e+00> : vector<82x64xf32>
    %179 = tpu.matmul %176, %178, %cst_124 {dimension_numbers = #tpu.dot_dimension_numbers<[1], [0], [0], [1], [0, 0, 1, 1], [], []>} : vector<82x64xbf16>, vector<64x64xbf16>, vector<82x64xf32> -> vector<82x64xf32>
    %180 = arith.addf %174, %179 : vector<82x64xf32>
    %c14_125 = arith.constant 14 : index
    %c0_126 = arith.constant 0 : index
    %181 = vector.load %arg10[%c14_125, %c0_126] : memref<98x64xf32, #tpu.memory_space<vmem>>, vector<82x64xf32>
    %182 = arith.truncf %181 : vector<82x64xf32> to vector<82x64xbf16>
    %c6 = arith.constant 6 : index
    %c0_127 = arith.constant 0 : index
    %c0_128 = arith.constant 0 : index
    %183 = vector.load %arg3[%c6, %c0_127, %c0_128] : memref<9x64x64xbf16, #tpu.memory_space<vmem>>, vector<1x64x64xbf16>
    %184 = vector.shape_cast %183 : vector<1x64x64xbf16> to vector<64x64xbf16>
    %cst_129 = arith.constant dense<0.000000e+00> : vector<82x64xf32>
    %185 = tpu.matmul %182, %184, %cst_129 {dimension_numbers = #tpu.dot_dimension_numbers<[1], [0], [0], [1], [0, 0, 1, 1], [], []>} : vector<82x64xbf16>, vector<64x64xbf16>, vector<82x64xf32> -> vector<82x64xf32>
    %186 = arith.addf %180, %185 : vector<82x64xf32>
    %c15 = arith.constant 15 : index
    %c0_130 = arith.constant 0 : index
    %187 = vector.load %arg10[%c15, %c0_130] : memref<98x64xf32, #tpu.memory_space<vmem>>, vector<82x64xf32>
    %188 = arith.truncf %187 : vector<82x64xf32> to vector<82x64xbf16>
    %c7_131 = arith.constant 7 : index
    %c0_132 = arith.constant 0 : index
    %c0_133 = arith.constant 0 : index
    %189 = vector.load %arg3[%c7_131, %c0_132, %c0_133] : memref<9x64x64xbf16, #tpu.memory_space<vmem>>, vector<1x64x64xbf16>
    %190 = vector.shape_cast %189 : vector<1x64x64xbf16> to vector<64x64xbf16>
    %cst_134 = arith.constant dense<0.000000e+00> : vector<82x64xf32>
    %191 = tpu.matmul %188, %190, %cst_134 {dimension_numbers = #tpu.dot_dimension_numbers<[1], [0], [0], [1], [0, 0, 1, 1], [], []>} : vector<82x64xbf16>, vector<64x64xbf16>, vector<82x64xf32> -> vector<82x64xf32>
    %192 = arith.addf %186, %191 : vector<82x64xf32>
    %c16_135 = arith.constant 16 : index
    %c0_136 = arith.constant 0 : index
    %193 = vector.load %arg10[%c16_135, %c0_136] : memref<98x64xf32, #tpu.memory_space<vmem>>, vector<82x64xf32>
    %194 = arith.truncf %193 : vector<82x64xf32> to vector<82x64xbf16>
    %c8_137 = arith.constant 8 : index
    %c0_138 = arith.constant 0 : index
    %c0_139 = arith.constant 0 : index
    %195 = vector.load %arg3[%c8_137, %c0_138, %c0_139] : memref<9x64x64xbf16, #tpu.memory_space<vmem>>, vector<1x64x64xbf16>
    %196 = vector.shape_cast %195 : vector<1x64x64xbf16> to vector<64x64xbf16>
    %cst_140 = arith.constant dense<0.000000e+00> : vector<82x64xf32>
    %197 = tpu.matmul %194, %196, %cst_140 {dimension_numbers = #tpu.dot_dimension_numbers<[1], [0], [0], [1], [0, 0, 1, 1], [], []>} : vector<82x64xbf16>, vector<64x64xbf16>, vector<82x64xf32> -> vector<82x64xf32>
    %198 = arith.addf %192, %197 : vector<82x64xf32>
    %c0_141 = arith.constant 0 : index
    %c0_142 = arith.constant 0 : index
    %199 = vector.load %arg11[%c0_141, %c0_142] : memref<82x64xf32, #tpu.memory_space<vmem>>, vector<82x64xf32>
    tpu.vector_store %arg11[%c0_141, %c0_142], %198 {strides = array<i32>} : memref<82x64xf32, #tpu.memory_space<vmem>>, vector<82x64xf32>,
    %cst_143 = arith.constant 0.000000e+00 : f32
    %200 = vector.broadcast %cst_143 : f32 to vector<1x64xf32>
    %cst_144 = arith.constant 0.000000e+00 : f32
    %201 = vector.broadcast %cst_144 : f32 to vector<1x64xf32>
    %c0_145 = arith.constant 0 : index
    %c0_146 = arith.constant 0 : index
    %202 = vector.load %arg11[%c0_145, %c0_146] : memref<82x64xf32, #tpu.memory_space<vmem>>, vector<5x64xf32>
    %cst_147 = arith.constant dense<0.000000e+00> : vector<64xf32>
    %203 = vector.multi_reduction <add>, %202, %cst_147 [0] : vector<5x64xf32> to vector<64xf32>
    %204 = vector.shape_cast %203 : vector<64xf32> to vector<1x64xf32>
    %205 = arith.addf %200, %204 : vector<1x64xf32>
    %206 = arith.mulf %202, %202 : vector<5x64xf32>
    %cst_148 = arith.constant dense<0.000000e+00> : vector<64xf32>
    %207 = vector.multi_reduction <add>, %206, %cst_148 [0] : vector<5x64xf32> to vector<64xf32>
    %208 = vector.shape_cast %207 : vector<64xf32> to vector<1x64xf32>
    %209 = arith.addf %201, %208 : vector<1x64xf32>
    %c7_149 = arith.constant 7 : index
    %c0_150 = arith.constant 0 : index
    %210 = vector.load %arg11[%c7_149, %c0_150] : memref<82x64xf32, #tpu.memory_space<vmem>>, vector<5x64xf32>
    %cst_151 = arith.constant dense<0.000000e+00> : vector<64xf32>
    %211 = vector.multi_reduction <add>, %210, %cst_151 [0] : vector<5x64xf32> to vector<64xf32>
    %212 = vector.shape_cast %211 : vector<64xf32> to vector<1x64xf32>
    %213 = arith.addf %205, %212 : vector<1x64xf32>
    %214 = arith.mulf %210, %210 : vector<5x64xf32>
    %cst_152 = arith.constant dense<0.000000e+00> : vector<64xf32>
    %215 = vector.multi_reduction <add>, %214, %cst_152 [0] : vector<5x64xf32> to vector<64xf32>
    %216 = vector.shape_cast %215 : vector<64xf32> to vector<1x64xf32>
    %217 = arith.addf %209, %216 : vector<1x64xf32>
    %c14_153 = arith.constant 14 : index
    %c0_154 = arith.constant 0 : index
    %218 = vector.load %arg11[%c14_153, %c0_154] : memref<82x64xf32, #tpu.memory_space<vmem>>, vector<5x64xf32>
    %cst_155 = arith.constant dense<0.000000e+00> : vector<64xf32>
    %219 = vector.multi_reduction <add>, %218, %cst_155 [0] : vector<5x64xf32> to vector<64xf32>
    %220 = vector.shape_cast %219 : vector<64xf32> to vector<1x64xf32>
    %221 = arith.addf %213, %220 : vector<1x64xf32>
    %222 = arith.mulf %218, %218 : vector<5x64xf32>
    %cst_156 = arith.constant dense<0.000000e+00> : vector<64xf32>
    %223 = vector.multi_reduction <add>, %222, %cst_156 [0] : vector<5x64xf32> to vector<64xf32>
    %224 = vector.shape_cast %223 : vector<64xf32> to vector<1x64xf32>
    %225 = arith.addf %217, %224 : vector<1x64xf32>
    %c21_157 = arith.constant 21 : index
    %c0_158 = arith.constant 0 : index
    %226 = vector.load %arg11[%c21_157, %c0_158] : memref<82x64xf32, #tpu.memory_space<vmem>>, vector<5x64xf32>
    %cst_159 = arith.constant dense<0.000000e+00> : vector<64xf32>
    %227 = vector.multi_reduction <add>, %226, %cst_159 [0] : vector<5x64xf32> to vector<64xf32>
    %228 = vector.shape_cast %227 : vector<64xf32> to vector<1x64xf32>
    %229 = arith.addf %221, %228 : vector<1x64xf32>
    %230 = arith.mulf %226, %226 : vector<5x64xf32>
    %cst_160 = arith.constant dense<0.000000e+00> : vector<64xf32>
    %231 = vector.multi_reduction <add>, %230, %cst_160 [0] : vector<5x64xf32> to vector<64xf32>
    %232 = vector.shape_cast %231 : vector<64xf32> to vector<1x64xf32>
    %233 = arith.addf %225, %232 : vector<1x64xf32>
    %c28_161 = arith.constant 28 : index
    %c0_162 = arith.constant 0 : index
    %234 = vector.load %arg11[%c28_161, %c0_162] : memref<82x64xf32, #tpu.memory_space<vmem>>, vector<5x64xf32>
    %cst_163 = arith.constant dense<0.000000e+00> : vector<64xf32>
    %235 = vector.multi_reduction <add>, %234, %cst_163 [0] : vector<5x64xf32> to vector<64xf32>
    %236 = vector.shape_cast %235 : vector<64xf32> to vector<1x64xf32>
    %237 = arith.addf %229, %236 : vector<1x64xf32>
    %238 = arith.mulf %234, %234 : vector<5x64xf32>
    %cst_164 = arith.constant dense<0.000000e+00> : vector<64xf32>
    %239 = vector.multi_reduction <add>, %238, %cst_164 [0] : vector<5x64xf32> to vector<64xf32>
    %240 = vector.shape_cast %239 : vector<64xf32> to vector<1x64xf32>
    %241 = arith.addf %233, %240 : vector<1x64xf32>
    %c49_165 = arith.constant 49 : index
    %c0_166 = arith.constant 0 : index
    %242 = vector.load %arg11[%c49_165, %c0_166] : memref<82x64xf32, #tpu.memory_space<vmem>>, vector<5x64xf32>
    %cst_167 = arith.constant dense<0.000000e+00> : vector<64xf32>
    %243 = vector.multi_reduction <add>, %242, %cst_167 [0] : vector<5x64xf32> to vector<64xf32>
    %244 = vector.shape_cast %243 : vector<64xf32> to vector<1x64xf32>
    %245 = arith.addf %237, %244 : vector<1x64xf32>
    %246 = arith.mulf %242, %242 : vector<5x64xf32>
    %cst_168 = arith.constant dense<0.000000e+00> : vector<64xf32>
    %247 = vector.multi_reduction <add>, %246, %cst_168 [0] : vector<5x64xf32> to vector<64xf32>
    %248 = vector.shape_cast %247 : vector<64xf32> to vector<1x64xf32>
    %249 = arith.addf %241, %248 : vector<1x64xf32>
    %c56_169 = arith.constant 56 : index
    %c0_170 = arith.constant 0 : index
    %250 = vector.load %arg11[%c56_169, %c0_170] : memref<82x64xf32, #tpu.memory_space<vmem>>, vector<5x64xf32>
    %cst_171 = arith.constant dense<0.000000e+00> : vector<64xf32>
    %251 = vector.multi_reduction <add>, %250, %cst_171 [0] : vector<5x64xf32> to vector<64xf32>
    %252 = vector.shape_cast %251 : vector<64xf32> to vector<1x64xf32>
    %253 = arith.addf %245, %252 : vector<1x64xf32>
    %254 = arith.mulf %250, %250 : vector<5x64xf32>
    %cst_172 = arith.constant dense<0.000000e+00> : vector<64xf32>
    %255 = vector.multi_reduction <add>, %254, %cst_172 [0] : vector<5x64xf32> to vector<64xf32>
    %256 = vector.shape_cast %255 : vector<64xf32> to vector<1x64xf32>
    %257 = arith.addf %249, %256 : vector<1x64xf32>
    %c63_173 = arith.constant 63 : index
    %c0_174 = arith.constant 0 : index
    %258 = vector.load %arg11[%c63_173, %c0_174] : memref<82x64xf32, #tpu.memory_space<vmem>>, vector<5x64xf32>
    %cst_175 = arith.constant dense<0.000000e+00> : vector<64xf32>
    %259 = vector.multi_reduction <add>, %258, %cst_175 [0] : vector<5x64xf32> to vector<64xf32>
    %260 = vector.shape_cast %259 : vector<64xf32> to vector<1x64xf32>
    %261 = arith.addf %253, %260 : vector<1x64xf32>
    %262 = arith.mulf %258, %258 : vector<5x64xf32>
    %cst_176 = arith.constant dense<0.000000e+00> : vector<64xf32>
    %263 = vector.multi_reduction <add>, %262, %cst_176 [0] : vector<5x64xf32> to vector<64xf32>
    %264 = vector.shape_cast %263 : vector<64xf32> to vector<1x64xf32>
    %265 = arith.addf %257, %264 : vector<1x64xf32>
    %c70_177 = arith.constant 70 : index
    %c0_178 = arith.constant 0 : index
    %266 = vector.load %arg11[%c70_177, %c0_178] : memref<82x64xf32, #tpu.memory_space<vmem>>, vector<5x64xf32>
    %cst_179 = arith.constant dense<0.000000e+00> : vector<64xf32>
    %267 = vector.multi_reduction <add>, %266, %cst_179 [0] : vector<5x64xf32> to vector<64xf32>
    %268 = vector.shape_cast %267 : vector<64xf32> to vector<1x64xf32>
    %269 = arith.addf %261, %268 : vector<1x64xf32>
    %270 = arith.mulf %266, %266 : vector<5x64xf32>
    %cst_180 = arith.constant dense<0.000000e+00> : vector<64xf32>
    %271 = vector.multi_reduction <add>, %270, %cst_180 [0] : vector<5x64xf32> to vector<64xf32>
    %272 = vector.shape_cast %271 : vector<64xf32> to vector<1x64xf32>
    %273 = arith.addf %265, %272 : vector<1x64xf32>
    %c77_181 = arith.constant 77 : index
    %c0_182 = arith.constant 0 : index
    %274 = vector.load %arg11[%c77_181, %c0_182] : memref<82x64xf32, #tpu.memory_space<vmem>>, vector<5x64xf32>
    %cst_183 = arith.constant dense<0.000000e+00> : vector<64xf32>
    %275 = vector.multi_reduction <add>, %274, %cst_183 [0] : vector<5x64xf32> to vector<64xf32>
    %276 = vector.shape_cast %275 : vector<64xf32> to vector<1x64xf32>
    %277 = arith.addf %269, %276 : vector<1x64xf32>
    %278 = arith.mulf %274, %274 : vector<5x64xf32>
    %cst_184 = arith.constant dense<0.000000e+00> : vector<64xf32>
    %279 = vector.multi_reduction <add>, %278, %cst_184 [0] : vector<5x64xf32> to vector<64xf32>
    %280 = vector.shape_cast %279 : vector<64xf32> to vector<1x64xf32>
    %281 = arith.addf %273, %280 : vector<1x64xf32>
    %cst_185 = arith.constant 2.000000e-02 : f32
    %282 = vector.broadcast %cst_185 : f32 to vector<1x64xf32>
    %283 = arith.mulf %277, %282 : vector<1x64xf32>
    %cst_186 = arith.constant 2.000000e-02 : f32
    %284 = vector.broadcast %cst_186 : f32 to vector<1x64xf32>
    %285 = arith.mulf %281, %284 : vector<1x64xf32>
    %286 = arith.mulf %283, %283 : vector<1x64xf32>
    %287 = arith.subf %285, %286 : vector<1x64xf32>
    %cst_187 = arith.constant 0.000000e+00 : f32
    %288 = vector.broadcast %cst_187 : f32 to vector<1x64xf32>
    %289 = arith.maximumf %287, %288 : vector<1x64xf32>
    %c1_188 = arith.constant 1 : index
    %c0_189 = arith.constant 0 : index
    %290 = vector.load %arg6[%c1_188, %c0_189] : memref<4x64xf32, #tpu.memory_space<vmem>>, vector<1x64xf32>
    %cst_190 = arith.constant 9.99999974E-6 : f32
    %291 = vector.broadcast %cst_190 : f32 to vector<1x64xf32>
    %292 = arith.addf %289, %291 : vector<1x64xf32>
    %293 = math.rsqrt %292 : vector<1x64xf32>
    %294 = arith.mulf %290, %293 : vector<1x64xf32>
    %c1_191 = arith.constant 1 : index
    %c0_192 = arith.constant 0 : index
    %295 = vector.load %arg7[%c1_191, %c0_192] : memref<4x64xf32, #tpu.memory_space<vmem>>, vector<1x64xf32>
    %296 = arith.mulf %283, %294 : vector<1x64xf32>
    %297 = arith.subf %295, %296 : vector<1x64xf32>
    %c0_193 = arith.constant 0 : index
    %c0_194 = arith.constant 0 : index
    %298 = vector.load %arg11[%c0_193, %c0_194] : memref<82x64xf32, #tpu.memory_space<vmem>>, vector<82x64xf32>
    %299 = vector.broadcast %294 : vector<1x64xf32> to vector<82x64xf32>
    %300 = arith.mulf %298, %299 : vector<82x64xf32>
    %301 = vector.broadcast %297 : vector<1x64xf32> to vector<82x64xf32>
    %302 = arith.addf %300, %301 : vector<82x64xf32>
    %cst_195 = arith.constant 0.000000e+00 : f32
    %303 = vector.broadcast %cst_195 : f32 to vector<82x64xf32>
    %304 = arith.maximumf %302, %303 : vector<82x64xf32>
    %c0_196 = arith.constant 0 : index
    %c0_197 = arith.constant 0 : index
    %305 = vector.load %arg11[%c0_196, %c0_197] : memref<82x64xf32, #tpu.memory_space<vmem>>, vector<82x64xf32>
    tpu.vector_store %arg11[%c0_196, %c0_197], %304 {strides = array<i32>} : memref<82x64xf32, #tpu.memory_space<vmem>>, vector<82x64xf32>,
    %cst_198 = arith.constant 0.000000e+00 : f32
    %306 = vector.broadcast %cst_198 : f32 to vector<32x64xf32>
    %c0_199 = arith.constant 0 : index
    %c0_200 = arith.constant 0 : index
    %307 = vector.load %arg12[%c0_199, %c0_200] : memref<32x64xf32, #tpu.memory_space<vmem>>, vector<32x64xf32>
    tpu.vector_store %arg12[%c0_199, %c0_200], %306 {strides = array<i32>} : memref<32x64xf32, #tpu.memory_space<vmem>>, vector<32x64xf32>,
    %c0_201 = arith.constant 0 : index
    %c0_202 = arith.constant 0 : index
    %308 = tpu.strided_load %arg11[%c0_201, %c0_202] {strides = array<i32: 2, 1>} : memref<82x64xf32, #tpu.memory_space<vmem>>, vector<2x64xf32>
    %c1_203 = arith.constant 1 : index
    %c0_204 = arith.constant 0 : index
    %309 = tpu.strided_load %arg11[%c1_203, %c0_204] {strides = array<i32: 2, 1>} : memref<82x64xf32, #tpu.memory_space<vmem>>, vector<2x64xf32>
    %c7_205 = arith.constant 7 : index
    %c0_206 = arith.constant 0 : index
    %310 = tpu.strided_load %arg11[%c7_205, %c0_206] {strides = array<i32: 2, 1>} : memref<82x64xf32, #tpu.memory_space<vmem>>, vector<2x64xf32>
    %c8_207 = arith.constant 8 : index
    %c0_208 = arith.constant 0 : index
    %311 = tpu.strided_load %arg11[%c8_207, %c0_208] {strides = array<i32: 2, 1>} : memref<82x64xf32, #tpu.memory_space<vmem>>, vector<2x64xf32>
    %312 = arith.maximumf %308, %309 : vector<2x64xf32>
    %313 = arith.maximumf %310, %311 : vector<2x64xf32>
    %314 = arith.maximumf %312, %313 : vector<2x64xf32>
    %c5_209 = arith.constant 5 : index
    %c0_210 = arith.constant 0 : index
    %315 = vector.load %arg12[%c5_209, %c0_210] : memref<32x64xf32, #tpu.memory_space<vmem>>, vector<2x64xf32>
    tpu.vector_store %arg12[%c5_209, %c0_210], %314 {strides = array<i32>} : memref<32x64xf32, #tpu.memory_space<vmem>>, vector<2x64xf32>,
    %c14_211 = arith.constant 14 : index
    %c0_212 = arith.constant 0 : index
    %316 = tpu.strided_load %arg11[%c14_211, %c0_212] {strides = array<i32: 2, 1>} : memref<82x64xf32, #tpu.memory_space<vmem>>, vector<2x64xf32>
    %c15_213 = arith.constant 15 : index
    %c0_214 = arith.constant 0 : index
    %317 = tpu.strided_load %arg11[%c15_213, %c0_214] {strides = array<i32: 2, 1>} : memref<82x64xf32, #tpu.memory_space<vmem>>, vector<2x64xf32>
    %c21_215 = arith.constant 21 : index
    %c0_216 = arith.constant 0 : index
    %318 = tpu.strided_load %arg11[%c21_215, %c0_216] {strides = array<i32: 2, 1>} : memref<82x64xf32, #tpu.memory_space<vmem>>, vector<2x64xf32>
    %c22 = arith.constant 22 : index
    %c0_217 = arith.constant 0 : index
    %319 = tpu.strided_load %arg11[%c22, %c0_217] {strides = array<i32: 2, 1>} : memref<82x64xf32, #tpu.memory_space<vmem>>, vector<2x64xf32>
    %320 = arith.maximumf %316, %317 : vector<2x64xf32>
    %321 = arith.maximumf %318, %319 : vector<2x64xf32>
    %322 = arith.maximumf %320, %321 : vector<2x64xf32>
    %c9_218 = arith.constant 9 : index
    %c0_219 = arith.constant 0 : index
    %323 = vector.load %arg12[%c9_218, %c0_219] : memref<32x64xf32, #tpu.memory_space<vmem>>, vector<2x64xf32>
    tpu.vector_store %arg12[%c9_218, %c0_219], %322 {strides = array<i32>} : memref<32x64xf32, #tpu.memory_space<vmem>>, vector<2x64xf32>,
    %c49_220 = arith.constant 49 : index
    %c0_221 = arith.constant 0 : index
    %324 = tpu.strided_load %arg11[%c49_220, %c0_221] {strides = array<i32: 2, 1>} : memref<82x64xf32, #tpu.memory_space<vmem>>, vector<2x64xf32>
    %c50 = arith.constant 50 : index
    %c0_222 = arith.constant 0 : index
    %325 = tpu.strided_load %arg11[%c50, %c0_222] {strides = array<i32: 2, 1>} : memref<82x64xf32, #tpu.memory_space<vmem>>, vector<2x64xf32>
    %c56_223 = arith.constant 56 : index
    %c0_224 = arith.constant 0 : index
    %326 = tpu.strided_load %arg11[%c56_223, %c0_224] {strides = array<i32: 2, 1>} : memref<82x64xf32, #tpu.memory_space<vmem>>, vector<2x64xf32>
    %c57 = arith.constant 57 : index
    %c0_225 = arith.constant 0 : index
    %327 = tpu.strided_load %arg11[%c57, %c0_225] {strides = array<i32: 2, 1>} : memref<82x64xf32, #tpu.memory_space<vmem>>, vector<2x64xf32>
    %328 = arith.maximumf %324, %325 : vector<2x64xf32>
    %329 = arith.maximumf %326, %327 : vector<2x64xf32>
    %330 = arith.maximumf %328, %329 : vector<2x64xf32>
    %c21_226 = arith.constant 21 : index
    %c0_227 = arith.constant 0 : index
    %331 = vector.load %arg12[%c21_226, %c0_227] : memref<32x64xf32, #tpu.memory_space<vmem>>, vector<2x64xf32>
    tpu.vector_store %arg12[%c21_226, %c0_227], %330 {strides = array<i32>} : memref<32x64xf32, #tpu.memory_space<vmem>>, vector<2x64xf32>,
    %c63_228 = arith.constant 63 : index
    %c0_229 = arith.constant 0 : index
    %332 = tpu.strided_load %arg11[%c63_228, %c0_229] {strides = array<i32: 2, 1>} : memref<82x64xf32, #tpu.memory_space<vmem>>, vector<2x64xf32>
    %c64_230 = arith.constant 64 : index
    %c0_231 = arith.constant 0 : index
    %333 = tpu.strided_load %arg11[%c64_230, %c0_231] {strides = array<i32: 2, 1>} : memref<82x64xf32, #tpu.memory_space<vmem>>, vector<2x64xf32>
    %c70_232 = arith.constant 70 : index
    %c0_233 = arith.constant 0 : index
    %334 = tpu.strided_load %arg11[%c70_232, %c0_233] {strides = array<i32: 2, 1>} : memref<82x64xf32, #tpu.memory_space<vmem>>, vector<2x64xf32>
    %c71 = arith.constant 71 : index
    %c0_234 = arith.constant 0 : index
    %335 = tpu.strided_load %arg11[%c71, %c0_234] {strides = array<i32: 2, 1>} : memref<82x64xf32, #tpu.memory_space<vmem>>, vector<2x64xf32>
    %336 = arith.maximumf %332, %333 : vector<2x64xf32>
    %337 = arith.maximumf %334, %335 : vector<2x64xf32>
    %338 = arith.maximumf %336, %337 : vector<2x64xf32>
    %c25 = arith.constant 25 : index
    %c0_235 = arith.constant 0 : index
    %339 = vector.load %arg12[%c25, %c0_235] : memref<32x64xf32, #tpu.memory_space<vmem>>, vector<2x64xf32>
    tpu.vector_store %arg12[%c25, %c0_235], %338 {strides = array<i32>} : memref<32x64xf32, #tpu.memory_space<vmem>>, vector<2x64xf32>,
    %c0_236 = arith.constant 0 : index
    %c0_237 = arith.constant 0 : index
    %340 = vector.load %arg12[%c0_236, %c0_237] : memref<32x64xf32, #tpu.memory_space<vmem>>, vector<22x64xf32>
    %341 = arith.truncf %340 : vector<22x64xf32> to vector<22x64xbf16>
    %c0_238 = arith.constant 0 : index
    %c0_239 = arith.constant 0 : index
    %c0_240 = arith.constant 0 : index
    %342 = vector.load %arg4[%c0_238, %c0_239, %c0_240] : memref<9x64x64xbf16, #tpu.memory_space<vmem>>, vector<1x64x64xbf16>
    %343 = vector.shape_cast %342 : vector<1x64x64xbf16> to vector<64x64xbf16>
    %cst_241 = arith.constant dense<0.000000e+00> : vector<22x64xf32>
    %344 = tpu.matmul %341, %343, %cst_241 {dimension_numbers = #tpu.dot_dimension_numbers<[1], [0], [0], [1], [0, 0, 1, 1], [], []>} : vector<22x64xbf16>, vector<64x64xbf16>, vector<22x64xf32> -> vector<22x64xf32>
    %c1_242 = arith.constant 1 : index
    %c0_243 = arith.constant 0 : index
    %345 = vector.load %arg12[%c1_242, %c0_243] : memref<32x64xf32, #tpu.memory_space<vmem>>, vector<22x64xf32>
    %346 = arith.truncf %345 : vector<22x64xf32> to vector<22x64xbf16>
    %c1_244 = arith.constant 1 : index
    %c0_245 = arith.constant 0 : index
    %c0_246 = arith.constant 0 : index
    %347 = vector.load %arg4[%c1_244, %c0_245, %c0_246] : memref<9x64x64xbf16, #tpu.memory_space<vmem>>, vector<1x64x64xbf16>
    %348 = vector.shape_cast %347 : vector<1x64x64xbf16> to vector<64x64xbf16>
    %cst_247 = arith.constant dense<0.000000e+00> : vector<22x64xf32>
    %349 = tpu.matmul %346, %348, %cst_247 {dimension_numbers = #tpu.dot_dimension_numbers<[1], [0], [0], [1], [0, 0, 1, 1], [], []>} : vector<22x64xbf16>, vector<64x64xbf16>, vector<22x64xf32> -> vector<22x64xf32>
    %350 = arith.addf %344, %349 : vector<22x64xf32>
    %c2_248 = arith.constant 2 : index
    %c0_249 = arith.constant 0 : index
    %351 = vector.load %arg12[%c2_248, %c0_249] : memref<32x64xf32, #tpu.memory_space<vmem>>, vector<22x64xf32>
    %352 = arith.truncf %351 : vector<22x64xf32> to vector<22x64xbf16>
    %c2_250 = arith.constant 2 : index
    %c0_251 = arith.constant 0 : index
    %c0_252 = arith.constant 0 : index
    %353 = vector.load %arg4[%c2_250, %c0_251, %c0_252] : memref<9x64x64xbf16, #tpu.memory_space<vmem>>, vector<1x64x64xbf16>
    %354 = vector.shape_cast %353 : vector<1x64x64xbf16> to vector<64x64xbf16>
    %cst_253 = arith.constant dense<0.000000e+00> : vector<22x64xf32>
    %355 = tpu.matmul %352, %354, %cst_253 {dimension_numbers = #tpu.dot_dimension_numbers<[1], [0], [0], [1], [0, 0, 1, 1], [], []>} : vector<22x64xbf16>, vector<64x64xbf16>, vector<22x64xf32> -> vector<22x64xf32>
    %356 = arith.addf %350, %355 : vector<22x64xf32>
    %c4_254 = arith.constant 4 : index
    %c0_255 = arith.constant 0 : index
    %357 = vector.load %arg12[%c4_254, %c0_255] : memref<32x64xf32, #tpu.memory_space<vmem>>, vector<22x64xf32>
    %358 = arith.truncf %357 : vector<22x64xf32> to vector<22x64xbf16>
    %c3_256 = arith.constant 3 : index
    %c0_257 = arith.constant 0 : index
    %c0_258 = arith.constant 0 : index
    %359 = vector.load %arg4[%c3_256, %c0_257, %c0_258] : memref<9x64x64xbf16, #tpu.memory_space<vmem>>, vector<1x64x64xbf16>
    %360 = vector.shape_cast %359 : vector<1x64x64xbf16> to vector<64x64xbf16>
    %cst_259 = arith.constant dense<0.000000e+00> : vector<22x64xf32>
    %361 = tpu.matmul %358, %360, %cst_259 {dimension_numbers = #tpu.dot_dimension_numbers<[1], [0], [0], [1], [0, 0, 1, 1], [], []>} : vector<22x64xbf16>, vector<64x64xbf16>, vector<22x64xf32> -> vector<22x64xf32>
    %362 = arith.addf %356, %361 : vector<22x64xf32>
    %c5_260 = arith.constant 5 : index
    %c0_261 = arith.constant 0 : index
    %363 = vector.load %arg12[%c5_260, %c0_261] : memref<32x64xf32, #tpu.memory_space<vmem>>, vector<22x64xf32>
    %364 = arith.truncf %363 : vector<22x64xf32> to vector<22x64xbf16>
    %c4_262 = arith.constant 4 : index
    %c0_263 = arith.constant 0 : index
    %c0_264 = arith.constant 0 : index
    %365 = vector.load %arg4[%c4_262, %c0_263, %c0_264] : memref<9x64x64xbf16, #tpu.memory_space<vmem>>, vector<1x64x64xbf16>
    %366 = vector.shape_cast %365 : vector<1x64x64xbf16> to vector<64x64xbf16>
    %cst_265 = arith.constant dense<0.000000e+00> : vector<22x64xf32>
    %367 = tpu.matmul %364, %366, %cst_265 {dimension_numbers = #tpu.dot_dimension_numbers<[1], [0], [0], [1], [0, 0, 1, 1], [], []>} : vector<22x64xbf16>, vector<64x64xbf16>, vector<22x64xf32> -> vector<22x64xf32>
    %368 = arith.addf %362, %367 : vector<22x64xf32>
    %c6_266 = arith.constant 6 : index
    %c0_267 = arith.constant 0 : index
    %369 = vector.load %arg12[%c6_266, %c0_267] : memref<32x64xf32, #tpu.memory_space<vmem>>, vector<22x64xf32>
    %370 = arith.truncf %369 : vector<22x64xf32> to vector<22x64xbf16>
    %c5_268 = arith.constant 5 : index
    %c0_269 = arith.constant 0 : index
    %c0_270 = arith.constant 0 : index
    %371 = vector.load %arg4[%c5_268, %c0_269, %c0_270] : memref<9x64x64xbf16, #tpu.memory_space<vmem>>, vector<1x64x64xbf16>
    %372 = vector.shape_cast %371 : vector<1x64x64xbf16> to vector<64x64xbf16>
    %cst_271 = arith.constant dense<0.000000e+00> : vector<22x64xf32>
    %373 = tpu.matmul %370, %372, %cst_271 {dimension_numbers = #tpu.dot_dimension_numbers<[1], [0], [0], [1], [0, 0, 1, 1], [], []>} : vector<22x64xbf16>, vector<64x64xbf16>, vector<22x64xf32> -> vector<22x64xf32>
    %374 = arith.addf %368, %373 : vector<22x64xf32>
    %c8_272 = arith.constant 8 : index
    %c0_273 = arith.constant 0 : index
    %375 = vector.load %arg12[%c8_272, %c0_273] : memref<32x64xf32, #tpu.memory_space<vmem>>, vector<22x64xf32>
    %376 = arith.truncf %375 : vector<22x64xf32> to vector<22x64xbf16>
    %c6_274 = arith.constant 6 : index
    %c0_275 = arith.constant 0 : index
    %c0_276 = arith.constant 0 : index
    %377 = vector.load %arg4[%c6_274, %c0_275, %c0_276] : memref<9x64x64xbf16, #tpu.memory_space<vmem>>, vector<1x64x64xbf16>
    %378 = vector.shape_cast %377 : vector<1x64x64xbf16> to vector<64x64xbf16>
    %cst_277 = arith.constant dense<0.000000e+00> : vector<22x64xf32>
    %379 = tpu.matmul %376, %378, %cst_277 {dimension_numbers = #tpu.dot_dimension_numbers<[1], [0], [0], [1], [0, 0, 1, 1], [], []>} : vector<22x64xbf16>, vector<64x64xbf16>, vector<22x64xf32> -> vector<22x64xf32>
    %380 = arith.addf %374, %379 : vector<22x64xf32>
    %c9_278 = arith.constant 9 : index
    %c0_279 = arith.constant 0 : index
    %381 = vector.load %arg12[%c9_278, %c0_279] : memref<32x64xf32, #tpu.memory_space<vmem>>, vector<22x64xf32>
    %382 = arith.truncf %381 : vector<22x64xf32> to vector<22x64xbf16>
    %c7_280 = arith.constant 7 : index
    %c0_281 = arith.constant 0 : index
    %c0_282 = arith.constant 0 : index
    %383 = vector.load %arg4[%c7_280, %c0_281, %c0_282] : memref<9x64x64xbf16, #tpu.memory_space<vmem>>, vector<1x64x64xbf16>
    %384 = vector.shape_cast %383 : vector<1x64x64xbf16> to vector<64x64xbf16>
    %cst_283 = arith.constant dense<0.000000e+00> : vector<22x64xf32>
    %385 = tpu.matmul %382, %384, %cst_283 {dimension_numbers = #tpu.dot_dimension_numbers<[1], [0], [0], [1], [0, 0, 1, 1], [], []>} : vector<22x64xbf16>, vector<64x64xbf16>, vector<22x64xf32> -> vector<22x64xf32>
    %386 = arith.addf %380, %385 : vector<22x64xf32>
    %c10 = arith.constant 10 : index
    %c0_284 = arith.constant 0 : index
    %387 = vector.load %arg12[%c10, %c0_284] : memref<32x64xf32, #tpu.memory_space<vmem>>, vector<22x64xf32>
    %388 = arith.truncf %387 : vector<22x64xf32> to vector<22x64xbf16>
    %c8_285 = arith.constant 8 : index
    %c0_286 = arith.constant 0 : index
    %c0_287 = arith.constant 0 : index
    %389 = vector.load %arg4[%c8_285, %c0_286, %c0_287] : memref<9x64x64xbf16, #tpu.memory_space<vmem>>, vector<1x64x64xbf16>
    %390 = vector.shape_cast %389 : vector<1x64x64xbf16> to vector<64x64xbf16>
    %cst_288 = arith.constant dense<0.000000e+00> : vector<22x64xf32>
    %391 = tpu.matmul %388, %390, %cst_288 {dimension_numbers = #tpu.dot_dimension_numbers<[1], [0], [0], [1], [0, 0, 1, 1], [], []>} : vector<22x64xbf16>, vector<64x64xbf16>, vector<22x64xf32> -> vector<22x64xf32>
    %392 = arith.addf %386, %391 : vector<22x64xf32>
    %c0_289 = arith.constant 0 : index
    %c0_290 = arith.constant 0 : index
    %393 = vector.load %arg13[%c0_289, %c0_290] : memref<22x64xf32, #tpu.memory_space<vmem>>, vector<22x64xf32>
    tpu.vector_store %arg13[%c0_289, %c0_290], %392 {strides = array<i32>} : memref<22x64xf32, #tpu.memory_space<vmem>>, vector<22x64xf32>,
    %cst_291 = arith.constant 0.000000e+00 : f32
    %394 = vector.broadcast %cst_291 : f32 to vector<1x64xf32>
    %cst_292 = arith.constant 0.000000e+00 : f32
    %395 = vector.broadcast %cst_292 : f32 to vector<1x64xf32>
    %c0_293 = arith.constant 0 : index
    %c0_294 = arith.constant 0 : index
    %396 = vector.load %arg13[%c0_293, %c0_294] : memref<22x64xf32, #tpu.memory_space<vmem>>, vector<2x64xf32>
    %cst_295 = arith.constant dense<0.000000e+00> : vector<64xf32>
    %397 = vector.multi_reduction <add>, %396, %cst_295 [0] : vector<2x64xf32> to vector<64xf32>
    %398 = vector.shape_cast %397 : vector<64xf32> to vector<1x64xf32>
    %399 = arith.addf %394, %398 : vector<1x64xf32>
    %400 = arith.mulf %396, %396 : vector<2x64xf32>
    %cst_296 = arith.constant dense<0.000000e+00> : vector<64xf32>
    %401 = vector.multi_reduction <add>, %400, %cst_296 [0] : vector<2x64xf32> to vector<64xf32>
    %402 = vector.shape_cast %401 : vector<64xf32> to vector<1x64xf32>
    %403 = arith.addf %395, %402 : vector<1x64xf32>
    %c4_297 = arith.constant 4 : index
    %c0_298 = arith.constant 0 : index
    %404 = vector.load %arg13[%c4_297, %c0_298] : memref<22x64xf32, #tpu.memory_space<vmem>>, vector<2x64xf32>
    %cst_299 = arith.constant dense<0.000000e+00> : vector<64xf32>
    %405 = vector.multi_reduction <add>, %404, %cst_299 [0] : vector<2x64xf32> to vector<64xf32>
    %406 = vector.shape_cast %405 : vector<64xf32> to vector<1x64xf32>
    %407 = arith.addf %399, %406 : vector<1x64xf32>
    %408 = arith.mulf %404, %404 : vector<2x64xf32>
    %cst_300 = arith.constant dense<0.000000e+00> : vector<64xf32>
    %409 = vector.multi_reduction <add>, %408, %cst_300 [0] : vector<2x64xf32> to vector<64xf32>
    %410 = vector.shape_cast %409 : vector<64xf32> to vector<1x64xf32>
    %411 = arith.addf %403, %410 : vector<1x64xf32>
    %c16_301 = arith.constant 16 : index
    %c0_302 = arith.constant 0 : index
    %412 = vector.load %arg13[%c16_301, %c0_302] : memref<22x64xf32, #tpu.memory_space<vmem>>, vector<2x64xf32>
    %cst_303 = arith.constant dense<0.000000e+00> : vector<64xf32>
    %413 = vector.multi_reduction <add>, %412, %cst_303 [0] : vector<2x64xf32> to vector<64xf32>
    %414 = vector.shape_cast %413 : vector<64xf32> to vector<1x64xf32>
    %415 = arith.addf %407, %414 : vector<1x64xf32>
    %416 = arith.mulf %412, %412 : vector<2x64xf32>
    %cst_304 = arith.constant dense<0.000000e+00> : vector<64xf32>
    %417 = vector.multi_reduction <add>, %416, %cst_304 [0] : vector<2x64xf32> to vector<64xf32>
    %418 = vector.shape_cast %417 : vector<64xf32> to vector<1x64xf32>
    %419 = arith.addf %411, %418 : vector<1x64xf32>
    %c20 = arith.constant 20 : index
    %c0_305 = arith.constant 0 : index
    %420 = vector.load %arg13[%c20, %c0_305] : memref<22x64xf32, #tpu.memory_space<vmem>>, vector<2x64xf32>
    %cst_306 = arith.constant dense<0.000000e+00> : vector<64xf32>
    %421 = vector.multi_reduction <add>, %420, %cst_306 [0] : vector<2x64xf32> to vector<64xf32>
    %422 = vector.shape_cast %421 : vector<64xf32> to vector<1x64xf32>
    %423 = arith.addf %415, %422 : vector<1x64xf32>
    %424 = arith.mulf %420, %420 : vector<2x64xf32>
    %cst_307 = arith.constant dense<0.000000e+00> : vector<64xf32>
    %425 = vector.multi_reduction <add>, %424, %cst_307 [0] : vector<2x64xf32> to vector<64xf32>
    %426 = vector.shape_cast %425 : vector<64xf32> to vector<1x64xf32>
    %427 = arith.addf %419, %426 : vector<1x64xf32>
    %cst_308 = arith.constant 1.250000e-01 : f32
    %428 = vector.broadcast %cst_308 : f32 to vector<1x64xf32>
    %429 = arith.mulf %423, %428 : vector<1x64xf32>
    %cst_309 = arith.constant 1.250000e-01 : f32
    %430 = vector.broadcast %cst_309 : f32 to vector<1x64xf32>
    %431 = arith.mulf %427, %430 : vector<1x64xf32>
    %432 = arith.mulf %429, %429 : vector<1x64xf32>
    %433 = arith.subf %431, %432 : vector<1x64xf32>
    %cst_310 = arith.constant 0.000000e+00 : f32
    %434 = vector.broadcast %cst_310 : f32 to vector<1x64xf32>
    %435 = arith.maximumf %433, %434 : vector<1x64xf32>
    %c2_311 = arith.constant 2 : index
    %c0_312 = arith.constant 0 : index
    %436 = vector.load %arg6[%c2_311, %c0_312] : memref<4x64xf32, #tpu.memory_space<vmem>>, vector<1x64xf32>
    %cst_313 = arith.constant 9.99999974E-6 : f32
    %437 = vector.broadcast %cst_313 : f32 to vector<1x64xf32>
    %438 = arith.addf %435, %437 : vector<1x64xf32>
    %439 = math.rsqrt %438 : vector<1x64xf32>
    %440 = arith.mulf %436, %439 : vector<1x64xf32>
    %c2_314 = arith.constant 2 : index
    %c0_315 = arith.constant 0 : index
    %441 = vector.load %arg7[%c2_314, %c0_315] : memref<4x64xf32, #tpu.memory_space<vmem>>, vector<1x64xf32>
    %442 = arith.mulf %429, %440 : vector<1x64xf32>
    %443 = arith.subf %441, %442 : vector<1x64xf32>
    %c0_316 = arith.constant 0 : index
    %c0_317 = arith.constant 0 : index
    %444 = vector.load %arg13[%c0_316, %c0_317] : memref<22x64xf32, #tpu.memory_space<vmem>>, vector<22x64xf32>
    %445 = vector.broadcast %440 : vector<1x64xf32> to vector<22x64xf32>
    %446 = arith.mulf %444, %445 : vector<22x64xf32>
    %447 = vector.broadcast %443 : vector<1x64xf32> to vector<22x64xf32>
    %448 = arith.addf %446, %447 : vector<22x64xf32>
    %cst_318 = arith.constant 0.000000e+00 : f32
    %449 = vector.broadcast %cst_318 : f32 to vector<22x64xf32>
    %450 = arith.maximumf %448, %449 : vector<22x64xf32>
    %c0_319 = arith.constant 0 : index
    %c0_320 = arith.constant 0 : index
    %451 = vector.load %arg13[%c0_319, %c0_320] : memref<22x64xf32, #tpu.memory_space<vmem>>, vector<22x64xf32>
    tpu.vector_store %arg13[%c0_319, %c0_320], %450 {strides = array<i32>} : memref<22x64xf32, #tpu.memory_space<vmem>>, vector<22x64xf32>,
    %cst_321 = arith.constant 0.000000e+00 : f32
    %452 = vector.broadcast %cst_321 : f32 to vector<32x64xf32>
    %c0_322 = arith.constant 0 : index
    %c0_323 = arith.constant 0 : index
    %453 = vector.load %arg14[%c0_322, %c0_323] : memref<32x64xf32, #tpu.memory_space<vmem>>, vector<32x64xf32>
    tpu.vector_store %arg14[%c0_322, %c0_323], %452 {strides = array<i32>} : memref<32x64xf32, #tpu.memory_space<vmem>>, vector<32x64xf32>,
    %c0_324 = arith.constant 0 : index
    %c0_325 = arith.constant 0 : index
    %454 = vector.load %arg13[%c0_324, %c0_325] : memref<22x64xf32, #tpu.memory_space<vmem>>, vector<2x64xf32>
    %c5_326 = arith.constant 5 : index
    %c0_327 = arith.constant 0 : index
    %455 = vector.load %arg14[%c5_326, %c0_327] : memref<32x64xf32, #tpu.memory_space<vmem>>, vector<2x64xf32>
    tpu.vector_store %arg14[%c5_326, %c0_327], %454 {strides = array<i32>} : memref<32x64xf32, #tpu.memory_space<vmem>>, vector<2x64xf32>,
    %c4_328 = arith.constant 4 : index
    %c0_329 = arith.constant 0 : index
    %456 = vector.load %arg13[%c4_328, %c0_329] : memref<22x64xf32, #tpu.memory_space<vmem>>, vector<2x64xf32>
    %c9_330 = arith.constant 9 : index
    %c0_331 = arith.constant 0 : index
    %457 = vector.load %arg14[%c9_330, %c0_331] : memref<32x64xf32, #tpu.memory_space<vmem>>, vector<2x64xf32>
    tpu.vector_store %arg14[%c9_330, %c0_331], %456 {strides = array<i32>} : memref<32x64xf32, #tpu.memory_space<vmem>>, vector<2x64xf32>,
    %c16_332 = arith.constant 16 : index
    %c0_333 = arith.constant 0 : index
    %458 = vector.load %arg13[%c16_332, %c0_333] : memref<22x64xf32, #tpu.memory_space<vmem>>, vector<2x64xf32>
    %c21_334 = arith.constant 21 : index
    %c0_335 = arith.constant 0 : index
    %459 = vector.load %arg14[%c21_334, %c0_335] : memref<32x64xf32, #tpu.memory_space<vmem>>, vector<2x64xf32>
    tpu.vector_store %arg14[%c21_334, %c0_335], %458 {strides = array<i32>} : memref<32x64xf32, #tpu.memory_space<vmem>>, vector<2x64xf32>,
    %c20_336 = arith.constant 20 : index
    %c0_337 = arith.constant 0 : index
    %460 = vector.load %arg13[%c20_336, %c0_337] : memref<22x64xf32, #tpu.memory_space<vmem>>, vector<2x64xf32>
    %c25_338 = arith.constant 25 : index
    %c0_339 = arith.constant 0 : index
    %461 = vector.load %arg14[%c25_338, %c0_339] : memref<32x64xf32, #tpu.memory_space<vmem>>, vector<2x64xf32>
    tpu.vector_store %arg14[%c25_338, %c0_339], %460 {strides = array<i32>} : memref<32x64xf32, #tpu.memory_space<vmem>>, vector<2x64xf32>,
    %c0_340 = arith.constant 0 : index
    %c0_341 = arith.constant 0 : index
    %462 = vector.load %arg14[%c0_340, %c0_341] : memref<32x64xf32, #tpu.memory_space<vmem>>, vector<22x64xf32>
    %463 = arith.truncf %462 : vector<22x64xf32> to vector<22x64xbf16>
    %c0_342 = arith.constant 0 : index
    %c0_343 = arith.constant 0 : index
    %c0_344 = arith.constant 0 : index
    %464 = vector.load %arg5[%c0_342, %c0_343, %c0_344] : memref<9x64x64xbf16, #tpu.memory_space<vmem>>, vector<1x64x64xbf16>
    %465 = vector.shape_cast %464 : vector<1x64x64xbf16> to vector<64x64xbf16>
    %cst_345 = arith.constant dense<0.000000e+00> : vector<22x64xf32>
    %466 = tpu.matmul %463, %465, %cst_345 {dimension_numbers = #tpu.dot_dimension_numbers<[1], [0], [0], [1], [0, 0, 1, 1], [], []>} : vector<22x64xbf16>, vector<64x64xbf16>, vector<22x64xf32> -> vector<22x64xf32>
    %c1_346 = arith.constant 1 : index
    %c0_347 = arith.constant 0 : index
    %467 = vector.load %arg14[%c1_346, %c0_347] : memref<32x64xf32, #tpu.memory_space<vmem>>, vector<22x64xf32>
    %468 = arith.truncf %467 : vector<22x64xf32> to vector<22x64xbf16>
    %c1_348 = arith.constant 1 : index
    %c0_349 = arith.constant 0 : index
    %c0_350 = arith.constant 0 : index
    %469 = vector.load %arg5[%c1_348, %c0_349, %c0_350] : memref<9x64x64xbf16, #tpu.memory_space<vmem>>, vector<1x64x64xbf16>
    %470 = vector.shape_cast %469 : vector<1x64x64xbf16> to vector<64x64xbf16>
    %cst_351 = arith.constant dense<0.000000e+00> : vector<22x64xf32>
    %471 = tpu.matmul %468, %470, %cst_351 {dimension_numbers = #tpu.dot_dimension_numbers<[1], [0], [0], [1], [0, 0, 1, 1], [], []>} : vector<22x64xbf16>, vector<64x64xbf16>, vector<22x64xf32> -> vector<22x64xf32>
    %472 = arith.addf %466, %471 : vector<22x64xf32>
    %c2_352 = arith.constant 2 : index
    %c0_353 = arith.constant 0 : index
    %473 = vector.load %arg14[%c2_352, %c0_353] : memref<32x64xf32, #tpu.memory_space<vmem>>, vector<22x64xf32>
    %474 = arith.truncf %473 : vector<22x64xf32> to vector<22x64xbf16>
    %c2_354 = arith.constant 2 : index
    %c0_355 = arith.constant 0 : index
    %c0_356 = arith.constant 0 : index
    %475 = vector.load %arg5[%c2_354, %c0_355, %c0_356] : memref<9x64x64xbf16, #tpu.memory_space<vmem>>, vector<1x64x64xbf16>
    %476 = vector.shape_cast %475 : vector<1x64x64xbf16> to vector<64x64xbf16>
    %cst_357 = arith.constant dense<0.000000e+00> : vector<22x64xf32>
    %477 = tpu.matmul %474, %476, %cst_357 {dimension_numbers = #tpu.dot_dimension_numbers<[1], [0], [0], [1], [0, 0, 1, 1], [], []>} : vector<22x64xbf16>, vector<64x64xbf16>, vector<22x64xf32> -> vector<22x64xf32>
    %478 = arith.addf %472, %477 : vector<22x64xf32>
    %c4_358 = arith.constant 4 : index
    %c0_359 = arith.constant 0 : index
    %479 = vector.load %arg14[%c4_358, %c0_359] : memref<32x64xf32, #tpu.memory_space<vmem>>, vector<22x64xf32>
    %480 = arith.truncf %479 : vector<22x64xf32> to vector<22x64xbf16>
    %c3_360 = arith.constant 3 : index
    %c0_361 = arith.constant 0 : index
    %c0_362 = arith.constant 0 : index
    %481 = vector.load %arg5[%c3_360, %c0_361, %c0_362] : memref<9x64x64xbf16, #tpu.memory_space<vmem>>, vector<1x64x64xbf16>
    %482 = vector.shape_cast %481 : vector<1x64x64xbf16> to vector<64x64xbf16>
    %cst_363 = arith.constant dense<0.000000e+00> : vector<22x64xf32>
    %483 = tpu.matmul %480, %482, %cst_363 {dimension_numbers = #tpu.dot_dimension_numbers<[1], [0], [0], [1], [0, 0, 1, 1], [], []>} : vector<22x64xbf16>, vector<64x64xbf16>, vector<22x64xf32> -> vector<22x64xf32>
    %484 = arith.addf %478, %483 : vector<22x64xf32>
    %c5_364 = arith.constant 5 : index
    %c0_365 = arith.constant 0 : index
    %485 = vector.load %arg14[%c5_364, %c0_365] : memref<32x64xf32, #tpu.memory_space<vmem>>, vector<22x64xf32>
    %486 = arith.truncf %485 : vector<22x64xf32> to vector<22x64xbf16>
    %c4_366 = arith.constant 4 : index
    %c0_367 = arith.constant 0 : index
    %c0_368 = arith.constant 0 : index
    %487 = vector.load %arg5[%c4_366, %c0_367, %c0_368] : memref<9x64x64xbf16, #tpu.memory_space<vmem>>, vector<1x64x64xbf16>
    %488 = vector.shape_cast %487 : vector<1x64x64xbf16> to vector<64x64xbf16>
    %cst_369 = arith.constant dense<0.000000e+00> : vector<22x64xf32>
    %489 = tpu.matmul %486, %488, %cst_369 {dimension_numbers = #tpu.dot_dimension_numbers<[1], [0], [0], [1], [0, 0, 1, 1], [], []>} : vector<22x64xbf16>, vector<64x64xbf16>, vector<22x64xf32> -> vector<22x64xf32>
    %490 = arith.addf %484, %489 : vector<22x64xf32>
    %c6_370 = arith.constant 6 : index
    %c0_371 = arith.constant 0 : index
    %491 = vector.load %arg14[%c6_370, %c0_371] : memref<32x64xf32, #tpu.memory_space<vmem>>, vector<22x64xf32>
    %492 = arith.truncf %491 : vector<22x64xf32> to vector<22x64xbf16>
    %c5_372 = arith.constant 5 : index
    %c0_373 = arith.constant 0 : index
    %c0_374 = arith.constant 0 : index
    %493 = vector.load %arg5[%c5_372, %c0_373, %c0_374] : memref<9x64x64xbf16, #tpu.memory_space<vmem>>, vector<1x64x64xbf16>
    %494 = vector.shape_cast %493 : vector<1x64x64xbf16> to vector<64x64xbf16>
    %cst_375 = arith.constant dense<0.000000e+00> : vector<22x64xf32>
    %495 = tpu.matmul %492, %494, %cst_375 {dimension_numbers = #tpu.dot_dimension_numbers<[1], [0], [0], [1], [0, 0, 1, 1], [], []>} : vector<22x64xbf16>, vector<64x64xbf16>, vector<22x64xf32> -> vector<22x64xf32>
    %496 = arith.addf %490, %495 : vector<22x64xf32>
    %c8_376 = arith.constant 8 : index
    %c0_377 = arith.constant 0 : index
    %497 = vector.load %arg14[%c8_376, %c0_377] : memref<32x64xf32, #tpu.memory_space<vmem>>, vector<22x64xf32>
    %498 = arith.truncf %497 : vector<22x64xf32> to vector<22x64xbf16>
    %c6_378 = arith.constant 6 : index
    %c0_379 = arith.constant 0 : index
    %c0_380 = arith.constant 0 : index
    %499 = vector.load %arg5[%c6_378, %c0_379, %c0_380] : memref<9x64x64xbf16, #tpu.memory_space<vmem>>, vector<1x64x64xbf16>
    %500 = vector.shape_cast %499 : vector<1x64x64xbf16> to vector<64x64xbf16>
    %cst_381 = arith.constant dense<0.000000e+00> : vector<22x64xf32>
    %501 = tpu.matmul %498, %500, %cst_381 {dimension_numbers = #tpu.dot_dimension_numbers<[1], [0], [0], [1], [0, 0, 1, 1], [], []>} : vector<22x64xbf16>, vector<64x64xbf16>, vector<22x64xf32> -> vector<22x64xf32>
    %502 = arith.addf %496, %501 : vector<22x64xf32>
    %c9_382 = arith.constant 9 : index
    %c0_383 = arith.constant 0 : index
    %503 = vector.load %arg14[%c9_382, %c0_383] : memref<32x64xf32, #tpu.memory_space<vmem>>, vector<22x64xf32>
    %504 = arith.truncf %503 : vector<22x64xf32> to vector<22x64xbf16>
    %c7_384 = arith.constant 7 : index
    %c0_385 = arith.constant 0 : index
    %c0_386 = arith.constant 0 : index
    %505 = vector.load %arg5[%c7_384, %c0_385, %c0_386] : memref<9x64x64xbf16, #tpu.memory_space<vmem>>, vector<1x64x64xbf16>
    %506 = vector.shape_cast %505 : vector<1x64x64xbf16> to vector<64x64xbf16>
    %cst_387 = arith.constant dense<0.000000e+00> : vector<22x64xf32>
    %507 = tpu.matmul %504, %506, %cst_387 {dimension_numbers = #tpu.dot_dimension_numbers<[1], [0], [0], [1], [0, 0, 1, 1], [], []>} : vector<22x64xbf16>, vector<64x64xbf16>, vector<22x64xf32> -> vector<22x64xf32>
    %508 = arith.addf %502, %507 : vector<22x64xf32>
    %c10_388 = arith.constant 10 : index
    %c0_389 = arith.constant 0 : index
    %509 = vector.load %arg14[%c10_388, %c0_389] : memref<32x64xf32, #tpu.memory_space<vmem>>, vector<22x64xf32>
    %510 = arith.truncf %509 : vector<22x64xf32> to vector<22x64xbf16>
    %c8_390 = arith.constant 8 : index
    %c0_391 = arith.constant 0 : index
    %c0_392 = arith.constant 0 : index
    %511 = vector.load %arg5[%c8_390, %c0_391, %c0_392] : memref<9x64x64xbf16, #tpu.memory_space<vmem>>, vector<1x64x64xbf16>
    %512 = vector.shape_cast %511 : vector<1x64x64xbf16> to vector<64x64xbf16>
    %cst_393 = arith.constant dense<0.000000e+00> : vector<22x64xf32>
    %513 = tpu.matmul %510, %512, %cst_393 {dimension_numbers = #tpu.dot_dimension_numbers<[1], [0], [0], [1], [0, 0, 1, 1], [], []>} : vector<22x64xbf16>, vector<64x64xbf16>, vector<22x64xf32> -> vector<22x64xf32>
    %514 = arith.addf %508, %513 : vector<22x64xf32>
    %c0_394 = arith.constant 0 : index
    %c0_395 = arith.constant 0 : index
    %515 = vector.load %arg15[%c0_394, %c0_395] : memref<22x64xf32, #tpu.memory_space<vmem>>, vector<22x64xf32>
    tpu.vector_store %arg15[%c0_394, %c0_395], %514 {strides = array<i32>} : memref<22x64xf32, #tpu.memory_space<vmem>>, vector<22x64xf32>,
    %cst_396 = arith.constant 0.000000e+00 : f32
    %516 = vector.broadcast %cst_396 : f32 to vector<1x64xf32>
    %cst_397 = arith.constant 0.000000e+00 : f32
    %517 = vector.broadcast %cst_397 : f32 to vector<1x64xf32>
    %c0_398 = arith.constant 0 : index
    %c0_399 = arith.constant 0 : index
    %518 = vector.load %arg15[%c0_398, %c0_399] : memref<22x64xf32, #tpu.memory_space<vmem>>, vector<2x64xf32>
    %cst_400 = arith.constant dense<0.000000e+00> : vector<64xf32>
    %519 = vector.multi_reduction <add>, %518, %cst_400 [0] : vector<2x64xf32> to vector<64xf32>
    %520 = vector.shape_cast %519 : vector<64xf32> to vector<1x64xf32>
    %521 = arith.addf %516, %520 : vector<1x64xf32>
    %522 = arith.mulf %518, %518 : vector<2x64xf32>
    %cst_401 = arith.constant dense<0.000000e+00> : vector<64xf32>
    %523 = vector.multi_reduction <add>, %522, %cst_401 [0] : vector<2x64xf32> to vector<64xf32>
    %524 = vector.shape_cast %523 : vector<64xf32> to vector<1x64xf32>
    %525 = arith.addf %517, %524 : vector<1x64xf32>
    %c4_402 = arith.constant 4 : index
    %c0_403 = arith.constant 0 : index
    %526 = vector.load %arg15[%c4_402, %c0_403] : memref<22x64xf32, #tpu.memory_space<vmem>>, vector<2x64xf32>
    %cst_404 = arith.constant dense<0.000000e+00> : vector<64xf32>
    %527 = vector.multi_reduction <add>, %526, %cst_404 [0] : vector<2x64xf32> to vector<64xf32>
    %528 = vector.shape_cast %527 : vector<64xf32> to vector<1x64xf32>
    %529 = arith.addf %521, %528 : vector<1x64xf32>
    %530 = arith.mulf %526, %526 : vector<2x64xf32>
    %cst_405 = arith.constant dense<0.000000e+00> : vector<64xf32>
    %531 = vector.multi_reduction <add>, %530, %cst_405 [0] : vector<2x64xf32> to vector<64xf32>
    %532 = vector.shape_cast %531 : vector<64xf32> to vector<1x64xf32>
    %533 = arith.addf %525, %532 : vector<1x64xf32>
    %c16_406 = arith.constant 16 : index
    %c0_407 = arith.constant 0 : index
    %534 = vector.load %arg15[%c16_406, %c0_407] : memref<22x64xf32, #tpu.memory_space<vmem>>, vector<2x64xf32>
    %cst_408 = arith.constant dense<0.000000e+00> : vector<64xf32>
    %535 = vector.multi_reduction <add>, %534, %cst_408 [0] : vector<2x64xf32> to vector<64xf32>
    %536 = vector.shape_cast %535 : vector<64xf32> to vector<1x64xf32>
    %537 = arith.addf %529, %536 : vector<1x64xf32>
    %538 = arith.mulf %534, %534 : vector<2x64xf32>
    %cst_409 = arith.constant dense<0.000000e+00> : vector<64xf32>
    %539 = vector.multi_reduction <add>, %538, %cst_409 [0] : vector<2x64xf32> to vector<64xf32>
    %540 = vector.shape_cast %539 : vector<64xf32> to vector<1x64xf32>
    %541 = arith.addf %533, %540 : vector<1x64xf32>
    %c20_410 = arith.constant 20 : index
    %c0_411 = arith.constant 0 : index
    %542 = vector.load %arg15[%c20_410, %c0_411] : memref<22x64xf32, #tpu.memory_space<vmem>>, vector<2x64xf32>
    %cst_412 = arith.constant dense<0.000000e+00> : vector<64xf32>
    %543 = vector.multi_reduction <add>, %542, %cst_412 [0] : vector<2x64xf32> to vector<64xf32>
    %544 = vector.shape_cast %543 : vector<64xf32> to vector<1x64xf32>
    %545 = arith.addf %537, %544 : vector<1x64xf32>
    %546 = arith.mulf %542, %542 : vector<2x64xf32>
    %cst_413 = arith.constant dense<0.000000e+00> : vector<64xf32>
    %547 = vector.multi_reduction <add>, %546, %cst_413 [0] : vector<2x64xf32> to vector<64xf32>
    %548 = vector.shape_cast %547 : vector<64xf32> to vector<1x64xf32>
    %549 = arith.addf %541, %548 : vector<1x64xf32>
    %cst_414 = arith.constant 1.250000e-01 : f32
    %550 = vector.broadcast %cst_414 : f32 to vector<1x64xf32>
    %551 = arith.mulf %545, %550 : vector<1x64xf32>
    %cst_415 = arith.constant 1.250000e-01 : f32
    %552 = vector.broadcast %cst_415 : f32 to vector<1x64xf32>
    %553 = arith.mulf %549, %552 : vector<1x64xf32>
    %554 = arith.mulf %551, %551 : vector<1x64xf32>
    %555 = arith.subf %553, %554 : vector<1x64xf32>
    %cst_416 = arith.constant 0.000000e+00 : f32
    %556 = vector.broadcast %cst_416 : f32 to vector<1x64xf32>
    %557 = arith.maximumf %555, %556 : vector<1x64xf32>
    %c3_417 = arith.constant 3 : index
    %c0_418 = arith.constant 0 : index
    %558 = vector.load %arg6[%c3_417, %c0_418] : memref<4x64xf32, #tpu.memory_space<vmem>>, vector<1x64xf32>
    %cst_419 = arith.constant 9.99999974E-6 : f32
    %559 = vector.broadcast %cst_419 : f32 to vector<1x64xf32>
    %560 = arith.addf %557, %559 : vector<1x64xf32>
    %561 = math.rsqrt %560 : vector<1x64xf32>
    %562 = arith.mulf %558, %561 : vector<1x64xf32>
    %c3_420 = arith.constant 3 : index
    %c0_421 = arith.constant 0 : index
    %563 = vector.load %arg7[%c3_420, %c0_421] : memref<4x64xf32, #tpu.memory_space<vmem>>, vector<1x64xf32>
    %564 = arith.mulf %551, %562 : vector<1x64xf32>
    %565 = arith.subf %563, %564 : vector<1x64xf32>
    %c0_422 = arith.constant 0 : index
    %c0_423 = arith.constant 0 : index
    %566 = vector.load %arg15[%c0_422, %c0_423] : memref<22x64xf32, #tpu.memory_space<vmem>>, vector<22x64xf32>
    %567 = vector.broadcast %562 : vector<1x64xf32> to vector<22x64xf32>
    %568 = arith.mulf %566, %567 : vector<22x64xf32>
    %569 = vector.broadcast %565 : vector<1x64xf32> to vector<22x64xf32>
    %570 = arith.addf %568, %569 : vector<22x64xf32>
    %cst_424 = arith.constant 0.000000e+00 : f32
    %571 = vector.broadcast %cst_424 : f32 to vector<22x64xf32>
    %572 = arith.maximumf %570, %571 : vector<22x64xf32>
    %c0_425 = arith.constant 0 : index
    %c0_426 = arith.constant 0 : index
    %573 = vector.load %arg15[%c0_425, %c0_426] : memref<22x64xf32, #tpu.memory_space<vmem>>, vector<22x64xf32>
    tpu.vector_store %arg15[%c0_425, %c0_426], %572 {strides = array<i32>} : memref<22x64xf32, #tpu.memory_space<vmem>>, vector<22x64xf32>,
    %c0_427 = arith.constant 0 : index
    %c0_428 = arith.constant 0 : index
    %574 = vector.load %arg15[%c0_427, %c0_428] : memref<22x64xf32, #tpu.memory_space<vmem>>, vector<2x64xf32>
    %c0_429 = arith.constant 0 : index
    %c0_430 = arith.constant 0 : index
    %575 = vector.load %arg8[%c0_429, %c0_430] : memref<8x64xf32, #tpu.memory_space<vmem>>, vector<2x64xf32>
    tpu.vector_store %arg8[%c0_429, %c0_430], %574 {strides = array<i32>} : memref<8x64xf32, #tpu.memory_space<vmem>>, vector<2x64xf32>,
    %c4_431 = arith.constant 4 : index
    %c0_432 = arith.constant 0 : index
    %576 = vector.load %arg15[%c4_431, %c0_432] : memref<22x64xf32, #tpu.memory_space<vmem>>, vector<2x64xf32>
    %c2_433 = arith.constant 2 : index
    %c0_434 = arith.constant 0 : index
    %577 = vector.load %arg8[%c2_433, %c0_434] : memref<8x64xf32, #tpu.memory_space<vmem>>, vector<2x64xf32>
    tpu.vector_store %arg8[%c2_433, %c0_434], %576 {strides = array<i32>} : memref<8x64xf32, #tpu.memory_space<vmem>>, vector<2x64xf32>,
    %c16_435 = arith.constant 16 : index
    %c0_436 = arith.constant 0 : index
    %578 = vector.load %arg15[%c16_435, %c0_436] : memref<22x64xf32, #tpu.memory_space<vmem>>, vector<2x64xf32>
    %c4_437 = arith.constant 4 : index
    %c0_438 = arith.constant 0 : index
    %579 = vector.load %arg8[%c4_437, %c0_438] : memref<8x64xf32, #tpu.memory_space<vmem>>, vector<2x64xf32>
    tpu.vector_store %arg8[%c4_437, %c0_438], %578 {strides = array<i32>} : memref<8x64xf32, #tpu.memory_space<vmem>>, vector<2x64xf32>,
    %c20_439 = arith.constant 20 : index
    %c0_440 = arith.constant 0 : index
    %580 = vector.load %arg15[%c20_439, %c0_440] : memref<22x64xf32, #tpu.memory_space<vmem>>, vector<2x64xf32>
    %c6_441 = arith.constant 6 : index
    %c0_442 = arith.constant 0 : index
    %581 = vector.load %arg8[%c6_441, %c0_442] : memref<8x64xf32, #tpu.memory_space<vmem>>, vector<2x64xf32>
    tpu.vector_store %arg8[%c6_441, %c0_442], %580 {strides = array<i32>} : memref<8x64xf32, #tpu.memory_space<vmem>>, vector<2x64xf32>,
    return
  }
  func.func @transform_0(%arg0: i32) -> (i32, i32) {
    %c0_i32 = arith.constant 0 : i32
    %c0_i32_0 = arith.constant 0 : i32
    %c0_i32_1 = arith.constant 0 : i32
    return %c0_i32, %c0_i32_0 : i32, i32
  }
  func.func @transform_1(%arg0: i32) -> (i32, i32) {
    %c0_i32 = arith.constant 0 : i32
    %c0_i32_0 = arith.constant 0 : i32
    %c0_i32_1 = arith.constant 0 : i32
    return %c0_i32, %c0_i32_0 : i32, i32
  }
  func.func @transform_2(%arg0: i32) -> (i32, i32, i32) {
    %c0_i32 = arith.constant 0 : i32
    %c0_i32_0 = arith.constant 0 : i32
    %c0_i32_1 = arith.constant 0 : i32
    %c0_i32_2 = arith.constant 0 : i32
    return %c0_i32, %c0_i32_0, %c0_i32_1 : i32, i32, i32
  }
  func.func @transform_3(%arg0: i32) -> (i32, i32, i32) {
    %c0_i32 = arith.constant 0 : i32
    %c0_i32_0 = arith.constant 0 : i32
    %c0_i32_1 = arith.constant 0 : i32
    %c0_i32_2 = arith.constant 0 : i32
    return %c0_i32, %c0_i32_0, %c0_i32_1 : i32, i32, i32
  }
  func.func @transform_4(%arg0: i32) -> (i32, i32, i32) {
    %c0_i32 = arith.constant 0 : i32
    %c0_i32_0 = arith.constant 0 : i32
    %c0_i32_1 = arith.constant 0 : i32
    %c0_i32_2 = arith.constant 0 : i32
    return %c0_i32, %c0_i32_0, %c0_i32_1 : i32, i32, i32
  }
  func.func @transform_5(%arg0: i32) -> (i32, i32) {
    %c0_i32 = arith.constant 0 : i32
    %c0_i32_0 = arith.constant 0 : i32
    %c0_i32_1 = arith.constant 0 : i32
    return %c0_i32, %c0_i32_0 : i32, i32
  }
  func.func @transform_6(%arg0: i32) -> (i32, i32) {
    %c0_i32 = arith.constant 0 : i32
    %c0_i32_0 = arith.constant 0 : i32
    %c0_i32_1 = arith.constant 0 : i32
    return %c0_i32, %c0_i32_0 : i32, i32
  }
  func.func @transform_7(%arg0: i32) -> (i32, i32) {
    %c0_i32 = arith.constant 0 : i32
    %c0_i32_0 = arith.constant 0 : i32
    %c0_i32_1 = arith.constant 0 : i32
    return %c0_i32, %c0_i32_0 : i32, i32
  }
}

</mosaic_0001>

<llo_original>
// kernel: cnn_encoder.1
$region0: #{cnn_encoder.1}
  #allocation0 [shape = 'u32[]', space=smem, size = 0x4, offset = 0x4, fixed_abs, tag = 'smem constant byte address 0x4 - core index']
  #allocation1 [shape = 'u32[144,128]{1,0:T(1,128)}', space=vmem, size = 0x12000, scoped, tag = 'internal scratch']
  #allocation2 [shape = 'f32[478,64]{1,0:T(8,128)}', space=vmem, size = 0x3c000, scoped, tag = 'scratch operand']
  #allocation3 [shape = 'f32[98,64]{1,0:T(8,128)}', space=vmem, size = 0xd000, scoped, tag = 'scratch operand']
  #allocation4 [shape = 'f32[82,64]{1,0:T(8,128)}', space=vmem, size = 0xb000, scoped, tag = 'scratch operand']
  #allocation5 [shape = 'f32[32,64]{1,0:T(8,128)}', space=vmem, size = 0x4000, scoped, tag = 'scratch operand']
  #allocation6 [shape = 'f32[22,64]{1,0:T(8,128)}', space=vmem, size = 0x3000, scoped, tag = 'scratch operand']
  #allocation7 [shape = 'f32[32,64]{1,0:T(8,128)}', space=vmem, size = 0x4000, scoped, tag = 'scratch operand']
  #allocation8 [shape = 'f32[22,64]{1,0:T(8,128)}', space=vmem, size = 0x3000, scoped, tag = 'scratch operand']
  %s0 = inlined_call_operand.vmem [shape: bf16[478,32], index: 0, kind: input, shape index: {}]
  %s1 = inlined_call_operand.vmem [shape: bf16[32,64], index: 1, kind: input, shape index: {}]
  %s2 = inlined_call_operand.vmem [shape: bf16[9,64,64], index: 2, kind: input, shape index: {}]
  %s3 = inlined_call_operand.vmem [shape: bf16[9,64,64], index: 3, kind: input, shape index: {}]
  %s4 = inlined_call_operand.vmem [shape: bf16[9,64,64], index: 4, kind: input, shape index: {}]
  %s5 = inlined_call_operand.vmem [shape: f32[4,64], index: 5, kind: input, shape index: {}]
  %s6 = inlined_call_operand.vmem [shape: f32[4,64], index: 6, kind: input, shape index: {}]
  %s7 = inlined_call_operand.hbm [shape: f32[8,64], index: 7, kind: output, shape index: {}]
  %s8 = sld [smem:[#allocation0]]
  $region38: #{cnn_encoder.1} parent=0
    _
  %s10 = ssub.s32 1, %s8
  %s11 = scalar_select 0, %s10, %s8
  $region1: #{cnn_encoder.1} parent=0
    #allocation9 [shape = 'u8[4096]{0}', space=vmem, size = 0x1000, scoped, tag = 'output window, operand 0, single buffered']
    #allocation10 [shape = 's32[1]{0}', space=sflag, size = 0x4, scoped, tag = 'scoped memory for cnn_encoder.1']
    %12 = vsyncpa [#allocation10], 0
    // Predicated region
    $region2: #{cnn_encoder.1} parent=1 // pred_check
      _
    $region3: #{cnn_encoder.1} parent=1 // pred_check_branch
      %14 = sbr.rel (0) target = $region5
    $region4: #{cnn_encoder.1} parent=1 // pred_region
      _
    $region5: #{cnn_encoder.1} parent=1 // pred_fallthru
      _
    // Predicated region
    $region6: #{cnn_encoder.1} parent=1 // pred_check
      _
    $region7: #{cnn_encoder.1} parent=1 // pred_check_branch
      %16 = sbr.rel (0) target = $region9
    $region8: #{cnn_encoder.1} parent=1 // pred_region
      _
    $region9: #{cnn_encoder.1} parent=1 // pred_fallthru
      _
    // Predicated region
    $region10: #{cnn_encoder.1} parent=1 // pred_check
      _
    $region11: #{cnn_encoder.1} parent=1 // pred_check_branch
      %18 = sbr.rel (0) target = $region13
    $region12: #{cnn_encoder.1} parent=1 // pred_region
      _
    $region13: #{cnn_encoder.1} parent=1 // pred_fallthru
      _
    // Predicated region
    $region14: #{cnn_encoder.1} parent=1 // pred_check
      _
    $region15: #{cnn_encoder.1} parent=1 // pred_check_branch
      %20 = sbr.rel (0) target = $region17
    $region16: #{cnn_encoder.1} parent=1 // pred_region
      _
    $region17: #{cnn_encoder.1} parent=1 // pred_fallthru
      _
    // Predicated region
    $region18: #{cnn_encoder.1} parent=1 // pred_check
      _
    $region19: #{cnn_encoder.1} parent=1 // pred_check_branch
      %22 = sbr.rel (0) target = $region21
    $region20: #{cnn_encoder.1} parent=1 // pred_region
      _
    $region21: #{cnn_encoder.1} parent=1 // pred_fallthru
      _
    // Predicated region
    $region22: #{cnn_encoder.1} parent=1 // pred_check
      _
    $region23: #{cnn_encoder.1} parent=1 // pred_check_branch
      %24 = sbr.rel (0) target = $region25
    $region24: #{cnn_encoder.1} parent=1 // pred_region
      _
    $region25: #{cnn_encoder.1} parent=1 // pred_fallthru
      _
    // Predicated region
    $region26: #{cnn_encoder.1} parent=1 // pred_check
      _
    $region27: #{cnn_encoder.1} parent=1 // pred_check_branch
      %26 = sbr.rel (0) target = $region29
    $region28: #{cnn_encoder.1} parent=1 // pred_region
      _
    $region29: #{cnn_encoder.1} parent=1 // pred_fallthru
      _
    %v28 = vld [vmem:[%s0] sm:$0xf]
    %v29 = vld [vmem:[%s0 + $0x4] sm:$0xf]
    %v30 = vld [vmem:[%s0 + $0x8] sm:$0xf]
    %v31 = vld [vmem:[%s0 + $0xc] sm:$0xf]
    %v32 = vld [vmem:[%s0 + $0x10] sm:$0xf]
    %v33 = vld [vmem:[%s0 + $0x14] sm:$0xf]
    %v34 = vld [vmem:[%s0 + $0x18] sm:$0xf]
    %v35 = vld [vmem:[%s0 + $0x1c] sm:$0xf]
    %v36 = vld [vmem:[%s0 + $0x20] sm:$0xf]
    %v37 = vld [vmem:[%s0 + $0x24] sm:$0xf]
    %v38 = vld [vmem:[%s0 + $0x28] sm:$0xf]
    %v39 = vld [vmem:[%s0 + $0x2c] sm:$0xf]
    %v40 = vld [vmem:[%s0 + $0x30] sm:$0xf]
    %v41 = vld [vmem:[%s0 + $0x34] sm:$0xf]
    %v42 = vld [vmem:[%s0 + $0x38] sm:$0xf]
    %v43 = vld [vmem:[%s0 + $0x3c] sm:$0xf]
    %v44 = vld [vmem:[%s0 + $0x40] sm:$0xf]
    %v45 = vld [vmem:[%s0 + $0x44] sm:$0xf]
    %v46 = vld [vmem:[%s0 + $0x48] sm:$0xf]
    %v47 = vld [vmem:[%s0 + $0x4c] sm:$0xf]
    %v48 = vld [vmem:[%s0 + $0x50] sm:$0xf]
    %v49 = vld [vmem:[%s0 + $0x54] sm:$0xf]
    %v50 = vld [vmem:[%s0 + $0x58] sm:$0xf]
    %v51 = vld [vmem:[%s0 + $0x5c] sm:$0xf]
    %v52 = vld [vmem:[%s0 + $0x60] sm:$0xf]
    %v53 = vld [vmem:[%s0 + $0x64] sm:$0xf]
    %v54 = vld [vmem:[%s0 + $0x68] sm:$0xf]
    %v55 = vld [vmem:[%s0 + $0x6c] sm:$0xf]
    %v56 = vld [vmem:[%s0 + $0x70] sm:$0xf]
    %v57 = vld [vmem:[%s0 + $0x74] sm:$0xf]
    %v58 = vld [vmem:[%s0 + $0x78] sm:$0xf]
    %v59 = vld [vmem:[%s0 + $0x7c] sm:$0xf]
    %v60 = vld [vmem:[%s0 + $0x80] sm:$0xf]
    %v61 = vld [vmem:[%s0 + $0x84] sm:$0xf]
    %v62 = vld [vmem:[%s0 + $0x88] sm:$0xf]
    %v63 = vld [vmem:[%s0 + $0x8c] sm:$0xf]
    %v64 = vld [vmem:[%s0 + $0x90] sm:$0xf]
    %v65 = vld [vmem:[%s0 + $0x94] sm:$0xf]
    %v66 = vld [vmem:[%s0 + $0x98] sm:$0xf]
    %v67 = vld [vmem:[%s0 + $0x9c] sm:$0xf]
    %v68 = vld [vmem:[%s0 + $0xa0] sm:$0xf]
    %v69 = vld [vmem:[%s0 + $0xa4] sm:$0xf]
    %v70 = vld [vmem:[%s0 + $0xa8] sm:$0xf]
    %v71 = vld [vmem:[%s0 + $0xac] sm:$0xf]
    %v72 = vld [vmem:[%s0 + $0xb0] sm:$0xf]
    %v73 = vld [vmem:[%s0 + $0xb4] sm:$0xf]
    %v74 = vld [vmem:[%s0 + $0xb8] sm:$0xf]
    %v75 = vld [vmem:[%s0 + $0xbc] sm:$0xf]
    %v76 = vld [vmem:[%s0 + $0xc0] sm:$0xf]
    %v77 = vld [vmem:[%s0 + $0xc4] sm:$0xf]
    %v78 = vld [vmem:[%s0 + $0xc8] sm:$0xf]
    %v79 = vld [vmem:[%s0 + $0xcc] sm:$0xf]
    %v80 = vld [vmem:[%s0 + $0xd0] sm:$0xf]
    %v81 = vld [vmem:[%s0 + $0xd4] sm:$0xf]
    %v82 = vld [vmem:[%s0 + $0xd8] sm:$0xf]
    %v83 = vld [vmem:[%s0 + $0xdc] sm:$0xf]
    %v84 = vld [vmem:[%s0 + $0xe0] sm:$0xf]
    %v85 = vld [vmem:[%s0 + $0xe4] sm:$0xf]
    %v86 = vld [vmem:[%s0 + $0xe8] sm:$0xf]
    %v87 = vld [vmem:[%s0 + $0xec] sm:$0x7]
    %v88 = vld [vmem:[%s1] sm:$0xf]
    %v89 = vld [vmem:[%s1 + $0x4] sm:$0xf]
    %v90 = vld [vmem:[%s1 + $0x8] sm:$0xf]
    %v91 = vld [vmem:[%s1 + $0xc] sm:$0xf]
    %v152 = vunpack.c.l.b16 %v28
    %v153 = vunpack.c.l.b16 %v29
    %v154 = vunpack.c.l.b16 %v30
    %v155 = vunpack.c.l.b16 %v31
    %v156 = vunpack.c.l.b16 %v32
    %v157 = vunpack.c.l.b16 %v33
    %v158 = vunpack.c.l.b16 %v34
    %v159 = vunpack.c.l.b16 %v35
    %v160 = vunpack.c.l.b16 %v36
    %v161 = vunpack.c.l.b16 %v37
    %v162 = vunpack.c.l.b16 %v38
    %v163 = vunpack.c.l.b16 %v39
    %v164 = vunpack.c.l.b16 %v40
    %v165 = vunpack.c.l.b16 %v41
    %v166 = vunpack.c.l.b16 %v42
    %v167 = vunpack.c.l.b16 %v43
    %v168 = vunpack.c.l.b16 %v44
    %v169 = vunpack.c.l.b16 %v45
    %v170 = vunpack.c.l.b16 %v46
    %v171 = vunpack.c.l.b16 %v47
    %v172 = vunpack.c.l.b16 %v48
    %v173 = vunpack.c.l.b16 %v49
    %v174 = vunpack.c.l.b16 %v50
    %v175 = vunpack.c.l.b16 %v51
    %v176 = vunpack.c.l.b16 %v52
    %v177 = vunpack.c.l.b16 %v53
    %v178 = vunpack.c.l.b16 %v54
    %v179 = vunpack.c.l.b16 %v55
    %v180 = vunpack.c.l.b16 %v56
    %v181 = vunpack.c.l.b16 %v57
    %v182 = vunpack.c.l.b16 %v58
    %v183 = vunpack.c.l.b16 %v59
    %v184 = vunpack.c.l.b16 %v60
    %v185 = vunpack.c.l.b16 %v61
    %v186 = vunpack.c.l.b16 %v62
    %v187 = vunpack.c.l.b16 %v63
    %v188 = vunpack.c.l.b16 %v64
    %v189 = vunpack.c.l.b16 %v65
    %v190 = vunpack.c.l.b16 %v66
    %v191 = vunpack.c.l.b16 %v67
    %v192 = vunpack.c.l.b16 %v68
    %v193 = vunpack.c.l.b16 %v69
    %v194 = vunpack.c.l.b16 %v70
    %v195 = vunpack.c.l.b16 %v71
    %v196 = vunpack.c.l.b16 %v72
    %v197 = vunpack.c.l.b16 %v73
    %v198 = vunpack.c.l.b16 %v74
    %v199 = vunpack.c.l.b16 %v75
    %v200 = vunpack.c.l.b16 %v76
    %v201 = vunpack.c.l.b16 %v77
    %v202 = vunpack.c.l.b16 %v78
    %v203 = vunpack.c.l.b16 %v79
    %v204 = vunpack.c.l.b16 %v80
    %v205 = vunpack.c.l.b16 %v81
    %v206 = vunpack.c.l.b16 %v82
    %v207 = vunpack.c.l.b16 %v83
    %v208 = vunpack.c.l.b16 %v84
    %v209 = vunpack.c.l.b16 %v85
    %v210 = vunpack.c.l.b16 %v86
    %v211 = vunpack.c.l.b16 %v87
    %v212 = vpack.c.b16 %v153, %v152
    %v213 = vpack.c.b16 %v155, %v154
    %v214 = vpack.c.b16 %v157, %v156
    %v215 = vpack.c.b16 %v159, %v158
    %v216 = vpack.c.b16 %v161, %v160
    %v217 = vpack.c.b16 %v163, %v162
    %v218 = vpack.c.b16 %v165, %v164
    %v219 = vpack.c.b16 %v167, %v166
    %v220 = vpack.c.b16 %v169, %v168
    %v221 = vpack.c.b16 %v171, %v170
    %v222 = vpack.c.b16 %v173, %v172
    %v223 = vpack.c.b16 %v175, %v174
    %v224 = vpack.c.b16 %v177, %v176
    %v225 = vpack.c.b16 %v179, %v178
    %v226 = vpack.c.b16 %v181, %v180
    %v227 = vpack.c.b16 %v183, %v182
    %v228 = vpack.c.b16 %v185, %v184
    %v229 = vpack.c.b16 %v187, %v186
    %v230 = vpack.c.b16 %v189, %v188
    %v231 = vpack.c.b16 %v191, %v190
    %v232 = vpack.c.b16 %v193, %v192
    %v233 = vpack.c.b16 %v195, %v194
    %v234 = vpack.c.b16 %v197, %v196
    %v235 = vpack.c.b16 %v199, %v198
    %v236 = vpack.c.b16 %v201, %v200
    %v237 = vpack.c.b16 %v203, %v202
    %v238 = vpack.c.b16 %v205, %v204
    %v239 = vpack.c.b16 %v207, %v206
    %v240 = vpack.c.b16 %v209, %v208
    %v241 = vpack.c.b16 %v211, %v210
    %v246 = vunpack.c.l.b16 %v88
    %v247 = vunpack.c.l.b16 %v89
    %v248 = vunpack.c.l.b16 %v90
    %v249 = vunpack.c.l.b16 %v91
    %v250 = vpack.c.b16 %v247, %v246
    %v251 = vpack.c.b16 %v249, %v248
    %vm254 = vcmask 261120
    %v256 = vsel %vm254, %v212, 0
    %v259 = vsel %vm254, %v213, 0
    %v262 = vsel %vm254, %v214, 0
    %v265 = vsel %vm254, %v215, 0
    %v268 = vsel %vm254, %v216, 0
    %v271 = vsel %vm254, %v217, 0
    %v274 = vsel %vm254, %v218, 0
    %v277 = vsel %vm254, %v219, 0
    %v280 = vsel %vm254, %v220, 0
    %v283 = vsel %vm254, %v221, 0
    %v286 = vsel %vm254, %v222, 0
    %v289 = vsel %vm254, %v223, 0
    %v292 = vsel %vm254, %v224, 0
    %v295 = vsel %vm254, %v225, 0
    %v298 = vsel %vm254, %v226, 0
    %v301 = vsel %vm254, %v227, 0
    %v304 = vsel %vm254, %v228, 0
    %v307 = vsel %vm254, %v229, 0
    %v310 = vsel %vm254, %v230, 0
    %v313 = vsel %vm254, %v231, 0
    %v316 = vsel %vm254, %v232, 0
    %v319 = vsel %vm254, %v233, 0
    %v322 = vsel %vm254, %v234, 0
    %v325 = vsel %vm254, %v235, 0
    %v328 = vsel %vm254, %v236, 0
    %v331 = vsel %vm254, %v237, 0
    %v334 = vsel %vm254, %v238, 0
    %v337 = vsel %vm254, %v239, 0
    %v340 = vsel %vm254, %v240, 0
    %v343 = vsel %vm254, %v241, 0
    %345 = vmatprep.subr.bf16.mxu0 0
    %346 = vmatpush1.bf16.msra.mxu0 %v250
    %347 = vmatprep.subr.bf16.mxu0 0
    %348 = vmatpush1.bf16.msra.mxu0 %v251
    %349 = vmatprep.subr.bf16.mxu0 0
    %350 = vmatpush1.bf16.msra.mxu0 0
    %351 = vmatprep.subr.bf16.mxu0 0
    %352 = vmatpush1.bf16.msra.mxu0 0
    %353 = vmatprep.subr.bf16.mxu0 0
    %354 = vmatpush1.bf16.msra.mxu0 0
    %355 = vmatprep.subr.bf16.mxu0 0
    %356 = vmatpush1.bf16.msra.mxu0 0
    %357 = vmatprep.subr.bf16.mxu0 0
    %358 = vmatpush1.bf16.msra.mxu0 0
    %359 = vmatprep.subr.bf16.mxu0 0
    %360 = vmatpush1.bf16.msra.mxu0 0
    %361 = vmatprep.subr.bf16.mxu0 0
    %362 = vmatpush1.bf16.msra.mxu0 0
    %363 = vmatprep.subr.bf16.mxu0 0
    %364 = vmatpush1.bf16.msra.mxu0 0
    %365 = vmatprep.subr.bf16.mxu0 0
    %366 = vmatpush1.bf16.msra.mxu0 0
    %367 = vmatprep.subr.bf16.mxu0 0
    %368 = vmatpush1.bf16.msra.mxu0 0
    %369 = vmatprep.subr.bf16.mxu0 0
    %370 = vmatpush1.bf16.msra.mxu0 0
    %371 = vmatprep.subr.bf16.mxu0 0
    %372 = vmatpush1.bf16.msra.mxu0 0
    %373 = vmatprep.subr.bf16.mxu0 0
    %374 = vmatpush1.bf16.msra.mxu0 0
    %375 = vmatprep.subr.bf16.mxu0 0
    %376 = vmatpush1.bf16.msra.mxu0 0
    %377 = vmatprep.mubr.bf16.mxu0 0
    %378 = vmatmul.mubr.bf16.gmra.mrb[0].mxu0 %v256
    %v379 = vpop.f32.mrb[0].mxu0
    %v380 = vadd.f32 0.0, %v379
    %v381 = vpop.f32.mrb[0].mxu0
    %v382 = vpop.f32.mrb[0].mxu0
    %v383 = vadd.f32 0.0, %v382
    %v384 = vpop.f32.mrb[0].mxu0
    %385 = vmatprep.mubr.bf16.mxu0 0
    %386 = vmatmul.mubr.bf16.gmra.mrb[0].mxu0 %v259
    %v387 = vpop.f32.mrb[0].mxu0
    %v388 = vadd.f32 0.0, %v387
    %v389 = vpop.f32.mrb[0].mxu0
    %v390 = vpop.f32.mrb[0].mxu0
    %v391 = vadd.f32 0.0, %v390
    %v392 = vpop.f32.mrb[0].mxu0
    %393 = vmatprep.mubr.bf16.mxu0 0
    %394 = vmatmul.mubr.bf16.gmra.mrb[0].mxu0 %v262
    %v395 = vpop.f32.mrb[0].mxu0
    %v396 = vadd.f32 0.0, %v395
    %v397 = vpop.f32.mrb[0].mxu0
    %v398 = vpop.f32.mrb[0].mxu0
    %v399 = vadd.f32 0.0, %v398
    %v400 = vpop.f32.mrb[0].mxu0
    %401 = vmatprep.mubr.bf16.mxu0 0
    %402 = vmatmul.mubr.bf16.gmra.mrb[0].mxu0 %v265
    %v403 = vpop.f32.mrb[0].mxu0
    %v404 = vadd.f32 0.0, %v403
    %v405 = vpop.f32.mrb[0].mxu0
    %v406 = vpop.f32.mrb[0].mxu0
    %v407 = vadd.f32 0.0, %v406
    %v408 = vpop.f32.mrb[0].mxu0
    %409 = vmatprep.mubr.bf16.mxu0 0
    %410 = vmatmul.mubr.bf16.gmra.mrb[0].mxu0 %v268
    %v411 = vpop.f32.mrb[0].mxu0
    %v412 = vadd.f32 0.0, %v411
    %v413 = vpop.f32.mrb[0].mxu0
    %v414 = vpop.f32.mrb[0].mxu0
    %v415 = vadd.f32 0.0, %v414
    %v416 = vpop.f32.mrb[0].mxu0
    %417 = vmatprep.mubr.bf16.mxu0 0
    %418 = vmatmul.mubr.bf16.gmra.mrb[0].mxu0 %v271
    %v419 = vpop.f32.mrb[0].mxu0
    %v420 = vadd.f32 0.0, %v419
    %v421 = vpop.f32.mrb[0].mxu0
    %v422 = vpop.f32.mrb[0].mxu0
    %v423 = vadd.f32 0.0, %v422
    %v424 = vpop.f32.mrb[0].mxu0
    %425 = vmatprep.mubr.bf16.mxu0 0
    %426 = vmatmul.mubr.bf16.gmra.mrb[0].mxu0 %v274
    %v427 = vpop.f32.mrb[0].mxu0
    %v428 = vadd.f32 0.0, %v427
    %v429 = vpop.f32.mrb[0].mxu0
    %v430 = vpop.f32.mrb[0].mxu0
    %v431 = vadd.f32 0.0, %v430
    %v432 = vpop.f32.mrb[0].mxu0
    %433 = vmatprep.mubr.bf16.mxu0 0
    %434 = vmatmul.mubr.bf16.gmra.mrb[0].mxu0 %v277
    %v435 = vpop.f32.mrb[0].mxu0
    %v436 = vadd.f32 0.0, %v435
    %v437 = vpop.f32.mrb[0].mxu0
    %v438 = vpop.f32.mrb[0].mxu0
    %v439 = vadd.f32 0.0, %v438
    %v440 = vpop.f32.mrb[0].mxu0
    %441 = vmatprep.mubr.bf16.mxu0 0
    %442 = vmatmul.mubr.bf16.gmra.mrb[0].mxu0 %v280
    %v443 = vpop.f32.mrb[0].mxu0
    %v444 = vadd.f32 0.0, %v443
    %v445 = vpop.f32.mrb[0].mxu0
    %v446 = vpop.f32.mrb[0].mxu0
    %v447 = vadd.f32 0.0, %v446
    %v448 = vpop.f32.mrb[0].mxu0
    %449 = vmatprep.mubr.bf16.mxu0 0
    %450 = vmatmul.mubr.bf16.gmra.mrb[0].mxu0 %v283
    %v451 = vpop.f32.mrb[0].mxu0
    %v452 = vadd.f32 0.0, %v451
    %v453 = vpop.f32.mrb[0].mxu0
    %v454 = vpop.f32.mrb[0].mxu0
    %v455 = vadd.f32 0.0, %v454
    %v456 = vpop.f32.mrb[0].mxu0
    %457 = vmatprep.mubr.bf16.mxu0 0
    %458 = vmatmul.mubr.bf16.gmra.mrb[0].mxu0 %v286
    %v459 = vpop.f32.mrb[0].mxu0
    %v460 = vadd.f32 0.0, %v459
    %v461 = vpop.f32.mrb[0].mxu0
    %v462 = vpop.f32.mrb[0].mxu0
    %v463 = vadd.f32 0.0, %v462
    %v464 = vpop.f32.mrb[0].mxu0
    %465 = vmatprep.mubr.bf16.mxu0 0
    %466 = vmatmul.mubr.bf16.gmra.mrb[0].mxu0 %v289
    %v467 = vpop.f32.mrb[0].mxu0
    %v468 = vadd.f32 0.0, %v467
    %v469 = vpop.f32.mrb[0].mxu0
    %v470 = vpop.f32.mrb[0].mxu0
    %v471 = vadd.f32 0.0, %v470
    %v472 = vpop.f32.mrb[0].mxu0
    %473 = vmatprep.mubr.bf16.mxu0 0
    %474 = vmatmul.mubr.bf16.gmra.mrb[0].mxu0 %v292
    %v475 = vpop.f32.mrb[0].mxu0
    %v476 = vadd.f32 0.0, %v475
    %v477 = vpop.f32.mrb[0].mxu0
    %v478 = vpop.f32.mrb[0].mxu0
    %v479 = vadd.f32 0.0, %v478
    %v480 = vpop.f32.mrb[0].mxu0
    %481 = vmatprep.mubr.bf16.mxu0 0
    %482 = vmatmul.mubr.bf16.gmra.mrb[0].mxu0 %v295
    %v483 = vpop.f32.mrb[0].mxu0
    %v484 = vadd.f32 0.0, %v483
    %v485 = vpop.f32.mrb[0].mxu0
    %v486 = vpop.f32.mrb[0].mxu0
    %v487 = vadd.f32 0.0, %v486
    %v488 = vpop.f32.mrb[0].mxu0
    %489 = vmatprep.mubr.bf16.mxu0 0
    %490 = vmatmul.mubr.bf16.gmra.mrb[0].mxu0 %v298
    %v491 = vpop.f32.mrb[0].mxu0
    %v492 = vadd.f32 0.0, %v491
    %v493 = vpop.f32.mrb[0].mxu0
    %v494 = vpop.f32.mrb[0].mxu0
    %v495 = vadd.f32 0.0, %v494
    %v496 = vpop.f32.mrb[0].mxu0
    %497 = vmatprep.mubr.bf16.mxu0 0
    %498 = vmatmul.mubr.bf16.gmra.mrb[0].mxu0 %v301
    %v499 = vpop.f32.mrb[0].mxu0
    %v500 = vadd.f32 0.0, %v499
    %v501 = vpop.f32.mrb[0].mxu0
    %v502 = vpop.f32.mrb[0].mxu0
    %v503 = vadd.f32 0.0, %v502
    %v504 = vpop.f32.mrb[0].mxu0
    %505 = vmatprep.mubr.bf16.mxu0 0
    %506 = vmatmul.mubr.bf16.gmra.mrb[0].mxu0 %v304
    %v507 = vpop.f32.mrb[0].mxu0
    %v508 = vadd.f32 0.0, %v507
    %v509 = vpop.f32.mrb[0].mxu0
    %v510 = vpop.f32.mrb[0].mxu0
    %v511 = vadd.f32 0.0, %v510
    %v512 = vpop.f32.mrb[0].mxu0
    %513 = vmatprep.mubr.bf16.mxu0 0
    %514 = vmatmul.mubr.bf16.gmra.mrb[0].mxu0 %v307
    %v515 = vpop.f32.mrb[0].mxu0
    %v516 = vadd.f32 0.0, %v515
    %v517 = vpop.f32.mrb[0].mxu0
    %v518 = vpop.f32.mrb[0].mxu0
    %v519 = vadd.f32 0.0, %v518
    %v520 = vpop.f32.mrb[0].mxu0
    %521 = vmatprep.mubr.bf16.mxu0 0
    %522 = vmatmul.mubr.bf16.gmra.mrb[0].mxu0 %v310
    %v523 = vpop.f32.mrb[0].mxu0
    %v524 = vadd.f32 0.0, %v523
    %v525 = vpop.f32.mrb[0].mxu0
    %v526 = vpop.f32.mrb[0].mxu0
    %v527 = vadd.f32 0.0, %v526
    %v528 = vpop.f32.mrb[0].mxu0
    %529 = vmatprep.mubr.bf16.mxu0 0
    %530 = vmatmul.mubr.bf16.gmra.mrb[0].mxu0 %v313
    %v531 = vpop.f32.mrb[0].mxu0
    %v532 = vadd.f32 0.0, %v531
    %v533 = vpop.f32.mrb[0].mxu0
    %v534 = vpop.f32.mrb[0].mxu0
    %v535 = vadd.f32 0.0, %v534
    %v536 = vpop.f32.mrb[0].mxu0
    %537 = vmatprep.mubr.bf16.mxu0 0
    %538 = vmatmul.mubr.bf16.gmra.mrb[0].mxu0 %v316
    %v539 = vpop.f32.mrb[0].mxu0
    %v540 = vadd.f32 0.0, %v539
    %v541 = vpop.f32.mrb[0].mxu0
    %v542 = vpop.f32.mrb[0].mxu0
    %v543 = vadd.f32 0.0, %v542
    %v544 = vpop.f32.mrb[0].mxu0
    %545 = vmatprep.mubr.bf16.mxu0 0
    %546 = vmatmul.mubr.bf16.gmra.mrb[0].mxu0 %v319
    %v547 = vpop.f32.mrb[0].mxu0
    %v548 = vadd.f32 0.0, %v547
    %v549 = vpop.f32.mrb[0].mxu0
    %v550 = vpop.f32.mrb[0].mxu0
    %v551 = vadd.f32 0.0, %v550
    %v552 = vpop.f32.mrb[0].mxu0
    %553 = vmatprep.mubr.bf16.mxu0 0
    %554 = vmatmul.mubr.bf16.gmra.mrb[0].mxu0 %v322
    %v555 = vpop.f32.mrb[0].mxu0
    %v556 = vadd.f32 0.0, %v555
    %v557 = vpop.f32.mrb[0].mxu0
    %v558 = vpop.f32.mrb[0].mxu0
    %v559 = vadd.f32 0.0, %v558
    %v560 = vpop.f32.mrb[0].mxu0
    %561 = vmatprep.mubr.bf16.mxu0 0
    %562 = vmatmul.mubr.bf16.gmra.mrb[0].mxu0 %v325
    %v563 = vpop.f32.mrb[0].mxu0
    %v564 = vadd.f32 0.0, %v563
    %v565 = vpop.f32.mrb[0].mxu0
    %v566 = vpop.f32.mrb[0].mxu0
    %v567 = vadd.f32 0.0, %v566
    %v568 = vpop.f32.mrb[0].mxu0
    %569 = vmatprep.mubr.bf16.mxu0 0
    %570 = vmatmul.mubr.bf16.gmra.mrb[0].mxu0 %v328
    %v571 = vpop.f32.mrb[0].mxu0
    %v572 = vadd.f32 0.0, %v571
    %v573 = vpop.f32.mrb[0].mxu0
    %v574 = vpop.f32.mrb[0].mxu0
    %v575 = vadd.f32 0.0, %v574
    %v576 = vpop.f32.mrb[0].mxu0
    %577 = vmatprep.mubr.bf16.mxu0 0
    %578 = vmatmul.mubr.bf16.gmra.mrb[0].mxu0 %v331
    %v579 = vpop.f32.mrb[0].mxu0
    %v580 = vadd.f32 0.0, %v579
    %v581 = vpop.f32.mrb[0].mxu0
    %v582 = vpop.f32.mrb[0].mxu0
    %v583 = vadd.f32 0.0, %v582
    %v584 = vpop.f32.mrb[0].mxu0
    %585 = vmatprep.mubr.bf16.mxu0 0
    %586 = vmatmul.mubr.bf16.gmra.mrb[0].mxu0 %v334
    %v587 = vpop.f32.mrb[0].mxu0
    %v588 = vadd.f32 0.0, %v587
    %v589 = vpop.f32.mrb[0].mxu0
    %v590 = vpop.f32.mrb[0].mxu0
    %v591 = vadd.f32 0.0, %v590
    %v592 = vpop.f32.mrb[0].mxu0
    %593 = vmatprep.mubr.bf16.mxu0 0
    %594 = vmatmul.mubr.bf16.gmra.mrb[0].mxu0 %v337
    %v595 = vpop.f32.mrb[0].mxu0
    %v596 = vadd.f32 0.0, %v595
    %v597 = vpop.f32.mrb[0].mxu0
    %v598 = vpop.f32.mrb[0].mxu0
    %v599 = vadd.f32 0.0, %v598
    %v600 = vpop.f32.mrb[0].mxu0
    %601 = vmatprep.mubr.bf16.mxu0 0
    %602 = vmatmul.mubr.bf16.gmra.mrb[0].mxu0 %v340
    %v603 = vpop.f32.mrb[0].mxu0
    %v604 = vadd.f32 0.0, %v603
    %v605 = vpop.f32.mrb[0].mxu0
    %v606 = vpop.f32.mrb[0].mxu0
    %v607 = vadd.f32 0.0, %v606
    %v608 = vpop.f32.mrb[0].mxu0
    %609 = vmatprep.mubr.bf16.mxu0 0
    %610 = vmatmul.mubr.bf16.gmra.mrb[0].mxu0 %v343
    %v611 = vpop.f32.mrb[0].mxu0
    %v612 = vadd.f32 0.0, %v611
    %v613 = vpop.f32.mrb[0].mxu0
    %v614 = vpop.f32.mrb[0].mxu0
    %v615 = vadd.f32 0.0, %v614
    %v616 = vpop.f32.mrb[0].mxu0
    %617 = vdwg.mxu0
    %vm618 = vcmask 523264
    %619 = vst.msk [vmem:[#allocation2] sm:$0xff] %vm618, %v380
    %620 = vst.msk [vmem:[#allocation2 + $0x8] sm:$0xff] %vm618, %v383
    %621 = vst.msk [vmem:[#allocation2 + $0x10] sm:$0xff] %vm618, %v388
    %622 = vst.msk [vmem:[#allocation2 + $0x18] sm:$0xff] %vm618, %v391
    %623 = vst.msk [vmem:[#allocation2 + $0x20] sm:$0xff] %vm618, %v396
    %624 = vst.msk [vmem:[#allocation2 + $0x28] sm:$0xff] %vm618, %v399
    %625 = vst.msk [vmem:[#allocation2 + $0x30] sm:$0xff] %vm618, %v404
    %626 = vst.msk [vmem:[#allocation2 + $0x38] sm:$0xff] %vm618, %v407
    %627 = vst.msk [vmem:[#allocation2 + $0x40] sm:$0xff] %vm618, %v412
    %628 = vst.msk [vmem:[#allocation2 + $0x48] sm:$0xff] %vm618, %v415
    %629 = vst.msk [vmem:[#allocation2 + $0x50] sm:$0xff] %vm618, %v420
    %630 = vst.msk [vmem:[#allocation2 + $0x58] sm:$0xff] %vm618, %v423
    %631 = vst.msk [vmem:[#allocation2 + $0x60] sm:$0xff] %vm618, %v428
    %632 = vst.msk [vmem:[#allocation2 + $0x68] sm:$0xff] %vm618, %v431
    %633 = vst.msk [vmem:[#allocation2 + $0x70] sm:$0xff] %vm618, %v436
    %634 = vst.msk [vmem:[#allocation2 + $0x78] sm:$0xff] %vm618, %v439
    %635 = vst.msk [vmem:[#allocation2 + $0x80] sm:$0xff] %vm618, %v444
    %636 = vst.msk [vmem:[#allocation2 + $0x88] sm:$0xff] %vm618, %v447
    %637 = vst.msk [vmem:[#allocation2 + $0x90] sm:$0xff] %vm618, %v452
    %638 = vst.msk [vmem:[#allocation2 + $0x98] sm:$0xff] %vm618, %v455
    %639 = vst.msk [vmem:[#allocation2 + $0xa0] sm:$0xff] %vm618, %v460
    %640 = vst.msk [vmem:[#allocation2 + $0xa8] sm:$0xff] %vm618, %v463
    %641 = vst.msk [vmem:[#allocation2 + $0xb0] sm:$0xff] %vm618, %v468
    %642 = vst.msk [vmem:[#allocation2 + $0xb8] sm:$0xff] %vm618, %v471
    %643 = vst.msk [vmem:[#allocation2 + $0xc0] sm:$0xff] %vm618, %v476
    %644 = vst.msk [vmem:[#allocation2 + $0xc8] sm:$0xff] %vm618, %v479
    %645 = vst.msk [vmem:[#allocation2 + $0xd0] sm:$0xff] %vm618, %v484
    %646 = vst.msk [vmem:[#allocation2 + $0xd8] sm:$0xff] %vm618, %v487
    %647 = vst.msk [vmem:[#allocation2 + $0xe0] sm:$0xff] %vm618, %v492
    %648 = vst.msk [vmem:[#allocation2 + $0xe8] sm:$0xff] %vm618, %v495
    %649 = vst.msk [vmem:[#allocation2 + $0xf0] sm:$0xff] %vm618, %v500
    %650 = vst.msk [vmem:[#allocation2 + $0xf8] sm:$0xff] %vm618, %v503
    %651 = vst.msk [vmem:[#allocation2 + $0x100] sm:$0xff] %vm618, %v508
    %652 = vst.msk [vmem:[#allocation2 + $0x108] sm:$0xff] %vm618, %v511
    %653 = vst.msk [vmem:[#allocation2 + $0x110] sm:$0xff] %vm618, %v516
    %654 = vst.msk [vmem:[#allocation2 + $0x118] sm:$0xff] %vm618, %v519
    %655 = vst.msk [vmem:[#allocation2 + $0x120] sm:$0xff] %vm618, %v524
    %656 = vst.msk [vmem:[#allocation2 + $0x128] sm:$0xff] %vm618, %v527
    %657 = vst.msk [vmem:[#allocation2 + $0x130] sm:$0xff] %vm618, %v532
    %658 = vst.msk [vmem:[#allocation2 + $0x138] sm:$0xff] %vm618, %v535
    %659 = vst.msk [vmem:[#allocation2 + $0x140] sm:$0xff] %vm618, %v540
    %660 = vst.msk [vmem:[#allocation2 + $0x148] sm:$0xff] %vm618, %v543
    %661 = vst.msk [vmem:[#allocation2 + $0x150] sm:$0xff] %vm618, %v548
    %662 = vst.msk [vmem:[#allocation2 + $0x158] sm:$0xff] %vm618, %v551
    %663 = vst.msk [vmem:[#allocation2 + $0x160] sm:$0xff] %vm618, %v556
    %664 = vst.msk [vmem:[#allocation2 + $0x168] sm:$0xff] %vm618, %v559
    %665 = vst.msk [vmem:[#allocation2 + $0x170] sm:$0xff] %vm618, %v564
    %666 = vst.msk [vmem:[#allocation2 + $0x178] sm:$0xff] %vm618, %v567
    %667 = vst.msk [vmem:[#allocation2 + $0x180] sm:$0xff] %vm618, %v572
    %668 = vst.msk [vmem:[#allocation2 + $0x188] sm:$0xff] %vm618, %v575
    %669 = vst.msk [vmem:[#allocation2 + $0x190] sm:$0xff] %vm618, %v580
    %670 = vst.msk [vmem:[#allocation2 + $0x198] sm:$0xff] %vm618, %v583
    %671 = vst.msk [vmem:[#allocation2 + $0x1a0] sm:$0xff] %vm618, %v588
    %672 = vst.msk [vmem:[#allocation2 + $0x1a8] sm:$0xff] %vm618, %v591
    %673 = vst.msk [vmem:[#allocation2 + $0x1b0] sm:$0xff] %vm618, %v596
    %674 = vst.msk [vmem:[#allocation2 + $0x1b8] sm:$0xff] %vm618, %v599
    %675 = vst.msk [vmem:[#allocation2 + $0x1c0] sm:$0xff] %vm618, %v604
    %676 = vst.msk [vmem:[#allocation2 + $0x1c8] sm:$0xff] %vm618, %v607
    %677 = vst.msk [vmem:[#allocation2 + $0x1d0] sm:$0xff] %vm618, %v612
    %vm678 = vcmask 521216
    %679 = vst.msk [vmem:[#allocation2 + $0x1d8] sm:$0x3f] %vm678, %v615
    %v680 = vld [vmem:[#allocation2] sm:$0xff]
    %v681 = vld [vmem:[#allocation2 + $0x8] sm:$0xff]
    %v682 = vld [vmem:[#allocation2 + $0x10] sm:$0xff]
    %v683 = vld [vmem:[#allocation2 + $0x18] sm:$0xff]
    %v684 = vld [vmem:[#allocation2 + $0x20] sm:$0xff]
    %v685 = vld [vmem:[#allocation2 + $0x28] sm:$0xff]
    %v686 = vld [vmem:[#allocation2 + $0x30] sm:$0xff]
    %v687 = vld [vmem:[#allocation2 + $0x38] sm:$0xff]
    %v688 = vld [vmem:[#allocation2 + $0x40] sm:$0xff]
    %v689 = vld [vmem:[#allocation2 + $0x48] sm:$0xff]
    %v690 = vld [vmem:[#allocation2 + $0x50] sm:$0xff]
    %v691 = vld [vmem:[#allocation2 + $0x58] sm:$0xff]
    %v692 = vld [vmem:[#allocation2 + $0x60] sm:$0xff]
    %v693 = vld [vmem:[#allocation2 + $0x68] sm:$0xff]
    %v694 = vld [vmem:[#allocation2 + $0x70] sm:$0xff]
    %v695 = vld [vmem:[#allocation2 + $0x78] sm:$0xff]
    %v696 = vld [vmem:[#allocation2 + $0x80] sm:$0xff]
    %v697 = vld [vmem:[#allocation2 + $0x88] sm:$0xff]
    %v698 = vld [vmem:[#allocation2 + $0x90] sm:$0xff]
    %v699 = vld [vmem:[#allocation2 + $0x98] sm:$0xff]
    %v700 = vld [vmem:[#allocation2 + $0xa0] sm:$0xff]
    %v701 = vld [vmem:[#allocation2 + $0xa8] sm:$0xff]
    %v702 = vld [vmem:[#allocation2 + $0xb0] sm:$0xff]
    %v703 = vld [vmem:[#allocation2 + $0xb8] sm:$0xff]
    %v704 = vld [vmem:[#allocation2 + $0xc0] sm:$0xff]
    %v705 = vld [vmem:[#allocation2 + $0xc8] sm:$0xff]
    %v706 = vld [vmem:[#allocation2 + $0xd0] sm:$0xff]
    %v707 = vld [vmem:[#allocation2 + $0xd8] sm:$0xff]
    %v708 = vld [vmem:[#allocation2 + $0xe0] sm:$0xff]
    %v709 = vld [vmem:[#allocation2 + $0xe8] sm:$0xff]
    %v710 = vld [vmem:[#allocation2 + $0xf0] sm:$0xff]
    %v711 = vld [vmem:[#allocation2 + $0xf8] sm:$0xff]
    %v712 = vld [vmem:[#allocation2 + $0x100] sm:$0xff]
    %v713 = vld [vmem:[#allocation2 + $0x108] sm:$0xff]
    %v714 = vld [vmem:[#allocation2 + $0x110] sm:$0xff]
    %v715 = vld [vmem:[#allocation2 + $0x118] sm:$0xff]
    %v716 = vld [vmem:[#allocation2 + $0x120] sm:$0xff]
    %v717 = vld [vmem:[#allocation2 + $0x128] sm:$0xff]
    %v718 = vld [vmem:[#allocation2 + $0x130] sm:$0xff]
    %v719 = vld [vmem:[#allocation2 + $0x138] sm:$0xff]
    %v720 = vld [vmem:[#allocation2 + $0x140] sm:$0xff]
    %v721 = vld [vmem:[#allocation2 + $0x148] sm:$0xff]
    %v722 = vld [vmem:[#allocation2 + $0x150] sm:$0xff]
    %v723 = vld [vmem:[#allocation2 + $0x158] sm:$0xff]
    %v724 = vld [vmem:[#allocation2 + $0x160] sm:$0xff]
    %v725 = vld [vmem:[#allocation2 + $0x168] sm:$0xff]
    %v726 = vld [vmem:[#allocation2 + $0x170] sm:$0xff]
    %v727 = vld [vmem:[#allocation2 + $0x178] sm:$0xff]
    %v728 = vld [vmem:[#allocation2 + $0x180] sm:$0xff]
    %v729 = vld [vmem:[#allocation2 + $0x188] sm:$0xff]
    %v730 = vld [vmem:[#allocation2 + $0x190] sm:$0xff]
    %v731 = vld [vmem:[#allocation2 + $0x198] sm:$0xff]
    %v732 = vld [vmem:[#allocation2 + $0x1a0] sm:$0xff]
    %v733 = vld [vmem:[#allocation2 + $0x1a8] sm:$0xff]
    %v734 = vld [vmem:[#allocation2 + $0x1b0] sm:$0xff]
    %v735 = vld [vmem:[#allocation2 + $0x1b8] sm:$0xff]
    %v736 = vld [vmem:[#allocation2 + $0x1c0] sm:$0xff]
    %v737 = vld [vmem:[#allocation2 + $0x1c8] sm:$0xff]
    %v738 = vld [vmem:[#allocation2 + $0x1d0] sm:$0xff]
    %v739 = vld [vmem:[#allocation2 + $0x1d8] sm:$0x3f]
    %v740 = vsel %vm618, %v680, 0.0
    %v741 = vsel %vm618, %v681, 0.0
    %v742 = vadd.f32 %v740, %v741
    %v743 = vsel %vm618, %v682, 0.0
    %v744 = vadd.f32 %v742, %v743
    %v745 = vsel %vm618, %v683, 0.0
    %v746 = vadd.f32 %v744, %v745
    %v747 = vsel %vm618, %v684, 0.0
    %v748 = vadd.f32 %v746, %v747
    %v749 = vsel %vm618, %v685, 0.0
    %v750 = vadd.f32 %v748, %v749
    %v751 = vsel %vm618, %v686, 0.0
    %v752 = vadd.f32 %v750, %v751
    %v753 = vsel %vm618, %v687, 0.0
    %v754 = vadd.f32 %v752, %v753
    %v755 = vsel %vm618, %v688, 0.0
    %v756 = vadd.f32 %v754, %v755
    %v757 = vsel %vm618, %v689, 0.0
    %v758 = vadd.f32 %v756, %v757
    %v759 = vsel %vm618, %v690, 0.0
    %v760 = vadd.f32 %v758, %v759
    %v761 = vsel %vm618, %v691, 0.0
    %v762 = vadd.f32 %v760, %v761
    %v763 = vsel %vm618, %v692, 0.0
    %v764 = vadd.f32 %v762, %v763
    %v765 = vsel %vm618, %v693, 0.0
    %v766 = vadd.f32 %v764, %v765
    %v767 = vsel %vm618, %v694, 0.0
    %v768 = vadd.f32 %v766, %v767
    %v769 = vsel %vm618, %v695, 0.0
    %v770 = vadd.f32 %v768, %v769
    %v771 = vsel %vm618, %v696, 0.0
    %v772 = vadd.f32 %v770, %v771
    %v773 = vsel %vm618, %v697, 0.0
    %v774 = vadd.f32 %v772, %v773
    %v775 = vsel %vm618, %v698, 0.0
    %v776 = vadd.f32 %v774, %v775
    %v777 = vsel %vm618, %v699, 0.0
    %v778 = vadd.f32 %v776, %v777
    %v779 = vsel %vm618, %v700, 0.0
    %v780 = vadd.f32 %v778, %v779
    %v781 = vsel %vm618, %v701, 0.0
    %v782 = vadd.f32 %v780, %v781
    %v783 = vsel %vm618, %v702, 0.0
    %v784 = vadd.f32 %v782, %v783
    %v785 = vsel %vm618, %v703, 0.0
    %v786 = vadd.f32 %v784, %v785
    %v787 = vsel %vm618, %v704, 0.0
    %v788 = vadd.f32 %v786, %v787
    %v789 = vsel %vm618, %v705, 0.0
    %v790 = vadd.f32 %v788, %v789
    %v791 = vsel %vm618, %v706, 0.0
    %v792 = vadd.f32 %v790, %v791
    %v793 = vsel %vm618, %v707, 0.0
    %v794 = vadd.f32 %v792, %v793
    %v795 = vsel %vm618, %v708, 0.0
    %v796 = vadd.f32 %v794, %v795
    %v797 = vsel %vm618, %v709, 0.0
    %v798 = vadd.f32 %v796, %v797
    %v799 = vsel %vm618, %v710, 0.0
    %v800 = vadd.f32 %v798, %v799
    %v801 = vsel %vm618, %v711, 0.0
    %v802 = vadd.f32 %v800, %v801
    %v803 = vsel %vm618, %v712, 0.0
    %v804 = vadd.f32 %v802, %v803
    %v805 = vsel %vm618, %v713, 0.0
    %v806 = vadd.f32 %v804, %v805
    %v807 = vsel %vm618, %v714, 0.0
    %v808 = vadd.f32 %v806, %v807
    %v809 = vsel %vm618, %v715, 0.0
    %v810 = vadd.f32 %v808, %v809
    %v811 = vsel %vm618, %v716, 0.0
    %v812 = vadd.f32 %v810, %v811
    %v813 = vsel %vm618, %v717, 0.0
    %v814 = vadd.f32 %v812, %v813
    %v815 = vsel %vm618, %v718, 0.0
    %v816 = vadd.f32 %v814, %v815
    %v817 = vsel %vm618, %v719, 0.0
    %v818 = vadd.f32 %v816, %v817
    %v819 = vsel %vm618, %v720, 0.0
    %v820 = vadd.f32 %v818, %v819
    %v821 = vsel %vm618, %v721, 0.0
    %v822 = vadd.f32 %v820, %v821
    %v823 = vsel %vm618, %v722, 0.0
    %v824 = vadd.f32 %v822, %v823
    %v825 = vsel %vm618, %v723, 0.0
    %v826 = vadd.f32 %v824, %v825
    %v827 = vsel %vm618, %v724, 0.0
    %v828 = vadd.f32 %v826, %v827
    %v829 = vsel %vm618, %v725, 0.0
    %v830 = vadd.f32 %v828, %v829
    %v831 = vsel %vm618, %v726, 0.0
    %v832 = vadd.f32 %v830, %v831
    %v833 = vsel %vm618, %v727, 0.0
    %v834 = vadd.f32 %v832, %v833
    %v835 = vsel %vm618, %v728, 0.0
    %v836 = vadd.f32 %v834, %v835
    %v837 = vsel %vm618, %v729, 0.0
    %v838 = vadd.f32 %v836, %v837
    %v839 = vsel %vm618, %v730, 0.0
    %v840 = vadd.f32 %v838, %v839
    %v841 = vsel %vm618, %v731, 0.0
    %v842 = vadd.f32 %v840, %v841
    %v843 = vsel %vm618, %v732, 0.0
    %v844 = vadd.f32 %v842, %v843
    %v845 = vsel %vm618, %v733, 0.0
    %v846 = vadd.f32 %v844, %v845
    %v847 = vsel %vm618, %v734, 0.0
    %v848 = vadd.f32 %v846, %v847
    %v849 = vsel %vm618, %v735, 0.0
    %v850 = vadd.f32 %v848, %v849
    %v851 = vsel %vm618, %v736, 0.0
    %v852 = vadd.f32 %v850, %v851
    %v853 = vsel %vm618, %v737, 0.0
    %v854 = vadd.f32 %v852, %v853
    %v855 = vsel %vm618, %v738, 0.0
    %v856 = vadd.f32 %v854, %v855
    %v857 = vsel %vm678, %v739, 0.0
    %v858 = vadd.f32 %v856, %v857
    %v859 = vrot.slane %v858, 4
    %v860 = vadd.f32 %v858, %v859
    %v861 = vrot.slane %v860, 2
    %v862 = vadd.f32 %v860, %v861
    %v863 = vrot.slane %v862, 1
    %v864 = vadd.f32 %v862, %v863
    %v865 = vmul.f32 %v680, %v680
    %v866 = vmul.f32 %v681, %v681
    %v867 = vmul.f32 %v682, %v682
    %v868 = vmul.f32 %v683, %v683
    %v869 = vmul.f32 %v684, %v684
    %v870 = vmul.f32 %v685, %v685
    %v871 = vmul.f32 %v686, %v686
    %v872 = vmul.f32 %v687, %v687
    %v873 = vmul.f32 %v688, %v688
    %v874 = vmul.f32 %v689, %v689
    %v875 = vmul.f32 %v690, %v690
    %v876 = vmul.f32 %v691, %v691
    %v877 = vmul.f32 %v692, %v692
    %v878 = vmul.f32 %v693, %v693
    %v879 = vmul.f32 %v694, %v694
    %v880 = vmul.f32 %v695, %v695
    %v881 = vmul.f32 %v696, %v696
    %v882 = vmul.f32 %v697, %v697
    %v883 = vmul.f32 %v698, %v698
    %v884 = vmul.f32 %v699, %v699
    %v885 = vmul.f32 %v700, %v700
    %v886 = vmul.f32 %v701, %v701
    %v887 = vmul.f32 %v702, %v702
    %v888 = vmul.f32 %v703, %v703
    %v889 = vmul.f32 %v704, %v704
    %v890 = vmul.f32 %v705, %v705
    %v891 = vmul.f32 %v706, %v706
    %v892 = vmul.f32 %v707, %v707
    %v893 = vmul.f32 %v708, %v708
    %v894 = vmul.f32 %v709, %v709
    %v895 = vmul.f32 %v710, %v710
    %v896 = vmul.f32 %v711, %v711
    %v897 = vmul.f32 %v712, %v712
    %v898 = vmul.f32 %v713, %v713
    %v899 = vmul.f32 %v714, %v714
    %v900 = vmul.f32 %v715, %v715
    %v901 = vmul.f32 %v716, %v716
    %v902 = vmul.f32 %v717, %v717
    %v903 = vmul.f32 %v718, %v718
    %v904 = vmul.f32 %v719, %v719
    %v905 = vmul.f32 %v720, %v720
    %v906 = vmul.f32 %v721, %v721
    %v907 = vmul.f32 %v722, %v722
    %v908 = vmul.f32 %v723, %v723
    %v909 = vmul.f32 %v724, %v724
    %v910 = vmul.f32 %v725, %v725
    %v911 = vmul.f32 %v726, %v726
    %v912 = vmul.f32 %v727, %v727
    %v913 = vmul.f32 %v728, %v728
    %v914 = vmul.f32 %v729, %v729
    %v915 = vmul.f32 %v730, %v730
    %v916 = vmul.f32 %v731, %v731
    %v917 = vmul.f32 %v732, %v732
    %v918 = vmul.f32 %v733, %v733
    %v919 = vmul.f32 %v734, %v734
    %v920 = vmul.f32 %v735, %v735
    %v921 = vmul.f32 %v736, %v736
    %v922 = vmul.f32 %v737, %v737
    %v923 = vmul.f32 %v738, %v738
    %v924 = vmul.f32 %v739, %v739
    %v925 = vsel %vm618, %v865, 0.0
    %v926 = vsel %vm618, %v866, 0.0
    %v927 = vadd.f32 %v925, %v926
    %v928 = vsel %vm618, %v867, 0.0
    %v929 = vadd.f32 %v927, %v928
    %v930 = vsel %vm618, %v868, 0.0
    %v931 = vadd.f32 %v929, %v930
    %v932 = vsel %vm618, %v869, 0.0
    %v933 = vadd.f32 %v931, %v932
    %v934 = vsel %vm618, %v870, 0.0
    %v935 = vadd.f32 %v933, %v934
    %v936 = vsel %vm618, %v871, 0.0
    %v937 = vadd.f32 %v935, %v936
    %v938 = vsel %vm618, %v872, 0.0
    %v939 = vadd.f32 %v937, %v938
    %v940 = vsel %vm618, %v873, 0.0
    %v941 = vadd.f32 %v939, %v940
    %v942 = vsel %vm618, %v874, 0.0
    %v943 = vadd.f32 %v941, %v942
    %v944 = vsel %vm618, %v875, 0.0
    %v945 = vadd.f32 %v943, %v944
    %v946 = vsel %vm618, %v876, 0.0
    %v947 = vadd.f32 %v945, %v946
    %v948 = vsel %vm618, %v877, 0.0
    %v949 = vadd.f32 %v947, %v948
    %v950 = vsel %vm618, %v878, 0.0
    %v951 = vadd.f32 %v949, %v950
    %v952 = vsel %vm618, %v879, 0.0
    %v953 = vadd.f32 %v951, %v952
    %v954 = vsel %vm618, %v880, 0.0
    %v955 = vadd.f32 %v953, %v954
    %v956 = vsel %vm618, %v881, 0.0
    %v957 = vadd.f32 %v955, %v956
    %v958 = vsel %vm618, %v882, 0.0
    %v959 = vadd.f32 %v957, %v958
    %v960 = vsel %vm618, %v883, 0.0
    %v961 = vadd.f32 %v959, %v960
    %v962 = vsel %vm618, %v884, 0.0
    %v963 = vadd.f32 %v961, %v962
    %v964 = vsel %vm618, %v885, 0.0
    %v965 = vadd.f32 %v963, %v964
    %v966 = vsel %vm618, %v886, 0.0
    %v967 = vadd.f32 %v965, %v966
    %v968 = vsel %vm618, %v887, 0.0
    %v969 = vadd.f32 %v967, %v968
    %v970 = vsel %vm618, %v888, 0.0
    %v971 = vadd.f32 %v969, %v970
    %v972 = vsel %vm618, %v889, 0.0
    %v973 = vadd.f32 %v971, %v972
    %v974 = vsel %vm618, %v890, 0.0
    %v975 = vadd.f32 %v973, %v974
    %v976 = vsel %vm618, %v891, 0.0
    %v977 = vadd.f32 %v975, %v976
    %v978 = vsel %vm618, %v892, 0.0
    %v979 = vadd.f32 %v977, %v978
    %v980 = vsel %vm618, %v893, 0.0
    %v981 = vadd.f32 %v979, %v980
    %v982 = vsel %vm618, %v894, 0.0
    %v983 = vadd.f32 %v981, %v982
    %v984 = vsel %vm618, %v895, 0.0
    %v985 = vadd.f32 %v983, %v984
    %v986 = vsel %vm618, %v896, 0.0
    %v987 = vadd.f32 %v985, %v986
    %v988 = vsel %vm618, %v897, 0.0
    %v989 = vadd.f32 %v987, %v988
    %v990 = vsel %vm618, %v898, 0.0
    %v991 = vadd.f32 %v989, %v990
    %v992 = vsel %vm618, %v899, 0.0
    %v993 = vadd.f32 %v991, %v992
    %v994 = vsel %vm618, %v900, 0.0
    %v995 = vadd.f32 %v993, %v994
    %v996 = vsel %vm618, %v901, 0.0
    %v997 = vadd.f32 %v995, %v996
    %v998 = vsel %vm618, %v902, 0.0
    %v999 = vadd.f32 %v997, %v998
    %v1000 = vsel %vm618, %v903, 0.0
    %v1001 = vadd.f32 %v999, %v1000
    %v1002 = vsel %vm618, %v904, 0.0
    %v1003 = vadd.f32 %v1001, %v1002
    %v1004 = vsel %vm618, %v905, 0.0
    %v1005 = vadd.f32 %v1003, %v1004
    %v1006 = vsel %vm618, %v906, 0.0
    %v1007 = vadd.f32 %v1005, %v1006
    %v1008 = vsel %vm618, %v907, 0.0
    %v1009 = vadd.f32 %v1007, %v1008
    %v1010 = vsel %vm618, %v908, 0.0
    %v1011 = vadd.f32 %v1009, %v1010
    %v1012 = vsel %vm618, %v909, 0.0
    %v1013 = vadd.f32 %v1011, %v1012
    %v1014 = vsel %vm618, %v910, 0.0
    %v1015 = vadd.f32 %v1013, %v1014
    %v1016 = vsel %vm618, %v911, 0.0
    %v1017 = vadd.f32 %v1015, %v1016
    %v1018 = vsel %vm618, %v912, 0.0
    %v1019 = vadd.f32 %v1017, %v1018
    %v1020 = vsel %vm618, %v913, 0.0
    %v1021 = vadd.f32 %v1019, %v1020
    %v1022 = vsel %vm618, %v914, 0.0
    %v1023 = vadd.f32 %v1021, %v1022
    %v1024 = vsel %vm618, %v915, 0.0
    %v1025 = vadd.f32 %v1023, %v1024
    %v1026 = vsel %vm618, %v916, 0.0
    %v1027 = vadd.f32 %v1025, %v1026
    %v1028 = vsel %vm618, %v917, 0.0
    %v1029 = vadd.f32 %v1027, %v1028
    %v1030 = vsel %vm618, %v918, 0.0
    %v1031 = vadd.f32 %v1029, %v1030
    %v1032 = vsel %vm618, %v919, 0.0
    %v1033 = vadd.f32 %v1031, %v1032
    %v1034 = vsel %vm618, %v920, 0.0
    %v1035 = vadd.f32 %v1033, %v1034
    %v1036 = vsel %vm618, %v921, 0.0
    %v1037 = vadd.f32 %v1035, %v1036
    %v1038 = vsel %vm618, %v922, 0.0
    %v1039 = vadd.f32 %v1037, %v1038
    %v1040 = vsel %vm618, %v923, 0.0
    %v1041 = vadd.f32 %v1039, %v1040
    %v1042 = vsel %vm678, %v924, 0.0
    %v1043 = vadd.f32 %v1041, %v1042
    %v1044 = vrot.slane %v1043, 4
    %v1045 = vadd.f32 %v1043, %v1044
    %v1046 = vrot.slane %v1045, 2
    %v1047 = vadd.f32 %v1045, %v1046
    %v1048 = vrot.slane %v1047, 1
    %v1049 = vadd.f32 %v1047, %v1048
    %v1050 = vmul.f32 %v864, 0.0025510204
    %v1051 = vmul.f32 %v1049, 0.0025510204
    %v1052 = vmul.f32 %v1050, %v1050
    %v1053 = vsub.f32 %v1051, %v1052
    %v1054 = vmax.f32 %v1053, 0.0
    %v1055 = vld [vmem:[%s5] sm:$0x1]
    %v1056 = vadd.f32 %v1054, 1e-05
    %v1057 = vrsqrt.pop %v1056
    %v1058 = vmul.f32 %v1055, %v1057
    %v1059 = vld [vmem:[%s6] sm:$0x1]
    %v1060 = vmul.f32 %v1050, %v1058
    %v1061 = vsub.f32 %v1059, %v1060
    %v1062 = vlaneseq
    %v1063 = vshrl.u32 %v1062, 7
    %v1064 = vsub.s32 0, %v1063
    %v1065 = vrot.slane %v1058, %v1064
    %v1066 = vmul.f32 %v680, %v1065
    %v1067 = vmul.f32 %v681, %v1065
    %v1068 = vmul.f32 %v682, %v1065
    %v1069 = vmul.f32 %v683, %v1065
    %v1070 = vmul.f32 %v684, %v1065
    %v1071 = vmul.f32 %v685, %v1065
    %v1072 = vmul.f32 %v686, %v1065
    %v1073 = vmul.f32 %v687, %v1065
    %v1074 = vmul.f32 %v688, %v1065
    %v1075 = vmul.f32 %v689, %v1065
    %v1076 = vmul.f32 %v690, %v1065
    %v1077 = vmul.f32 %v691, %v1065
    %v1078 = vmul.f32 %v692, %v1065
    %v1079 = vmul.f32 %v693, %v1065
    %v1080 = vmul.f32 %v694, %v1065
    %v1081 = vmul.f32 %v695, %v1065
    %v1082 = vmul.f32 %v696, %v1065
    %v1083 = vmul.f32 %v697, %v1065
    %v1084 = vmul.f32 %v698, %v1065
    %v1085 = vmul.f32 %v699, %v1065
    %v1086 = vmul.f32 %v700, %v1065
    %v1087 = vmul.f32 %v701, %v1065
    %v1088 = vmul.f32 %v702, %v1065
    %v1089 = vmul.f32 %v703, %v1065
    %v1090 = vmul.f32 %v704, %v1065
    %v1091 = vmul.f32 %v705, %v1065
    %v1092 = vmul.f32 %v706, %v1065
    %v1093 = vmul.f32 %v707, %v1065
    %v1094 = vmul.f32 %v708, %v1065
    %v1095 = vmul.f32 %v709, %v1065
    %v1096 = vmul.f32 %v710, %v1065
    %v1097 = vmul.f32 %v711, %v1065
    %v1098 = vmul.f32 %v712, %v1065
    %v1099 = vmul.f32 %v713, %v1065
    %v1100 = vmul.f32 %v714, %v1065
    %v1101 = vmul.f32 %v715, %v1065
    %v1102 = vmul.f32 %v716, %v1065
    %v1103 = vmul.f32 %v717, %v1065
    %v1104 = vmul.f32 %v718, %v1065
    %v1105 = vmul.f32 %v719, %v1065
    %v1106 = vmul.f32 %v720, %v1065
    %v1107 = vmul.f32 %v721, %v1065
    %v1108 = vmul.f32 %v722, %v1065
    %v1109 = vmul.f32 %v723, %v1065
    %v1110 = vmul.f32 %v724, %v1065
    %v1111 = vmul.f32 %v725, %v1065
    %v1112 = vmul.f32 %v726, %v1065
    %v1113 = vmul.f32 %v727, %v1065
    %v1114 = vmul.f32 %v728, %v1065
    %v1115 = vmul.f32 %v729, %v1065
    %v1116 = vmul.f32 %v730, %v1065
    %v1117 = vmul.f32 %v731, %v1065
    %v1118 = vmul.f32 %v732, %v1065
    %v1119 = vmul.f32 %v733, %v1065
    %v1120 = vmul.f32 %v734, %v1065
    %v1121 = vmul.f32 %v735, %v1065
    %v1122 = vmul.f32 %v736, %v1065
    %v1123 = vmul.f32 %v737, %v1065
    %v1124 = vmul.f32 %v738, %v1065
    %v1125 = vmul.f32 %v739, %v1065
    %v1126 = vlaneseq
    %v1127 = vshrl.u32 %v1126, 7
    %v1128 = vsub.s32 0, %v1127
    %v1129 = vrot.slane %v1061, %v1128
    %v1130 = vadd.f32 %v1066, %v1129
    %v1131 = vadd.f32 %v1067, %v1129
    %v1132 = vadd.f32 %v1068, %v1129
    %v1133 = vadd.f32 %v1069, %v1129
    %v1134 = vadd.f32 %v1070, %v1129
    %v1135 = vadd.f32 %v1071, %v1129
    %v1136 = vadd.f32 %v1072, %v1129
    %v1137 = vadd.f32 %v1073, %v1129
    %v1138 = vadd.f32 %v1074, %v1129
    %v1139 = vadd.f32 %v1075, %v1129
    %v1140 = vadd.f32 %v1076, %v1129
    %v1141 = vadd.f32 %v1077, %v1129
    %v1142 = vadd.f32 %v1078, %v1129
    %v1143 = vadd.f32 %v1079, %v1129
    %v1144 = vadd.f32 %v1080, %v1129
    %v1145 = vadd.f32 %v1081, %v1129
    %v1146 = vadd.f32 %v1082, %v1129
    %v1147 = vadd.f32 %v1083, %v1129
    %v1148 = vadd.f32 %v1084, %v1129
    %v1149 = vadd.f32 %v1085, %v1129
    %v1150 = vadd.f32 %v1086, %v1129
    %v1151 = vadd.f32 %v1087, %v1129
    %v1152 = vadd.f32 %v1088, %v1129
    %v1153 = vadd.f32 %v1089, %v1129
    %v1154 = vadd.f32 %v1090, %v1129
    %v1155 = vadd.f32 %v1091, %v1129
    %v1156 = vadd.f32 %v1092, %v1129
    %v1157 = vadd.f32 %v1093, %v1129
    %v1158 = vadd.f32 %v1094, %v1129
    %v1159 = vadd.f32 %v1095, %v1129
    %v1160 = vadd.f32 %v1096, %v1129
    %v1161 = vadd.f32 %v1097, %v1129
    %v1162 = vadd.f32 %v1098, %v1129
    %v1163 = vadd.f32 %v1099, %v1129
    %v1164 = vadd.f32 %v1100, %v1129
    %v1165 = vadd.f32 %v1101, %v1129
    %v1166 = vadd.f32 %v1102, %v1129
    %v1167 = vadd.f32 %v1103, %v1129
    %v1168 = vadd.f32 %v1104, %v1129
    %v1169 = vadd.f32 %v1105, %v1129
    %v1170 = vadd.f32 %v1106, %v1129
    %v1171 = vadd.f32 %v1107, %v1129
    %v1172 = vadd.f32 %v1108, %v1129
    %v1173 = vadd.f32 %v1109, %v1129
    %v1174 = vadd.f32 %v1110, %v1129
    %v1175 = vadd.f32 %v1111, %v1129
    %v1176 = vadd.f32 %v1112, %v1129
    %v1177 = vadd.f32 %v1113, %v1129
    %v1178 = vadd.f32 %v1114, %v1129
    %v1179 = vadd.f32 %v1115, %v1129
    %v1180 = vadd.f32 %v1116, %v1129
    %v1181 = vadd.f32 %v1117, %v1129
    %v1182 = vadd.f32 %v1118, %v1129
    %v1183 = vadd.f32 %v1119, %v1129
    %v1184 = vadd.f32 %v1120, %v1129
    %v1185 = vadd.f32 %v1121, %v1129
    %v1186 = vadd.f32 %v1122, %v1129
    %v1187 = vadd.f32 %v1123, %v1129
    %v1188 = vadd.f32 %v1124, %v1129
    %v1189 = vadd.f32 %v1125, %v1129
    %v1190 = vmax.f32 %v1130, 0.0
    %v1191 = vmax.f32 %v1131, 0.0
    %v1192 = vmax.f32 %v1132, 0.0
    %v1193 = vmax.f32 %v1133, 0.0
    %v1194 = vmax.f32 %v1134, 0.0
    %v1195 = vmax.f32 %v1135, 0.0
    %v1196 = vmax.f32 %v1136, 0.0
    %v1197 = vmax.f32 %v1137, 0.0
    %v1198 = vmax.f32 %v1138, 0.0
    %v1199 = vmax.f32 %v1139, 0.0
    %v1200 = vmax.f32 %v1140, 0.0
    %v1201 = vmax.f32 %v1141, 0.0
    %v1202 = vmax.f32 %v1142, 0.0
    %v1203 = vmax.f32 %v1143, 0.0
    %v1204 = vmax.f32 %v1144, 0.0
    %v1205 = vmax.f32 %v1145, 0.0
    %v1206 = vmax.f32 %v1146, 0.0
    %v1207 = vmax.f32 %v1147, 0.0
    %v1208 = vmax.f32 %v1148, 0.0
    %v1209 = vmax.f32 %v1149, 0.0
    %v1210 = vmax.f32 %v1150, 0.0
    %v1211 = vmax.f32 %v1151, 0.0
    %v1212 = vmax.f32 %v1152, 0.0
    %v1213 = vmax.f32 %v1153, 0.0
    %v1214 = vmax.f32 %v1154, 0.0
    %v1215 = vmax.f32 %v1155, 0.0
    %v1216 = vmax.f32 %v1156, 0.0
    %v1217 = vmax.f32 %v1157, 0.0
    %v1218 = vmax.f32 %v1158, 0.0
    %v1219 = vmax.f32 %v1159, 0.0
    %v1220 = vmax.f32 %v1160, 0.0
    %v1221 = vmax.f32 %v1161, 0.0
    %v1222 = vmax.f32 %v1162, 0.0
    %v1223 = vmax.f32 %v1163, 0.0
    %v1224 = vmax.f32 %v1164, 0.0
    %v1225 = vmax.f32 %v1165, 0.0
    %v1226 = vmax.f32 %v1166, 0.0
    %v1227 = vmax.f32 %v1167, 0.0
    %v1228 = vmax.f32 %v1168, 0.0
    %v1229 = vmax.f32 %v1169, 0.0
    %v1230 = vmax.f32 %v1170, 0.0
    %v1231 = vmax.f32 %v1171, 0.0
    %v1232 = vmax.f32 %v1172, 0.0
    %v1233 = vmax.f32 %v1173, 0.0
    %v1234 = vmax.f32 %v1174, 0.0
    %v1235 = vmax.f32 %v1175, 0.0
    %v1236 = vmax.f32 %v1176, 0.0
    %v1237 = vmax.f32 %v1177, 0.0
    %v1238 = vmax.f32 %v1178, 0.0
    %v1239 = vmax.f32 %v1179, 0.0
    %v1240 = vmax.f32 %v1180, 0.0
    %v1241 = vmax.f32 %v1181, 0.0
    %v1242 = vmax.f32 %v1182, 0.0
    %v1243 = vmax.f32 %v1183, 0.0
    %v1244 = vmax.f32 %v1184, 0.0
    %v1245 = vmax.f32 %v1185, 0.0
    %v1246 = vmax.f32 %v1186, 0.0
    %v1247 = vmax.f32 %v1187, 0.0
    %v1248 = vmax.f32 %v1188, 0.0
    %v1249 = vmax.f32 %v1189, 0.0
    %1250 = vst.msk [vmem:[#allocation2] sm:$0xff] %vm618, %v1190
    %1251 = vst.msk [vmem:[#allocation2 + $0x8] sm:$0xff] %vm618, %v1191
    %1252 = vst.msk [vmem:[#allocation2 + $0x10] sm:$0xff] %vm618, %v1192
    %1253 = vst.msk [vmem:[#allocation2 + $0x18] sm:$0xff] %vm618, %v1193
    %1254 = vst.msk [vmem:[#allocation2 + $0x20] sm:$0xff] %vm618, %v1194
    %1255 = vst.msk [vmem:[#allocation2 + $0x28] sm:$0xff] %vm618, %v1195
    %1256 = vst.msk [vmem:[#allocation2 + $0x30] sm:$0xff] %vm618, %v1196
    %1257 = vst.msk [vmem:[#allocation2 + $0x38] sm:$0xff] %vm618, %v1197
    %1258 = vst.msk [vmem:[#allocation2 + $0x40] sm:$0xff] %vm618, %v1198
    %1259 = vst.msk [vmem:[#allocation2 + $0x48] sm:$0xff] %vm618, %v1199
    %1260 = vst.msk [vmem:[#allocation2 + $0x50] sm:$0xff] %vm618, %v1200
    %1261 = vst.msk [vmem:[#allocation2 + $0x58] sm:$0xff] %vm618, %v1201
    %1262 = vst.msk [vmem:[#allocation2 + $0x60] sm:$0xff] %vm618, %v1202
    %1263 = vst.msk [vmem:[#allocation2 + $0x68] sm:$0xff] %vm618, %v1203
    %1264 = vst.msk [vmem:[#allocation2 + $0x70] sm:$0xff] %vm618, %v1204
    %1265 = vst.msk [vmem:[#allocation2 + $0x78] sm:$0xff] %vm618, %v1205
    %1266 = vst.msk [vmem:[#allocation2 + $0x80] sm:$0xff] %vm618, %v1206
    %1267 = vst.msk [vmem:[#allocation2 + $0x88] sm:$0xff] %vm618, %v1207
    %1268 = vst.msk [vmem:[#allocation2 + $0x90] sm:$0xff] %vm618, %v1208
    %1269 = vst.msk [vmem:[#allocation2 + $0x98] sm:$0xff] %vm618, %v1209
    %1270 = vst.msk [vmem:[#allocation2 + $0xa0] sm:$0xff] %vm618, %v1210
    %1271 = vst.msk [vmem:[#allocation2 + $0xa8] sm:$0xff] %vm618, %v1211
    %1272 = vst.msk [vmem:[#allocation2 + $0xb0] sm:$0xff] %vm618, %v1212
    %1273 = vst.msk [vmem:[#allocation2 + $0xb8] sm:$0xff] %vm618, %v1213
    %1274 = vst.msk [vmem:[#allocation2 + $0xc0] sm:$0xff] %vm618, %v1214
    %1275 = vst.msk [vmem:[#allocation2 + $0xc8] sm:$0xff] %vm618, %v1215
    %1276 = vst.msk [vmem:[#allocation2 + $0xd0] sm:$0xff] %vm618, %v1216
    %1277 = vst.msk [vmem:[#allocation2 + $0xd8] sm:$0xff] %vm618, %v1217
    %1278 = vst.msk [vmem:[#allocation2 + $0xe0] sm:$0xff] %vm618, %v1218
    %1279 = vst.msk [vmem:[#allocation2 + $0xe8] sm:$0xff] %vm618, %v1219
    %1280 = vst.msk [vmem:[#allocation2 + $0xf0] sm:$0xff] %vm618, %v1220
    %1281 = vst.msk [vmem:[#allocation2 + $0xf8] sm:$0xff] %vm618, %v1221
    %1282 = vst.msk [vmem:[#allocation2 + $0x100] sm:$0xff] %vm618, %v1222
    %1283 = vst.msk [vmem:[#allocation2 + $0x108] sm:$0xff] %vm618, %v1223
    %1284 = vst.msk [vmem:[#allocation2 + $0x110] sm:$0xff] %vm618, %v1224
    %1285 = vst.msk [vmem:[#allocation2 + $0x118] sm:$0xff] %vm618, %v1225
    %1286 = vst.msk [vmem:[#allocation2 + $0x120] sm:$0xff] %vm618, %v1226
    %1287 = vst.msk [vmem:[#allocation2 + $0x128] sm:$0xff] %vm618, %v1227
    %1288 = vst.msk [vmem:[#allocation2 + $0x130] sm:$0xff] %vm618, %v1228
    %1289 = vst.msk [vmem:[#allocation2 + $0x138] sm:$0xff] %vm618, %v1229
    %1290 = vst.msk [vmem:[#allocation2 + $0x140] sm:$0xff] %vm618, %v1230
    %1291 = vst.msk [vmem:[#allocation2 + $0x148] sm:$0xff] %vm618, %v1231
    %1292 = vst.msk [vmem:[#allocation2 + $0x150] sm:$0xff] %vm618, %v1232
    %1293 = vst.msk [vmem:[#allocation2 + $0x158] sm:$0xff] %vm618, %v1233
    %1294 = vst.msk [vmem:[#allocation2 + $0x160] sm:$0xff] %vm618, %v1234
    %1295 = vst.msk [vmem:[#allocation2 + $0x168] sm:$0xff] %vm618, %v1235
    %1296 = vst.msk [vmem:[#allocation2 + $0x170] sm:$0xff] %vm618, %v1236
    %1297 = vst.msk [vmem:[#allocation2 + $0x178] sm:$0xff] %vm618, %v1237
    %1298 = vst.msk [vmem:[#allocation2 + $0x180] sm:$0xff] %vm618, %v1238
    %1299 = vst.msk [vmem:[#allocation2 + $0x188] sm:$0xff] %vm618, %v1239
    %1300 = vst.msk [vmem:[#allocation2 + $0x190] sm:$0xff] %vm618, %v1240
    %1301 = vst.msk [vmem:[#allocation2 + $0x198] sm:$0xff] %vm618, %v1241
    %1302 = vst.msk [vmem:[#allocation2 + $0x1a0] sm:$0xff] %vm618, %v1242
    %1303 = vst.msk [vmem:[#allocation2 + $0x1a8] sm:$0xff] %vm618, %v1243
    %1304 = vst.msk [vmem:[#allocation2 + $0x1b0] sm:$0xff] %vm618, %v1244
    %1305 = vst.msk [vmem:[#allocation2 + $0x1b8] sm:$0xff] %vm618, %v1245
    %1306 = vst.msk [vmem:[#allocation2 + $0x1c0] sm:$0xff] %vm618, %v1246
    %1307 = vst.msk [vmem:[#allocation2 + $0x1c8] sm:$0xff] %vm618, %v1247
    %1308 = vst.msk [vmem:[#allocation2 + $0x1d0] sm:$0xff] %vm618, %v1248
    %1309 = vst.msk [vmem:[#allocation2 + $0x1d8] sm:$0x3f] %vm678, %v1249
    %v1310 = vld [vmem:[#allocation2] ss:$2 sm:$0x7f]
    %s1311 = scalar_lea.vmem [#allocation2], 1
    %v1312 = vld [vmem:[%s1311] ss:$2 sm:$0x7f]
    %s1313 = scalar_lea.vmem [#allocation2], 16
    %v1314 = vld [vmem:[%s1313] ss:$2 sm:$0x7f]
    %s1315 = scalar_lea.vmem [#allocation2], 17
    %v1316 = vld [vmem:[%s1315] ss:$2 sm:$0x7f]
    %v1317 = vmax.f32 %v1310, %v1312
    %v1318 = vmax.f32 %v1314, %v1316
    %v1319 = vmax.f32 %v1317, %v1318
    %vm1320 = vcmask 522240
    %1321 = vst.msk [vmem:[#allocation3] sm:$0x7f] %vm1320, %v1319
    %s1322 = scalar_lea.vmem [#allocation2], 32
    %v1323 = vld [vmem:[%s1322] ss:$2 sm:$0x7f]
    %s1324 = scalar_lea.vmem [#allocation2], 33
    %v1325 = vld [vmem:[%s1324] ss:$2 sm:$0x7f]
    %s1326 = scalar_lea.vmem [#allocation2], 48
    %v1327 = vld [vmem:[%s1326] ss:$2 sm:$0x7f]
    %s1328 = scalar_lea.vmem [#allocation2], 49
    %v1329 = vld [vmem:[%s1328] ss:$2 sm:$0x7f]
    %v1330 = vmax.f32 %v1323, %v1325
    %v1331 = vmax.f32 %v1327, %v1329
    %v1332 = vmax.f32 %v1330, %v1331
    %1333 = vst.msk [vmem:[#allocation3 + $0x7] sm:$0x7f] %vm1320, %v1332
    %s1334 = scalar_lea.vmem [#allocation2], 64
    %v1335 = vld [vmem:[%s1334] ss:$2 sm:$0x7f]
    %s1336 = scalar_lea.vmem [#allocation2], 65
    %v1337 = vld [vmem:[%s1336] ss:$2 sm:$0x7f]
    %s1338 = scalar_lea.vmem [#allocation2], 80
    %v1339 = vld [vmem:[%s1338] ss:$2 sm:$0x7f]
    %s1340 = scalar_lea.vmem [#allocation2], 81
    %v1341 = vld [vmem:[%s1340] ss:$2 sm:$0x7f]
    %v1342 = vmax.f32 %v1335, %v1337
    %v1343 = vmax.f32 %v1339, %v1341
    %v1344 = vmax.f32 %v1342, %v1343
    %1345 = vst.msk [vmem:[#allocation3 + $0xe] sm:$0x7f] %vm1320, %v1344
    %s1346 = scalar_lea.vmem [#allocation2], 96
    %v1347 = vld [vmem:[%s1346] ss:$2 sm:$0x7f]
    %s1348 = scalar_lea.vmem [#allocation2], 97
    %v1349 = vld [vmem:[%s1348] ss:$2 sm:$0x7f]
    %s1350 = scalar_lea.vmem [#allocation2], 112
    %v1351 = vld [vmem:[%s1350] ss:$2 sm:$0x7f]
    %s1352 = scalar_lea.vmem [#allocation2], 113
    %v1353 = vld [vmem:[%s1352] ss:$2 sm:$0x7f]
    %v1354 = vmax.f32 %v1347, %v1349
    %v1355 = vmax.f32 %v1351, %v1353
    %v1356 = vmax.f32 %v1354, %v1355
    %1357 = vst.msk [vmem:[#allocation3 + $0x15] sm:$0x7f] %vm1320, %v1356
    %s1358 = scalar_lea.vmem [#allocation2], 128
    %v1359 = vld [vmem:[%s1358] ss:$2 sm:$0x7f]
    %s1360 = scalar_lea.vmem [#allocation2], 129
    %v1361 = vld [vmem:[%s1360] ss:$2 sm:$0x7f]
    %s1362 = scalar_lea.vmem [#allocation2], 144
    %v1363 = vld [vmem:[%s1362] ss:$2 sm:$0x7f]
    %s1364 = scalar_lea.vmem [#allocation2], 145
    %v1365 = vld [vmem:[%s1364] ss:$2 sm:$0x7f]
    %v1366 = vmax.f32 %v1359, %v1361
    %v1367 = vmax.f32 %v1363, %v1365
    %v1368 = vmax.f32 %v1366, %v1367
    %1369 = vst.msk [vmem:[#allocation3 + $0x1c] sm:$0x7f] %vm1320, %v1368
    %s1370 = scalar_lea.vmem [#allocation2], 160
    %v1371 = vld [vmem:[%s1370] ss:$2 sm:$0x7f]
    %s1372 = scalar_lea.vmem [#allocation2], 161
    %v1373 = vld [vmem:[%s1372] ss:$2 sm:$0x7f]
    %s1374 = scalar_lea.vmem [#allocation2], 176
    %v1375 = vld [vmem:[%s1374] ss:$2 sm:$0x7f]
    %s1376 = scalar_lea.vmem [#allocation2], 177
    %v1377 = vld [vmem:[%s1376] ss:$2 sm:$0x7f]
    %v1378 = vmax.f32 %v1371, %v1373
    %v1379 = vmax.f32 %v1375, %v1377
    %v1380 = vmax.f32 %v1378, %v1379
    %1381 = vst.msk [vmem:[#allocation3 + $0x23] sm:$0x7f] %vm1320, %v1380
    %s1382 = scalar_lea.vmem [#allocation2], 192
    %v1383 = vld [vmem:[%s1382] ss:$2 sm:$0x7f]
    %s1384 = scalar_lea.vmem [#allocation2], 193
    %v1385 = vld [vmem:[%s1384] ss:$2 sm:$0x7f]
    %s1386 = scalar_lea.vmem [#allocation2], 208
    %v1387 = vld [vmem:[%s1386] ss:$2 sm:$0x7f]
    %s1388 = scalar_lea.vmem [#allocation2], 209
    %v1389 = vld [vmem:[%s1388] ss:$2 sm:$0x7f]
    %v1390 = vmax.f32 %v1383, %v1385
    %v1391 = vmax.f32 %v1387, %v1389
    %v1392 = vmax.f32 %v1390, %v1391
    %1393 = vst.msk [vmem:[#allocation3 + $0x2a] sm:$0x7f] %vm1320, %v1392
    %s1394 = scalar_lea.vmem [#allocation2], 256
    %v1395 = vld [vmem:[%s1394] ss:$2 sm:$0x7f]
    %s1396 = scalar_lea.vmem [#allocation2], 257
    %v1397 = vld [vmem:[%s1396] ss:$2 sm:$0x7f]
    %s1398 = scalar_lea.vmem [#allocation2], 272
    %v1399 = vld [vmem:[%s1398] ss:$2 sm:$0x7f]
    %s1400 = scalar_lea.vmem [#allocation2], 273
    %v1401 = vld [vmem:[%s1400] ss:$2 sm:$0x7f]
    %v1402 = vmax.f32 %v1395, %v1397
    %v1403 = vmax.f32 %v1399, %v1401
    %v1404 = vmax.f32 %v1402, %v1403
    %1405 = vst.msk [vmem:[#allocation3 + $0x31] sm:$0x7f] %vm1320, %v1404
    %s1406 = scalar_lea.vmem [#allocation2], 288
    %v1407 = vld [vmem:[%s1406] ss:$2 sm:$0x7f]
    %s1408 = scalar_lea.vmem [#allocation2], 289
    %v1409 = vld [vmem:[%s1408] ss:$2 sm:$0x7f]
    %s1410 = scalar_lea.vmem [#allocation2], 304
    %v1411 = vld [vmem:[%s1410] ss:$2 sm:$0x7f]
    %s1412 = scalar_lea.vmem [#allocation2], 305
    %v1413 = vld [vmem:[%s1412] ss:$2 sm:$0x7f]
    %v1414 = vmax.f32 %v1407, %v1409
    %v1415 = vmax.f32 %v1411, %v1413
    %v1416 = vmax.f32 %v1414, %v1415
    %1417 = vst.msk [vmem:[#allocation3 + $0x38] sm:$0x7f] %vm1320, %v1416
    %s1418 = scalar_lea.vmem [#allocation2], 320
    %v1419 = vld [vmem:[%s1418] ss:$2 sm:$0x7f]
    %s1420 = scalar_lea.vmem [#allocation2], 321
    %v1421 = vld [vmem:[%s1420] ss:$2 sm:$0x7f]
    %s1422 = scalar_lea.vmem [#allocation2], 336
    %v1423 = vld [vmem:[%s1422] ss:$2 sm:$0x7f]
    %s1424 = scalar_lea.vmem [#allocation2], 337
    %v1425 = vld [vmem:[%s1424] ss:$2 sm:$0x7f]
    %v1426 = vmax.f32 %v1419, %v1421
    %v1427 = vmax.f32 %v1423, %v1425
    %v1428 = vmax.f32 %v1426, %v1427
    %1429 = vst.msk [vmem:[#allocation3 + $0x3f] sm:$0x7f] %vm1320, %v1428
    %s1430 = scalar_lea.vmem [#allocation2], 352
    %v1431 = vld [vmem:[%s1430] ss:$2 sm:$0x7f]
    %s1432 = scalar_lea.vmem [#allocation2], 353
    %v1433 = vld [vmem:[%s1432] ss:$2 sm:$0x7f]
    %s1434 = scalar_lea.vmem [#allocation2], 368
    %v1435 = vld [vmem:[%s1434] ss:$2 sm:$0x7f]
    %s1436 = scalar_lea.vmem [#allocation2], 369
    %v1437 = vld [vmem:[%s1436] ss:$2 sm:$0x7f]
    %v1438 = vmax.f32 %v1431, %v1433
    %v1439 = vmax.f32 %v1435, %v1437
    %v1440 = vmax.f32 %v1438, %v1439
    %1441 = vst.msk [vmem:[#allocation3 + $0x46] sm:$0x7f] %vm1320, %v1440
    %s1442 = scalar_lea.vmem [#allocation2], 384
    %v1443 = vld [vmem:[%s1442] ss:$2 sm:$0x7f]
    %s1444 = scalar_lea.vmem [#allocation2], 385
    %v1445 = vld [vmem:[%s1444] ss:$2 sm:$0x7f]
    %s1446 = scalar_lea.vmem [#allocation2], 400
    %v1447 = vld [vmem:[%s1446] ss:$2 sm:$0x7f]
    %s1448 = scalar_lea.vmem [#allocation2], 401
    %v1449 = vld [vmem:[%s1448] ss:$2 sm:$0x7f]
    %v1450 = vmax.f32 %v1443, %v1445
    %v1451 = vmax.f32 %v1447, %v1449
    %v1452 = vmax.f32 %v1450, %v1451
    %1453 = vst.msk [vmem:[#allocation3 + $0x4d] sm:$0x7f] %vm1320, %v1452
    %s1454 = scalar_lea.vmem [#allocation2], 416
    %v1455 = vld [vmem:[%s1454] ss:$2 sm:$0x7f]
    %s1456 = scalar_lea.vmem [#allocation2], 417
    %v1457 = vld [vmem:[%s1456] ss:$2 sm:$0x7f]
    %s1458 = scalar_lea.vmem [#allocation2], 432
    %v1459 = vld [vmem:[%s1458] ss:$2 sm:$0x7f]
    %s1460 = scalar_lea.vmem [#allocation2], 433
    %v1461 = vld [vmem:[%s1460] ss:$2 sm:$0x7f]
    %v1462 = vmax.f32 %v1455, %v1457
    %v1463 = vmax.f32 %v1459, %v1461
    %v1464 = vmax.f32 %v1462, %v1463
    %1465 = vst.msk [vmem:[#allocation3 + $0x54] sm:$0x7f] %vm1320, %v1464
    %s1466 = scalar_lea.vmem [#allocation2], 448
    %v1467 = vld [vmem:[%s1466] ss:$2 sm:$0x7f]
    %s1468 = scalar_lea.vmem [#allocation2], 449
    %v1469 = vld [vmem:[%s1468] ss:$2 sm:$0x7f]
    %s1470 = scalar_lea.vmem [#allocation2], 464
    %v1471 = vld [vmem:[%s1470] ss:$2 sm:$0x7f]
    %s1472 = scalar_lea.vmem [#allocation2], 465
    %v1473 = vld [vmem:[%s1472] ss:$2 sm:$0x7f]
    %v1474 = vmax.f32 %v1467, %v1469
    %v1475 = vmax.f32 %v1471, %v1473
    %v1476 = vmax.f32 %v1474, %v1475
    %1477 = vst.msk [vmem:[#allocation3 + $0x5b] sm:$0x7f] %vm1320, %v1476
    %v1478 = vld [vmem:[#allocation3] sm:$0xff]
    %v1479 = vld [vmem:[#allocation3 + $0x8] sm:$0xff]
    %v1480 = vld [vmem:[#allocation3 + $0x10] sm:$0xff]
    %v1481 = vld [vmem:[#allocation3 + $0x18] sm:$0xff]
    %v1482 = vld [vmem:[#allocation3 + $0x20] sm:$0xff]
    %v1483 = vld [vmem:[#allocation3 + $0x28] sm:$0xff]
    %v1484 = vld [vmem:[#allocation3 + $0x30] sm:$0xff]
    %v1485 = vld [vmem:[#allocation3 + $0x38] sm:$0xff]
    %v1486 = vld [vmem:[#allocation3 + $0x40] sm:$0xff]
    %v1487 = vld [vmem:[#allocation3 + $0x48] sm:$0xff]
    %v1488 = vld [vmem:[#allocation3 + $0x50] sm:$0x3]
    %v1489 = vpack.c.bf16 %v1479, %v1478
    %v1490 = vpack.c.bf16 %v1481, %v1480
    %v1491 = vpack.c.bf16 %v1483, %v1482
    %v1492 = vpack.c.bf16 %v1485, %v1484
    %v1493 = vpack.c.bf16 %v1487, %v1486
    %v1494 = vpack.c.bf16 %v1488, %v1488
    %v1495 = vld [vmem:[%s2] sm:$0xf]
    %v1496 = vld [vmem:[%s2 + $0x4] sm:$0xf]
    %v1497 = vld [vmem:[%s2 + $0x8] sm:$0xf]
    %v1498 = vld [vmem:[%s2 + $0xc] sm:$0xf]
    %v1499 = vld [vmem:[%s2 + $0x10] sm:$0xf]
    %v1500 = vld [vmem:[%s2 + $0x14] sm:$0xf]
    %v1501 = vld [vmem:[%s2 + $0x18] sm:$0xf]
    %v1502 = vld [vmem:[%s2 + $0x1c] sm:$0xf]
    %v1503 = vld [vmem:[#allocation3 + $0x1] sm:$0xff]
    %v1504 = vld [vmem:[#allocation3 + $0x9] sm:$0xff]
    %v1505 = vld [vmem:[#allocation3 + $0x11] sm:$0xff]
    %v1506 = vld [vmem:[#allocation3 + $0x19] sm:$0xff]
    %v1507 = vld [vmem:[#allocation3 + $0x21] sm:$0xff]
    %v1508 = vld [vmem:[#allocation3 + $0x29] sm:$0xff]
    %v1509 = vld [vmem:[#allocation3 + $0x31] sm:$0xff]
    %v1510 = vld [vmem:[#allocation3 + $0x39] sm:$0xff]
    %v1511 = vld [vmem:[#allocation3 + $0x41] sm:$0xff]
    %v1512 = vld [vmem:[#allocation3 + $0x49] sm:$0xff]
    %v1513 = vld [vmem:[#allocation3 + $0x51] sm:$0x3]
    %v1514 = vpack.c.bf16 %v1504, %v1503
    %v1515 = vpack.c.bf16 %v1506, %v1505
    %v1516 = vpack.c.bf16 %v1508, %v1507
    %v1517 = vpack.c.bf16 %v1510, %v1509
    %v1518 = vpack.c.bf16 %v1512, %v1511
    %v1519 = vpack.c.bf16 %v1513, %v1513
    %s1520 = scalar_lea.vmem %s2, 32
    %v1521 = vld [vmem:[%s1520] sm:$0xf]
    %v1522 = vld [vmem:[%s1520 + $0x4] sm:$0xf]
    %v1523 = vld [vmem:[%s1520 + $0x8] sm:$0xf]
    %v1524 = vld [vmem:[%s1520 + $0xc] sm:$0xf]
    %v1525 = vld [vmem:[%s1520 + $0x10] sm:$0xf]
    %v1526 = vld [vmem:[%s1520 + $0x14] sm:$0xf]
    %v1527 = vld [vmem:[%s1520 + $0x18] sm:$0xf]
    %v1528 = vld [vmem:[%s1520 + $0x1c] sm:$0xf]
    %v1537 = vunpack.c.l.b16 %v1521
    %v1538 = vunpack.c.l.b16 %v1522
    %v1539 = vunpack.c.l.b16 %v1523
    %v1540 = vunpack.c.l.b16 %v1524
    %v1541 = vunpack.c.l.b16 %v1525
    %v1542 = vunpack.c.l.b16 %v1526
    %v1543 = vunpack.c.l.b16 %v1527
    %v1544 = vunpack.c.l.b16 %v1528
    %v1545 = vpack.c.b16 %v1538, %v1537
    %v1546 = vpack.c.b16 %v1540, %v1539
    %v1547 = vpack.c.b16 %v1542, %v1541
    %v1548 = vpack.c.b16 %v1544, %v1543
    %v1554 = vsel %vm618, %v1514, 0
    %v1557 = vsel %vm618, %v1515, 0
    %v1560 = vsel %vm618, %v1516, 0
    %v1563 = vsel %vm618, %v1517, 0
    %v1566 = vsel %vm618, %v1518, 0
    %v1569 = vsel %vm618, %v1519, 0
    %1571 = vmatprep.subr.bf16.mxu0 0
    %1572 = vmatpush1.bf16.msra.mxu0 %v1545
    %1573 = vmatprep.subr.bf16.mxu0 0
    %1574 = vmatpush1.bf16.msra.mxu0 %v1546
    %1575 = vmatprep.subr.bf16.mxu0 0
    %1576 = vmatpush1.bf16.msra.mxu0 %v1547
    %1577 = vmatprep.subr.bf16.mxu0 0
    %1578 = vmatpush1.bf16.msra.mxu0 %v1548
    %1579 = vmatprep.subr.bf16.mxu0 0
    %1580 = vmatpush1.bf16.msra.mxu0 0
    %1581 = vmatprep.subr.bf16.mxu0 0
    %1582 = vmatpush1.bf16.msra.mxu0 0
    %1583 = vmatprep.subr.bf16.mxu0 0
    %1584 = vmatpush1.bf16.msra.mxu0 0
    %1585 = vmatprep.subr.bf16.mxu0 0
    %1586 = vmatpush1.bf16.msra.mxu0 0
    %1587 = vmatprep.subr.bf16.mxu0 0
    %1588 = vmatpush1.bf16.msra.mxu0 0
    %1589 = vmatprep.subr.bf16.mxu0 0
    %1590 = vmatpush1.bf16.msra.mxu0 0
    %1591 = vmatprep.subr.bf16.mxu0 0
    %1592 = vmatpush1.bf16.msra.mxu0 0
    %1593 = vmatprep.subr.bf16.mxu0 0
    %1594 = vmatpush1.bf16.msra.mxu0 0
    %1595 = vmatprep.subr.bf16.mxu0 0
    %1596 = vmatpush1.bf16.msra.mxu0 0
    %1597 = vmatprep.subr.bf16.mxu0 0
    %1598 = vmatpush1.bf16.msra.mxu0 0
    %1599 = vmatprep.subr.bf16.mxu0 0
    %1600 = vmatpush1.bf16.msra.mxu0 0
    %1601 = vmatprep.subr.bf16.mxu0 0
    %1602 = vmatpush1.bf16.msra.mxu0 0
    %1603 = vmatprep.mubr.bf16.mxu0 0
    %1604 = vmatmul.mubr.bf16.gmra.mrb[0].mxu0 %v1554
    %v1605 = vpop.f32.mrb[0].mxu0
    %v1606 = vadd.f32 0.0, %v1605
    %v1607 = vpop.f32.mrb[0].mxu0
    %v1608 = vpop.f32.mrb[0].mxu0
    %v1609 = vadd.f32 0.0, %v1608
    %v1610 = vpop.f32.mrb[0].mxu0
    %1611 = vmatprep.mubr.bf16.mxu0 0
    %1612 = vmatmul.mubr.bf16.gmra.mrb[0].mxu0 %v1557
    %v1613 = vpop.f32.mrb[0].mxu0
    %v1614 = vadd.f32 0.0, %v1613
    %v1615 = vpop.f32.mrb[0].mxu0
    %v1616 = vpop.f32.mrb[0].mxu0
    %v1617 = vadd.f32 0.0, %v1616
    %v1618 = vpop.f32.mrb[0].mxu0
    %1619 = vmatprep.mubr.bf16.mxu0 0
    %1620 = vmatmul.mubr.bf16.gmra.mrb[0].mxu0 %v1560
    %v1621 = vpop.f32.mrb[0].mxu0
    %v1622 = vadd.f32 0.0, %v1621
    %v1623 = vpop.f32.mrb[0].mxu0
    %v1624 = vpop.f32.mrb[0].mxu0
    %v1625 = vadd.f32 0.0, %v1624
    %v1626 = vpop.f32.mrb[0].mxu0
    %1627 = vmatprep.mubr.bf16.mxu0 0
    %1628 = vmatmul.mubr.bf16.gmra.mrb[0].mxu0 %v1563
    %v1629 = vpop.f32.mrb[0].mxu0
    %v1630 = vadd.f32 0.0, %v1629
    %v1631 = vpop.f32.mrb[0].mxu0
    %v1632 = vpop.f32.mrb[0].mxu0
    %v1633 = vadd.f32 0.0, %v1632
    %v1634 = vpop.f32.mrb[0].mxu0
    %1635 = vmatprep.mubr.bf16.mxu0 0
    %1636 = vmatmul.mubr.bf16.gmra.mrb[0].mxu0 %v1566
    %v1637 = vpop.f32.mrb[0].mxu0
    %v1638 = vadd.f32 0.0, %v1637
    %v1639 = vpop.f32.mrb[0].mxu0
    %v1640 = vpop.f32.mrb[0].mxu0
    %v1641 = vadd.f32 0.0, %v1640
    %v1642 = vpop.f32.mrb[0].mxu0
    %1643 = vmatprep.mubr.bf16.mxu0 0
    %1644 = vmatmul.mubr.bf16.gmra.mrb[0].mxu0 %v1569
    %v1645 = vpop.f32.mrb[0].mxu0
    %v1646 = vadd.f32 0.0, %v1645
    %v1647 = vpop.f32.mrb[0].mxu0
    %v1648 = vpop.f32.mrb[0].mxu0
    %v1649 = vpop.f32.mrb[0].mxu0
    %1650 = vdwg.mxu0
    %v1659 = vunpack.c.l.b16 %v1495
    %v1660 = vunpack.c.l.b16 %v1496
    %v1661 = vunpack.c.l.b16 %v1497
    %v1662 = vunpack.c.l.b16 %v1498
    %v1663 = vunpack.c.l.b16 %v1499
    %v1664 = vunpack.c.l.b16 %v1500
    %v1665 = vunpack.c.l.b16 %v1501
    %v1666 = vunpack.c.l.b16 %v1502
    %v1667 = vpack.c.b16 %v1660, %v1659
    %v1668 = vpack.c.b16 %v1662, %v1661
    %v1669 = vpack.c.b16 %v1664, %v1663
    %v1670 = vpack.c.b16 %v1666, %v1665
    %v1676 = vsel %vm618, %v1489, 0
    %v1679 = vsel %vm618, %v1490, 0
    %v1682 = vsel %vm618, %v1491, 0
    %v1685 = vsel %vm618, %v1492, 0
    %v1688 = vsel %vm618, %v1493, 0
    %v1691 = vsel %vm618, %v1494, 0
    %1693 = vmatprep.subr.bf16.mxu0 0
    %1694 = vmatpush1.bf16.msra.mxu0 %v1667
    %1695 = vmatprep.subr.bf16.mxu0 0
    %1696 = vmatpush1.bf16.msra.mxu0 %v1668
    %1697 = vmatprep.subr.bf16.mxu0 0
    %1698 = vmatpush1.bf16.msra.mxu0 %v1669
    %1699 = vmatprep.subr.bf16.mxu0 0
    %1700 = vmatpush1.bf16.msra.mxu0 %v1670
    %1701 = vmatprep.subr.bf16.mxu0 0
    %1702 = vmatpush1.bf16.msra.mxu0 0
    %1703 = vmatprep.subr.bf16.mxu0 0
    %1704 = vmatpush1.bf16.msra.mxu0 0
    %1705 = vmatprep.subr.bf16.mxu0 0
    %1706 = vmatpush1.bf16.msra.mxu0 0
    %1707 = vmatprep.subr.bf16.mxu0 0
    %1708 = vmatpush1.bf16.msra.mxu0 0
    %1709 = vmatprep.subr.bf16.mxu0 0
    %1710 = vmatpush1.bf16.msra.mxu0 0
    %1711 = vmatprep.subr.bf16.mxu0 0
    %1712 = vmatpush1.bf16.msra.mxu0 0
    %1713 = vmatprep.subr.bf16.mxu0 0
    %1714 = vmatpush1.bf16.msra.mxu0 0
    %1715 = vmatprep.subr.bf16.mxu0 0
    %1716 = vmatpush1.bf16.msra.mxu0 0
    %1717 = vmatprep.subr.bf16.mxu0 0
    %1718 = vmatpush1.bf16.msra.mxu0 0
    %1719 = vmatprep.subr.bf16.mxu0 0
    %1720 = vmatpush1.bf16.msra.mxu0 0
    %1721 = vmatprep.subr.bf16.mxu0 0
    %1722 = vmatpush1.bf16.msra.mxu0 0
    %1723 = vmatprep.subr.bf16.mxu0 0
    %1724 = vmatpush1.bf16.msra.mxu0 0
    %1725 = vmatprep.mubr.bf16.mxu0 0
    %1726 = vmatmul.mubr.bf16.gmra.mrb[0].mxu0 %v1676
    %v1727 = vpop.f32.mrb[0].mxu0
    %v1728 = vadd.f32 %v1606, %v1727
    %v1729 = vpop.f32.mrb[0].mxu0
    %v1730 = vpop.f32.mrb[0].mxu0
    %v1731 = vadd.f32 %v1609, %v1730
    %v1732 = vpop.f32.mrb[0].mxu0
    %1733 = vmatprep.mubr.bf16.mxu0 0
    %1734 = vmatmul.mubr.bf16.gmra.mrb[0].mxu0 %v1679
    %v1735 = vpop.f32.mrb[0].mxu0
    %v1736 = vadd.f32 %v1614, %v1735
    %v1737 = vpop.f32.mrb[0].mxu0
    %v1738 = vpop.f32.mrb[0].mxu0
    %v1739 = vadd.f32 %v1617, %v1738
    %v1740 = vpop.f32.mrb[0].mxu0
    %1741 = vmatprep.mubr.bf16.mxu0 0
    %1742 = vmatmul.mubr.bf16.gmra.mrb[0].mxu0 %v1682
    %v1743 = vpop.f32.mrb[0].mxu0
    %v1744 = vadd.f32 %v1622, %v1743
    %v1745 = vpop.f32.mrb[0].mxu0
    %v1746 = vpop.f32.mrb[0].mxu0
    %v1747 = vadd.f32 %v1625, %v1746
    %v1748 = vpop.f32.mrb[0].mxu0
    %1749 = vmatprep.mubr.bf16.mxu0 0
    %1750 = vmatmul.mubr.bf16.gmra.mrb[0].mxu0 %v1685
    %v1751 = vpop.f32.mrb[0].mxu0
    %v1752 = vadd.f32 %v1630, %v1751
    %v1753 = vpop.f32.mrb[0].mxu0
    %v1754 = vpop.f32.mrb[0].mxu0
    %v1755 = vadd.f32 %v1633, %v1754
    %v1756 = vpop.f32.mrb[0].mxu0
    %1757 = vmatprep.mubr.bf16.mxu0 0
    %1758 = vmatmul.mubr.bf16.gmra.mrb[0].mxu0 %v1688
    %v1759 = vpop.f32.mrb[0].mxu0
    %v1760 = vadd.f32 %v1638, %v1759
    %v1761 = vpop.f32.mrb[0].mxu0
    %v1762 = vpop.f32.mrb[0].mxu0
    %v1763 = vadd.f32 %v1641, %v1762
    %v1764 = vpop.f32.mrb[0].mxu0
    %1765 = vmatprep.mubr.bf16.mxu0 0
    %1766 = vmatmul.mubr.bf16.gmra.mrb[0].mxu0 %v1691
    %v1767 = vpop.f32.mrb[0].mxu0
    %v1768 = vadd.f32 %v1646, %v1767
    %v1769 = vpop.f32.mrb[0].mxu0
    %v1770 = vpop.f32.mrb[0].mxu0
    %v1771 = vpop.f32.mrb[0].mxu0
    %1772 = vdwg.mxu0
    %v1773 = vld [vmem:[#allocation3 + $0x2] sm:$0xff]
    %v1774 = vld [vmem:[#allocation3 + $0xa] sm:$0xff]
    %v1775 = vld [vmem:[#allocation3 + $0x12] sm:$0xff]
    %v1776 = vld [vmem:[#allocation3 + $0x1a] sm:$0xff]
    %v1777 = vld [vmem:[#allocation3 + $0x22] sm:$0xff]
    %v1778 = vld [vmem:[#allocation3 + $0x2a] sm:$0xff]
    %v1779 = vld [vmem:[#allocation3 + $0x32] sm:$0xff]
    %v1780 = vld [vmem:[#allocation3 + $0x3a] sm:$0xff]
    %v1781 = vld [vmem:[#allocation3 + $0x42] sm:$0xff]
    %v1782 = vld [vmem:[#allocation3 + $0x4a] sm:$0xff]
    %v1783 = vld [vmem:[#allocation3 + $0x52] sm:$0x3]
    %v1784 = vpack.c.bf16 %v1774, %v1773
    %v1785 = vpack.c.bf16 %v1776, %v1775
    %v1786 = vpack.c.bf16 %v1778, %v1777
    %v1787 = vpack.c.bf16 %v1780, %v1779
    %v1788 = vpack.c.bf16 %v1782, %v1781
    %v1789 = vpack.c.bf16 %v1783, %v1783
    %s1790 = scalar_lea.vmem %s2, 64
    %v1791 = vld [vmem:[%s1790] sm:$0xf]
    %v1792 = vld [vmem:[%s1790 + $0x4] sm:$0xf]
    %v1793 = vld [vmem:[%s1790 + $0x8] sm:$0xf]
    %v1794 = vld [vmem:[%s1790 + $0xc] sm:$0xf]
    %v1795 = vld [vmem:[%s1790 + $0x10] sm:$0xf]
    %v1796 = vld [vmem:[%s1790 + $0x14] sm:$0xf]
    %v1797 = vld [vmem:[%s1790 + $0x18] sm:$0xf]
    %v1798 = vld [vmem:[%s1790 + $0x1c] sm:$0xf]
    %v1807 = vunpack.c.l.b16 %v1791
    %v1808 = vunpack.c.l.b16 %v1792
    %v1809 = vunpack.c.l.b16 %v1793
    %v1810 = vunpack.c.l.b16 %v1794
    %v1811 = vunpack.c.l.b16 %v1795
    %v1812 = vunpack.c.l.b16 %v1796
    %v1813 = vunpack.c.l.b16 %v1797
    %v1814 = vunpack.c.l.b16 %v1798
    %v1815 = vpack.c.b16 %v1808, %v1807
    %v1816 = vpack.c.b16 %v1810, %v1809
    %v1817 = vpack.c.b16 %v1812, %v1811
    %v1818 = vpack.c.b16 %v1814, %v1813
    %v1824 = vsel %vm618, %v1784, 0
    %v1827 = vsel %vm618, %v1785, 0
    %v1830 = vsel %vm618, %v1786, 0
    %v1833 = vsel %vm618, %v1787, 0
    %v1836 = vsel %vm618, %v1788, 0
    %v1839 = vsel %vm618, %v1789, 0
    %1841 = vmatprep.subr.bf16.mxu0 0
    %1842 = vmatpush1.bf16.msra.mxu0 %v1815
    %1843 = vmatprep.subr.bf16.mxu0 0
    %1844 = vmatpush1.bf16.msra.mxu0 %v1816
    %1845 = vmatprep.subr.bf16.mxu0 0
    %1846 = vmatpush1.bf16.msra.mxu0 %v1817
    %1847 = vmatprep.subr.bf16.mxu0 0
    %1848 = vmatpush1.bf16.msra.mxu0 %v1818
    %1849 = vmatprep.subr.bf16.mxu0 0
    %1850 = vmatpush1.bf16.msra.mxu0 0
    %1851 = vmatprep.subr.bf16.mxu0 0
    %1852 = vmatpush1.bf16.msra.mxu0 0
    %1853 = vmatprep.subr.bf16.mxu0 0
    %1854 = vmatpush1.bf16.msra.mxu0 0
    %1855 = vmatprep.subr.bf16.mxu0 0
    %1856 = vmatpush1.bf16.msra.mxu0 0
    %1857 = vmatprep.subr.bf16.mxu0 0
    %1858 = vmatpush1.bf16.msra.mxu0 0
    %1859 = vmatprep.subr.bf16.mxu0 0
    %1860 = vmatpush1.bf16.msra.mxu0 0
    %1861 = vmatprep.subr.bf16.mxu0 0
    %1862 = vmatpush1.bf16.msra.mxu0 0
    %1863 = vmatprep.subr.bf16.mxu0 0
    %1864 = vmatpush1.bf16.msra.mxu0 0
    %1865 = vmatprep.subr.bf16.mxu0 0
    %1866 = vmatpush1.bf16.msra.mxu0 0
    %1867 = vmatprep.subr.bf16.mxu0 0
    %1868 = vmatpush1.bf16.msra.mxu0 0
    %1869 = vmatprep.subr.bf16.mxu0 0
    %1870 = vmatpush1.bf16.msra.mxu0 0
    %1871 = vmatprep.subr.bf16.mxu0 0
    %1872 = vmatpush1.bf16.msra.mxu0 0
    %1873 = vmatprep.mubr.bf16.mxu0 0
    %1874 = vmatmul.mubr.bf16.gmra.mrb[0].mxu0 %v1824
    %v1875 = vpop.f32.mrb[0].mxu0
    %v1876 = vadd.f32 0.0, %v1875
    %v1877 = vpop.f32.mrb[0].mxu0
    %v1878 = vpop.f32.mrb[0].mxu0
    %v1879 = vadd.f32 0.0, %v1878
    %v1880 = vpop.f32.mrb[0].mxu0
    %1881 = vmatprep.mubr.bf16.mxu0 0
    %1882 = vmatmul.mubr.bf16.gmra.mrb[0].mxu0 %v1827
    %v1883 = vpop.f32.mrb[0].mxu0
    %v1884 = vadd.f32 0.0, %v1883
    %v1885 = vpop.f32.mrb[0].mxu0
    %v1886 = vpop.f32.mrb[0].mxu0
    %v1887 = vadd.f32 0.0, %v1886
    %v1888 = vpop.f32.mrb[0].mxu0
    %1889 = vmatprep.mubr.bf16.mxu0 0
    %1890 = vmatmul.mubr.bf16.gmra.mrb[0].mxu0 %v1830
    %v1891 = vpop.f32.mrb[0].mxu0
    %v1892 = vadd.f32 0.0, %v1891
    %v1893 = vpop.f32.mrb[0].mxu0
    %v1894 = vpop.f32.mrb[0].mxu0
    %v1895 = vadd.f32 0.0, %v1894
    %v1896 = vpop.f32.mrb[0].mxu0
    %1897 = vmatprep.mubr.bf16.mxu0 0
    %1898 = vmatmul.mubr.bf16.gmra.mrb[0].mxu0 %v1833
    %v1899 = vpop.f32.mrb[0].mxu0
    %v1900 = vadd.f32 0.0, %v1899
    %v1901 = vpop.f32.mrb[0].mxu0
    %v1902 = vpop.f32.mrb[0].mxu0
    %v1903 = vadd.f32 0.0, %v1902
    %v1904 = vpop.f32.mrb[0].mxu0
    %1905 = vmatprep.mubr.bf16.mxu0 0
    %1906 = vmatmul.mubr.bf16.gmra.mrb[0].mxu0 %v1836
    %v1907 = vpop.f32.mrb[0].mxu0
    %v1908 = vadd.f32 0.0, %v1907
    %v1909 = vpop.f32.mrb[0].mxu0
    %v1910 = vpop.f32.mrb[0].mxu0
    %v1911 = vadd.f32 0.0, %v1910
    %v1912 = vpop.f32.mrb[0].mxu0
    %1913 = vmatprep.mubr.bf16.mxu0 0
    %1914 = vmatmul.mubr.bf16.gmra.mrb[0].mxu0 %v1839
    %v1915 = vpop.f32.mrb[0].mxu0
    %v1916 = vadd.f32 0.0, %v1915
    %v1917 = vpop.f32.mrb[0].mxu0
    %v1918 = vpop.f32.mrb[0].mxu0
    %v1919 = vpop.f32.mrb[0].mxu0
    %1920 = vdwg.mxu0
    %v1921 = vadd.f32 %v1728, %v1876
    %v1922 = vadd.f32 %v1731, %v1879
    %v1923 = vadd.f32 %v1736, %v1884
    %v1924 = vadd.f32 %v1739, %v1887
    %v1925 = vadd.f32 %v1744, %v1892
    %v1926 = vadd.f32 %v1747, %v1895
    %v1927 = vadd.f32 %v1752, %v1900
    %v1928 = vadd.f32 %v1755, %v1903
    %v1929 = vadd.f32 %v1760, %v1908
    %v1930 = vadd.f32 %v1763, %v1911
    %v1931 = vadd.f32 %v1768, %v1916
    %v1932 = vld [vmem:[#allocation3 + $0x7] sm:$0xff]
    %v1933 = vld [vmem:[#allocation3 + $0xf] sm:$0xff]
    %v1934 = vld [vmem:[#allocation3 + $0x17] sm:$0xff]
    %v1935 = vld [vmem:[#allocation3 + $0x1f] sm:$0xff]
    %v1936 = vld [vmem:[#allocation3 + $0x27] sm:$0xff]
    %v1937 = vld [vmem:[#allocation3 + $0x2f] sm:$0xff]
    %v1938 = vld [vmem:[#allocation3 + $0x37] sm:$0xff]
    %v1939 = vld [vmem:[#allocation3 + $0x3f] sm:$0xff]
    %v1940 = vld [vmem:[#allocation3 + $0x47] sm:$0xff]
    %v1941 = vld [vmem:[#allocation3 + $0x4f] sm:$0xff]
    %v1942 = vld [vmem:[#allocation3 + $0x57] sm:$0x3]
    %v1943 = vpack.c.bf16 %v1933, %v1932
    %v1944 = vpack.c.bf16 %v1935, %v1934
    %v1945 = vpack.c.bf16 %v1937, %v1936
    %v1946 = vpack.c.bf16 %v1939, %v1938
    %v1947 = vpack.c.bf16 %v1941, %v1940
    %v1948 = vpack.c.bf16 %v1942, %v1942
    %s1949 = scalar_lea.vmem %s2, 96
    %v1950 = vld [vmem:[%s1949] sm:$0xf]
    %v1951 = vld [vmem:[%s1949 + $0x4] sm:$0xf]
    %v1952 = vld [vmem:[%s1949 + $0x8] sm:$0xf]
    %v1953 = vld [vmem:[%s1949 + $0xc] sm:$0xf]
    %v1954 = vld [vmem:[%s1949 + $0x10] sm:$0xf]
    %v1955 = vld [vmem:[%s1949 + $0x14] sm:$0xf]
    %v1956 = vld [vmem:[%s1949 + $0x18] sm:$0xf]
    %v1957 = vld [vmem:[%s1949 + $0x1c] sm:$0xf]
    %v1966 = vunpack.c.l.b16 %v1950
    %v1967 = vunpack.c.l.b16 %v1951
    %v1968 = vunpack.c.l.b16 %v1952
    %v1969 = vunpack.c.l.b16 %v1953
    %v1970 = vunpack.c.l.b16 %v1954
    %v1971 = vunpack.c.l.b16 %v1955
    %v1972 = vunpack.c.l.b16 %v1956
    %v1973 = vunpack.c.l.b16 %v1957
    %v1974 = vpack.c.b16 %v1967, %v1966
    %v1975 = vpack.c.b16 %v1969, %v1968
    %v1976 = vpack.c.b16 %v1971, %v1970
    %v1977 = vpack.c.b16 %v1973, %v1972
    %v1983 = vsel %vm618, %v1943, 0
    %v1986 = vsel %vm618, %v1944, 0
    %v1989 = vsel %vm618, %v1945, 0
    %v1992 = vsel %vm618, %v1946, 0
    %v1995 = vsel %vm618, %v1947, 0
    %v1998 = vsel %vm618, %v1948, 0
    %2000 = vmatprep.subr.bf16.mxu0 0
    %2001 = vmatpush1.bf16.msra.mxu0 %v1974
    %2002 = vmatprep.subr.bf16.mxu0 0
    %2003 = vmatpush1.bf16.msra.mxu0 %v1975
    %2004 = vmatprep.subr.bf16.mxu0 0
    %2005 = vmatpush1.bf16.msra.mxu0 %v1976
    %2006 = vmatprep.subr.bf16.mxu0 0
    %2007 = vmatpush1.bf16.msra.mxu0 %v1977
    %2008 = vmatprep.subr.bf16.mxu0 0
    %2009 = vmatpush1.bf16.msra.mxu0 0
    %2010 = vmatprep.subr.bf16.mxu0 0
    %2011 = vmatpush1.bf16.msra.mxu0 0
    %2012 = vmatprep.subr.bf16.mxu0 0
    %2013 = vmatpush1.bf16.msra.mxu0 0
    %2014 = vmatprep.subr.bf16.mxu0 0
    %2015 = vmatpush1.bf16.msra.mxu0 0
    %2016 = vmatprep.subr.bf16.mxu0 0
    %2017 = vmatpush1.bf16.msra.mxu0 0
    %2018 = vmatprep.subr.bf16.mxu0 0
    %2019 = vmatpush1.bf16.msra.mxu0 0
    %2020 = vmatprep.subr.bf16.mxu0 0
    %2021 = vmatpush1.bf16.msra.mxu0 0
    %2022 = vmatprep.subr.bf16.mxu0 0
    %2023 = vmatpush1.bf16.msra.mxu0 0
    %2024 = vmatprep.subr.bf16.mxu0 0
    %2025 = vmatpush1.bf16.msra.mxu0 0
    %2026 = vmatprep.subr.bf16.mxu0 0
    %2027 = vmatpush1.bf16.msra.mxu0 0
    %2028 = vmatprep.subr.bf16.mxu0 0
    %2029 = vmatpush1.bf16.msra.mxu0 0
    %2030 = vmatprep.subr.bf16.mxu0 0
    %2031 = vmatpush1.bf16.msra.mxu0 0
    %2032 = vmatprep.mubr.bf16.mxu0 0
    %2033 = vmatmul.mubr.bf16.gmra.mrb[0].mxu0 %v1983
    %v2034 = vpop.f32.mrb[0].mxu0
    %v2035 = vadd.f32 0.0, %v2034
    %v2036 = vpop.f32.mrb[0].mxu0
    %v2037 = vpop.f32.mrb[0].mxu0
    %v2038 = vadd.f32 0.0, %v2037
    %v2039 = vpop.f32.mrb[0].mxu0
    %2040 = vmatprep.mubr.bf16.mxu0 0
    %2041 = vmatmul.mubr.bf16.gmra.mrb[0].mxu0 %v1986
    %v2042 = vpop.f32.mrb[0].mxu0
    %v2043 = vadd.f32 0.0, %v2042
    %v2044 = vpop.f32.mrb[0].mxu0
    %v2045 = vpop.f32.mrb[0].mxu0
    %v2046 = vadd.f32 0.0, %v2045
    %v2047 = vpop.f32.mrb[0].mxu0
    %2048 = vmatprep.mubr.bf16.mxu0 0
    %2049 = vmatmul.mubr.bf16.gmra.mrb[0].mxu0 %v1989
    %v2050 = vpop.f32.mrb[0].mxu0
    %v2051 = vadd.f32 0.0, %v2050
    %v2052 = vpop.f32.mrb[0].mxu0
    %v2053 = vpop.f32.mrb[0].mxu0
    %v2054 = vadd.f32 0.0, %v2053
    %v2055 = vpop.f32.mrb[0].mxu0
    %2056 = vmatprep.mubr.bf16.mxu0 0
    %2057 = vmatmul.mubr.bf16.gmra.mrb[0].mxu0 %v1992
    %v2058 = vpop.f32.mrb[0].mxu0
    %v2059 = vadd.f32 0.0, %v2058
    %v2060 = vpop.f32.mrb[0].mxu0
    %v2061 = vpop.f32.mrb[0].mxu0
    %v2062 = vadd.f32 0.0, %v2061
    %v2063 = vpop.f32.mrb[0].mxu0
    %2064 = vmatprep.mubr.bf16.mxu0 0
    %2065 = vmatmul.mubr.bf16.gmra.mrb[0].mxu0 %v1995
    %v2066 = vpop.f32.mrb[0].mxu0
    %v2067 = vadd.f32 0.0, %v2066
    %v2068 = vpop.f32.mrb[0].mxu0
    %v2069 = vpop.f32.mrb[0].mxu0
    %v2070 = vadd.f32 0.0, %v2069
    %v2071 = vpop.f32.mrb[0].mxu0
    %2072 = vmatprep.mubr.bf16.mxu0 0
    %2073 = vmatmul.mubr.bf16.gmra.mrb[0].mxu0 %v1998
    %v2074 = vpop.f32.mrb[0].mxu0
    %v2075 = vadd.f32 0.0, %v2074
    %v2076 = vpop.f32.mrb[0].mxu0
    %v2077 = vpop.f32.mrb[0].mxu0
    %v2078 = vpop.f32.mrb[0].mxu0
    %2079 = vdwg.mxu0
    %v2080 = vadd.f32 %v1921, %v2035
    %v2081 = vadd.f32 %v1922, %v2038
    %v2082 = vadd.f32 %v1923, %v2043
    %v2083 = vadd.f32 %v1924, %v2046
    %v2084 = vadd.f32 %v1925, %v2051
    %v2085 = vadd.f32 %v1926, %v2054
    %v2086 = vadd.f32 %v1927, %v2059
    %v2087 = vadd.f32 %v1928, %v2062
    %v2088 = vadd.f32 %v1929, %v2067
    %v2089 = vadd.f32 %v1930, %v2070
    %v2090 = vadd.f32 %v1931, %v2075
    %v2091 = vld [vmem:[#allocation3 + $0x8] sm:$0xff]
    %v2092 = vld [vmem:[#allocation3 + $0x10] sm:$0xff]
    %v2093 = vld [vmem:[#allocation3 + $0x18] sm:$0xff]
    %v2094 = vld [vmem:[#allocation3 + $0x20] sm:$0xff]
    %v2095 = vld [vmem:[#allocation3 + $0x28] sm:$0xff]
    %v2096 = vld [vmem:[#allocation3 + $0x30] sm:$0xff]
    %v2097 = vld [vmem:[#allocation3 + $0x38] sm:$0xff]
    %v2098 = vld [vmem:[#allocation3 + $0x40] sm:$0xff]
    %v2099 = vld [vmem:[#allocation3 + $0x48] sm:$0xff]
    %v2100 = vld [vmem:[#allocation3 + $0x50] sm:$0xff]
    %v2101 = vld [vmem:[#allocation3 + $0x58] sm:$0x3]
    %v2102 = vpack.c.bf16 %v2092, %v2091
    %v2103 = vpack.c.bf16 %v2094, %v2093
    %v2104 = vpack.c.bf16 %v2096, %v2095
    %v2105 = vpack.c.bf16 %v2098, %v2097
    %v2106 = vpack.c.bf16 %v2100, %v2099
    %v2107 = vpack.c.bf16 %v2101, %v2101
    %s2108 = scalar_lea.vmem %s2, 128
    %v2109 = vld [vmem:[%s2108] sm:$0xf]
    %v2110 = vld [vmem:[%s2108 + $0x4] sm:$0xf]
    %v2111 = vld [vmem:[%s2108 + $0x8] sm:$0xf]
    %v2112 = vld [vmem:[%s2108 + $0xc] sm:$0xf]
    %v2113 = vld [vmem:[%s2108 + $0x10] sm:$0xf]
    %v2114 = vld [vmem:[%s2108 + $0x14] sm:$0xf]
    %v2115 = vld [vmem:[%s2108 + $0x18] sm:$0xf]
    %v2116 = vld [vmem:[%s2108 + $0x1c] sm:$0xf]
    %v2125 = vunpack.c.l.b16 %v2109
    %v2126 = vunpack.c.l.b16 %v2110
    %v2127 = vunpack.c.l.b16 %v2111
    %v2128 = vunpack.c.l.b16 %v2112
    %v2129 = vunpack.c.l.b16 %v2113
    %v2130 = vunpack.c.l.b16 %v2114
    %v2131 = vunpack.c.l.b16 %v2115
    %v2132 = vunpack.c.l.b16 %v2116
    %v2133 = vpack.c.b16 %v2126, %v2125
    %v2134 = vpack.c.b16 %v2128, %v2127
    %v2135 = vpack.c.b16 %v2130, %v2129
    %v2136 = vpack.c.b16 %v2132, %v2131
    %v2142 = vsel %vm618, %v2102, 0
    %v2145 = vsel %vm618, %v2103, 0
    %v2148 = vsel %vm618, %v2104, 0
    %v2151 = vsel %vm618, %v2105, 0
    %v2154 = vsel %vm618, %v2106, 0
    %v2157 = vsel %vm618, %v2107, 0
    %2159 = vmatprep.subr.bf16.mxu0 0
    %2160 = vmatpush1.bf16.msra.mxu0 %v2133
    %2161 = vmatprep.subr.bf16.mxu0 0
    %2162 = vmatpush1.bf16.msra.mxu0 %v2134
    %2163 = vmatprep.subr.bf16.mxu0 0
    %2164 = vmatpush1.bf16.msra.mxu0 %v2135
    %2165 = vmatprep.subr.bf16.mxu0 0
    %2166 = vmatpush1.bf16.msra.mxu0 %v2136
    %2167 = vmatprep.subr.bf16.mxu0 0
    %2168 = vmatpush1.bf16.msra.mxu0 0
    %2169 = vmatprep.subr.bf16.mxu0 0
    %2170 = vmatpush1.bf16.msra.mxu0 0
    %2171 = vmatprep.subr.bf16.mxu0 0
    %2172 = vmatpush1.bf16.msra.mxu0 0
    %2173 = vmatprep.subr.bf16.mxu0 0
    %2174 = vmatpush1.bf16.msra.mxu0 0
    %2175 = vmatprep.subr.bf16.mxu0 0
    %2176 = vmatpush1.bf16.msra.mxu0 0
    %2177 = vmatprep.subr.bf16.mxu0 0
    %2178 = vmatpush1.bf16.msra.mxu0 0
    %2179 = vmatprep.subr.bf16.mxu0 0
    %2180 = vmatpush1.bf16.msra.mxu0 0
    %2181 = vmatprep.subr.bf16.mxu0 0
    %2182 = vmatpush1.bf16.msra.mxu0 0
    %2183 = vmatprep.subr.bf16.mxu0 0
    %2184 = vmatpush1.bf16.msra.mxu0 0
    %2185 = vmatprep.subr.bf16.mxu0 0
    %2186 = vmatpush1.bf16.msra.mxu0 0
    %2187 = vmatprep.subr.bf16.mxu0 0
    %2188 = vmatpush1.bf16.msra.mxu0 0
    %2189 = vmatprep.subr.bf16.mxu0 0
    %2190 = vmatpush1.bf16.msra.mxu0 0
    %2191 = vmatprep.mubr.bf16.mxu0 0
    %2192 = vmatmul.mubr.bf16.gmra.mrb[0].mxu0 %v2142
    %v2193 = vpop.f32.mrb[0].mxu0
    %v2194 = vadd.f32 0.0, %v2193
    %v2195 = vpop.f32.mrb[0].mxu0
    %v2196 = vpop.f32.mrb[0].mxu0
    %v2197 = vadd.f32 0.0, %v2196
    %v2198 = vpop.f32.mrb[0].mxu0
    %2199 = vmatprep.mubr.bf16.mxu0 0
    %2200 = vmatmul.mubr.bf16.gmra.mrb[0].mxu0 %v2145
    %v2201 = vpop.f32.mrb[0].mxu0
    %v2202 = vadd.f32 0.0, %v2201
    %v2203 = vpop.f32.mrb[0].mxu0
    %v2204 = vpop.f32.mrb[0].mxu0
    %v2205 = vadd.f32 0.0, %v2204
    %v2206 = vpop.f32.mrb[0].mxu0
    %2207 = vmatprep.mubr.bf16.mxu0 0
    %2208 = vmatmul.mubr.bf16.gmra.mrb[0].mxu0 %v2148
    %v2209 = vpop.f32.mrb[0].mxu0
    %v2210 = vadd.f32 0.0, %v2209
    %v2211 = vpop.f32.mrb[0].mxu0
    %v2212 = vpop.f32.mrb[0].mxu0
    %v2213 = vadd.f32 0.0, %v2212
    %v2214 = vpop.f32.mrb[0].mxu0
    %2215 = vmatprep.mubr.bf16.mxu0 0
    %2216 = vmatmul.mubr.bf16.gmra.mrb[0].mxu0 %v2151
    %v2217 = vpop.f32.mrb[0].mxu0
    %v2218 = vadd.f32 0.0, %v2217
    %v2219 = vpop.f32.mrb[0].mxu0
    %v2220 = vpop.f32.mrb[0].mxu0
    %v2221 = vadd.f32 0.0, %v2220
    %v2222 = vpop.f32.mrb[0].mxu0
    %2223 = vmatprep.mubr.bf16.mxu0 0
    %2224 = vmatmul.mubr.bf16.gmra.mrb[0].mxu0 %v2154
    %v2225 = vpop.f32.mrb[0].mxu0
    %v2226 = vadd.f32 0.0, %v2225
    %v2227 = vpop.f32.mrb[0].mxu0
    %v2228 = vpop.f32.mrb[0].mxu0
    %v2229 = vadd.f32 0.0, %v2228
    %v2230 = vpop.f32.mrb[0].mxu0
    %2231 = vmatprep.mubr.bf16.mxu0 0
    %2232 = vmatmul.mubr.bf16.gmra.mrb[0].mxu0 %v2157
    %v2233 = vpop.f32.mrb[0].mxu0
    %v2234 = vadd.f32 0.0, %v2233
    %v2235 = vpop.f32.mrb[0].mxu0
    %v2236 = vpop.f32.mrb[0].mxu0
    %v2237 = vpop.f32.mrb[0].mxu0
    %2238 = vdwg.mxu0
    %v2239 = vadd.f32 %v2080, %v2194
    %v2240 = vadd.f32 %v2081, %v2197
    %v2241 = vadd.f32 %v2082, %v2202
    %v2242 = vadd.f32 %v2083, %v2205
    %v2243 = vadd.f32 %v2084, %v2210
    %v2244 = vadd.f32 %v2085, %v2213
    %v2245 = vadd.f32 %v2086, %v2218
    %v2246 = vadd.f32 %v2087, %v2221
    %v2247 = vadd.f32 %v2088, %v2226
    %v2248 = vadd.f32 %v2089, %v2229
    %v2249 = vadd.f32 %v2090, %v2234
    %v2250 = vld [vmem:[#allocation3 + $0x9] sm:$0xff]
    %v2251 = vld [vmem:[#allocation3 + $0x11] sm:$0xff]
    %v2252 = vld [vmem:[#allocation3 + $0x19] sm:$0xff]
    %v2253 = vld [vmem:[#allocation3 + $0x21] sm:$0xff]
    %v2254 = vld [vmem:[#allocation3 + $0x29] sm:$0xff]
    %v2255 = vld [vmem:[#allocation3 + $0x31] sm:$0xff]
    %v2256 = vld [vmem:[#allocation3 + $0x39] sm:$0xff]
    %v2257 = vld [vmem:[#allocation3 + $0x41] sm:$0xff]
    %v2258 = vld [vmem:[#allocation3 + $0x49] sm:$0xff]
    %v2259 = vld [vmem:[#allocation3 + $0x51] sm:$0xff]
    %v2260 = vld [vmem:[#allocation3 + $0x59] sm:$0x3]
    %v2261 = vpack.c.bf16 %v2251, %v2250
    %v2262 = vpack.c.bf16 %v2253, %v2252
    %v2263 = vpack.c.bf16 %v2255, %v2254
    %v2264 = vpack.c.bf16 %v2257, %v2256
    %v2265 = vpack.c.bf16 %v2259, %v2258
    %v2266 = vpack.c.bf16 %v2260, %v2260
    %s2267 = scalar_lea.vmem %s2, 160
    %v2268 = vld [vmem:[%s2267] sm:$0xf]
    %v2269 = vld [vmem:[%s2267 + $0x4] sm:$0xf]
    %v2270 = vld [vmem:[%s2267 + $0x8] sm:$0xf]
    %v2271 = vld [vmem:[%s2267 + $0xc] sm:$0xf]
    %v2272 = vld [vmem:[%s2267 + $0x10] sm:$0xf]
    %v2273 = vld [vmem:[%s2267 + $0x14] sm:$0xf]
    %v2274 = vld [vmem:[%s2267 + $0x18] sm:$0xf]
    %v2275 = vld [vmem:[%s2267 + $0x1c] sm:$0xf]
    %v2284 = vunpack.c.l.b16 %v2268
    %v2285 = vunpack.c.l.b16 %v2269
    %v2286 = vunpack.c.l.b16 %v2270
    %v2287 = vunpack.c.l.b16 %v2271
    %v2288 = vunpack.c.l.b16 %v2272
    %v2289 = vunpack.c.l.b16 %v2273
    %v2290 = vunpack.c.l.b16 %v2274
    %v2291 = vunpack.c.l.b16 %v2275
    %v2292 = vpack.c.b16 %v2285, %v2284
    %v2293 = vpack.c.b16 %v2287, %v2286
    %v2294 = vpack.c.b16 %v2289, %v2288
    %v2295 = vpack.c.b16 %v2291, %v2290
    %v2301 = vsel %vm618, %v2261, 0
    %v2304 = vsel %vm618, %v2262, 0
    %v2307 = vsel %vm618, %v2263, 0
    %v2310 = vsel %vm618, %v2264, 0
    %v2313 = vsel %vm618, %v2265, 0
    %v2316 = vsel %vm618, %v2266, 0
    %2318 = vmatprep.subr.bf16.mxu0 0
    %2319 = vmatpush1.bf16.msra.mxu0 %v2292
    %2320 = vmatprep.subr.bf16.mxu0 0
    %2321 = vmatpush1.bf16.msra.mxu0 %v2293
    %2322 = vmatprep.subr.bf16.mxu0 0
    %2323 = vmatpush1.bf16.msra.mxu0 %v2294
    %2324 = vmatprep.subr.bf16.mxu0 0
    %2325 = vmatpush1.bf16.msra.mxu0 %v2295
    %2326 = vmatprep.subr.bf16.mxu0 0
    %2327 = vmatpush1.bf16.msra.mxu0 0
    %2328 = vmatprep.subr.bf16.mxu0 0
    %2329 = vmatpush1.bf16.msra.mxu0 0
    %2330 = vmatprep.subr.bf16.mxu0 0
    %2331 = vmatpush1.bf16.msra.mxu0 0
    %2332 = vmatprep.subr.bf16.mxu0 0
    %2333 = vmatpush1.bf16.msra.mxu0 0
    %2334 = vmatprep.subr.bf16.mxu0 0
    %2335 = vmatpush1.bf16.msra.mxu0 0
    %2336 = vmatprep.subr.bf16.mxu0 0
    %2337 = vmatpush1.bf16.msra.mxu0 0
    %2338 = vmatprep.subr.bf16.mxu0 0
    %2339 = vmatpush1.bf16.msra.mxu0 0
    %2340 = vmatprep.subr.bf16.mxu0 0
    %2341 = vmatpush1.bf16.msra.mxu0 0
    %2342 = vmatprep.subr.bf16.mxu0 0
    %2343 = vmatpush1.bf16.msra.mxu0 0
    %2344 = vmatprep.subr.bf16.mxu0 0
    %2345 = vmatpush1.bf16.msra.mxu0 0
    %2346 = vmatprep.subr.bf16.mxu0 0
    %2347 = vmatpush1.bf16.msra.mxu0 0
    %2348 = vmatprep.subr.bf16.mxu0 0
    %2349 = vmatpush1.bf16.msra.mxu0 0
    %2350 = vmatprep.mubr.bf16.mxu0 0
    %2351 = vmatmul.mubr.bf16.gmra.mrb[0].mxu0 %v2301
    %v2352 = vpop.f32.mrb[0].mxu0
    %v2353 = vadd.f32 0.0, %v2352
    %v2354 = vpop.f32.mrb[0].mxu0
    %v2355 = vpop.f32.mrb[0].mxu0
    %v2356 = vadd.f32 0.0, %v2355
    %v2357 = vpop.f32.mrb[0].mxu0
    %2358 = vmatprep.mubr.bf16.mxu0 0
    %2359 = vmatmul.mubr.bf16.gmra.mrb[0].mxu0 %v2304
    %v2360 = vpop.f32.mrb[0].mxu0
    %v2361 = vadd.f32 0.0, %v2360
    %v2362 = vpop.f32.mrb[0].mxu0
    %v2363 = vpop.f32.mrb[0].mxu0
    %v2364 = vadd.f32 0.0, %v2363
    %v2365 = vpop.f32.mrb[0].mxu0
    %2366 = vmatprep.mubr.bf16.mxu0 0
    %2367 = vmatmul.mubr.bf16.gmra.mrb[0].mxu0 %v2307
    %v2368 = vpop.f32.mrb[0].mxu0
    %v2369 = vadd.f32 0.0, %v2368
    %v2370 = vpop.f32.mrb[0].mxu0
    %v2371 = vpop.f32.mrb[0].mxu0
    %v2372 = vadd.f32 0.0, %v2371
    %v2373 = vpop.f32.mrb[0].mxu0
    %2374 = vmatprep.mubr.bf16.mxu0 0
    %2375 = vmatmul.mubr.bf16.gmra.mrb[0].mxu0 %v2310
    %v2376 = vpop.f32.mrb[0].mxu0
    %v2377 = vadd.f32 0.0, %v2376
    %v2378 = vpop.f32.mrb[0].mxu0
    %v2379 = vpop.f32.mrb[0].mxu0
    %v2380 = vadd.f32 0.0, %v2379
    %v2381 = vpop.f32.mrb[0].mxu0
    %2382 = vmatprep.mubr.bf16.mxu0 0
    %2383 = vmatmul.mubr.bf16.gmra.mrb[0].mxu0 %v2313
    %v2384 = vpop.f32.mrb[0].mxu0
    %v2385 = vadd.f32 0.0, %v2384
    %v2386 = vpop.f32.mrb[0].mxu0
    %v2387 = vpop.f32.mrb[0].mxu0
    %v2388 = vadd.f32 0.0, %v2387
    %v2389 = vpop.f32.mrb[0].mxu0
    %2390 = vmatprep.mubr.bf16.mxu0 0
    %2391 = vmatmul.mubr.bf16.gmra.mrb[0].mxu0 %v2316
    %v2392 = vpop.f32.mrb[0].mxu0
    %v2393 = vadd.f32 0.0, %v2392
    %v2394 = vpop.f32.mrb[0].mxu0
    %v2395 = vpop.f32.mrb[0].mxu0
    %v2396 = vpop.f32.mrb[0].mxu0
    %2397 = vdwg.mxu0
    %v2398 = vadd.f32 %v2239, %v2353
    %v2399 = vadd.f32 %v2240, %v2356
    %v2400 = vadd.f32 %v2241, %v2361
    %v2401 = vadd.f32 %v2242, %v2364
    %v2402 = vadd.f32 %v2243, %v2369
    %v2403 = vadd.f32 %v2244, %v2372
    %v2404 = vadd.f32 %v2245, %v2377
    %v2405 = vadd.f32 %v2246, %v2380
    %v2406 = vadd.f32 %v2247, %v2385
    %v2407 = vadd.f32 %v2248, %v2388
    %v2408 = vadd.f32 %v2249, %v2393
    %v2409 = vld [vmem:[#allocation3 + $0xe] sm:$0xff]
    %v2410 = vld [vmem:[#allocation3 + $0x16] sm:$0xff]
    %v2411 = vld [vmem:[#allocation3 + $0x1e] sm:$0xff]
    %v2412 = vld [vmem:[#allocation3 + $0x26] sm:$0xff]
    %v2413 = vld [vmem:[#allocation3 + $0x2e] sm:$0xff]
    %v2414 = vld [vmem:[#allocation3 + $0x36] sm:$0xff]
    %v2415 = vld [vmem:[#allocation3 + $0x3e] sm:$0xff]
    %v2416 = vld [vmem:[#allocation3 + $0x46] sm:$0xff]
    %v2417 = vld [vmem:[#allocation3 + $0x4e] sm:$0xff]
    %v2418 = vld [vmem:[#allocation3 + $0x56] sm:$0xff]
    %v2419 = vld [vmem:[#allocation3 + $0x5e] sm:$0x3]
    %v2420 = vpack.c.bf16 %v2410, %v2409
    %v2421 = vpack.c.bf16 %v2412, %v2411
    %v2422 = vpack.c.bf16 %v2414, %v2413
    %v2423 = vpack.c.bf16 %v2416, %v2415
    %v2424 = vpack.c.bf16 %v2418, %v2417
    %v2425 = vpack.c.bf16 %v2419, %v2419
    %s2426 = scalar_lea.vmem %s2, 192
    %v2427 = vld [vmem:[%s2426] sm:$0xf]
    %v2428 = vld [vmem:[%s2426 + $0x4] sm:$0xf]
    %v2429 = vld [vmem:[%s2426 + $0x8] sm:$0xf]
    %v2430 = vld [vmem:[%s2426 + $0xc] sm:$0xf]
    %v2431 = vld [vmem:[%s2426 + $0x10] sm:$0xf]
    %v2432 = vld [vmem:[%s2426 + $0x14] sm:$0xf]
    %v2433 = vld [vmem:[%s2426 + $0x18] sm:$0xf]
    %v2434 = vld [vmem:[%s2426 + $0x1c] sm:$0xf]
    %v2443 = vunpack.c.l.b16 %v2427
    %v2444 = vunpack.c.l.b16 %v2428
    %v2445 = vunpack.c.l.b16 %v2429
    %v2446 = vunpack.c.l.b16 %v2430
    %v2447 = vunpack.c.l.b16 %v2431
    %v2448 = vunpack.c.l.b16 %v2432
    %v2449 = vunpack.c.l.b16 %v2433
    %v2450 = vunpack.c.l.b16 %v2434
    %v2451 = vpack.c.b16 %v2444, %v2443
    %v2452 = vpack.c.b16 %v2446, %v2445
    %v2453 = vpack.c.b16 %v2448, %v2447
    %v2454 = vpack.c.b16 %v2450, %v2449
    %v2460 = vsel %vm618, %v2420, 0
    %v2463 = vsel %vm618, %v2421, 0
    %v2466 = vsel %vm618, %v2422, 0
    %v2469 = vsel %vm618, %v2423, 0
    %v2472 = vsel %vm618, %v2424, 0
    %v2475 = vsel %vm618, %v2425, 0
    %2477 = vmatprep.subr.bf16.mxu0 0
    %2478 = vmatpush1.bf16.msra.mxu0 %v2451
    %2479 = vmatprep.subr.bf16.mxu0 0
    %2480 = vmatpush1.bf16.msra.mxu0 %v2452
    %2481 = vmatprep.subr.bf16.mxu0 0
    %2482 = vmatpush1.bf16.msra.mxu0 %v2453
    %2483 = vmatprep.subr.bf16.mxu0 0
    %2484 = vmatpush1.bf16.msra.mxu0 %v2454
    %2485 = vmatprep.subr.bf16.mxu0 0
    %2486 = vmatpush1.bf16.msra.mxu0 0
    %2487 = vmatprep.subr.bf16.mxu0 0
    %2488 = vmatpush1.bf16.msra.mxu0 0
    %2489 = vmatprep.subr.bf16.mxu0 0
    %2490 = vmatpush1.bf16.msra.mxu0 0
    %2491 = vmatprep.subr.bf16.mxu0 0
    %2492 = vmatpush1.bf16.msra.mxu0 0
    %2493 = vmatprep.subr.bf16.mxu0 0
    %2494 = vmatpush1.bf16.msra.mxu0 0
    %2495 = vmatprep.subr.bf16.mxu0 0
    %2496 = vmatpush1.bf16.msra.mxu0 0
    %2497 = vmatprep.subr.bf16.mxu0 0
    %2498 = vmatpush1.bf16.msra.mxu0 0
    %2499 = vmatprep.subr.bf16.mxu0 0
    %2500 = vmatpush1.bf16.msra.mxu0 0
    %2501 = vmatprep.subr.bf16.mxu0 0
    %2502 = vmatpush1.bf16.msra.mxu0 0
    %2503 = vmatprep.subr.bf16.mxu0 0
    %2504 = vmatpush1.bf16.msra.mxu0 0
    %2505 = vmatprep.subr.bf16.mxu0 0
    %2506 = vmatpush1.bf16.msra.mxu0 0
    %2507 = vmatprep.subr.bf16.mxu0 0
    %2508 = vmatpush1.bf16.msra.mxu0 0
    %2509 = vmatprep.mubr.bf16.mxu0 0
    %2510 = vmatmul.mubr.bf16.gmra.mrb[0].mxu0 %v2460
    %v2511 = vpop.f32.mrb[0].mxu0
    %v2512 = vadd.f32 0.0, %v2511
    %v2513 = vpop.f32.mrb[0].mxu0
    %v2514 = vpop.f32.mrb[0].mxu0
    %v2515 = vadd.f32 0.0, %v2514
    %v2516 = vpop.f32.mrb[0].mxu0
    %2517 = vmatprep.mubr.bf16.mxu0 0
    %2518 = vmatmul.mubr.bf16.gmra.mrb[0].mxu0 %v2463
    %v2519 = vpop.f32.mrb[0].mxu0
    %v2520 = vadd.f32 0.0, %v2519
    %v2521 = vpop.f32.mrb[0].mxu0
    %v2522 = vpop.f32.mrb[0].mxu0
    %v2523 = vadd.f32 0.0, %v2522
    %v2524 = vpop.f32.mrb[0].mxu0
    %2525 = vmatprep.mubr.bf16.mxu0 0
    %2526 = vmatmul.mubr.bf16.gmra.mrb[0].mxu0 %v2466
    %v2527 = vpop.f32.mrb[0].mxu0
    %v2528 = vadd.f32 0.0, %v2527
    %v2529 = vpop.f32.mrb[0].mxu0
    %v2530 = vpop.f32.mrb[0].mxu0
    %v2531 = vadd.f32 0.0, %v2530
    %v2532 = vpop.f32.mrb[0].mxu0
    %2533 = vmatprep.mubr.bf16.mxu0 0
    %2534 = vmatmul.mubr.bf16.gmra.mrb[0].mxu0 %v2469
    %v2535 = vpop.f32.mrb[0].mxu0
    %v2536 = vadd.f32 0.0, %v2535
    %v2537 = vpop.f32.mrb[0].mxu0
    %v2538 = vpop.f32.mrb[0].mxu0
    %v2539 = vadd.f32 0.0, %v2538
    %v2540 = vpop.f32.mrb[0].mxu0
    %2541 = vmatprep.mubr.bf16.mxu0 0
    %2542 = vmatmul.mubr.bf16.gmra.mrb[0].mxu0 %v2472
    %v2543 = vpop.f32.mrb[0].mxu0
    %v2544 = vadd.f32 0.0, %v2543
    %v2545 = vpop.f32.mrb[0].mxu0
    %v2546 = vpop.f32.mrb[0].mxu0
    %v2547 = vadd.f32 0.0, %v2546
    %v2548 = vpop.f32.mrb[0].mxu0
    %2549 = vmatprep.mubr.bf16.mxu0 0
    %2550 = vmatmul.mubr.bf16.gmra.mrb[0].mxu0 %v2475
    %v2551 = vpop.f32.mrb[0].mxu0
    %v2552 = vadd.f32 0.0, %v2551
    %v2553 = vpop.f32.mrb[0].mxu0
    %v2554 = vpop.f32.mrb[0].mxu0
    %v2555 = vpop.f32.mrb[0].mxu0
    %2556 = vdwg.mxu0
    %v2557 = vadd.f32 %v2398, %v2512
    %v2558 = vadd.f32 %v2399, %v2515
    %v2559 = vadd.f32 %v2400, %v2520
    %v2560 = vadd.f32 %v2401, %v2523
    %v2561 = vadd.f32 %v2402, %v2528
    %v2562 = vadd.f32 %v2403, %v2531
    %v2563 = vadd.f32 %v2404, %v2536
    %v2564 = vadd.f32 %v2405, %v2539
    %v2565 = vadd.f32 %v2406, %v2544
    %v2566 = vadd.f32 %v2407, %v2547
    %v2567 = vadd.f32 %v2408, %v2552
    %v2568 = vld [vmem:[#allocation3 + $0xf] sm:$0xff]
    %v2569 = vld [vmem:[#allocation3 + $0x17] sm:$0xff]
    %v2570 = vld [vmem:[#allocation3 + $0x1f] sm:$0xff]
    %v2571 = vld [vmem:[#allocation3 + $0x27] sm:$0xff]
    %v2572 = vld [vmem:[#allocation3 + $0x2f] sm:$0xff]
    %v2573 = vld [vmem:[#allocation3 + $0x37] sm:$0xff]
    %v2574 = vld [vmem:[#allocation3 + $0x3f] sm:$0xff]
    %v2575 = vld [vmem:[#allocation3 + $0x47] sm:$0xff]
    %v2576 = vld [vmem:[#allocation3 + $0x4f] sm:$0xff]
    %v2577 = vld [vmem:[#allocation3 + $0x57] sm:$0xff]
    %v2578 = vld [vmem:[#allocation3 + $0x5f] sm:$0x3]
    %v2579 = vpack.c.bf16 %v2569, %v2568
    %v2580 = vpack.c.bf16 %v2571, %v2570
    %v2581 = vpack.c.bf16 %v2573, %v2572
    %v2582 = vpack.c.bf16 %v2575, %v2574
    %v2583 = vpack.c.bf16 %v2577, %v2576
    %v2584 = vpack.c.bf16 %v2578, %v2578
    %s2585 = scalar_lea.vmem %s2, 224
    %v2586 = vld [vmem:[%s2585] sm:$0xf]
    %v2587 = vld [vmem:[%s2585 + $0x4] sm:$0xf]
    %v2588 = vld [vmem:[%s2585 + $0x8] sm:$0xf]
    %v2589 = vld [vmem:[%s2585 + $0xc] sm:$0xf]
    %v2590 = vld [vmem:[%s2585 + $0x10] sm:$0xf]
    %v2591 = vld [vmem:[%s2585 + $0x14] sm:$0xf]
    %v2592 = vld [vmem:[%s2585 + $0x18] sm:$0xf]
    %v2593 = vld [vmem:[%s2585 + $0x1c] sm:$0xf]
    %v2602 = vunpack.c.l.b16 %v2586
    %v2603 = vunpack.c.l.b16 %v2587
    %v2604 = vunpack.c.l.b16 %v2588
    %v2605 = vunpack.c.l.b16 %v2589
    %v2606 = vunpack.c.l.b16 %v2590
    %v2607 = vunpack.c.l.b16 %v2591
    %v2608 = vunpack.c.l.b16 %v2592
    %v2609 = vunpack.c.l.b16 %v2593
    %v2610 = vpack.c.b16 %v2603, %v2602
    %v2611 = vpack.c.b16 %v2605, %v2604
    %v2612 = vpack.c.b16 %v2607, %v2606
    %v2613 = vpack.c.b16 %v2609, %v2608
    %v2619 = vsel %vm618, %v2579, 0
    %v2622 = vsel %vm618, %v2580, 0
    %v2625 = vsel %vm618, %v2581, 0
    %v2628 = vsel %vm618, %v2582, 0
    %v2631 = vsel %vm618, %v2583, 0
    %v2634 = vsel %vm618, %v2584, 0
    %2636 = vmatprep.subr.bf16.mxu0 0
    %2637 = vmatpush1.bf16.msra.mxu0 %v2610
    %2638 = vmatprep.subr.bf16.mxu0 0
    %2639 = vmatpush1.bf16.msra.mxu0 %v2611
    %2640 = vmatprep.subr.bf16.mxu0 0
    %2641 = vmatpush1.bf16.msra.mxu0 %v2612
    %2642 = vmatprep.subr.bf16.mxu0 0
    %2643 = vmatpush1.bf16.msra.mxu0 %v2613
    %2644 = vmatprep.subr.bf16.mxu0 0
    %2645 = vmatpush1.bf16.msra.mxu0 0
    %2646 = vmatprep.subr.bf16.mxu0 0
    %2647 = vmatpush1.bf16.msra.mxu0 0
    %2648 = vmatprep.subr.bf16.mxu0 0
    %2649 = vmatpush1.bf16.msra.mxu0 0
    %2650 = vmatprep.subr.bf16.mxu0 0
    %2651 = vmatpush1.bf16.msra.mxu0 0
    %2652 = vmatprep.subr.bf16.mxu0 0
    %2653 = vmatpush1.bf16.msra.mxu0 0
    %2654 = vmatprep.subr.bf16.mxu0 0
    %2655 = vmatpush1.bf16.msra.mxu0 0
    %2656 = vmatprep.subr.bf16.mxu0 0
    %2657 = vmatpush1.bf16.msra.mxu0 0
    %2658 = vmatprep.subr.bf16.mxu0 0
    %2659 = vmatpush1.bf16.msra.mxu0 0
    %2660 = vmatprep.subr.bf16.mxu0 0
    %2661 = vmatpush1.bf16.msra.mxu0 0
    %2662 = vmatprep.subr.bf16.mxu0 0
    %2663 = vmatpush1.bf16.msra.mxu0 0
    %2664 = vmatprep.subr.bf16.mxu0 0
    %2665 = vmatpush1.bf16.msra.mxu0 0
    %2666 = vmatprep.subr.bf16.mxu0 0
    %2667 = vmatpush1.bf16.msra.mxu0 0
    %2668 = vmatprep.mubr.bf16.mxu0 0
    %2669 = vmatmul.mubr.bf16.gmra.mrb[0].mxu0 %v2619
    %v2670 = vpop.f32.mrb[0].mxu0
    %v2671 = vadd.f32 0.0, %v2670
    %v2672 = vpop.f32.mrb[0].mxu0
    %v2673 = vpop.f32.mrb[0].mxu0
    %v2674 = vadd.f32 0.0, %v2673
    %v2675 = vpop.f32.mrb[0].mxu0
    %2676 = vmatprep.mubr.bf16.mxu0 0
    %2677 = vmatmul.mubr.bf16.gmra.mrb[0].mxu0 %v2622
    %v2678 = vpop.f32.mrb[0].mxu0
    %v2679 = vadd.f32 0.0, %v2678
    %v2680 = vpop.f32.mrb[0].mxu0
    %v2681 = vpop.f32.mrb[0].mxu0
    %v2682 = vadd.f32 0.0, %v2681
    %v2683 = vpop.f32.mrb[0].mxu0
    %2684 = vmatprep.mubr.bf16.mxu0 0
    %2685 = vmatmul.mubr.bf16.gmra.mrb[0].mxu0 %v2625
    %v2686 = vpop.f32.mrb[0].mxu0
    %v2687 = vadd.f32 0.0, %v2686
    %v2688 = vpop.f32.mrb[0].mxu0
    %v2689 = vpop.f32.mrb[0].mxu0
    %v2690 = vadd.f32 0.0, %v2689
    %v2691 = vpop.f32.mrb[0].mxu0
    %2692 = vmatprep.mubr.bf16.mxu0 0
    %2693 = vmatmul.mubr.bf16.gmra.mrb[0].mxu0 %v2628
    %v2694 = vpop.f32.mrb[0].mxu0
    %v2695 = vadd.f32 0.0, %v2694
    %v2696 = vpop.f32.mrb[0].mxu0
    %v2697 = vpop.f32.mrb[0].mxu0
    %v2698 = vadd.f32 0.0, %v2697
    %v2699 = vpop.f32.mrb[0].mxu0
    %2700 = vmatprep.mubr.bf16.mxu0 0
    %2701 = vmatmul.mubr.bf16.gmra.mrb[0].mxu0 %v2631
    %v2702 = vpop.f32.mrb[0].mxu0
    %v2703 = vadd.f32 0.0, %v2702
    %v2704 = vpop.f32.mrb[0].mxu0
    %v2705 = vpop.f32.mrb[0].mxu0
    %v2706 = vadd.f32 0.0, %v2705
    %v2707 = vpop.f32.mrb[0].mxu0
    %2708 = vmatprep.mubr.bf16.mxu0 0
    %2709 = vmatmul.mubr.bf16.gmra.mrb[0].mxu0 %v2634
    %v2710 = vpop.f32.mrb[0].mxu0
    %v2711 = vadd.f32 0.0, %v2710
    %v2712 = vpop.f32.mrb[0].mxu0
    %v2713 = vpop.f32.mrb[0].mxu0
    %v2714 = vpop.f32.mrb[0].mxu0
    %2715 = vdwg.mxu0
    %v2716 = vadd.f32 %v2557, %v2671
    %v2717 = vadd.f32 %v2558, %v2674
    %v2718 = vadd.f32 %v2559, %v2679
    %v2719 = vadd.f32 %v2560, %v2682
    %v2720 = vadd.f32 %v2561, %v2687
    %v2721 = vadd.f32 %v2562, %v2690
    %v2722 = vadd.f32 %v2563, %v2695
    %v2723 = vadd.f32 %v2564, %v2698
    %v2724 = vadd.f32 %v2565, %v2703
    %v2725 = vadd.f32 %v2566, %v2706
    %v2726 = vadd.f32 %v2567, %v2711
    %v2727 = vld [vmem:[#allocation3 + $0x10] sm:$0xff]
    %v2728 = vld [vmem:[#allocation3 + $0x18] sm:$0xff]
    %v2729 = vld [vmem:[#allocation3 + $0x20] sm:$0xff]
    %v2730 = vld [vmem:[#allocation3 + $0x28] sm:$0xff]
    %v2731 = vld [vmem:[#allocation3 + $0x30] sm:$0xff]
    %v2732 = vld [vmem:[#allocation3 + $0x38] sm:$0xff]
    %v2733 = vld [vmem:[#allocation3 + $0x40] sm:$0xff]
    %v2734 = vld [vmem:[#allocation3 + $0x48] sm:$0xff]
    %v2735 = vld [vmem:[#allocation3 + $0x50] sm:$0xff]
    %v2736 = vld [vmem:[#allocation3 + $0x58] sm:$0xff]
    %v2737 = vld [vmem:[#allocation3 + $0x60] sm:$0x3]
    %v2738 = vpack.c.bf16 %v2728, %v2727
    %v2739 = vpack.c.bf16 %v2730, %v2729
    %v2740 = vpack.c.bf16 %v2732, %v2731
    %v2741 = vpack.c.bf16 %v2734, %v2733
    %v2742 = vpack.c.bf16 %v2736, %v2735
    %v2743 = vpack.c.bf16 %v2737, %v2737
    %s2744 = scalar_lea.vmem %s2, 256
    %v2745 = vld [vmem:[%s2744] sm:$0xf]
    %v2746 = vld [vmem:[%s2744 + $0x4] sm:$0xf]
    %v2747 = vld [vmem:[%s2744 + $0x8] sm:$0xf]
    %v2748 = vld [vmem:[%s2744 + $0xc] sm:$0xf]
    %v2749 = vld [vmem:[%s2744 + $0x10] sm:$0xf]
    %v2750 = vld [vmem:[%s2744 + $0x14] sm:$0xf]
    %v2751 = vld [vmem:[%s2744 + $0x18] sm:$0xf]
    %v2752 = vld [vmem:[%s2744 + $0x1c] sm:$0xf]
    %v2761 = vunpack.c.l.b16 %v2745
    %v2762 = vunpack.c.l.b16 %v2746
    %v2763 = vunpack.c.l.b16 %v2747
    %v2764 = vunpack.c.l.b16 %v2748
    %v2765 = vunpack.c.l.b16 %v2749
    %v2766 = vunpack.c.l.b16 %v2750
    %v2767 = vunpack.c.l.b16 %v2751
    %v2768 = vunpack.c.l.b16 %v2752
    %v2769 = vpack.c.b16 %v2762, %v2761
    %v2770 = vpack.c.b16 %v2764, %v2763
    %v2771 = vpack.c.b16 %v2766, %v2765
    %v2772 = vpack.c.b16 %v2768, %v2767
    %v2778 = vsel %vm618, %v2738, 0
    %v2781 = vsel %vm618, %v2739, 0
    %v2784 = vsel %vm618, %v2740, 0
    %v2787 = vsel %vm618, %v2741, 0
    %v2790 = vsel %vm618, %v2742, 0
    %v2793 = vsel %vm618, %v2743, 0
    %2795 = vmatprep.subr.bf16.mxu0 0
    %2796 = vmatpush1.bf16.msra.mxu0 %v2769
    %2797 = vmatprep.subr.bf16.mxu0 0
    %2798 = vmatpush1.bf16.msra.mxu0 %v2770
    %2799 = vmatprep.subr.bf16.mxu0 0
    %2800 = vmatpush1.bf16.msra.mxu0 %v2771
    %2801 = vmatprep.subr.bf16.mxu0 0
    %2802 = vmatpush1.bf16.msra.mxu0 %v2772
    %2803 = vmatprep.subr.bf16.mxu0 0
    %2804 = vmatpush1.bf16.msra.mxu0 0
    %2805 = vmatprep.subr.bf16.mxu0 0
    %2806 = vmatpush1.bf16.msra.mxu0 0
    %2807 = vmatprep.subr.bf16.mxu0 0
    %2808 = vmatpush1.bf16.msra.mxu0 0
    %2809 = vmatprep.subr.bf16.mxu0 0
    %2810 = vmatpush1.bf16.msra.mxu0 0
    %2811 = vmatprep.subr.bf16.mxu0 0
    %2812 = vmatpush1.bf16.msra.mxu0 0
    %2813 = vmatprep.subr.bf16.mxu0 0
    %2814 = vmatpush1.bf16.msra.mxu0 0
    %2815 = vmatprep.subr.bf16.mxu0 0
    %2816 = vmatpush1.bf16.msra.mxu0 0
    %2817 = vmatprep.subr.bf16.mxu0 0
    %2818 = vmatpush1.bf16.msra.mxu0 0
    %2819 = vmatprep.subr.bf16.mxu0 0
    %2820 = vmatpush1.bf16.msra.mxu0 0
    %2821 = vmatprep.subr.bf16.mxu0 0
    %2822 = vmatpush1.bf16.msra.mxu0 0
    %2823 = vmatprep.subr.bf16.mxu0 0
    %2824 = vmatpush1.bf16.msra.mxu0 0
    %2825 = vmatprep.subr.bf16.mxu0 0
    %2826 = vmatpush1.bf16.msra.mxu0 0
    %2827 = vmatprep.mubr.bf16.mxu0 0
    %2828 = vmatmul.mubr.bf16.gmra.mrb[0].mxu0 %v2778
    %v2829 = vpop.f32.mrb[0].mxu0
    %v2830 = vadd.f32 0.0, %v2829
    %v2831 = vpop.f32.mrb[0].mxu0
    %v2832 = vpop.f32.mrb[0].mxu0
    %v2833 = vadd.f32 0.0, %v2832
    %v2834 = vpop.f32.mrb[0].mxu0
    %2835 = vmatprep.mubr.bf16.mxu0 0
    %2836 = vmatmul.mubr.bf16.gmra.mrb[0].mxu0 %v2781
    %v2837 = vpop.f32.mrb[0].mxu0
    %v2838 = vadd.f32 0.0, %v2837
    %v2839 = vpop.f32.mrb[0].mxu0
    %v2840 = vpop.f32.mrb[0].mxu0
    %v2841 = vadd.f32 0.0, %v2840
    %v2842 = vpop.f32.mrb[0].mxu0
    %2843 = vmatprep.mubr.bf16.mxu0 0
    %2844 = vmatmul.mubr.bf16.gmra.mrb[0].mxu0 %v2784
    %v2845 = vpop.f32.mrb[0].mxu0
    %v2846 = vadd.f32 0.0, %v2845
    %v2847 = vpop.f32.mrb[0].mxu0
    %v2848 = vpop.f32.mrb[0].mxu0
    %v2849 = vadd.f32 0.0, %v2848
    %v2850 = vpop.f32.mrb[0].mxu0
    %2851 = vmatprep.mubr.bf16.mxu0 0
    %2852 = vmatmul.mubr.bf16.gmra.mrb[0].mxu0 %v2787
    %v2853 = vpop.f32.mrb[0].mxu0
    %v2854 = vadd.f32 0.0, %v2853
    %v2855 = vpop.f32.mrb[0].mxu0
    %v2856 = vpop.f32.mrb[0].mxu0
    %v2857 = vadd.f32 0.0, %v2856
    %v2858 = vpop.f32.mrb[0].mxu0
    %2859 = vmatprep.mubr.bf16.mxu0 0
    %2860 = vmatmul.mubr.bf16.gmra.mrb[0].mxu0 %v2790
    %v2861 = vpop.f32.mrb[0].mxu0
    %v2862 = vadd.f32 0.0, %v2861
    %v2863 = vpop.f32.mrb[0].mxu0
    %v2864 = vpop.f32.mrb[0].mxu0
    %v2865 = vadd.f32 0.0, %v2864
    %v2866 = vpop.f32.mrb[0].mxu0
    %2867 = vmatprep.mubr.bf16.mxu0 0
    %2868 = vmatmul.mubr.bf16.gmra.mrb[0].mxu0 %v2793
    %v2869 = vpop.f32.mrb[0].mxu0
    %v2870 = vadd.f32 0.0, %v2869
    %v2871 = vpop.f32.mrb[0].mxu0
    %v2872 = vpop.f32.mrb[0].mxu0
    %v2873 = vpop.f32.mrb[0].mxu0
    %2874 = vdwg.mxu0
    %v2875 = vadd.f32 %v2716, %v2830
    %v2876 = vadd.f32 %v2717, %v2833
    %v2877 = vadd.f32 %v2718, %v2838
    %v2878 = vadd.f32 %v2719, %v2841
    %v2879 = vadd.f32 %v2720, %v2846
    %v2880 = vadd.f32 %v2721, %v2849
    %v2881 = vadd.f32 %v2722, %v2854
    %v2882 = vadd.f32 %v2723, %v2857
    %v2883 = vadd.f32 %v2724, %v2862
    %v2884 = vadd.f32 %v2725, %v2865
    %v2885 = vadd.f32 %v2726, %v2870
    %2886 = vst.msk [vmem:[#allocation4] sm:$0xff] %vm618, %v2875
    %2887 = vst.msk [vmem:[#allocation4 + $0x8] sm:$0xff] %vm618, %v2876
    %2888 = vst.msk [vmem:[#allocation4 + $0x10] sm:$0xff] %vm618, %v2877
    %2889 = vst.msk [vmem:[#allocation4 + $0x18] sm:$0xff] %vm618, %v2878
    %2890 = vst.msk [vmem:[#allocation4 + $0x20] sm:$0xff] %vm618, %v2879
    %2891 = vst.msk [vmem:[#allocation4 + $0x28] sm:$0xff] %vm618, %v2880
    %2892 = vst.msk [vmem:[#allocation4 + $0x30] sm:$0xff] %vm618, %v2881
    %2893 = vst.msk [vmem:[#allocation4 + $0x38] sm:$0xff] %vm618, %v2882
    %2894 = vst.msk [vmem:[#allocation4 + $0x40] sm:$0xff] %vm618, %v2883
    %2895 = vst.msk [vmem:[#allocation4 + $0x48] sm:$0xff] %vm618, %v2884
    %vm2896 = vcmask 517120
    %2897 = vst.msk [vmem:[#allocation4 + $0x50] sm:$0x3] %vm2896, %v2885
    %v2898 = vld [vmem:[#allocation4] sm:$0x1f]
    %vm2899 = vcmask 520192
    %v2900 = vsel %vm2899, %v2898, 0.0
    %v2901 = vrot.slane %v2900, 4
    %v2902 = vadd.f32 %v2900, %v2901
    %v2903 = vrot.slane %v2902, 2
    %v2904 = vadd.f32 %v2902, %v2903
    %v2905 = vrot.slane %v2904, 1
    %v2906 = vadd.f32 %v2904, %v2905
    %v2907 = vadd.f32 %v2906, 0.0
    %v2908 = vmul.f32 %v2898, %v2898
    %v2909 = vsel %vm2899, %v2908, 0.0
    %v2910 = vrot.slane %v2909, 4
    %v2911 = vadd.f32 %v2909, %v2910
    %v2912 = vrot.slane %v2911, 2
    %v2913 = vadd.f32 %v2911, %v2912
    %v2914 = vrot.slane %v2913, 1
    %v2915 = vadd.f32 %v2913, %v2914
    %v2916 = vadd.f32 %v2915, 0.0
    %v2917 = vld [vmem:[#allocation4 + $0x7] sm:$0x1f]
    %v2918 = vsel %vm2899, %v2917, 0.0
    %v2919 = vrot.slane %v2918, 4
    %v2920 = vadd.f32 %v2918, %v2919
    %v2921 = vrot.slane %v2920, 2
    %v2922 = vadd.f32 %v2920, %v2921
    %v2923 = vrot.slane %v2922, 1
    %v2924 = vadd.f32 %v2922, %v2923
    %v2925 = vadd.f32 %v2907, %v2924
    %v2926 = vmul.f32 %v2917, %v2917
    %v2927 = vsel %vm2899, %v2926, 0.0
    %v2928 = vrot.slane %v2927, 4
    %v2929 = vadd.f32 %v2927, %v2928
    %v2930 = vrot.slane %v2929, 2
    %v2931 = vadd.f32 %v2929, %v2930
    %v2932 = vrot.slane %v2931, 1
    %v2933 = vadd.f32 %v2931, %v2932
    %v2934 = vadd.f32 %v2916, %v2933
    %v2935 = vld [vmem:[#allocation4 + $0xe] sm:$0x1f]
    %v2936 = vsel %vm2899, %v2935, 0.0
    %v2937 = vrot.slane %v2936, 4
    %v2938 = vadd.f32 %v2936, %v2937
    %v2939 = vrot.slane %v2938, 2
    %v2940 = vadd.f32 %v2938, %v2939
    %v2941 = vrot.slane %v2940, 1
    %v2942 = vadd.f32 %v2940, %v2941
    %v2943 = vadd.f32 %v2925, %v2942
    %v2944 = vmul.f32 %v2935, %v2935
    %v2945 = vsel %vm2899, %v2944, 0.0
    %v2946 = vrot.slane %v2945, 4
    %v2947 = vadd.f32 %v2945, %v2946
    %v2948 = vrot.slane %v2947, 2
    %v2949 = vadd.f32 %v2947, %v2948
    %v2950 = vrot.slane %v2949, 1
    %v2951 = vadd.f32 %v2949, %v2950
    %v2952 = vadd.f32 %v2934, %v2951
    %v2953 = vld [vmem:[#allocation4 + $0x15] sm:$0x1f]
    %v2954 = vsel %vm2899, %v2953, 0.0
    %v2955 = vrot.slane %v2954, 4
    %v2956 = vadd.f32 %v2954, %v2955
    %v2957 = vrot.slane %v2956, 2
    %v2958 = vadd.f32 %v2956, %v2957
    %v2959 = vrot.slane %v2958, 1
    %v2960 = vadd.f32 %v2958, %v2959
    %v2961 = vadd.f32 %v2943, %v2960
    %v2962 = vmul.f32 %v2953, %v2953
    %v2963 = vsel %vm2899, %v2962, 0.0
    %v2964 = vrot.slane %v2963, 4
    %v2965 = vadd.f32 %v2963, %v2964
    %v2966 = vrot.slane %v2965, 2
    %v2967 = vadd.f32 %v2965, %v2966
    %v2968 = vrot.slane %v2967, 1
    %v2969 = vadd.f32 %v2967, %v2968
    %v2970 = vadd.f32 %v2952, %v2969
    %v2971 = vld [vmem:[#allocation4 + $0x1c] sm:$0x1f]
    %v2972 = vsel %vm2899, %v2971, 0.0
    %v2973 = vrot.slane %v2972, 4
    %v2974 = vadd.f32 %v2972, %v2973
    %v2975 = vrot.slane %v2974, 2
    %v2976 = vadd.f32 %v2974, %v2975
    %v2977 = vrot.slane %v2976, 1
    %v2978 = vadd.f32 %v2976, %v2977
    %v2979 = vadd.f32 %v2961, %v2978
    %v2980 = vmul.f32 %v2971, %v2971
    %v2981 = vsel %vm2899, %v2980, 0.0
    %v2982 = vrot.slane %v2981, 4
    %v2983 = vadd.f32 %v2981, %v2982
    %v2984 = vrot.slane %v2983, 2
    %v2985 = vadd.f32 %v2983, %v2984
    %v2986 = vrot.slane %v2985, 1
    %v2987 = vadd.f32 %v2985, %v2986
    %v2988 = vadd.f32 %v2970, %v2987
    %v2989 = vld [vmem:[#allocation4 + $0x31] sm:$0x1f]
    %v2990 = vsel %vm2899, %v2989, 0.0
    %v2991 = vrot.slane %v2990, 4
    %v2992 = vadd.f32 %v2990, %v2991
    %v2993 = vrot.slane %v2992, 2
    %v2994 = vadd.f32 %v2992, %v2993
    %v2995 = vrot.slane %v2994, 1
    %v2996 = vadd.f32 %v2994, %v2995
    %v2997 = vadd.f32 %v2979, %v2996
    %v2998 = vmul.f32 %v2989, %v2989
    %v2999 = vsel %vm2899, %v2998, 0.0
    %v3000 = vrot.slane %v2999, 4
    %v3001 = vadd.f32 %v2999, %v3000
    %v3002 = vrot.slane %v3001, 2
    %v3003 = vadd.f32 %v3001, %v3002
    %v3004 = vrot.slane %v3003, 1
    %v3005 = vadd.f32 %v3003, %v3004
    %v3006 = vadd.f32 %v2988, %v3005
    %v3007 = vld [vmem:[#allocation4 + $0x38] sm:$0x1f]
    %v3008 = vsel %vm2899, %v3007, 0.0
    %v3009 = vrot.slane %v3008, 4
    %v3010 = vadd.f32 %v3008, %v3009
    %v3011 = vrot.slane %v3010, 2
    %v3012 = vadd.f32 %v3010, %v3011
    %v3013 = vrot.slane %v3012, 1
    %v3014 = vadd.f32 %v3012, %v3013
    %v3015 = vadd.f32 %v2997, %v3014
    %v3016 = vmul.f32 %v3007, %v3007
    %v3017 = vsel %vm2899, %v3016, 0.0
    %v3018 = vrot.slane %v3017, 4
    %v3019 = vadd.f32 %v3017, %v3018
    %v3020 = vrot.slane %v3019, 2
    %v3021 = vadd.f32 %v3019, %v3020
    %v3022 = vrot.slane %v3021, 1
    %v3023 = vadd.f32 %v3021, %v3022
    %v3024 = vadd.f32 %v3006, %v3023
    %v3025 = vld [vmem:[#allocation4 + $0x3f] sm:$0x1f]
    %v3026 = vsel %vm2899, %v3025, 0.0
    %v3027 = vrot.slane %v3026, 4
    %v3028 = vadd.f32 %v3026, %v3027
    %v3029 = vrot.slane %v3028, 2
    %v3030 = vadd.f32 %v3028, %v3029
    %v3031 = vrot.slane %v3030, 1
    %v3032 = vadd.f32 %v3030, %v3031
    %v3033 = vadd.f32 %v3015, %v3032
    %v3034 = vmul.f32 %v3025, %v3025
    %v3035 = vsel %vm2899, %v3034, 0.0
    %v3036 = vrot.slane %v3035, 4
    %v3037 = vadd.f32 %v3035, %v3036
    %v3038 = vrot.slane %v3037, 2
    %v3039 = vadd.f32 %v3037, %v3038
    %v3040 = vrot.slane %v3039, 1
    %v3041 = vadd.f32 %v3039, %v3040
    %v3042 = vadd.f32 %v3024, %v3041
    %v3043 = vld [vmem:[#allocation4 + $0x46] sm:$0x1f]
    %v3044 = vsel %vm2899, %v3043, 0.0
    %v3045 = vrot.slane %v3044, 4
    %v3046 = vadd.f32 %v3044, %v3045
    %v3047 = vrot.slane %v3046, 2
    %v3048 = vadd.f32 %v3046, %v3047
    %v3049 = vrot.slane %v3048, 1
    %v3050 = vadd.f32 %v3048, %v3049
    %v3051 = vadd.f32 %v3033, %v3050
    %v3052 = vmul.f32 %v3043, %v3043
    %v3053 = vsel %vm2899, %v3052, 0.0
    %v3054 = vrot.slane %v3053, 4
    %v3055 = vadd.f32 %v3053, %v3054
    %v3056 = vrot.slane %v3055, 2
    %v3057 = vadd.f32 %v3055, %v3056
    %v3058 = vrot.slane %v3057, 1
    %v3059 = vadd.f32 %v3057, %v3058
    %v3060 = vadd.f32 %v3042, %v3059
    %v3061 = vld [vmem:[#allocation4 + $0x4d] sm:$0x1f]
    %v3062 = vsel %vm2899, %v3061, 0.0
    %v3063 = vrot.slane %v3062, 4
    %v3064 = vadd.f32 %v3062, %v3063
    %v3065 = vrot.slane %v3064, 2
    %v3066 = vadd.f32 %v3064, %v3065
    %v3067 = vrot.slane %v3066, 1
    %v3068 = vadd.f32 %v3066, %v3067
    %v3069 = vadd.f32 %v3051, %v3068
    %v3070 = vmul.f32 %v3061, %v3061
    %v3071 = vsel %vm2899, %v3070, 0.0
    %v3072 = vrot.slane %v3071, 4
    %v3073 = vadd.f32 %v3071, %v3072
    %v3074 = vrot.slane %v3073, 2
    %v3075 = vadd.f32 %v3073, %v3074
    %v3076 = vrot.slane %v3075, 1
    %v3077 = vadd.f32 %v3075, %v3076
    %v3078 = vadd.f32 %v3060, %v3077
    %v3079 = vmul.f32 %v3069, 0.02
    %v3080 = vmul.f32 %v3078, 0.02
    %v3081 = vmul.f32 %v3079, %v3079
    %v3082 = vsub.f32 %v3080, %v3081
    %v3083 = vmax.f32 %v3082, 0.0
    %v3084 = vld [vmem:[%s5 + $0x1] sm:$0x1]
    %v3085 = vadd.f32 %v3083, 1e-05
    %v3086 = vrsqrt.pop %v3085
    %v3087 = vmul.f32 %v3084, %v3086
    %v3088 = vld [vmem:[%s6 + $0x1] sm:$0x1]
    %v3089 = vmul.f32 %v3079, %v3087
    %v3090 = vsub.f32 %v3088, %v3089
    %v3091 = vld [vmem:[#allocation4] sm:$0xff]
    %v3092 = vld [vmem:[#allocation4 + $0x8] sm:$0xff]
    %v3093 = vld [vmem:[#allocation4 + $0x10] sm:$0xff]
    %v3094 = vld [vmem:[#allocation4 + $0x18] sm:$0xff]
    %v3095 = vld [vmem:[#allocation4 + $0x20] sm:$0xff]
    %v3096 = vld [vmem:[#allocation4 + $0x28] sm:$0xff]
    %v3097 = vld [vmem:[#allocation4 + $0x30] sm:$0xff]
    %v3098 = vld [vmem:[#allocation4 + $0x38] sm:$0xff]
    %v3099 = vld [vmem:[#allocation4 + $0x40] sm:$0xff]
    %v3100 = vld [vmem:[#allocation4 + $0x48] sm:$0xff]
    %v3101 = vld [vmem:[#allocation4 + $0x50] sm:$0x3]
    %v3102 = vlaneseq
    %v3103 = vshrl.u32 %v3102, 7
    %v3104 = vsub.s32 0, %v3103
    %v3105 = vrot.slane %v3087, %v3104
    %v3106 = vmul.f32 %v3091, %v3105
    %v3107 = vmul.f32 %v3092, %v3105
    %v3108 = vmul.f32 %v3093, %v3105
    %v3109 = vmul.f32 %v3094, %v3105
    %v3110 = vmul.f32 %v3095, %v3105
    %v3111 = vmul.f32 %v3096, %v3105
    %v3112 = vmul.f32 %v3097, %v3105
    %v3113 = vmul.f32 %v3098, %v3105
    %v3114 = vmul.f32 %v3099, %v3105
    %v3115 = vmul.f32 %v3100, %v3105
    %v3116 = vmul.f32 %v3101, %v3105
    %v3117 = vlaneseq
    %v3118 = vshrl.u32 %v3117, 7
    %v3119 = vsub.s32 0, %v3118
    %v3120 = vrot.slane %v3090, %v3119
    %v3121 = vadd.f32 %v3106, %v3120
    %v3122 = vadd.f32 %v3107, %v3120
    %v3123 = vadd.f32 %v3108, %v3120
    %v3124 = vadd.f32 %v3109, %v3120
    %v3125 = vadd.f32 %v3110, %v3120
    %v3126 = vadd.f32 %v3111, %v3120
    %v3127 = vadd.f32 %v3112, %v3120
    %v3128 = vadd.f32 %v3113, %v3120
    %v3129 = vadd.f32 %v3114, %v3120
    %v3130 = vadd.f32 %v3115, %v3120
    %v3131 = vadd.f32 %v3116, %v3120
    %v3132 = vmax.f32 %v3121, 0.0
    %v3133 = vmax.f32 %v3122, 0.0
    %v3134 = vmax.f32 %v3123, 0.0
    %v3135 = vmax.f32 %v3124, 0.0
    %v3136 = vmax.f32 %v3125, 0.0
    %v3137 = vmax.f32 %v3126, 0.0
    %v3138 = vmax.f32 %v3127, 0.0
    %v3139 = vmax.f32 %v3128, 0.0
    %v3140 = vmax.f32 %v3129, 0.0
    %v3141 = vmax.f32 %v3130, 0.0
    %v3142 = vmax.f32 %v3131, 0.0
    %3143 = vst.msk [vmem:[#allocation4] sm:$0xff] %vm618, %v3132
    %3144 = vst.msk [vmem:[#allocation4 + $0x8] sm:$0xff] %vm618, %v3133
    %3145 = vst.msk [vmem:[#allocation4 + $0x10] sm:$0xff] %vm618, %v3134
    %3146 = vst.msk [vmem:[#allocation4 + $0x18] sm:$0xff] %vm618, %v3135
    %3147 = vst.msk [vmem:[#allocation4 + $0x20] sm:$0xff] %vm618, %v3136
    %3148 = vst.msk [vmem:[#allocation4 + $0x28] sm:$0xff] %vm618, %v3137
    %3149 = vst.msk [vmem:[#allocation4 + $0x30] sm:$0xff] %vm618, %v3138
    %3150 = vst.msk [vmem:[#allocation4 + $0x38] sm:$0xff] %vm618, %v3139
    %3151 = vst.msk [vmem:[#allocation4 + $0x40] sm:$0xff] %vm618, %v3140
    %3152 = vst.msk [vmem:[#allocation4 + $0x48] sm:$0xff] %vm618, %v3141
    %3153 = vst.msk [vmem:[#allocation4 + $0x50] sm:$0x3] %vm2896, %v3142
    %3154 = vst.msk [vmem:[#allocation5] sm:$0xff] %vm618, 0.0
    %3155 = vst.msk [vmem:[#allocation5 + $0x8] sm:$0xff] %vm618, 0.0
    %3156 = vst.msk [vmem:[#allocation5 + $0x10] sm:$0xff] %vm618, 0.0
    %3157 = vst.msk [vmem:[#allocation5 + $0x18] sm:$0xff] %vm618, 0.0
    %v3158 = vld [vmem:[#allocation4] ss:$2 sm:$0x3]
    %s3159 = scalar_lea.vmem [#allocation4], 1
    %v3160 = vld [vmem:[%s3159] ss:$2 sm:$0x3]
    %s3161 = scalar_lea.vmem [#allocation4], 7
    %v3162 = vld [vmem:[%s3161] ss:$2 sm:$0x3]
    %s3163 = scalar_lea.vmem [#allocation4], 8
    %v3164 = vld [vmem:[%s3163] ss:$2 sm:$0x3]
    %v3165 = vmax.f32 %v3158, %v3160
    %v3166 = vmax.f32 %v3162, %v3164
    %v3167 = vmax.f32 %v3165, %v3166
    %3168 = vst.msk [vmem:[#allocation5 + $0x5] sm:$0x3] %vm2896, %v3167
    %s3169 = scalar_lea.vmem [#allocation4], 14
    %v3170 = vld [vmem:[%s3169] ss:$2 sm:$0x3]
    %s3171 = scalar_lea.vmem [#allocation4], 15
    %v3172 = vld [vmem:[%s3171] ss:$2 sm:$0x3]
    %s3173 = scalar_lea.vmem [#allocation4], 21
    %v3174 = vld [vmem:[%s3173] ss:$2 sm:$0x3]
    %s3175 = scalar_lea.vmem [#allocation4], 22
    %v3176 = vld [vmem:[%s3175] ss:$2 sm:$0x3]
    %v3177 = vmax.f32 %v3170, %v3172
    %v3178 = vmax.f32 %v3174, %v3176
    %v3179 = vmax.f32 %v3177, %v3178
    %3180 = vst.msk [vmem:[#allocation5 + $0x9] sm:$0x3] %vm2896, %v3179
    %s3181 = scalar_lea.vmem [#allocation4], 49
    %v3182 = vld [vmem:[%s3181] ss:$2 sm:$0x3]
    %s3183 = scalar_lea.vmem [#allocation4], 50
    %v3184 = vld [vmem:[%s3183] ss:$2 sm:$0x3]
    %s3185 = scalar_lea.vmem [#allocation4], 56
    %v3186 = vld [vmem:[%s3185] ss:$2 sm:$0x3]
    %s3187 = scalar_lea.vmem [#allocation4], 57
    %v3188 = vld [vmem:[%s3187] ss:$2 sm:$0x3]
    %v3189 = vmax.f32 %v3182, %v3184
    %v3190 = vmax.f32 %v3186, %v3188
    %v3191 = vmax.f32 %v3189, %v3190
    %3192 = vst.msk [vmem:[#allocation5 + $0x15] sm:$0x3] %vm2896, %v3191
    %s3193 = scalar_lea.vmem [#allocation4], 63
    %v3194 = vld [vmem:[%s3193] ss:$2 sm:$0x3]
    %s3195 = scalar_lea.vmem [#allocation4], 64
    %v3196 = vld [vmem:[%s3195] ss:$2 sm:$0x3]
    %s3197 = scalar_lea.vmem [#allocation4], 70
    %v3198 = vld [vmem:[%s3197] ss:$2 sm:$0x3]
    %s3199 = scalar_lea.vmem [#allocation4], 71
    %v3200 = vld [vmem:[%s3199] ss:$2 sm:$0x3]
    %v3201 = vmax.f32 %v3194, %v3196
    %v3202 = vmax.f32 %v3198, %v3200
    %v3203 = vmax.f32 %v3201, %v3202
    %3204 = vst.msk [vmem:[#allocation5 + $0x19] sm:$0x3] %vm2896, %v3203
    %v3205 = vld [vmem:[#allocation5] sm:$0xff]
    %v3206 = vld [vmem:[#allocation5 + $0x8] sm:$0xff]
    %v3207 = vld [vmem:[#allocation5 + $0x10] sm:$0x3f]
    %v3208 = vpack.c.bf16 %v3206, %v3205
    %v3209 = vpack.c.bf16 %v3207, %v3207
    %v3210 = vld [vmem:[%s3] sm:$0xf]
    %v3211 = vld [vmem:[%s3 + $0x4] sm:$0xf]
    %v3212 = vld [vmem:[%s3 + $0x8] sm:$0xf]
    %v3213 = vld [vmem:[%s3 + $0xc] sm:$0xf]
    %v3214 = vld [vmem:[%s3 + $0x10] sm:$0xf]
    %v3215 = vld [vmem:[%s3 + $0x14] sm:$0xf]
    %v3216 = vld [vmem:[%s3 + $0x18] sm:$0xf]
    %v3217 = vld [vmem:[%s3 + $0x1c] sm:$0xf]
    %v3218 = vld [vmem:[#allocation5 + $0x1] sm:$0xff]
    %v3219 = vld [vmem:[#allocation5 + $0x9] sm:$0xff]
    %v3220 = vld [vmem:[#allocation5 + $0x11] sm:$0x3f]
    %v3221 = vpack.c.bf16 %v3219, %v3218
    %v3222 = vpack.c.bf16 %v3220, %v3220
    %s3223 = scalar_lea.vmem %s3, 32
    %v3224 = vld [vmem:[%s3223] sm:$0xf]
    %v3225 = vld [vmem:[%s3223 + $0x4] sm:$0xf]
    %v3226 = vld [vmem:[%s3223 + $0x8] sm:$0xf]
    %v3227 = vld [vmem:[%s3223 + $0xc] sm:$0xf]
    %v3228 = vld [vmem:[%s3223 + $0x10] sm:$0xf]
    %v3229 = vld [vmem:[%s3223 + $0x14] sm:$0xf]
    %v3230 = vld [vmem:[%s3223 + $0x18] sm:$0xf]
    %v3231 = vld [vmem:[%s3223 + $0x1c] sm:$0xf]
    %v3240 = vunpack.c.l.b16 %v3224
    %v3241 = vunpack.c.l.b16 %v3225
    %v3242 = vunpack.c.l.b16 %v3226
    %v3243 = vunpack.c.l.b16 %v3227
    %v3244 = vunpack.c.l.b16 %v3228
    %v3245 = vunpack.c.l.b16 %v3229
    %v3246 = vunpack.c.l.b16 %v3230
    %v3247 = vunpack.c.l.b16 %v3231
    %v3248 = vpack.c.b16 %v3241, %v3240
    %v3249 = vpack.c.b16 %v3243, %v3242
    %v3250 = vpack.c.b16 %v3245, %v3244
    %v3251 = vpack.c.b16 %v3247, %v3246
    %v3257 = vsel %vm618, %v3221, 0
    %v3260 = vsel %vm618, %v3222, 0
    %3262 = vmatprep.subr.bf16.mxu0 0
    %3263 = vmatpush1.bf16.msra.mxu0 %v3248
    %3264 = vmatprep.subr.bf16.mxu0 0
    %3265 = vmatpush1.bf16.msra.mxu0 %v3249
    %3266 = vmatprep.subr.bf16.mxu0 0
    %3267 = vmatpush1.bf16.msra.mxu0 %v3250
    %3268 = vmatprep.subr.bf16.mxu0 0
    %3269 = vmatpush1.bf16.msra.mxu0 %v3251
    %3270 = vmatprep.subr.bf16.mxu0 0
    %3271 = vmatpush1.bf16.msra.mxu0 0
    %3272 = vmatprep.subr.bf16.mxu0 0
    %3273 = vmatpush1.bf16.msra.mxu0 0
    %3274 = vmatprep.subr.bf16.mxu0 0
    %3275 = vmatpush1.bf16.msra.mxu0 0
    %3276 = vmatprep.subr.bf16.mxu0 0
    %3277 = vmatpush1.bf16.msra.mxu0 0
    %3278 = vmatprep.subr.bf16.mxu0 0
    %3279 = vmatpush1.bf16.msra.mxu0 0
    %3280 = vmatprep.subr.bf16.mxu0 0
    %3281 = vmatpush1.bf16.msra.mxu0 0
    %3282 = vmatprep.subr.bf16.mxu0 0
    %3283 = vmatpush1.bf16.msra.mxu0 0
    %3284 = vmatprep.subr.bf16.mxu0 0
    %3285 = vmatpush1.bf16.msra.mxu0 0
    %3286 = vmatprep.subr.bf16.mxu0 0
    %3287 = vmatpush1.bf16.msra.mxu0 0
    %3288 = vmatprep.subr.bf16.mxu0 0
    %3289 = vmatpush1.bf16.msra.mxu0 0
    %3290 = vmatprep.subr.bf16.mxu0 0
    %3291 = vmatpush1.bf16.msra.mxu0 0
    %3292 = vmatprep.subr.bf16.mxu0 0
    %3293 = vmatpush1.bf16.msra.mxu0 0
    %3294 = vmatprep.mubr.bf16.mxu0 0
    %3295 = vmatmul.mubr.bf16.gmra.mrb[0].mxu0 %v3257
    %v3296 = vpop.f32.mrb[0].mxu0
    %v3297 = vadd.f32 0.0, %v3296
    %v3298 = vpop.f32.mrb[0].mxu0
    %v3299 = vpop.f32.mrb[0].mxu0
    %v3300 = vadd.f32 0.0, %v3299
    %v3301 = vpop.f32.mrb[0].mxu0
    %3302 = vmatprep.mubr.bf16.mxu0 0
    %3303 = vmatmul.mubr.bf16.gmra.mrb[0].mxu0 %v3260
    %v3304 = vpop.f32.mrb[0].mxu0
    %v3305 = vadd.f32 0.0, %v3304
    %v3306 = vpop.f32.mrb[0].mxu0
    %v3307 = vpop.f32.mrb[0].mxu0
    %v3308 = vpop.f32.mrb[0].mxu0
    %3309 = vdwg.mxu0
    %v3318 = vunpack.c.l.b16 %v3210
    %v3319 = vunpack.c.l.b16 %v3211
    %v3320 = vunpack.c.l.b16 %v3212
    %v3321 = vunpack.c.l.b16 %v3213
    %v3322 = vunpack.c.l.b16 %v3214
    %v3323 = vunpack.c.l.b16 %v3215
    %v3324 = vunpack.c.l.b16 %v3216
    %v3325 = vunpack.c.l.b16 %v3217
    %v3326 = vpack.c.b16 %v3319, %v3318
    %v3327 = vpack.c.b16 %v3321, %v3320
    %v3328 = vpack.c.b16 %v3323, %v3322
    %v3329 = vpack.c.b16 %v3325, %v3324
    %v3335 = vsel %vm618, %v3208, 0
    %v3338 = vsel %vm618, %v3209, 0
    %3340 = vmatprep.subr.bf16.mxu0 0
    %3341 = vmatpush1.bf16.msra.mxu0 %v3326
    %3342 = vmatprep.subr.bf16.mxu0 0
    %3343 = vmatpush1.bf16.msra.mxu0 %v3327
    %3344 = vmatprep.subr.bf16.mxu0 0
    %3345 = vmatpush1.bf16.msra.mxu0 %v3328
    %3346 = vmatprep.subr.bf16.mxu0 0
    %3347 = vmatpush1.bf16.msra.mxu0 %v3329
    %3348 = vmatprep.subr.bf16.mxu0 0
    %3349 = vmatpush1.bf16.msra.mxu0 0
    %3350 = vmatprep.subr.bf16.mxu0 0
    %3351 = vmatpush1.bf16.msra.mxu0 0
    %3352 = vmatprep.subr.bf16.mxu0 0
    %3353 = vmatpush1.bf16.msra.mxu0 0
    %3354 = vmatprep.subr.bf16.mxu0 0
    %3355 = vmatpush1.bf16.msra.mxu0 0
    %3356 = vmatprep.subr.bf16.mxu0 0
    %3357 = vmatpush1.bf16.msra.mxu0 0
    %3358 = vmatprep.subr.bf16.mxu0 0
    %3359 = vmatpush1.bf16.msra.mxu0 0
    %3360 = vmatprep.subr.bf16.mxu0 0
    %3361 = vmatpush1.bf16.msra.mxu0 0
    %3362 = vmatprep.subr.bf16.mxu0 0
    %3363 = vmatpush1.bf16.msra.mxu0 0
    %3364 = vmatprep.subr.bf16.mxu0 0
    %3365 = vmatpush1.bf16.msra.mxu0 0
    %3366 = vmatprep.subr.bf16.mxu0 0
    %3367 = vmatpush1.bf16.msra.mxu0 0
    %3368 = vmatprep.subr.bf16.mxu0 0
    %3369 = vmatpush1.bf16.msra.mxu0 0
    %3370 = vmatprep.subr.bf16.mxu0 0
    %3371 = vmatpush1.bf16.msra.mxu0 0
    %3372 = vmatprep.mubr.bf16.mxu0 0
    %3373 = vmatmul.mubr.bf16.gmra.mrb[0].mxu0 %v3335
    %v3374 = vpop.f32.mrb[0].mxu0
    %v3375 = vadd.f32 %v3297, %v3374
    %v3376 = vpop.f32.mrb[0].mxu0
    %v3377 = vpop.f32.mrb[0].mxu0
    %v3378 = vadd.f32 %v3300, %v3377
    %v3379 = vpop.f32.mrb[0].mxu0
    %3380 = vmatprep.mubr.bf16.mxu0 0
    %3381 = vmatmul.mubr.bf16.gmra.mrb[0].mxu0 %v3338
    %v3382 = vpop.f32.mrb[0].mxu0
    %v3383 = vadd.f32 %v3305, %v3382
    %v3384 = vpop.f32.mrb[0].mxu0
    %v3385 = vpop.f32.mrb[0].mxu0
    %v3386 = vpop.f32.mrb[0].mxu0
    %3387 = vdwg.mxu0
    %v3388 = vld [vmem:[#allocation5 + $0x2] sm:$0xff]
    %v3389 = vld [vmem:[#allocation5 + $0xa] sm:$0xff]
    %v3390 = vld [vmem:[#allocation5 + $0x12] sm:$0x3f]
    %v3391 = vpack.c.bf16 %v3389, %v3388
    %v3392 = vpack.c.bf16 %v3390, %v3390
    %s3393 = scalar_lea.vmem %s3, 64
    %v3394 = vld [vmem:[%s3393] sm:$0xf]
    %v3395 = vld [vmem:[%s3393 + $0x4] sm:$0xf]
    %v3396 = vld [vmem:[%s3393 + $0x8] sm:$0xf]
    %v3397 = vld [vmem:[%s3393 + $0xc] sm:$0xf]
    %v3398 = vld [vmem:[%s3393 + $0x10] sm:$0xf]
    %v3399 = vld [vmem:[%s3393 + $0x14] sm:$0xf]
    %v3400 = vld [vmem:[%s3393 + $0x18] sm:$0xf]
    %v3401 = vld [vmem:[%s3393 + $0x1c] sm:$0xf]
    %v3410 = vunpack.c.l.b16 %v3394
    %v3411 = vunpack.c.l.b16 %v3395
    %v3412 = vunpack.c.l.b16 %v3396
    %v3413 = vunpack.c.l.b16 %v3397
    %v3414 = vunpack.c.l.b16 %v3398
    %v3415 = vunpack.c.l.b16 %v3399
    %v3416 = vunpack.c.l.b16 %v3400
    %v3417 = vunpack.c.l.b16 %v3401
    %v3418 = vpack.c.b16 %v3411, %v3410
    %v3419 = vpack.c.b16 %v3413, %v3412
    %v3420 = vpack.c.b16 %v3415, %v3414
    %v3421 = vpack.c.b16 %v3417, %v3416
    %v3427 = vsel %vm618, %v3391, 0
    %v3430 = vsel %vm618, %v3392, 0
    %3432 = vmatprep.subr.bf16.mxu0 0
    %3433 = vmatpush1.bf16.msra.mxu0 %v3418
    %3434 = vmatprep.subr.bf16.mxu0 0
    %3435 = vmatpush1.bf16.msra.mxu0 %v3419
    %3436 = vmatprep.subr.bf16.mxu0 0
    %3437 = vmatpush1.bf16.msra.mxu0 %v3420
    %3438 = vmatprep.subr.bf16.mxu0 0
    %3439 = vmatpush1.bf16.msra.mxu0 %v3421
    %3440 = vmatprep.subr.bf16.mxu0 0
    %3441 = vmatpush1.bf16.msra.mxu0 0
    %3442 = vmatprep.subr.bf16.mxu0 0
    %3443 = vmatpush1.bf16.msra.mxu0 0
    %3444 = vmatprep.subr.bf16.mxu0 0
    %3445 = vmatpush1.bf16.msra.mxu0 0
    %3446 = vmatprep.subr.bf16.mxu0 0
    %3447 = vmatpush1.bf16.msra.mxu0 0
    %3448 = vmatprep.subr.bf16.mxu0 0
    %3449 = vmatpush1.bf16.msra.mxu0 0
    %3450 = vmatprep.subr.bf16.mxu0 0
    %3451 = vmatpush1.bf16.msra.mxu0 0
    %3452 = vmatprep.subr.bf16.mxu0 0
    %3453 = vmatpush1.bf16.msra.mxu0 0
    %3454 = vmatprep.subr.bf16.mxu0 0
    %3455 = vmatpush1.bf16.msra.mxu0 0
    %3456 = vmatprep.subr.bf16.mxu0 0
    %3457 = vmatpush1.bf16.msra.mxu0 0
    %3458 = vmatprep.subr.bf16.mxu0 0
    %3459 = vmatpush1.bf16.msra.mxu0 0
    %3460 = vmatprep.subr.bf16.mxu0 0
    %3461 = vmatpush1.bf16.msra.mxu0 0
    %3462 = vmatprep.subr.bf16.mxu0 0
    %3463 = vmatpush1.bf16.msra.mxu0 0
    %3464 = vmatprep.mubr.bf16.mxu0 0
    %3465 = vmatmul.mubr.bf16.gmra.mrb[0].mxu0 %v3427
    %v3466 = vpop.f32.mrb[0].mxu0
    %v3467 = vadd.f32 0.0, %v3466
    %v3468 = vpop.f32.mrb[0].mxu0
    %v3469 = vpop.f32.mrb[0].mxu0
    %v3470 = vadd.f32 0.0, %v3469
    %v3471 = vpop.f32.mrb[0].mxu0
    %3472 = vmatprep.mubr.bf16.mxu0 0
    %3473 = vmatmul.mubr.bf16.gmra.mrb[0].mxu0 %v3430
    %v3474 = vpop.f32.mrb[0].mxu0
    %v3475 = vadd.f32 0.0, %v3474
    %v3476 = vpop.f32.mrb[0].mxu0
    %v3477 = vpop.f32.mrb[0].mxu0
    %v3478 = vpop.f32.mrb[0].mxu0
    %3479 = vdwg.mxu0
    %v3480 = vadd.f32 %v3375, %v3467
    %v3481 = vadd.f32 %v3378, %v3470
    %v3482 = vadd.f32 %v3383, %v3475
    %v3483 = vld [vmem:[#allocation5 + $0x4] sm:$0xff]
    %v3484 = vld [vmem:[#allocation5 + $0xc] sm:$0xff]
    %v3485 = vld [vmem:[#allocation5 + $0x14] sm:$0x3f]
    %v3486 = vpack.c.bf16 %v3484, %v3483
    %v3487 = vpack.c.bf16 %v3485, %v3485
    %s3488 = scalar_lea.vmem %s3, 96
    %v3489 = vld [vmem:[%s3488] sm:$0xf]
    %v3490 = vld [vmem:[%s3488 + $0x4] sm:$0xf]
    %v3491 = vld [vmem:[%s3488 + $0x8] sm:$0xf]
    %v3492 = vld [vmem:[%s3488 + $0xc] sm:$0xf]
    %v3493 = vld [vmem:[%s3488 + $0x10] sm:$0xf]
    %v3494 = vld [vmem:[%s3488 + $0x14] sm:$0xf]
    %v3495 = vld [vmem:[%s3488 + $0x18] sm:$0xf]
    %v3496 = vld [vmem:[%s3488 + $0x1c] sm:$0xf]
    %v3505 = vunpack.c.l.b16 %v3489
    %v3506 = vunpack.c.l.b16 %v3490
    %v3507 = vunpack.c.l.b16 %v3491
    %v3508 = vunpack.c.l.b16 %v3492
    %v3509 = vunpack.c.l.b16 %v3493
    %v3510 = vunpack.c.l.b16 %v3494
    %v3511 = vunpack.c.l.b16 %v3495
    %v3512 = vunpack.c.l.b16 %v3496
    %v3513 = vpack.c.b16 %v3506, %v3505
    %v3514 = vpack.c.b16 %v3508, %v3507
    %v3515 = vpack.c.b16 %v3510, %v3509
    %v3516 = vpack.c.b16 %v3512, %v3511
    %v3522 = vsel %vm618, %v3486, 0
    %v3525 = vsel %vm618, %v3487, 0
    %3527 = vmatprep.subr.bf16.mxu0 0
    %3528 = vmatpush1.bf16.msra.mxu0 %v3513
    %3529 = vmatprep.subr.bf16.mxu0 0
    %3530 = vmatpush1.bf16.msra.mxu0 %v3514
    %3531 = vmatprep.subr.bf16.mxu0 0
    %3532 = vmatpush1.bf16.msra.mxu0 %v3515
    %3533 = vmatprep.subr.bf16.mxu0 0
    %3534 = vmatpush1.bf16.msra.mxu0 %v3516
    %3535 = vmatprep.subr.bf16.mxu0 0
    %3536 = vmatpush1.bf16.msra.mxu0 0
    %3537 = vmatprep.subr.bf16.mxu0 0
    %3538 = vmatpush1.bf16.msra.mxu0 0
    %3539 = vmatprep.subr.bf16.mxu0 0
    %3540 = vmatpush1.bf16.msra.mxu0 0
    %3541 = vmatprep.subr.bf16.mxu0 0
    %3542 = vmatpush1.bf16.msra.mxu0 0
    %3543 = vmatprep.subr.bf16.mxu0 0
    %3544 = vmatpush1.bf16.msra.mxu0 0
    %3545 = vmatprep.subr.bf16.mxu0 0
    %3546 = vmatpush1.bf16.msra.mxu0 0
    %3547 = vmatprep.subr.bf16.mxu0 0
    %3548 = vmatpush1.bf16.msra.mxu0 0
    %3549 = vmatprep.subr.bf16.mxu0 0
    %3550 = vmatpush1.bf16.msra.mxu0 0
    %3551 = vmatprep.subr.bf16.mxu0 0
    %3552 = vmatpush1.bf16.msra.mxu0 0
    %3553 = vmatprep.subr.bf16.mxu0 0
    %3554 = vmatpush1.bf16.msra.mxu0 0
    %3555 = vmatprep.subr.bf16.mxu0 0
    %3556 = vmatpush1.bf16.msra.mxu0 0
    %3557 = vmatprep.subr.bf16.mxu0 0
    %3558 = vmatpush1.bf16.msra.mxu0 0
    %3559 = vmatprep.mubr.bf16.mxu0 0
    %3560 = vmatmul.mubr.bf16.gmra.mrb[0].mxu0 %v3522
    %v3561 = vpop.f32.mrb[0].mxu0
    %v3562 = vadd.f32 0.0, %v3561
    %v3563 = vpop.f32.mrb[0].mxu0
    %v3564 = vpop.f32.mrb[0].mxu0
    %v3565 = vadd.f32 0.0, %v3564
    %v3566 = vpop.f32.mrb[0].mxu0
    %3567 = vmatprep.mubr.bf16.mxu0 0
    %3568 = vmatmul.mubr.bf16.gmra.mrb[0].mxu0 %v3525
    %v3569 = vpop.f32.mrb[0].mxu0
    %v3570 = vadd.f32 0.0, %v3569
    %v3571 = vpop.f32.mrb[0].mxu0
    %v3572 = vpop.f32.mrb[0].mxu0
    %v3573 = vpop.f32.mrb[0].mxu0
    %3574 = vdwg.mxu0
    %v3575 = vadd.f32 %v3480, %v3562
    %v3576 = vadd.f32 %v3481, %v3565
    %v3577 = vadd.f32 %v3482, %v3570
    %v3578 = vld [vmem:[#allocation5 + $0x5] sm:$0xff]
    %v3579 = vld [vmem:[#allocation5 + $0xd] sm:$0xff]
    %v3580 = vld [vmem:[#allocation5 + $0x15] sm:$0x3f]
    %v3581 = vpack.c.bf16 %v3579, %v3578
    %v3582 = vpack.c.bf16 %v3580, %v3580
    %s3583 = scalar_lea.vmem %s3, 128
    %v3584 = vld [vmem:[%s3583] sm:$0xf]
    %v3585 = vld [vmem:[%s3583 + $0x4] sm:$0xf]
    %v3586 = vld [vmem:[%s3583 + $0x8] sm:$0xf]
    %v3587 = vld [vmem:[%s3583 + $0xc] sm:$0xf]
    %v3588 = vld [vmem:[%s3583 + $0x10] sm:$0xf]
    %v3589 = vld [vmem:[%s3583 + $0x14] sm:$0xf]
    %v3590 = vld [vmem:[%s3583 + $0x18] sm:$0xf]
    %v3591 = vld [vmem:[%s3583 + $0x1c] sm:$0xf]
    %v3600 = vunpack.c.l.b16 %v3584
    %v3601 = vunpack.c.l.b16 %v3585
    %v3602 = vunpack.c.l.b16 %v3586
    %v3603 = vunpack.c.l.b16 %v3587
    %v3604 = vunpack.c.l.b16 %v3588
    %v3605 = vunpack.c.l.b16 %v3589
    %v3606 = vunpack.c.l.b16 %v3590
    %v3607 = vunpack.c.l.b16 %v3591
    %v3608 = vpack.c.b16 %v3601, %v3600
    %v3609 = vpack.c.b16 %v3603, %v3602
    %v3610 = vpack.c.b16 %v3605, %v3604
    %v3611 = vpack.c.b16 %v3607, %v3606
    %v3617 = vsel %vm618, %v3581, 0
    %v3620 = vsel %vm618, %v3582, 0
    %3622 = vmatprep.subr.bf16.mxu0 0
    %3623 = vmatpush1.bf16.msra.mxu0 %v3608
    %3624 = vmatprep.subr.bf16.mxu0 0
    %3625 = vmatpush1.bf16.msra.mxu0 %v3609
    %3626 = vmatprep.subr.bf16.mxu0 0
    %3627 = vmatpush1.bf16.msra.mxu0 %v3610
    %3628 = vmatprep.subr.bf16.mxu0 0
    %3629 = vmatpush1.bf16.msra.mxu0 %v3611
    %3630 = vmatprep.subr.bf16.mxu0 0
    %3631 = vmatpush1.bf16.msra.mxu0 0
    %3632 = vmatprep.subr.bf16.mxu0 0
    %3633 = vmatpush1.bf16.msra.mxu0 0
    %3634 = vmatprep.subr.bf16.mxu0 0
    %3635 = vmatpush1.bf16.msra.mxu0 0
    %3636 = vmatprep.subr.bf16.mxu0 0
    %3637 = vmatpush1.bf16.msra.mxu0 0
    %3638 = vmatprep.subr.bf16.mxu0 0
    %3639 = vmatpush1.bf16.msra.mxu0 0
    %3640 = vmatprep.subr.bf16.mxu0 0
    %3641 = vmatpush1.bf16.msra.mxu0 0
    %3642 = vmatprep.subr.bf16.mxu0 0
    %3643 = vmatpush1.bf16.msra.mxu0 0
    %3644 = vmatprep.subr.bf16.mxu0 0
    %3645 = vmatpush1.bf16.msra.mxu0 0
    %3646 = vmatprep.subr.bf16.mxu0 0
    %3647 = vmatpush1.bf16.msra.mxu0 0
    %3648 = vmatprep.subr.bf16.mxu0 0
    %3649 = vmatpush1.bf16.msra.mxu0 0
    %3650 = vmatprep.subr.bf16.mxu0 0
    %3651 = vmatpush1.bf16.msra.mxu0 0
    %3652 = vmatprep.subr.bf16.mxu0 0
    %3653 = vmatpush1.bf16.msra.mxu0 0
    %3654 = vmatprep.mubr.bf16.mxu0 0
    %3655 = vmatmul.mubr.bf16.gmra.mrb[0].mxu0 %v3617
    %v3656 = vpop.f32.mrb[0].mxu0
    %v3657 = vadd.f32 0.0, %v3656
    %v3658 = vpop.f32.mrb[0].mxu0
    %v3659 = vpop.f32.mrb[0].mxu0
    %v3660 = vadd.f32 0.0, %v3659
    %v3661 = vpop.f32.mrb[0].mxu0
    %3662 = vmatprep.mubr.bf16.mxu0 0
    %3663 = vmatmul.mubr.bf16.gmra.mrb[0].mxu0 %v3620
    %v3664 = vpop.f32.mrb[0].mxu0
    %v3665 = vadd.f32 0.0, %v3664
    %v3666 = vpop.f32.mrb[0].mxu0
    %v3667 = vpop.f32.mrb[0].mxu0
    %v3668 = vpop.f32.mrb[0].mxu0
    %3669 = vdwg.mxu0
    %v3670 = vadd.f32 %v3575, %v3657
    %v3671 = vadd.f32 %v3576, %v3660
    %v3672 = vadd.f32 %v3577, %v3665
    %v3673 = vld [vmem:[#allocation5 + $0x6] sm:$0xff]
    %v3674 = vld [vmem:[#allocation5 + $0xe] sm:$0xff]
    %v3675 = vld [vmem:[#allocation5 + $0x16] sm:$0x3f]
    %v3676 = vpack.c.bf16 %v3674, %v3673
    %v3677 = vpack.c.bf16 %v3675, %v3675
    %s3678 = scalar_lea.vmem %s3, 160
    %v3679 = vld [vmem:[%s3678] sm:$0xf]
    %v3680 = vld [vmem:[%s3678 + $0x4] sm:$0xf]
    %v3681 = vld [vmem:[%s3678 + $0x8] sm:$0xf]
    %v3682 = vld [vmem:[%s3678 + $0xc] sm:$0xf]
    %v3683 = vld [vmem:[%s3678 + $0x10] sm:$0xf]
    %v3684 = vld [vmem:[%s3678 + $0x14] sm:$0xf]
    %v3685 = vld [vmem:[%s3678 + $0x18] sm:$0xf]
    %v3686 = vld [vmem:[%s3678 + $0x1c] sm:$0xf]
    %v3695 = vunpack.c.l.b16 %v3679
    %v3696 = vunpack.c.l.b16 %v3680
    %v3697 = vunpack.c.l.b16 %v3681
    %v3698 = vunpack.c.l.b16 %v3682
    %v3699 = vunpack.c.l.b16 %v3683
    %v3700 = vunpack.c.l.b16 %v3684
    %v3701 = vunpack.c.l.b16 %v3685
    %v3702 = vunpack.c.l.b16 %v3686
    %v3703 = vpack.c.b16 %v3696, %v3695
    %v3704 = vpack.c.b16 %v3698, %v3697
    %v3705 = vpack.c.b16 %v3700, %v3699
    %v3706 = vpack.c.b16 %v3702, %v3701
    %v3712 = vsel %vm618, %v3676, 0
    %v3715 = vsel %vm618, %v3677, 0
    %3717 = vmatprep.subr.bf16.mxu0 0
    %3718 = vmatpush1.bf16.msra.mxu0 %v3703
    %3719 = vmatprep.subr.bf16.mxu0 0
    %3720 = vmatpush1.bf16.msra.mxu0 %v3704
    %3721 = vmatprep.subr.bf16.mxu0 0
    %3722 = vmatpush1.bf16.msra.mxu0 %v3705
    %3723 = vmatprep.subr.bf16.mxu0 0
    %3724 = vmatpush1.bf16.msra.mxu0 %v3706
    %3725 = vmatprep.subr.bf16.mxu0 0
    %3726 = vmatpush1.bf16.msra.mxu0 0
    %3727 = vmatprep.subr.bf16.mxu0 0
    %3728 = vmatpush1.bf16.msra.mxu0 0
    %3729 = vmatprep.subr.bf16.mxu0 0
    %3730 = vmatpush1.bf16.msra.mxu0 0
    %3731 = vmatprep.subr.bf16.mxu0 0
    %3732 = vmatpush1.bf16.msra.mxu0 0
    %3733 = vmatprep.subr.bf16.mxu0 0
    %3734 = vmatpush1.bf16.msra.mxu0 0
    %3735 = vmatprep.subr.bf16.mxu0 0
    %3736 = vmatpush1.bf16.msra.mxu0 0
    %3737 = vmatprep.subr.bf16.mxu0 0
    %3738 = vmatpush1.bf16.msra.mxu0 0
    %3739 = vmatprep.subr.bf16.mxu0 0
    %3740 = vmatpush1.bf16.msra.mxu0 0
    %3741 = vmatprep.subr.bf16.mxu0 0
    %3742 = vmatpush1.bf16.msra.mxu0 0
    %3743 = vmatprep.subr.bf16.mxu0 0
    %3744 = vmatpush1.bf16.msra.mxu0 0
    %3745 = vmatprep.subr.bf16.mxu0 0
    %3746 = vmatpush1.bf16.msra.mxu0 0
    %3747 = vmatprep.subr.bf16.mxu0 0
    %3748 = vmatpush1.bf16.msra.mxu0 0
    %3749 = vmatprep.mubr.bf16.mxu0 0
    %3750 = vmatmul.mubr.bf16.gmra.mrb[0].mxu0 %v3712
    %v3751 = vpop.f32.mrb[0].mxu0
    %v3752 = vadd.f32 0.0, %v3751
    %v3753 = vpop.f32.mrb[0].mxu0
    %v3754 = vpop.f32.mrb[0].mxu0
    %v3755 = vadd.f32 0.0, %v3754
    %v3756 = vpop.f32.mrb[0].mxu0
    %3757 = vmatprep.mubr.bf16.mxu0 0
    %3758 = vmatmul.mubr.bf16.gmra.mrb[0].mxu0 %v3715
    %v3759 = vpop.f32.mrb[0].mxu0
    %v3760 = vadd.f32 0.0, %v3759
    %v3761 = vpop.f32.mrb[0].mxu0
    %v3762 = vpop.f32.mrb[0].mxu0
    %v3763 = vpop.f32.mrb[0].mxu0
    %3764 = vdwg.mxu0
    %v3765 = vadd.f32 %v3670, %v3752
    %v3766 = vadd.f32 %v3671, %v3755
    %v3767 = vadd.f32 %v3672, %v3760
    %v3768 = vld [vmem:[#allocation5 + $0x8] sm:$0xff]
    %v3769 = vld [vmem:[#allocation5 + $0x10] sm:$0xff]
    %v3770 = vld [vmem:[#allocation5 + $0x18] sm:$0x3f]
    %v3771 = vpack.c.bf16 %v3769, %v3768
    %v3772 = vpack.c.bf16 %v3770, %v3770
    %s3773 = scalar_lea.vmem %s3, 192
    %v3774 = vld [vmem:[%s3773] sm:$0xf]
    %v3775 = vld [vmem:[%s3773 + $0x4] sm:$0xf]
    %v3776 = vld [vmem:[%s3773 + $0x8] sm:$0xf]
    %v3777 = vld [vmem:[%s3773 + $0xc] sm:$0xf]
    %v3778 = vld [vmem:[%s3773 + $0x10] sm:$0xf]
    %v3779 = vld [vmem:[%s3773 + $0x14] sm:$0xf]
    %v3780 = vld [vmem:[%s3773 + $0x18] sm:$0xf]
    %v3781 = vld [vmem:[%s3773 + $0x1c] sm:$0xf]
    %v3790 = vunpack.c.l.b16 %v3774
    %v3791 = vunpack.c.l.b16 %v3775
    %v3792 = vunpack.c.l.b16 %v3776
    %v3793 = vunpack.c.l.b16 %v3777
    %v3794 = vunpack.c.l.b16 %v3778
    %v3795 = vunpack.c.l.b16 %v3779
    %v3796 = vunpack.c.l.b16 %v3780
    %v3797 = vunpack.c.l.b16 %v3781
    %v3798 = vpack.c.b16 %v3791, %v3790
    %v3799 = vpack.c.b16 %v3793, %v3792
    %v3800 = vpack.c.b16 %v3795, %v3794
    %v3801 = vpack.c.b16 %v3797, %v3796
    %v3807 = vsel %vm618, %v3771, 0
    %v3810 = vsel %vm618, %v3772, 0
    %3812 = vmatprep.subr.bf16.mxu0 0
    %3813 = vmatpush1.bf16.msra.mxu0 %v3798
    %3814 = vmatprep.subr.bf16.mxu0 0
    %3815 = vmatpush1.bf16.msra.mxu0 %v3799
    %3816 = vmatprep.subr.bf16.mxu0 0
    %3817 = vmatpush1.bf16.msra.mxu0 %v3800
    %3818 = vmatprep.subr.bf16.mxu0 0
    %3819 = vmatpush1.bf16.msra.mxu0 %v3801
    %3820 = vmatprep.subr.bf16.mxu0 0
    %3821 = vmatpush1.bf16.msra.mxu0 0
    %3822 = vmatprep.subr.bf16.mxu0 0
    %3823 = vmatpush1.bf16.msra.mxu0 0
    %3824 = vmatprep.subr.bf16.mxu0 0
    %3825 = vmatpush1.bf16.msra.mxu0 0
    %3826 = vmatprep.subr.bf16.mxu0 0
    %3827 = vmatpush1.bf16.msra.mxu0 0
    %3828 = vmatprep.subr.bf16.mxu0 0
    %3829 = vmatpush1.bf16.msra.mxu0 0
    %3830 = vmatprep.subr.bf16.mxu0 0
    %3831 = vmatpush1.bf16.msra.mxu0 0
    %3832 = vmatprep.subr.bf16.mxu0 0
    %3833 = vmatpush1.bf16.msra.mxu0 0
    %3834 = vmatprep.subr.bf16.mxu0 0
    %3835 = vmatpush1.bf16.msra.mxu0 0
    %3836 = vmatprep.subr.bf16.mxu0 0
    %3837 = vmatpush1.bf16.msra.mxu0 0
    %3838 = vmatprep.subr.bf16.mxu0 0
    %3839 = vmatpush1.bf16.msra.mxu0 0
    %3840 = vmatprep.subr.bf16.mxu0 0
    %3841 = vmatpush1.bf16.msra.mxu0 0
    %3842 = vmatprep.subr.bf16.mxu0 0
    %3843 = vmatpush1.bf16.msra.mxu0 0
    %3844 = vmatprep.mubr.bf16.mxu0 0
    %3845 = vmatmul.mubr.bf16.gmra.mrb[0].mxu0 %v3807
    %v3846 = vpop.f32.mrb[0].mxu0
    %v3847 = vadd.f32 0.0, %v3846
    %v3848 = vpop.f32.mrb[0].mxu0
    %v3849 = vpop.f32.mrb[0].mxu0
    %v3850 = vadd.f32 0.0, %v3849
    %v3851 = vpop.f32.mrb[0].mxu0
    %3852 = vmatprep.mubr.bf16.mxu0 0
    %3853 = vmatmul.mubr.bf16.gmra.mrb[0].mxu0 %v3810
    %v3854 = vpop.f32.mrb[0].mxu0
    %v3855 = vadd.f32 0.0, %v3854
    %v3856 = vpop.f32.mrb[0].mxu0
    %v3857 = vpop.f32.mrb[0].mxu0
    %v3858 = vpop.f32.mrb[0].mxu0
    %3859 = vdwg.mxu0
    %v3860 = vadd.f32 %v3765, %v3847
    %v3861 = vadd.f32 %v3766, %v3850
    %v3862 = vadd.f32 %v3767, %v3855
    %v3863 = vld [vmem:[#allocation5 + $0x9] sm:$0xff]
    %v3864 = vld [vmem:[#allocation5 + $0x11] sm:$0xff]
    %v3865 = vld [vmem:[#allocation5 + $0x19] sm:$0x3f]
    %v3866 = vpack.c.bf16 %v3864, %v3863
    %v3867 = vpack.c.bf16 %v3865, %v3865
    %s3868 = scalar_lea.vmem %s3, 224
    %v3869 = vld [vmem:[%s3868] sm:$0xf]
    %v3870 = vld [vmem:[%s3868 + $0x4] sm:$0xf]
    %v3871 = vld [vmem:[%s3868 + $0x8] sm:$0xf]
    %v3872 = vld [vmem:[%s3868 + $0xc] sm:$0xf]
    %v3873 = vld [vmem:[%s3868 + $0x10] sm:$0xf]
    %v3874 = vld [vmem:[%s3868 + $0x14] sm:$0xf]
    %v3875 = vld [vmem:[%s3868 + $0x18] sm:$0xf]
    %v3876 = vld [vmem:[%s3868 + $0x1c] sm:$0xf]
    %v3885 = vunpack.c.l.b16 %v3869
    %v3886 = vunpack.c.l.b16 %v3870
    %v3887 = vunpack.c.l.b16 %v3871
    %v3888 = vunpack.c.l.b16 %v3872
    %v3889 = vunpack.c.l.b16 %v3873
    %v3890 = vunpack.c.l.b16 %v3874
    %v3891 = vunpack.c.l.b16 %v3875
    %v3892 = vunpack.c.l.b16 %v3876
    %v3893 = vpack.c.b16 %v3886, %v3885
    %v3894 = vpack.c.b16 %v3888, %v3887
    %v3895 = vpack.c.b16 %v3890, %v3889
    %v3896 = vpack.c.b16 %v3892, %v3891
    %v3902 = vsel %vm618, %v3866, 0
    %v3905 = vsel %vm618, %v3867, 0
    %3907 = vmatprep.subr.bf16.mxu0 0
    %3908 = vmatpush1.bf16.msra.mxu0 %v3893
    %3909 = vmatprep.subr.bf16.mxu0 0
    %3910 = vmatpush1.bf16.msra.mxu0 %v3894
    %3911 = vmatprep.subr.bf16.mxu0 0
    %3912 = vmatpush1.bf16.msra.mxu0 %v3895
    %3913 = vmatprep.subr.bf16.mxu0 0
    %3914 = vmatpush1.bf16.msra.mxu0 %v3896
    %3915 = vmatprep.subr.bf16.mxu0 0
    %3916 = vmatpush1.bf16.msra.mxu0 0
    %3917 = vmatprep.subr.bf16.mxu0 0
    %3918 = vmatpush1.bf16.msra.mxu0 0
    %3919 = vmatprep.subr.bf16.mxu0 0
    %3920 = vmatpush1.bf16.msra.mxu0 0
    %3921 = vmatprep.subr.bf16.mxu0 0
    %3922 = vmatpush1.bf16.msra.mxu0 0
    %3923 = vmatprep.subr.bf16.mxu0 0
    %3924 = vmatpush1.bf16.msra.mxu0 0
    %3925 = vmatprep.subr.bf16.mxu0 0
    %3926 = vmatpush1.bf16.msra.mxu0 0
    %3927 = vmatprep.subr.bf16.mxu0 0
    %3928 = vmatpush1.bf16.msra.mxu0 0
    %3929 = vmatprep.subr.bf16.mxu0 0
    %3930 = vmatpush1.bf16.msra.mxu0 0
    %3931 = vmatprep.subr.bf16.mxu0 0
    %3932 = vmatpush1.bf16.msra.mxu0 0
    %3933 = vmatprep.subr.bf16.mxu0 0
    %3934 = vmatpush1.bf16.msra.mxu0 0
    %3935 = vmatprep.subr.bf16.mxu0 0
    %3936 = vmatpush1.bf16.msra.mxu0 0
    %3937 = vmatprep.subr.bf16.mxu0 0
    %3938 = vmatpush1.bf16.msra.mxu0 0
    %3939 = vmatprep.mubr.bf16.mxu0 0
    %3940 = vmatmul.mubr.bf16.gmra.mrb[0].mxu0 %v3902
    %v3941 = vpop.f32.mrb[0].mxu0
    %v3942 = vadd.f32 0.0, %v3941
    %v3943 = vpop.f32.mrb[0].mxu0
    %v3944 = vpop.f32.mrb[0].mxu0
    %v3945 = vadd.f32 0.0, %v3944
    %v3946 = vpop.f32.mrb[0].mxu0
    %3947 = vmatprep.mubr.bf16.mxu0 0
    %3948 = vmatmul.mubr.bf16.gmra.mrb[0].mxu0 %v3905
    %v3949 = vpop.f32.mrb[0].mxu0
    %v3950 = vadd.f32 0.0, %v3949
    %v3951 = vpop.f32.mrb[0].mxu0
    %v3952 = vpop.f32.mrb[0].mxu0
    %v3953 = vpop.f32.mrb[0].mxu0
    %3954 = vdwg.mxu0
    %v3955 = vadd.f32 %v3860, %v3942
    %v3956 = vadd.f32 %v3861, %v3945
    %v3957 = vadd.f32 %v3862, %v3950
    %v3958 = vld [vmem:[#allocation5 + $0xa] sm:$0xff]
    %v3959 = vld [vmem:[#allocation5 + $0x12] sm:$0xff]
    %v3960 = vld [vmem:[#allocation5 + $0x1a] sm:$0x3f]
    %v3961 = vpack.c.bf16 %v3959, %v3958
    %v3962 = vpack.c.bf16 %v3960, %v3960
    %s3963 = scalar_lea.vmem %s3, 256
    %v3964 = vld [vmem:[%s3963] sm:$0xf]
    %v3965 = vld [vmem:[%s3963 + $0x4] sm:$0xf]
    %v3966 = vld [vmem:[%s3963 + $0x8] sm:$0xf]
    %v3967 = vld [vmem:[%s3963 + $0xc] sm:$0xf]
    %v3968 = vld [vmem:[%s3963 + $0x10] sm:$0xf]
    %v3969 = vld [vmem:[%s3963 + $0x14] sm:$0xf]
    %v3970 = vld [vmem:[%s3963 + $0x18] sm:$0xf]
    %v3971 = vld [vmem:[%s3963 + $0x1c] sm:$0xf]
    %v3980 = vunpack.c.l.b16 %v3964
    %v3981 = vunpack.c.l.b16 %v3965
    %v3982 = vunpack.c.l.b16 %v3966
    %v3983 = vunpack.c.l.b16 %v3967
    %v3984 = vunpack.c.l.b16 %v3968
    %v3985 = vunpack.c.l.b16 %v3969
    %v3986 = vunpack.c.l.b16 %v3970
    %v3987 = vunpack.c.l.b16 %v3971
    %v3988 = vpack.c.b16 %v3981, %v3980
    %v3989 = vpack.c.b16 %v3983, %v3982
    %v3990 = vpack.c.b16 %v3985, %v3984
    %v3991 = vpack.c.b16 %v3987, %v3986
    %v3997 = vsel %vm618, %v3961, 0
    %v4000 = vsel %vm618, %v3962, 0
    %4002 = vmatprep.subr.bf16.mxu0 0
    %4003 = vmatpush1.bf16.msra.mxu0 %v3988
    %4004 = vmatprep.subr.bf16.mxu0 0
    %4005 = vmatpush1.bf16.msra.mxu0 %v3989
    %4006 = vmatprep.subr.bf16.mxu0 0
    %4007 = vmatpush1.bf16.msra.mxu0 %v3990
    %4008 = vmatprep.subr.bf16.mxu0 0
    %4009 = vmatpush1.bf16.msra.mxu0 %v3991
    %4010 = vmatprep.subr.bf16.mxu0 0
    %4011 = vmatpush1.bf16.msra.mxu0 0
    %4012 = vmatprep.subr.bf16.mxu0 0
    %4013 = vmatpush1.bf16.msra.mxu0 0
    %4014 = vmatprep.subr.bf16.mxu0 0
    %4015 = vmatpush1.bf16.msra.mxu0 0
    %4016 = vmatprep.subr.bf16.mxu0 0
    %4017 = vmatpush1.bf16.msra.mxu0 0
    %4018 = vmatprep.subr.bf16.mxu0 0
    %4019 = vmatpush1.bf16.msra.mxu0 0
    %4020 = vmatprep.subr.bf16.mxu0 0
    %4021 = vmatpush1.bf16.msra.mxu0 0
    %4022 = vmatprep.subr.bf16.mxu0 0
    %4023 = vmatpush1.bf16.msra.mxu0 0
    %4024 = vmatprep.subr.bf16.mxu0 0
    %4025 = vmatpush1.bf16.msra.mxu0 0
    %4026 = vmatprep.subr.bf16.mxu0 0
    %4027 = vmatpush1.bf16.msra.mxu0 0
    %4028 = vmatprep.subr.bf16.mxu0 0
    %4029 = vmatpush1.bf16.msra.mxu0 0
    %4030 = vmatprep.subr.bf16.mxu0 0
    %4031 = vmatpush1.bf16.msra.mxu0 0
    %4032 = vmatprep.subr.bf16.mxu0 0
    %4033 = vmatpush1.bf16.msra.mxu0 0
    %4034 = vmatprep.mubr.bf16.mxu0 0
    %4035 = vmatmul.mubr.bf16.gmra.mrb[0].mxu0 %v3997
    %v4036 = vpop.f32.mrb[0].mxu0
    %v4037 = vadd.f32 0.0, %v4036
    %v4038 = vpop.f32.mrb[0].mxu0
    %v4039 = vpop.f32.mrb[0].mxu0
    %v4040 = vadd.f32 0.0, %v4039
    %v4041 = vpop.f32.mrb[0].mxu0
    %4042 = vmatprep.mubr.bf16.mxu0 0
    %4043 = vmatmul.mubr.bf16.gmra.mrb[0].mxu0 %v4000
    %v4044 = vpop.f32.mrb[0].mxu0
    %v4045 = vadd.f32 0.0, %v4044
    %v4046 = vpop.f32.mrb[0].mxu0
    %v4047 = vpop.f32.mrb[0].mxu0
    %v4048 = vpop.f32.mrb[0].mxu0
    %4049 = vdwg.mxu0
    %v4050 = vadd.f32 %v3955, %v4037
    %v4051 = vadd.f32 %v3956, %v4040
    %v4052 = vadd.f32 %v3957, %v4045
    %4053 = vst.msk [vmem:[#allocation6] sm:$0xff] %vm618, %v4050
    %4054 = vst.msk [vmem:[#allocation6 + $0x8] sm:$0xff] %vm618, %v4051
    %4055 = vst.msk [vmem:[#allocation6 + $0x10] sm:$0x3f] %vm678, %v4052
    %v4056 = vld [vmem:[#allocation6] sm:$0x3]
    %v4057 = vsel %vm2896, %v4056, 0.0
    %v4058 = vrot.slane %v4057, 4
    %v4059 = vadd.f32 %v4057, %v4058
    %v4060 = vrot.slane %v4059, 2
    %v4061 = vadd.f32 %v4059, %v4060
    %v4062 = vrot.slane %v4061, 1
    %v4063 = vadd.f32 %v4061, %v4062
    %v4064 = vadd.f32 %v4063, 0.0
    %v4065 = vmul.f32 %v4056, %v4056
    %v4066 = vsel %vm2896, %v4065, 0.0
    %v4067 = vrot.slane %v4066, 4
    %v4068 = vadd.f32 %v4066, %v4067
    %v4069 = vrot.slane %v4068, 2
    %v4070 = vadd.f32 %v4068, %v4069
    %v4071 = vrot.slane %v4070, 1
    %v4072 = vadd.f32 %v4070, %v4071
    %v4073 = vadd.f32 %v4072, 0.0
    %v4074 = vld [vmem:[#allocation6 + $0x4] sm:$0x3]
    %v4075 = vsel %vm2896, %v4074, 0.0
    %v4076 = vrot.slane %v4075, 4
    %v4077 = vadd.f32 %v4075, %v4076
    %v4078 = vrot.slane %v4077, 2
    %v4079 = vadd.f32 %v4077, %v4078
    %v4080 = vrot.slane %v4079, 1
    %v4081 = vadd.f32 %v4079, %v4080
    %v4082 = vadd.f32 %v4064, %v4081
    %v4083 = vmul.f32 %v4074, %v4074
    %v4084 = vsel %vm2896, %v4083, 0.0
    %v4085 = vrot.slane %v4084, 4
    %v4086 = vadd.f32 %v4084, %v4085
    %v4087 = vrot.slane %v4086, 2
    %v4088 = vadd.f32 %v4086, %v4087
    %v4089 = vrot.slane %v4088, 1
    %v4090 = vadd.f32 %v4088, %v4089
    %v4091 = vadd.f32 %v4073, %v4090
    %v4092 = vld [vmem:[#allocation6 + $0x10] sm:$0x3]
    %v4093 = vsel %vm2896, %v4092, 0.0
    %v4094 = vrot.slane %v4093, 4
    %v4095 = vadd.f32 %v4093, %v4094
    %v4096 = vrot.slane %v4095, 2
    %v4097 = vadd.f32 %v4095, %v4096
    %v4098 = vrot.slane %v4097, 1
    %v4099 = vadd.f32 %v4097, %v4098
    %v4100 = vadd.f32 %v4082, %v4099
    %v4101 = vmul.f32 %v4092, %v4092
    %v4102 = vsel %vm2896, %v4101, 0.0
    %v4103 = vrot.slane %v4102, 4
    %v4104 = vadd.f32 %v4102, %v4103
    %v4105 = vrot.slane %v4104, 2
    %v4106 = vadd.f32 %v4104, %v4105
    %v4107 = vrot.slane %v4106, 1
    %v4108 = vadd.f32 %v4106, %v4107
    %v4109 = vadd.f32 %v4091, %v4108
    %v4110 = vld [vmem:[#allocation6 + $0x14] sm:$0x3]
    %v4111 = vsel %vm2896, %v4110, 0.0
    %v4112 = vrot.slane %v4111, 4
    %v4113 = vadd.f32 %v4111, %v4112
    %v4114 = vrot.slane %v4113, 2
    %v4115 = vadd.f32 %v4113, %v4114
    %v4116 = vrot.slane %v4115, 1
    %v4117 = vadd.f32 %v4115, %v4116
    %v4118 = vadd.f32 %v4100, %v4117
    %v4119 = vmul.f32 %v4110, %v4110
    %v4120 = vsel %vm2896, %v4119, 0.0
    %v4121 = vrot.slane %v4120, 4
    %v4122 = vadd.f32 %v4120, %v4121
    %v4123 = vrot.slane %v4122, 2
    %v4124 = vadd.f32 %v4122, %v4123
    %v4125 = vrot.slane %v4124, 1
    %v4126 = vadd.f32 %v4124, %v4125
    %v4127 = vadd.f32 %v4109, %v4126
    %v4128 = vmul.f32 %v4118, 0.125
    %v4129 = vmul.f32 %v4127, 0.125
    %v4130 = vmul.f32 %v4128, %v4128
    %v4131 = vsub.f32 %v4129, %v4130
    %v4132 = vmax.f32 %v4131, 0.0
    %v4133 = vld [vmem:[%s5 + $0x2] sm:$0x1]
    %v4134 = vadd.f32 %v4132, 1e-05
    %v4135 = vrsqrt.pop %v4134
    %v4136 = vmul.f32 %v4133, %v4135
    %v4137 = vld [vmem:[%s6 + $0x2] sm:$0x1]
    %v4138 = vmul.f32 %v4128, %v4136
    %v4139 = vsub.f32 %v4137, %v4138
    %v4140 = vld [vmem:[#allocation6] sm:$0xff]
    %v4141 = vld [vmem:[#allocation6 + $0x8] sm:$0xff]
    %v4142 = vld [vmem:[#allocation6 + $0x10] sm:$0x3f]
    %v4143 = vlaneseq
    %v4144 = vshrl.u32 %v4143, 7
    %v4145 = vsub.s32 0, %v4144
    %v4146 = vrot.slane %v4136, %v4145
    %v4147 = vmul.f32 %v4140, %v4146
    %v4148 = vmul.f32 %v4141, %v4146
    %v4149 = vmul.f32 %v4142, %v4146
    %v4150 = vlaneseq
    %v4151 = vshrl.u32 %v4150, 7
    %v4152 = vsub.s32 0, %v4151
    %v4153 = vrot.slane %v4139, %v4152
    %v4154 = vadd.f32 %v4147, %v4153
    %v4155 = vadd.f32 %v4148, %v4153
    %v4156 = vadd.f32 %v4149, %v4153
    %v4157 = vmax.f32 %v4154, 0.0
    %v4158 = vmax.f32 %v4155, 0.0
    %v4159 = vmax.f32 %v4156, 0.0
    %4160 = vst.msk [vmem:[#allocation6] sm:$0xff] %vm618, %v4157
    %4161 = vst.msk [vmem:[#allocation6 + $0x8] sm:$0xff] %vm618, %v4158
    %4162 = vst.msk [vmem:[#allocation6 + $0x10] sm:$0x3f] %vm678, %v4159
    %4163 = vst.msk [vmem:[#allocation7] sm:$0xff] %vm618, 0.0
    %4164 = vst.msk [vmem:[#allocation7 + $0x8] sm:$0xff] %vm618, 0.0
    %4165 = vst.msk [vmem:[#allocation7 + $0x10] sm:$0xff] %vm618, 0.0
    %4166 = vst.msk [vmem:[#allocation7 + $0x18] sm:$0xff] %vm618, 0.0
    %v4167 = vld [vmem:[#allocation6] sm:$0x3]
    %4168 = vst.msk [vmem:[#allocation7 + $0x5] sm:$0x3] %vm2896, %v4167
    %v4169 = vld [vmem:[#allocation6 + $0x4] sm:$0x3]
    %4170 = vst.msk [vmem:[#allocation7 + $0x9] sm:$0x3] %vm2896, %v4169
    %v4171 = vld [vmem:[#allocation6 + $0x10] sm:$0x3]
    %4172 = vst.msk [vmem:[#allocation7 + $0x15] sm:$0x3] %vm2896, %v4171
    %v4173 = vld [vmem:[#allocation6 + $0x14] sm:$0x3]
    %4174 = vst.msk [vmem:[#allocation7 + $0x19] sm:$0x3] %vm2896, %v4173
    %v4175 = vld [vmem:[#allocation7] sm:$0xff]
    %v4176 = vld [vmem:[#allocation7 + $0x8] sm:$0xff]
    %v4177 = vld [vmem:[#allocation7 + $0x10] sm:$0x3f]
    %v4178 = vpack.c.bf16 %v4176, %v4175
    %v4179 = vpack.c.bf16 %v4177, %v4177
    %v4180 = vld [vmem:[%s4] sm:$0xf]
    %v4181 = vld [vmem:[%s4 + $0x4] sm:$0xf]
    %v4182 = vld [vmem:[%s4 + $0x8] sm:$0xf]
    %v4183 = vld [vmem:[%s4 + $0xc] sm:$0xf]
    %v4184 = vld [vmem:[%s4 + $0x10] sm:$0xf]
    %v4185 = vld [vmem:[%s4 + $0x14] sm:$0xf]
    %v4186 = vld [vmem:[%s4 + $0x18] sm:$0xf]
    %v4187 = vld [vmem:[%s4 + $0x1c] sm:$0xf]
    %v4188 = vld [vmem:[#allocation7 + $0x1] sm:$0xff]
    %v4189 = vld [vmem:[#allocation7 + $0x9] sm:$0xff]
    %v4190 = vld [vmem:[#allocation7 + $0x11] sm:$0x3f]
    %v4191 = vpack.c.bf16 %v4189, %v4188
    %v4192 = vpack.c.bf16 %v4190, %v4190
    %s4193 = scalar_lea.vmem %s4, 32
    %v4194 = vld [vmem:[%s4193] sm:$0xf]
    %v4195 = vld [vmem:[%s4193 + $0x4] sm:$0xf]
    %v4196 = vld [vmem:[%s4193 + $0x8] sm:$0xf]
    %v4197 = vld [vmem:[%s4193 + $0xc] sm:$0xf]
    %v4198 = vld [vmem:[%s4193 + $0x10] sm:$0xf]
    %v4199 = vld [vmem:[%s4193 + $0x14] sm:$0xf]
    %v4200 = vld [vmem:[%s4193 + $0x18] sm:$0xf]
    %v4201 = vld [vmem:[%s4193 + $0x1c] sm:$0xf]
    %v4210 = vunpack.c.l.b16 %v4194
    %v4211 = vunpack.c.l.b16 %v4195
    %v4212 = vunpack.c.l.b16 %v4196
    %v4213 = vunpack.c.l.b16 %v4197
    %v4214 = vunpack.c.l.b16 %v4198
    %v4215 = vunpack.c.l.b16 %v4199
    %v4216 = vunpack.c.l.b16 %v4200
    %v4217 = vunpack.c.l.b16 %v4201
    %v4218 = vpack.c.b16 %v4211, %v4210
    %v4219 = vpack.c.b16 %v4213, %v4212
    %v4220 = vpack.c.b16 %v4215, %v4214
    %v4221 = vpack.c.b16 %v4217, %v4216
    %v4227 = vsel %vm618, %v4191, 0
    %v4230 = vsel %vm618, %v4192, 0
    %4232 = vmatprep.subr.bf16.mxu0 0
    %4233 = vmatpush1.bf16.msra.mxu0 %v4218
    %4234 = vmatprep.subr.bf16.mxu0 0
    %4235 = vmatpush1.bf16.msra.mxu0 %v4219
    %4236 = vmatprep.subr.bf16.mxu0 0
    %4237 = vmatpush1.bf16.msra.mxu0 %v4220
    %4238 = vmatprep.subr.bf16.mxu0 0
    %4239 = vmatpush1.bf16.msra.mxu0 %v4221
    %4240 = vmatprep.subr.bf16.mxu0 0
    %4241 = vmatpush1.bf16.msra.mxu0 0
    %4242 = vmatprep.subr.bf16.mxu0 0
    %4243 = vmatpush1.bf16.msra.mxu0 0
    %4244 = vmatprep.subr.bf16.mxu0 0
    %4245 = vmatpush1.bf16.msra.mxu0 0
    %4246 = vmatprep.subr.bf16.mxu0 0
    %4247 = vmatpush1.bf16.msra.mxu0 0
    %4248 = vmatprep.subr.bf16.mxu0 0
    %4249 = vmatpush1.bf16.msra.mxu0 0
    %4250 = vmatprep.subr.bf16.mxu0 0
    %4251 = vmatpush1.bf16.msra.mxu0 0
    %4252 = vmatprep.subr.bf16.mxu0 0
    %4253 = vmatpush1.bf16.msra.mxu0 0
    %4254 = vmatprep.subr.bf16.mxu0 0
    %4255 = vmatpush1.bf16.msra.mxu0 0
    %4256 = vmatprep.subr.bf16.mxu0 0
    %4257 = vmatpush1.bf16.msra.mxu0 0
    %4258 = vmatprep.subr.bf16.mxu0 0
    %4259 = vmatpush1.bf16.msra.mxu0 0
    %4260 = vmatprep.subr.bf16.mxu0 0
    %4261 = vmatpush1.bf16.msra.mxu0 0
    %4262 = vmatprep.subr.bf16.mxu0 0
    %4263 = vmatpush1.bf16.msra.mxu0 0
    %4264 = vmatprep.mubr.bf16.mxu0 0
    %4265 = vmatmul.mubr.bf16.gmra.mrb[0].mxu0 %v4227
    %v4266 = vpop.f32.mrb[0].mxu0
    %v4267 = vadd.f32 0.0, %v4266
    %v4268 = vpop.f32.mrb[0].mxu0
    %v4269 = vpop.f32.mrb[0].mxu0
    %v4270 = vadd.f32 0.0, %v4269
    %v4271 = vpop.f32.mrb[0].mxu0
    %4272 = vmatprep.mubr.bf16.mxu0 0
    %4273 = vmatmul.mubr.bf16.gmra.mrb[0].mxu0 %v4230
    %v4274 = vpop.f32.mrb[0].mxu0
    %v4275 = vadd.f32 0.0, %v4274
    %v4276 = vpop.f32.mrb[0].mxu0
    %v4277 = vpop.f32.mrb[0].mxu0
    %v4278 = vpop.f32.mrb[0].mxu0
    %4279 = vdwg.mxu0
    %v4288 = vunpack.c.l.b16 %v4180
    %v4289 = vunpack.c.l.b16 %v4181
    %v4290 = vunpack.c.l.b16 %v4182
    %v4291 = vunpack.c.l.b16 %v4183
    %v4292 = vunpack.c.l.b16 %v4184
    %v4293 = vunpack.c.l.b16 %v4185
    %v4294 = vunpack.c.l.b16 %v4186
    %v4295 = vunpack.c.l.b16 %v4187
    %v4296 = vpack.c.b16 %v4289, %v4288
    %v4297 = vpack.c.b16 %v4291, %v4290
    %v4298 = vpack.c.b16 %v4293, %v4292
    %v4299 = vpack.c.b16 %v4295, %v4294
    %v4305 = vsel %vm618, %v4178, 0
    %v4308 = vsel %vm618, %v4179, 0
    %4310 = vmatprep.subr.bf16.mxu0 0
    %4311 = vmatpush1.bf16.msra.mxu0 %v4296
    %4312 = vmatprep.subr.bf16.mxu0 0
    %4313 = vmatpush1.bf16.msra.mxu0 %v4297
    %4314 = vmatprep.subr.bf16.mxu0 0
    %4315 = vmatpush1.bf16.msra.mxu0 %v4298
    %4316 = vmatprep.subr.bf16.mxu0 0
    %4317 = vmatpush1.bf16.msra.mxu0 %v4299
    %4318 = vmatprep.subr.bf16.mxu0 0
    %4319 = vmatpush1.bf16.msra.mxu0 0
    %4320 = vmatprep.subr.bf16.mxu0 0
    %4321 = vmatpush1.bf16.msra.mxu0 0
    %4322 = vmatprep.subr.bf16.mxu0 0
    %4323 = vmatpush1.bf16.msra.mxu0 0
    %4324 = vmatprep.subr.bf16.mxu0 0
    %4325 = vmatpush1.bf16.msra.mxu0 0
    %4326 = vmatprep.subr.bf16.mxu0 0
    %4327 = vmatpush1.bf16.msra.mxu0 0
    %4328 = vmatprep.subr.bf16.mxu0 0
    %4329 = vmatpush1.bf16.msra.mxu0 0
    %4330 = vmatprep.subr.bf16.mxu0 0
    %4331 = vmatpush1.bf16.msra.mxu0 0
    %4332 = vmatprep.subr.bf16.mxu0 0
    %4333 = vmatpush1.bf16.msra.mxu0 0
    %4334 = vmatprep.subr.bf16.mxu0 0
    %4335 = vmatpush1.bf16.msra.mxu0 0
    %4336 = vmatprep.subr.bf16.mxu0 0
    %4337 = vmatpush1.bf16.msra.mxu0 0
    %4338 = vmatprep.subr.bf16.mxu0 0
    %4339 = vmatpush1.bf16.msra.mxu0 0
    %4340 = vmatprep.subr.bf16.mxu0 0
    %4341 = vmatpush1.bf16.msra.mxu0 0
    %4342 = vmatprep.mubr.bf16.mxu0 0
    %4343 = vmatmul.mubr.bf16.gmra.mrb[0].mxu0 %v4305
    %v4344 = vpop.f32.mrb[0].mxu0
    %v4345 = vadd.f32 %v4267, %v4344
    %v4346 = vpop.f32.mrb[0].mxu0
    %v4347 = vpop.f32.mrb[0].mxu0
    %v4348 = vadd.f32 %v4270, %v4347
    %v4349 = vpop.f32.mrb[0].mxu0
    %4350 = vmatprep.mubr.bf16.mxu0 0
    %4351 = vmatmul.mubr.bf16.gmra.mrb[0].mxu0 %v4308
    %v4352 = vpop.f32.mrb[0].mxu0
    %v4353 = vadd.f32 %v4275, %v4352
    %v4354 = vpop.f32.mrb[0].mxu0
    %v4355 = vpop.f32.mrb[0].mxu0
    %v4356 = vpop.f32.mrb[0].mxu0
    %4357 = vdwg.mxu0
    %v4358 = vld [vmem:[#allocation7 + $0x2] sm:$0xff]
    %v4359 = vld [vmem:[#allocation7 + $0xa] sm:$0xff]
    %v4360 = vld [vmem:[#allocation7 + $0x12] sm:$0x3f]
    %v4361 = vpack.c.bf16 %v4359, %v4358
    %v4362 = vpack.c.bf16 %v4360, %v4360
    %s4363 = scalar_lea.vmem %s4, 64
    %v4364 = vld [vmem:[%s4363] sm:$0xf]
    %v4365 = vld [vmem:[%s4363 + $0x4] sm:$0xf]
    %v4366 = vld [vmem:[%s4363 + $0x8] sm:$0xf]
    %v4367 = vld [vmem:[%s4363 + $0xc] sm:$0xf]
    %v4368 = vld [vmem:[%s4363 + $0x10] sm:$0xf]
    %v4369 = vld [vmem:[%s4363 + $0x14] sm:$0xf]
    %v4370 = vld [vmem:[%s4363 + $0x18] sm:$0xf]
    %v4371 = vld [vmem:[%s4363 + $0x1c] sm:$0xf]
    %v4380 = vunpack.c.l.b16 %v4364
    %v4381 = vunpack.c.l.b16 %v4365
    %v4382 = vunpack.c.l.b16 %v4366
    %v4383 = vunpack.c.l.b16 %v4367
    %v4384 = vunpack.c.l.b16 %v4368
    %v4385 = vunpack.c.l.b16 %v4369
    %v4386 = vunpack.c.l.b16 %v4370
    %v4387 = vunpack.c.l.b16 %v4371
    %v4388 = vpack.c.b16 %v4381, %v4380
    %v4389 = vpack.c.b16 %v4383, %v4382
    %v4390 = vpack.c.b16 %v4385, %v4384
    %v4391 = vpack.c.b16 %v4387, %v4386
    %v4397 = vsel %vm618, %v4361, 0
    %v4400 = vsel %vm618, %v4362, 0
    %4402 = vmatprep.subr.bf16.mxu0 0
    %4403 = vmatpush1.bf16.msra.mxu0 %v4388
    %4404 = vmatprep.subr.bf16.mxu0 0
    %4405 = vmatpush1.bf16.msra.mxu0 %v4389
    %4406 = vmatprep.subr.bf16.mxu0 0
    %4407 = vmatpush1.bf16.msra.mxu0 %v4390
    %4408 = vmatprep.subr.bf16.mxu0 0
    %4409 = vmatpush1.bf16.msra.mxu0 %v4391
    %4410 = vmatprep.subr.bf16.mxu0 0
    %4411 = vmatpush1.bf16.msra.mxu0 0
    %4412 = vmatprep.subr.bf16.mxu0 0
    %4413 = vmatpush1.bf16.msra.mxu0 0
    %4414 = vmatprep.subr.bf16.mxu0 0
    %4415 = vmatpush1.bf16.msra.mxu0 0
    %4416 = vmatprep.subr.bf16.mxu0 0
    %4417 = vmatpush1.bf16.msra.mxu0 0
    %4418 = vmatprep.subr.bf16.mxu0 0
    %4419 = vmatpush1.bf16.msra.mxu0 0
    %4420 = vmatprep.subr.bf16.mxu0 0
    %4421 = vmatpush1.bf16.msra.mxu0 0
    %4422 = vmatprep.subr.bf16.mxu0 0
    %4423 = vmatpush1.bf16.msra.mxu0 0
    %4424 = vmatprep.subr.bf16.mxu0 0
    %4425 = vmatpush1.bf16.msra.mxu0 0
    %4426 = vmatprep.subr.bf16.mxu0 0
    %4427 = vmatpush1.bf16.msra.mxu0 0
    %4428 = vmatprep.subr.bf16.mxu0 0
    %4429 = vmatpush1.bf16.msra.mxu0 0
    %4430 = vmatprep.subr.bf16.mxu0 0
    %4431 = vmatpush1.bf16.msra.mxu0 0
    %4432 = vmatprep.subr.bf16.mxu0 0
    %4433 = vmatpush1.bf16.msra.mxu0 0
    %4434 = vmatprep.mubr.bf16.mxu0 0
    %4435 = vmatmul.mubr.bf16.gmra.mrb[0].mxu0 %v4397
    %v4436 = vpop.f32.mrb[0].mxu0
    %v4437 = vadd.f32 0.0, %v4436
    %v4438 = vpop.f32.mrb[0].mxu0
    %v4439 = vpop.f32.mrb[0].mxu0
    %v4440 = vadd.f32 0.0, %v4439
    %v4441 = vpop.f32.mrb[0].mxu0
    %4442 = vmatprep.mubr.bf16.mxu0 0
    %4443 = vmatmul.mubr.bf16.gmra.mrb[0].mxu0 %v4400
    %v4444 = vpop.f32.mrb[0].mxu0
    %v4445 = vadd.f32 0.0, %v4444
    %v4446 = vpop.f32.mrb[0].mxu0
    %v4447 = vpop.f32.mrb[0].mxu0
    %v4448 = vpop.f32.mrb[0].mxu0
    %4449 = vdwg.mxu0
    %v4450 = vadd.f32 %v4345, %v4437
    %v4451 = vadd.f32 %v4348, %v4440
    %v4452 = vadd.f32 %v4353, %v4445
    %v4453 = vld [vmem:[#allocation7 + $0x4] sm:$0xff]
    %v4454 = vld [vmem:[#allocation7 + $0xc] sm:$0xff]
    %v4455 = vld [vmem:[#allocation7 + $0x14] sm:$0x3f]
    %v4456 = vpack.c.bf16 %v4454, %v4453
    %v4457 = vpack.c.bf16 %v4455, %v4455
    %s4458 = scalar_lea.vmem %s4, 96
    %v4459 = vld [vmem:[%s4458] sm:$0xf]
    %v4460 = vld [vmem:[%s4458 + $0x4] sm:$0xf]
    %v4461 = vld [vmem:[%s4458 + $0x8] sm:$0xf]
    %v4462 = vld [vmem:[%s4458 + $0xc] sm:$0xf]
    %v4463 = vld [vmem:[%s4458 + $0x10] sm:$0xf]
    %v4464 = vld [vmem:[%s4458 + $0x14] sm:$0xf]
    %v4465 = vld [vmem:[%s4458 + $0x18] sm:$0xf]
    %v4466 = vld [vmem:[%s4458 + $0x1c] sm:$0xf]
    %v4475 = vunpack.c.l.b16 %v4459
    %v4476 = vunpack.c.l.b16 %v4460
    %v4477 = vunpack.c.l.b16 %v4461
    %v4478 = vunpack.c.l.b16 %v4462
    %v4479 = vunpack.c.l.b16 %v4463
    %v4480 = vunpack.c.l.b16 %v4464
    %v4481 = vunpack.c.l.b16 %v4465
    %v4482 = vunpack.c.l.b16 %v4466
    %v4483 = vpack.c.b16 %v4476, %v4475
    %v4484 = vpack.c.b16 %v4478, %v4477
    %v4485 = vpack.c.b16 %v4480, %v4479
    %v4486 = vpack.c.b16 %v4482, %v4481
    %v4492 = vsel %vm618, %v4456, 0
    %v4495 = vsel %vm618, %v4457, 0
    %4497 = vmatprep.subr.bf16.mxu0 0
    %4498 = vmatpush1.bf16.msra.mxu0 %v4483
    %4499 = vmatprep.subr.bf16.mxu0 0
    %4500 = vmatpush1.bf16.msra.mxu0 %v4484
    %4501 = vmatprep.subr.bf16.mxu0 0
    %4502 = vmatpush1.bf16.msra.mxu0 %v4485
    %4503 = vmatprep.subr.bf16.mxu0 0
    %4504 = vmatpush1.bf16.msra.mxu0 %v4486
    %4505 = vmatprep.subr.bf16.mxu0 0
    %4506 = vmatpush1.bf16.msra.mxu0 0
    %4507 = vmatprep.subr.bf16.mxu0 0
    %4508 = vmatpush1.bf16.msra.mxu0 0
    %4509 = vmatprep.subr.bf16.mxu0 0
    %4510 = vmatpush1.bf16.msra.mxu0 0
    %4511 = vmatprep.subr.bf16.mxu0 0
    %4512 = vmatpush1.bf16.msra.mxu0 0
    %4513 = vmatprep.subr.bf16.mxu0 0
    %4514 = vmatpush1.bf16.msra.mxu0 0
    %4515 = vmatprep.subr.bf16.mxu0 0
    %4516 = vmatpush1.bf16.msra.mxu0 0
    %4517 = vmatprep.subr.bf16.mxu0 0
    %4518 = vmatpush1.bf16.msra.mxu0 0
    %4519 = vmatprep.subr.bf16.mxu0 0
    %4520 = vmatpush1.bf16.msra.mxu0 0
    %4521 = vmatprep.subr.bf16.mxu0 0
    %4522 = vmatpush1.bf16.msra.mxu0 0
    %4523 = vmatprep.subr.bf16.mxu0 0
    %4524 = vmatpush1.bf16.msra.mxu0 0
    %4525 = vmatprep.subr.bf16.mxu0 0
    %4526 = vmatpush1.bf16.msra.mxu0 0
    %4527 = vmatprep.subr.bf16.mxu0 0
    %4528 = vmatpush1.bf16.msra.mxu0 0
    %4529 = vmatprep.mubr.bf16.mxu0 0
    %4530 = vmatmul.mubr.bf16.gmra.mrb[0].mxu0 %v4492
    %v4531 = vpop.f32.mrb[0].mxu0
    %v4532 = vadd.f32 0.0, %v4531
    %v4533 = vpop.f32.mrb[0].mxu0
    %v4534 = vpop.f32.mrb[0].mxu0
    %v4535 = vadd.f32 0.0, %v4534
    %v4536 = vpop.f32.mrb[0].mxu0
    %4537 = vmatprep.mubr.bf16.mxu0 0
    %4538 = vmatmul.mubr.bf16.gmra.mrb[0].mxu0 %v4495
    %v4539 = vpop.f32.mrb[0].mxu0
    %v4540 = vadd.f32 0.0, %v4539
    %v4541 = vpop.f32.mrb[0].mxu0
    %v4542 = vpop.f32.mrb[0].mxu0
    %v4543 = vpop.f32.mrb[0].mxu0
    %4544 = vdwg.mxu0
    %v4545 = vadd.f32 %v4450, %v4532
    %v4546 = vadd.f32 %v4451, %v4535
    %v4547 = vadd.f32 %v4452, %v4540
    %v4548 = vld [vmem:[#allocation7 + $0x5] sm:$0xff]
    %v4549 = vld [vmem:[#allocation7 + $0xd] sm:$0xff]
    %v4550 = vld [vmem:[#allocation7 + $0x15] sm:$0x3f]
    %v4551 = vpack.c.bf16 %v4549, %v4548
    %v4552 = vpack.c.bf16 %v4550, %v4550
    %s4553 = scalar_lea.vmem %s4, 128
    %v4554 = vld [vmem:[%s4553] sm:$0xf]
    %v4555 = vld [vmem:[%s4553 + $0x4] sm:$0xf]
    %v4556 = vld [vmem:[%s4553 + $0x8] sm:$0xf]
    %v4557 = vld [vmem:[%s4553 + $0xc] sm:$0xf]
    %v4558 = vld [vmem:[%s4553 + $0x10] sm:$0xf]
    %v4559 = vld [vmem:[%s4553 + $0x14] sm:$0xf]
    %v4560 = vld [vmem:[%s4553 + $0x18] sm:$0xf]
    %v4561 = vld [vmem:[%s4553 + $0x1c] sm:$0xf]
    %v4570 = vunpack.c.l.b16 %v4554
    %v4571 = vunpack.c.l.b16 %v4555
    %v4572 = vunpack.c.l.b16 %v4556
    %v4573 = vunpack.c.l.b16 %v4557
    %v4574 = vunpack.c.l.b16 %v4558
    %v4575 = vunpack.c.l.b16 %v4559
    %v4576 = vunpack.c.l.b16 %v4560
    %v4577 = vunpack.c.l.b16 %v4561
    %v4578 = vpack.c.b16 %v4571, %v4570
    %v4579 = vpack.c.b16 %v4573, %v4572
    %v4580 = vpack.c.b16 %v4575, %v4574
    %v4581 = vpack.c.b16 %v4577, %v4576
    %v4587 = vsel %vm618, %v4551, 0
    %v4590 = vsel %vm618, %v4552, 0
    %4592 = vmatprep.subr.bf16.mxu0 0
    %4593 = vmatpush1.bf16.msra.mxu0 %v4578
    %4594 = vmatprep.subr.bf16.mxu0 0
    %4595 = vmatpush1.bf16.msra.mxu0 %v4579
    %4596 = vmatprep.subr.bf16.mxu0 0
    %4597 = vmatpush1.bf16.msra.mxu0 %v4580
    %4598 = vmatprep.subr.bf16.mxu0 0
    %4599 = vmatpush1.bf16.msra.mxu0 %v4581
    %4600 = vmatprep.subr.bf16.mxu0 0
    %4601 = vmatpush1.bf16.msra.mxu0 0
    %4602 = vmatprep.subr.bf16.mxu0 0
    %4603 = vmatpush1.bf16.msra.mxu0 0
    %4604 = vmatprep.subr.bf16.mxu0 0
    %4605 = vmatpush1.bf16.msra.mxu0 0
    %4606 = vmatprep.subr.bf16.mxu0 0
    %4607 = vmatpush1.bf16.msra.mxu0 0
    %4608 = vmatprep.subr.bf16.mxu0 0
    %4609 = vmatpush1.bf16.msra.mxu0 0
    %4610 = vmatprep.subr.bf16.mxu0 0
    %4611 = vmatpush1.bf16.msra.mxu0 0
    %4612 = vmatprep.subr.bf16.mxu0 0
    %4613 = vmatpush1.bf16.msra.mxu0 0
    %4614 = vmatprep.subr.bf16.mxu0 0
    %4615 = vmatpush1.bf16.msra.mxu0 0
    %4616 = vmatprep.subr.bf16.mxu0 0
    %4617 = vmatpush1.bf16.msra.mxu0 0
    %4618 = vmatprep.subr.bf16.mxu0 0
    %4619 = vmatpush1.bf16.msra.mxu0 0
    %4620 = vmatprep.subr.bf16.mxu0 0
    %4621 = vmatpush1.bf16.msra.mxu0 0
    %4622 = vmatprep.subr.bf16.mxu0 0
    %4623 = vmatpush1.bf16.msra.mxu0 0
    %4624 = vmatprep.mubr.bf16.mxu0 0
    %4625 = vmatmul.mubr.bf16.gmra.mrb[0].mxu0 %v4587
    %v4626 = vpop.f32.mrb[0].mxu0
    %v4627 = vadd.f32 0.0, %v4626
    %v4628 = vpop.f32.mrb[0].mxu0
    %v4629 = vpop.f32.mrb[0].mxu0
    %v4630 = vadd.f32 0.0, %v4629
    %v4631 = vpop.f32.mrb[0].mxu0
    %4632 = vmatprep.mubr.bf16.mxu0 0
    %4633 = vmatmul.mubr.bf16.gmra.mrb[0].mxu0 %v4590
    %v4634 = vpop.f32.mrb[0].mxu0
    %v4635 = vadd.f32 0.0, %v4634
    %v4636 = vpop.f32.mrb[0].mxu0
    %v4637 = vpop.f32.mrb[0].mxu0
    %v4638 = vpop.f32.mrb[0].mxu0
    %4639 = vdwg.mxu0
    %v4640 = vadd.f32 %v4545, %v4627
    %v4641 = vadd.f32 %v4546, %v4630
    %v4642 = vadd.f32 %v4547, %v4635
    %v4643 = vld [vmem:[#allocation7 + $0x6] sm:$0xff]
    %v4644 = vld [vmem:[#allocation7 + $0xe] sm:$0xff]
    %v4645 = vld [vmem:[#allocation7 + $0x16] sm:$0x3f]
    %v4646 = vpack.c.bf16 %v4644, %v4643
    %v4647 = vpack.c.bf16 %v4645, %v4645
    %s4648 = scalar_lea.vmem %s4, 160
    %v4649 = vld [vmem:[%s4648] sm:$0xf]
    %v4650 = vld [vmem:[%s4648 + $0x4] sm:$0xf]
    %v4651 = vld [vmem:[%s4648 + $0x8] sm:$0xf]
    %v4652 = vld [vmem:[%s4648 + $0xc] sm:$0xf]
    %v4653 = vld [vmem:[%s4648 + $0x10] sm:$0xf]
    %v4654 = vld [vmem:[%s4648 + $0x14] sm:$0xf]
    %v4655 = vld [vmem:[%s4648 + $0x18] sm:$0xf]
    %v4656 = vld [vmem:[%s4648 + $0x1c] sm:$0xf]
    %v4665 = vunpack.c.l.b16 %v4649
    %v4666 = vunpack.c.l.b16 %v4650
    %v4667 = vunpack.c.l.b16 %v4651
    %v4668 = vunpack.c.l.b16 %v4652
    %v4669 = vunpack.c.l.b16 %v4653
    %v4670 = vunpack.c.l.b16 %v4654
    %v4671 = vunpack.c.l.b16 %v4655
    %v4672 = vunpack.c.l.b16 %v4656
    %v4673 = vpack.c.b16 %v4666, %v4665
    %v4674 = vpack.c.b16 %v4668, %v4667
    %v4675 = vpack.c.b16 %v4670, %v4669
    %v4676 = vpack.c.b16 %v4672, %v4671
    %v4682 = vsel %vm618, %v4646, 0
    %v4685 = vsel %vm618, %v4647, 0
    %4687 = vmatprep.subr.bf16.mxu0 0
    %4688 = vmatpush1.bf16.msra.mxu0 %v4673
    %4689 = vmatprep.subr.bf16.mxu0 0
    %4690 = vmatpush1.bf16.msra.mxu0 %v4674
    %4691 = vmatprep.subr.bf16.mxu0 0
    %4692 = vmatpush1.bf16.msra.mxu0 %v4675
    %4693 = vmatprep.subr.bf16.mxu0 0
    %4694 = vmatpush1.bf16.msra.mxu0 %v4676
    %4695 = vmatprep.subr.bf16.mxu0 0
    %4696 = vmatpush1.bf16.msra.mxu0 0
    %4697 = vmatprep.subr.bf16.mxu0 0
    %4698 = vmatpush1.bf16.msra.mxu0 0
    %4699 = vmatprep.subr.bf16.mxu0 0
    %4700 = vmatpush1.bf16.msra.mxu0 0
    %4701 = vmatprep.subr.bf16.mxu0 0
    %4702 = vmatpush1.bf16.msra.mxu0 0
    %4703 = vmatprep.subr.bf16.mxu0 0
    %4704 = vmatpush1.bf16.msra.mxu0 0
    %4705 = vmatprep.subr.bf16.mxu0 0
    %4706 = vmatpush1.bf16.msra.mxu0 0
    %4707 = vmatprep.subr.bf16.mxu0 0
    %4708 = vmatpush1.bf16.msra.mxu0 0
    %4709 = vmatprep.subr.bf16.mxu0 0
    %4710 = vmatpush1.bf16.msra.mxu0 0
    %4711 = vmatprep.subr.bf16.mxu0 0
    %4712 = vmatpush1.bf16.msra.mxu0 0
    %4713 = vmatprep.subr.bf16.mxu0 0
    %4714 = vmatpush1.bf16.msra.mxu0 0
    %4715 = vmatprep.subr.bf16.mxu0 0
    %4716 = vmatpush1.bf16.msra.mxu0 0
    %4717 = vmatprep.subr.bf16.mxu0 0
    %4718 = vmatpush1.bf16.msra.mxu0 0
    %4719 = vmatprep.mubr.bf16.mxu0 0
    %4720 = vmatmul.mubr.bf16.gmra.mrb[0].mxu0 %v4682
    %v4721 = vpop.f32.mrb[0].mxu0
    %v4722 = vadd.f32 0.0, %v4721
    %v4723 = vpop.f32.mrb[0].mxu0
    %v4724 = vpop.f32.mrb[0].mxu0
    %v4725 = vadd.f32 0.0, %v4724
    %v4726 = vpop.f32.mrb[0].mxu0
    %4727 = vmatprep.mubr.bf16.mxu0 0
    %4728 = vmatmul.mubr.bf16.gmra.mrb[0].mxu0 %v4685
    %v4729 = vpop.f32.mrb[0].mxu0
    %v4730 = vadd.f32 0.0, %v4729
    %v4731 = vpop.f32.mrb[0].mxu0
    %v4732 = vpop.f32.mrb[0].mxu0
    %v4733 = vpop.f32.mrb[0].mxu0
    %4734 = vdwg.mxu0
    %v4735 = vadd.f32 %v4640, %v4722
    %v4736 = vadd.f32 %v4641, %v4725
    %v4737 = vadd.f32 %v4642, %v4730
    %v4738 = vld [vmem:[#allocation7 + $0x8] sm:$0xff]
    %v4739 = vld [vmem:[#allocation7 + $0x10] sm:$0xff]
    %v4740 = vld [vmem:[#allocation7 + $0x18] sm:$0x3f]
    %v4741 = vpack.c.bf16 %v4739, %v4738
    %v4742 = vpack.c.bf16 %v4740, %v4740
    %s4743 = scalar_lea.vmem %s4, 192
    %v4744 = vld [vmem:[%s4743] sm:$0xf]
    %v4745 = vld [vmem:[%s4743 + $0x4] sm:$0xf]
    %v4746 = vld [vmem:[%s4743 + $0x8] sm:$0xf]
    %v4747 = vld [vmem:[%s4743 + $0xc] sm:$0xf]
    %v4748 = vld [vmem:[%s4743 + $0x10] sm:$0xf]
    %v4749 = vld [vmem:[%s4743 + $0x14] sm:$0xf]
    %v4750 = vld [vmem:[%s4743 + $0x18] sm:$0xf]
    %v4751 = vld [vmem:[%s4743 + $0x1c] sm:$0xf]
    %v4760 = vunpack.c.l.b16 %v4744
    %v4761 = vunpack.c.l.b16 %v4745
    %v4762 = vunpack.c.l.b16 %v4746
    %v4763 = vunpack.c.l.b16 %v4747
    %v4764 = vunpack.c.l.b16 %v4748
    %v4765 = vunpack.c.l.b16 %v4749
    %v4766 = vunpack.c.l.b16 %v4750
    %v4767 = vunpack.c.l.b16 %v4751
    %v4768 = vpack.c.b16 %v4761, %v4760
    %v4769 = vpack.c.b16 %v4763, %v4762
    %v4770 = vpack.c.b16 %v4765, %v4764
    %v4771 = vpack.c.b16 %v4767, %v4766
    %v4777 = vsel %vm618, %v4741, 0
    %v4780 = vsel %vm618, %v4742, 0
    %4782 = vmatprep.subr.bf16.mxu0 0
    %4783 = vmatpush1.bf16.msra.mxu0 %v4768
    %4784 = vmatprep.subr.bf16.mxu0 0
    %4785 = vmatpush1.bf16.msra.mxu0 %v4769
    %4786 = vmatprep.subr.bf16.mxu0 0
    %4787 = vmatpush1.bf16.msra.mxu0 %v4770
    %4788 = vmatprep.subr.bf16.mxu0 0
    %4789 = vmatpush1.bf16.msra.mxu0 %v4771
    %4790 = vmatprep.subr.bf16.mxu0 0
    %4791 = vmatpush1.bf16.msra.mxu0 0
    %4792 = vmatprep.subr.bf16.mxu0 0
    %4793 = vmatpush1.bf16.msra.mxu0 0
    %4794 = vmatprep.subr.bf16.mxu0 0
    %4795 = vmatpush1.bf16.msra.mxu0 0
    %4796 = vmatprep.subr.bf16.mxu0 0
    %4797 = vmatpush1.bf16.msra.mxu0 0
    %4798 = vmatprep.subr.bf16.mxu0 0
    %4799 = vmatpush1.bf16.msra.mxu0 0
    %4800 = vmatprep.subr.bf16.mxu0 0
    %4801 = vmatpush1.bf16.msra.mxu0 0
    %4802 = vmatprep.subr.bf16.mxu0 0
    %4803 = vmatpush1.bf16.msra.mxu0 0
    %4804 = vmatprep.subr.bf16.mxu0 0
    %4805 = vmatpush1.bf16.msra.mxu0 0
    %4806 = vmatprep.subr.bf16.mxu0 0
    %4807 = vmatpush1.bf16.msra.mxu0 0
    %4808 = vmatprep.subr.bf16.mxu0 0
    %4809 = vmatpush1.bf16.msra.mxu0 0
    %4810 = vmatprep.subr.bf16.mxu0 0
    %4811 = vmatpush1.bf16.msra.mxu0 0
    %4812 = vmatprep.subr.bf16.mxu0 0
    %4813 = vmatpush1.bf16.msra.mxu0 0
    %4814 = vmatprep.mubr.bf16.mxu0 0
    %4815 = vmatmul.mubr.bf16.gmra.mrb[0].mxu0 %v4777
    %v4816 = vpop.f32.mrb[0].mxu0
    %v4817 = vadd.f32 0.0, %v4816
    %v4818 = vpop.f32.mrb[0].mxu0
    %v4819 = vpop.f32.mrb[0].mxu0
    %v4820 = vadd.f32 0.0, %v4819
    %v4821 = vpop.f32.mrb[0].mxu0
    %4822 = vmatprep.mubr.bf16.mxu0 0
    %4823 = vmatmul.mubr.bf16.gmra.mrb[0].mxu0 %v4780
    %v4824 = vpop.f32.mrb[0].mxu0
    %v4825 = vadd.f32 0.0, %v4824
    %v4826 = vpop.f32.mrb[0].mxu0
    %v4827 = vpop.f32.mrb[0].mxu0
    %v4828 = vpop.f32.mrb[0].mxu0
    %4829 = vdwg.mxu0
    %v4830 = vadd.f32 %v4735, %v4817
    %v4831 = vadd.f32 %v4736, %v4820
    %v4832 = vadd.f32 %v4737, %v4825
    %v4833 = vld [vmem:[#allocation7 + $0x9] sm:$0xff]
    %v4834 = vld [vmem:[#allocation7 + $0x11] sm:$0xff]
    %v4835 = vld [vmem:[#allocation7 + $0x19] sm:$0x3f]
    %v4836 = vpack.c.bf16 %v4834, %v4833
    %v4837 = vpack.c.bf16 %v4835, %v4835
    %s4838 = scalar_lea.vmem %s4, 224
    %v4839 = vld [vmem:[%s4838] sm:$0xf]
    %v4840 = vld [vmem:[%s4838 + $0x4] sm:$0xf]
    %v4841 = vld [vmem:[%s4838 + $0x8] sm:$0xf]
    %v4842 = vld [vmem:[%s4838 + $0xc] sm:$0xf]
    %v4843 = vld [vmem:[%s4838 + $0x10] sm:$0xf]
    %v4844 = vld [vmem:[%s4838 + $0x14] sm:$0xf]
    %v4845 = vld [vmem:[%s4838 + $0x18] sm:$0xf]
    %v4846 = vld [vmem:[%s4838 + $0x1c] sm:$0xf]
    %v4855 = vunpack.c.l.b16 %v4839
    %v4856 = vunpack.c.l.b16 %v4840
    %v4857 = vunpack.c.l.b16 %v4841
    %v4858 = vunpack.c.l.b16 %v4842
    %v4859 = vunpack.c.l.b16 %v4843
    %v4860 = vunpack.c.l.b16 %v4844
    %v4861 = vunpack.c.l.b16 %v4845
    %v4862 = vunpack.c.l.b16 %v4846
    %v4863 = vpack.c.b16 %v4856, %v4855
    %v4864 = vpack.c.b16 %v4858, %v4857
    %v4865 = vpack.c.b16 %v4860, %v4859
    %v4866 = vpack.c.b16 %v4862, %v4861
    %v4872 = vsel %vm618, %v4836, 0
    %v4875 = vsel %vm618, %v4837, 0
    %4877 = vmatprep.subr.bf16.mxu0 0
    %4878 = vmatpush1.bf16.msra.mxu0 %v4863
    %4879 = vmatprep.subr.bf16.mxu0 0
    %4880 = vmatpush1.bf16.msra.mxu0 %v4864
    %4881 = vmatprep.subr.bf16.mxu0 0
    %4882 = vmatpush1.bf16.msra.mxu0 %v4865
    %4883 = vmatprep.subr.bf16.mxu0 0
    %4884 = vmatpush1.bf16.msra.mxu0 %v4866
    %4885 = vmatprep.subr.bf16.mxu0 0
    %4886 = vmatpush1.bf16.msra.mxu0 0
    %4887 = vmatprep.subr.bf16.mxu0 0
    %4888 = vmatpush1.bf16.msra.mxu0 0
    %4889 = vmatprep.subr.bf16.mxu0 0
    %4890 = vmatpush1.bf16.msra.mxu0 0
    %4891 = vmatprep.subr.bf16.mxu0 0
    %4892 = vmatpush1.bf16.msra.mxu0 0
    %4893 = vmatprep.subr.bf16.mxu0 0
    %4894 = vmatpush1.bf16.msra.mxu0 0
    %4895 = vmatprep.subr.bf16.mxu0 0
    %4896 = vmatpush1.bf16.msra.mxu0 0
    %4897 = vmatprep.subr.bf16.mxu0 0
    %4898 = vmatpush1.bf16.msra.mxu0 0
    %4899 = vmatprep.subr.bf16.mxu0 0
    %4900 = vmatpush1.bf16.msra.mxu0 0
    %4901 = vmatprep.subr.bf16.mxu0 0
    %4902 = vmatpush1.bf16.msra.mxu0 0
    %4903 = vmatprep.subr.bf16.mxu0 0
    %4904 = vmatpush1.bf16.msra.mxu0 0
    %4905 = vmatprep.subr.bf16.mxu0 0
    %4906 = vmatpush1.bf16.msra.mxu0 0
    %4907 = vmatprep.subr.bf16.mxu0 0
    %4908 = vmatpush1.bf16.msra.mxu0 0
    %4909 = vmatprep.mubr.bf16.mxu0 0
    %4910 = vmatmul.mubr.bf16.gmra.mrb[0].mxu0 %v4872
    %v4911 = vpop.f32.mrb[0].mxu0
    %v4912 = vadd.f32 0.0, %v4911
    %v4913 = vpop.f32.mrb[0].mxu0
    %v4914 = vpop.f32.mrb[0].mxu0
    %v4915 = vadd.f32 0.0, %v4914
    %v4916 = vpop.f32.mrb[0].mxu0
    %4917 = vmatprep.mubr.bf16.mxu0 0
    %4918 = vmatmul.mubr.bf16.gmra.mrb[0].mxu0 %v4875
    %v4919 = vpop.f32.mrb[0].mxu0
    %v4920 = vadd.f32 0.0, %v4919
    %v4921 = vpop.f32.mrb[0].mxu0
    %v4922 = vpop.f32.mrb[0].mxu0
    %v4923 = vpop.f32.mrb[0].mxu0
    %4924 = vdwg.mxu0
    %v4925 = vadd.f32 %v4830, %v4912
    %v4926 = vadd.f32 %v4831, %v4915
    %v4927 = vadd.f32 %v4832, %v4920
    %v4928 = vld [vmem:[#allocation7 + $0xa] sm:$0xff]
    %v4929 = vld [vmem:[#allocation7 + $0x12] sm:$0xff]
    %v4930 = vld [vmem:[#allocation7 + $0x1a] sm:$0x3f]
    %v4931 = vpack.c.bf16 %v4929, %v4928
    %v4932 = vpack.c.bf16 %v4930, %v4930
    %s4933 = scalar_lea.vmem %s4, 256
    %v4934 = vld [vmem:[%s4933] sm:$0xf]
    %v4935 = vld [vmem:[%s4933 + $0x4] sm:$0xf]
    %v4936 = vld [vmem:[%s4933 + $0x8] sm:$0xf]
    %v4937 = vld [vmem:[%s4933 + $0xc] sm:$0xf]
    %v4938 = vld [vmem:[%s4933 + $0x10] sm:$0xf]
    %v4939 = vld [vmem:[%s4933 + $0x14] sm:$0xf]
    %v4940 = vld [vmem:[%s4933 + $0x18] sm:$0xf]
    %v4941 = vld [vmem:[%s4933 + $0x1c] sm:$0xf]
    %v4950 = vunpack.c.l.b16 %v4934
    %v4951 = vunpack.c.l.b16 %v4935
    %v4952 = vunpack.c.l.b16 %v4936
    %v4953 = vunpack.c.l.b16 %v4937
    %v4954 = vunpack.c.l.b16 %v4938
    %v4955 = vunpack.c.l.b16 %v4939
    %v4956 = vunpack.c.l.b16 %v4940
    %v4957 = vunpack.c.l.b16 %v4941
    %v4958 = vpack.c.b16 %v4951, %v4950
    %v4959 = vpack.c.b16 %v4953, %v4952
    %v4960 = vpack.c.b16 %v4955, %v4954
    %v4961 = vpack.c.b16 %v4957, %v4956
    %v4967 = vsel %vm618, %v4931, 0
    %v4970 = vsel %vm618, %v4932, 0
    %4972 = vmatprep.subr.bf16.mxu0 0
    %4973 = vmatpush1.bf16.msra.mxu0 %v4958
    %4974 = vmatprep.subr.bf16.mxu0 0
    %4975 = vmatpush1.bf16.msra.mxu0 %v4959
    %4976 = vmatprep.subr.bf16.mxu0 0
    %4977 = vmatpush1.bf16.msra.mxu0 %v4960
    %4978 = vmatprep.subr.bf16.mxu0 0
    %4979 = vmatpush1.bf16.msra.mxu0 %v4961
    %4980 = vmatprep.subr.bf16.mxu0 0
    %4981 = vmatpush1.bf16.msra.mxu0 0
    %4982 = vmatprep.subr.bf16.mxu0 0
    %4983 = vmatpush1.bf16.msra.mxu0 0
    %4984 = vmatprep.subr.bf16.mxu0 0
    %4985 = vmatpush1.bf16.msra.mxu0 0
    %4986 = vmatprep.subr.bf16.mxu0 0
    %4987 = vmatpush1.bf16.msra.mxu0 0
    %4988 = vmatprep.subr.bf16.mxu0 0
    %4989 = vmatpush1.bf16.msra.mxu0 0
    %4990 = vmatprep.subr.bf16.mxu0 0
    %4991 = vmatpush1.bf16.msra.mxu0 0
    %4992 = vmatprep.subr.bf16.mxu0 0
    %4993 = vmatpush1.bf16.msra.mxu0 0
    %4994 = vmatprep.subr.bf16.mxu0 0
    %4995 = vmatpush1.bf16.msra.mxu0 0
    %4996 = vmatprep.subr.bf16.mxu0 0
    %4997 = vmatpush1.bf16.msra.mxu0 0
    %4998 = vmatprep.subr.bf16.mxu0 0
    %4999 = vmatpush1.bf16.msra.mxu0 0
    %5000 = vmatprep.subr.bf16.mxu0 0
    %5001 = vmatpush1.bf16.msra.mxu0 0
    %5002 = vmatprep.subr.bf16.mxu0 0
    %5003 = vmatpush1.bf16.msra.mxu0 0
    %5004 = vmatprep.mubr.bf16.mxu0 0
    %5005 = vmatmul.mubr.bf16.gmra.mrb[0].mxu0 %v4967
    %v5006 = vpop.f32.mrb[0].mxu0
    %v5007 = vadd.f32 0.0, %v5006
    %v5008 = vpop.f32.mrb[0].mxu0
    %v5009 = vpop.f32.mrb[0].mxu0
    %v5010 = vadd.f32 0.0, %v5009
    %v5011 = vpop.f32.mrb[0].mxu0
    %5012 = vmatprep.mubr.bf16.mxu0 0
    %5013 = vmatmul.mubr.bf16.gmra.mrb[0].mxu0 %v4970
    %v5014 = vpop.f32.mrb[0].mxu0
    %v5015 = vadd.f32 0.0, %v5014
    %v5016 = vpop.f32.mrb[0].mxu0
    %v5017 = vpop.f32.mrb[0].mxu0
    %v5018 = vpop.f32.mrb[0].mxu0
    %5019 = vdwg.mxu0
    %v5020 = vadd.f32 %v4925, %v5007
    %v5021 = vadd.f32 %v4926, %v5010
    %v5022 = vadd.f32 %v4927, %v5015
    %5023 = vst.msk [vmem:[#allocation8] sm:$0xff] %vm618, %v5020
    %5024 = vst.msk [vmem:[#allocation8 + $0x8] sm:$0xff] %vm618, %v5021
    %5025 = vst.msk [vmem:[#allocation8 + $0x10] sm:$0x3f] %vm678, %v5022
    %v5026 = vld [vmem:[#allocation8] sm:$0x3]
    %v5027 = vsel %vm2896, %v5026, 0.0
    %v5028 = vrot.slane %v5027, 4
    %v5029 = vadd.f32 %v5027, %v5028
    %v5030 = vrot.slane %v5029, 2
    %v5031 = vadd.f32 %v5029, %v5030
    %v5032 = vrot.slane %v5031, 1
    %v5033 = vadd.f32 %v5031, %v5032
    %v5034 = vadd.f32 %v5033, 0.0
    %v5035 = vmul.f32 %v5026, %v5026
    %v5036 = vsel %vm2896, %v5035, 0.0
    %v5037 = vrot.slane %v5036, 4
    %v5038 = vadd.f32 %v5036, %v5037
    %v5039 = vrot.slane %v5038, 2
    %v5040 = vadd.f32 %v5038, %v5039
    %v5041 = vrot.slane %v5040, 1
    %v5042 = vadd.f32 %v5040, %v5041
    %v5043 = vadd.f32 %v5042, 0.0
    %v5044 = vld [vmem:[#allocation8 + $0x4] sm:$0x3]
    %v5045 = vsel %vm2896, %v5044, 0.0
    %v5046 = vrot.slane %v5045, 4
    %v5047 = vadd.f32 %v5045, %v5046
    %v5048 = vrot.slane %v5047, 2
    %v5049 = vadd.f32 %v5047, %v5048
    %v5050 = vrot.slane %v5049, 1
    %v5051 = vadd.f32 %v5049, %v5050
    %v5052 = vadd.f32 %v5034, %v5051
    %v5053 = vmul.f32 %v5044, %v5044
    %v5054 = vsel %vm2896, %v5053, 0.0
    %v5055 = vrot.slane %v5054, 4
    %v5056 = vadd.f32 %v5054, %v5055
    %v5057 = vrot.slane %v5056, 2
    %v5058 = vadd.f32 %v5056, %v5057
    %v5059 = vrot.slane %v5058, 1
    %v5060 = vadd.f32 %v5058, %v5059
    %v5061 = vadd.f32 %v5043, %v5060
    %v5062 = vld [vmem:[#allocation8 + $0x10] sm:$0x3]
    %v5063 = vsel %vm2896, %v5062, 0.0
    %v5064 = vrot.slane %v5063, 4
    %v5065 = vadd.f32 %v5063, %v5064
    %v5066 = vrot.slane %v5065, 2
    %v5067 = vadd.f32 %v5065, %v5066
    %v5068 = vrot.slane %v5067, 1
    %v5069 = vadd.f32 %v5067, %v5068
    %v5070 = vadd.f32 %v5052, %v5069
    %v5071 = vmul.f32 %v5062, %v5062
    %v5072 = vsel %vm2896, %v5071, 0.0
    %v5073 = vrot.slane %v5072, 4
    %v5074 = vadd.f32 %v5072, %v5073
    %v5075 = vrot.slane %v5074, 2
    %v5076 = vadd.f32 %v5074, %v5075
    %v5077 = vrot.slane %v5076, 1
    %v5078 = vadd.f32 %v5076, %v5077
    %v5079 = vadd.f32 %v5061, %v5078
    %v5080 = vld [vmem:[#allocation8 + $0x14] sm:$0x3]
    %v5081 = vsel %vm2896, %v5080, 0.0
    %v5082 = vrot.slane %v5081, 4
    %v5083 = vadd.f32 %v5081, %v5082
    %v5084 = vrot.slane %v5083, 2
    %v5085 = vadd.f32 %v5083, %v5084
    %v5086 = vrot.slane %v5085, 1
    %v5087 = vadd.f32 %v5085, %v5086
    %v5088 = vadd.f32 %v5070, %v5087
    %v5089 = vmul.f32 %v5080, %v5080
    %v5090 = vsel %vm2896, %v5089, 0.0
    %v5091 = vrot.slane %v5090, 4
    %v5092 = vadd.f32 %v5090, %v5091
    %v5093 = vrot.slane %v5092, 2
    %v5094 = vadd.f32 %v5092, %v5093
    %v5095 = vrot.slane %v5094, 1
    %v5096 = vadd.f32 %v5094, %v5095
    %v5097 = vadd.f32 %v5079, %v5096
    %v5098 = vmul.f32 %v5088, 0.125
    %v5099 = vmul.f32 %v5097, 0.125
    %v5100 = vmul.f32 %v5098, %v5098
    %v5101 = vsub.f32 %v5099, %v5100
    %v5102 = vmax.f32 %v5101, 0.0
    %v5103 = vld [vmem:[%s5 + $0x3] sm:$0x1]
    %v5104 = vadd.f32 %v5102, 1e-05
    %v5105 = vrsqrt.pop %v5104
    %v5106 = vmul.f32 %v5103, %v5105
    %v5107 = vld [vmem:[%s6 + $0x3] sm:$0x1]
    %v5108 = vmul.f32 %v5098, %v5106
    %v5109 = vsub.f32 %v5107, %v5108
    %v5110 = vld [vmem:[#allocation8] sm:$0xff]
    %v5111 = vld [vmem:[#allocation8 + $0x8] sm:$0xff]
    %v5112 = vld [vmem:[#allocation8 + $0x10] sm:$0x3f]
    %v5113 = vlaneseq
    %v5114 = vshrl.u32 %v5113, 7
    %v5115 = vsub.s32 0, %v5114
    %v5116 = vrot.slane %v5106, %v5115
    %v5117 = vmul.f32 %v5110, %v5116
    %v5118 = vmul.f32 %v5111, %v5116
    %v5119 = vmul.f32 %v5112, %v5116
    %v5120 = vlaneseq
    %v5121 = vshrl.u32 %v5120, 7
    %v5122 = vsub.s32 0, %v5121
    %v5123 = vrot.slane %v5109, %v5122
    %v5124 = vadd.f32 %v5117, %v5123
    %v5125 = vadd.f32 %v5118, %v5123
    %v5126 = vadd.f32 %v5119, %v5123
    %v5127 = vmax.f32 %v5124, 0.0
    %v5128 = vmax.f32 %v5125, 0.0
    %v5129 = vmax.f32 %v5126, 0.0
    %5130 = vst.msk [vmem:[#allocation8] sm:$0xff] %vm618, %v5127
    %5131 = vst.msk [vmem:[#allocation8 + $0x8] sm:$0xff] %vm618, %v5128
    %5132 = vst.msk [vmem:[#allocation8 + $0x10] sm:$0x3f] %vm678, %v5129
    %v5133 = vld [vmem:[#allocation8] sm:$0x3]
    %5134 = vst.msk [vmem:[#allocation9] sm:$0x3] %vm2896, %v5133
    %v5135 = vld [vmem:[#allocation8 + $0x4] sm:$0x3]
    %5136 = vst.msk [vmem:[#allocation9 + $0x2] sm:$0x3] %vm2896, %v5135
    %v5137 = vld [vmem:[#allocation8 + $0x10] sm:$0x3]
    %5138 = vst.msk [vmem:[#allocation9 + $0x4] sm:$0x3] %vm2896, %v5137
    %v5139 = vld [vmem:[#allocation8 + $0x14] sm:$0x3]
    %5140 = vst.msk [vmem:[#allocation9 + $0x6] sm:$0x3] %vm2896, %v5139
    // Predicated region
    $region30: #{cnn_encoder.1} parent=1 // pred_check
      _
    $region31: #{cnn_encoder.1} parent=1 // pred_check_branch
      %5142 = sbr.rel (0) target = $region33
    $region32: #{cnn_encoder.1} parent=1 // pred_region
      %s5144 = ssub.s32 128, 128
      %5145 = vsyncadd [#allocation10], %s5144
      %s5147 = sshll.u32 [#allocation9], 4
      %s5148 = int_to_ptr.vmem [resolvable:$true] %s5147
      %5150 = dma.vmem_to_hbm [thread:$0]  %s5148, 128, %s7, [#allocation10]
    $region33: #{cnn_encoder.1} parent=1 // pred_fallthru
      _
    // Predicated region
    $region34: #{cnn_encoder.1} parent=1 // pred_check
      _
    $region35: #{cnn_encoder.1} parent=1 // pred_check_branch
      %5152 = sbr.rel (0) target = $region37
    $region36: #{cnn_encoder.1} parent=1 // pred_region
      %5153 = dma.done [#allocation10], 128
    $region37: #{cnn_encoder.1} parent=1 // pred_fallthru
      _
    %5154 = vsyncpa [#allocation10], 1

</llo_original>
